<compile_context>
chip_gen: v7x
topology: tpu7x:2x2x1
jax: 0.10.0
libtpu: 0.0.40
codegen_flags: <defaults>
</compile_context>

<pallas_src>
import jax
import jax.numpy as jnp
import numpy as np
from jax.experimental import pallas as pl
from jax.experimental.pallas import tpu as pltpu

BN_EPS = 1e-5
_TAPS = tuple((kd, kh) for kd in range(3) for kh in range(3))


# --------------------------- fused Down kernel ---------------------------
def _down_fused_kernel(x_ref, w1_ref, s1_ref, t1_ref, w2_ref, s2_ref, t2_ref,
                       o_ref, pad1_ref, col1_ref, pad2_ref, col2_ref):
    # x_ref   : [1, D, H, W, Cin]    channels-last input block (one batch elem)
    # w1_ref  : [9*Cin,  Cout]       conv1 weights, rows ordered (kd, kh, ci)
    # w2_ref  : [9*Cout, Cout]       conv2 weights
    # s*/t*   : [1, Cout]            folded conv-bias + BatchNorm scale/shift
    # o_ref   : [1, D2, H2, W, Cout] channels-last output block
    # pad*_ref: [D2+2, H2+2, W, C]   zero-padded activations (VMEM scratch)
    # col*_ref: [D2*H2*W, 9*C]       im2col patch buffers    (VMEM scratch)
    D2p, H2p, W, Cin = pad1_ref.shape
    D2, H2 = D2p - 2, H2p - 2
    Cout = o_ref.shape[4]
    M = D2 * H2 * W

    # ------------------- MaxPool3d(kernel=(2,2,1)) -------------------
    # Splits only touch leading (non-layout) dims -> pure VPU max, no relayout.
    x = x_ref[0]                                   # [D, H, W, Cin]
    H = x.shape[1]
    x = x.reshape(D2, 2, H, W, Cin)
    x = jnp.max(x, axis=1)                         # pool over D
    x = x.reshape(D2, H2, 2, W, Cin)
    pooled = jnp.max(x, axis=2)                    # pool over H -> [D2,H2,W,Cin]

    def conv_bn_relu(src, pad_ref, col_ref, w_ref, s_ref, t_ref, cin):
        # Zero-pad (D2, H2) by 1 inside VMEM.  Borders are re-zeroed every grid
        # step so the kernel stays correct under megacore grid partitioning.
        pad_ref[...] = jnp.zeros(pad_ref.shape, pad_ref.dtype)
        pad_ref[1:D2 + 1, 1:H2 + 1, :, :] = src.astype(jnp.float32)
        # im2col: 9 relayout-free slices assembled once into (M, 9*cin).
        for t, (kd, kh) in enumerate(_TAPS):
            col_ref[:, t * cin:(t + 1) * cin] = (
                pad_ref[kd:kd + D2, kh:kh + H2, :, :].reshape(M, cin))
        # One MXU matmul (M=512, K=9*cin), fused bias+BN scale/shift and ReLU.
        y = jnp.dot(col_ref[...], w_ref[...],
                    preferred_element_type=jnp.float32)        # [M, Cout]
        return jnp.maximum(y * s_ref[...] + t_ref[...], 0.0)

    y1 = conv_bn_relu(pooled, pad1_ref, col1_ref, w1_ref, s1_ref, t1_ref, Cin)
    y1 = y1.reshape(D2, H2, W, Cout)
    y2 = conv_bn_relu(y1, pad2_ref, col2_ref, w2_ref, s2_ref, t2_ref, Cout)
    o_ref[0] = y2.reshape(D2, H2, W, Cout).astype(o_ref.dtype)


# ------------------------------- wrapper -------------------------------
def _fold_bn(bias, gamma, beta, mean, var):
    # BN(conv + bias) == conv * scale + shift   (inference mode)
    scale = gamma / jnp.sqrt(var + BN_EPS)
    shift = beta + (bias - mean) * scale
    return (scale.reshape(1, -1).astype(jnp.float32),
            shift.reshape(1, -1).astype(jnp.float32))


def down_forward(x, params):
    # x: [N, C, D, H, W] (PyTorch NCDHW); D and H must be even.
    N, C, D, H, W = x.shape
    D2, H2 = D // 2, H // 2
    Cin = C
    Cout = params["w1"].shape[-1]
    M = D2 * H2 * W

    s1, t1 = _fold_bn(params["b1"], params["g1"], params["be1"],
                      params["m1"], params["v1"])
    s2, t2 = _fold_bn(params["b2"], params["g2"], params["be2"],
                      params["m2"], params["v2"])
    w1m = params["w1"].reshape(9 * Cin, Cout)      # rows ordered (kd, kh, ci)
    w2m = params["w2"].reshape(9 * Cout, Cout)

    # TODO(synk): nn.Dropout is modeled in inference mode (identity); training-
    # mode RNG masking and BatchNorm batch-statistics are not reproduced here.
    x_cl = jnp.transpose(x, (0, 2, 3, 4, 1))       # [N, D, H, W, C] (tiny XLA op)

    out_cl = pl.pallas_call(
        _down_fused_kernel,
        out_shape=jax.ShapeDtypeStruct((N, D2, H2, W, Cout), x.dtype),
        grid_spec=pltpu.PrefetchScalarGridSpec(
            num_scalar_prefetch=0,
            grid=(N,),
            in_specs=[
                pl.BlockSpec((1, D, H, W, Cin), lambda n: (n, 0, 0, 0, 0)),
                pl.BlockSpec((9 * Cin, Cout), lambda n: (0, 0)),
                pl.BlockSpec((1, Cout), lambda n: (0, 0)),
                pl.BlockSpec((1, Cout), lambda n: (0, 0)),
                pl.BlockSpec((9 * Cout, Cout), lambda n: (0, 0)),
                pl.BlockSpec((1, Cout), lambda n: (0, 0)),
                pl.BlockSpec((1, Cout), lambda n: (0, 0)),
            ],
            out_specs=pl.BlockSpec((1, D2, H2, W, Cout),
                                   lambda n: (n, 0, 0, 0, 0)),
            scratch_shapes=[
                pltpu.VMEM((D2 + 2, H2 + 2, W, Cin), jnp.float32),   # pad1
                pltpu.VMEM((M, 9 * Cin), jnp.float32),               # col1
                pltpu.VMEM((D2 + 2, H2 + 2, W, Cout), jnp.float32),  # pad2
                pltpu.VMEM((M, 9 * Cout), jnp.float32),              # col2
            ]),
        compiler_params=pltpu.CompilerParams(
            dimension_semantics=("parallel",),
            vmem_limit_bytes=32 * 1024 * 1024),
    )(x_cl, w1m, s1, t1, w2m, s2, t2)

    return jnp.transpose(out_cl, (0, 4, 1, 2, 3))  # [N, Cout, D2, H2, W]


# -------------------- pure-JAX reference (for checking) --------------------
def down_forward_ref(x, params):
    N, C, D, H, W = x.shape
    z = x.reshape(N, C, D // 2, 2, H // 2, 2, W).max(axis=(3, 5))

    def block(z, w, b, gamma, beta, mean, var):
        w_oidhw = jnp.transpose(w, (3, 2, 0, 1))[..., None]  # [O, I, 3, 3, 1]
        out = jax.lax.conv_general_dilated(
            z, w_oidhw, window_strides=(1, 1, 1),
            padding=((1, 1), (1, 1), (0, 0)),
            dimension_numbers=("NCDHW", "OIDHW", "NCDHW"))
        out = out + b[None, :, None, None, None]
        s = gamma / jnp.sqrt(var + BN_EPS)
        out = (out - mean[None, :, None, None, None]) * s[None, :, None, None, None] \
              + beta[None, :, None, None, None]
        return jnp.maximum(out, 0.0)

    z = block(z, params["w1"], params["b1"], params["g1"], params["be1"],
              params["m1"], params["v1"])
    z = block(z, params["w2"], params["b2"], params["g2"], params["be2"],
              params["m2"], params["v2"])
    return z


if __name__ == "__main__":
    N, Cin, Cout = 2, 4, 8
    D, H, W = 16, 16, 8

    key = jax.random.PRNGKey(0)
    ks = jax.random.split(key, 13)
    x = jax.random.normal(ks[0], (N, Cin, D, H, W), jnp.float32)

    params = dict(
        # conv1 weights in kernel layout [kd, kh, Cin, Cout]
        w1=0.2 * jax.random.normal(ks[1], (3, 3, Cin, Cout), jnp.float32),
        b1=0.1 * jax.random.normal(ks[2], (Cout,), jnp.float32),
        g1=1.0 + 0.1 * jax.random.normal(ks[3], (Cout,), jnp.float32),
        be1=0.1 * jax.random.normal(ks[4], (Cout,), jnp.float32),
        m1=0.1 * jax.random.normal(ks[5], (Cout,), jnp.float32),
        v1=jax.random.uniform(ks[6], (Cout,), jnp.float32, 0.5, 1.5),
        # conv2
        w2=0.2 * jax.random.normal(ks[7], (3, 3, Cout, Cout), jnp.float32),
        b2=0.1 * jax.random.normal(ks[8], (Cout,), jnp.float32),
        g2=1.0 + 0.1 * jax.random.normal(ks[9], (Cout,), jnp.float32),
        be2=0.1 * jax.random.normal(ks[10], (Cout,), jnp.float32),
        m2=0.1 * jax.random.normal(ks[11], (Cout,), jnp.float32),
        v2=jax.random.uniform(ks[12], (Cout,), jnp.float32, 0.5, 1.5),
    )

    out = jax.jit(down_forward)(x, params)
    out = jax.block_until_ready(out)
    assert out.shape == (N, Cout, D // 2, H // 2, W), out.shape

    ref = down_forward_ref(x, params)
    np.testing.assert_allclose(np.asarray(out), np.asarray(ref),
                               rtol=1e-4, atol=1e-4)
    print("KERNEL_OK")
</pallas_src>

<mosaic_0001>
module attributes {stable_mosaic.version = 11 : i64} {
  func.func @_down_fused_kernel(%arg0: i32, %arg1: memref<1x16x16x8x4xf32, #tpu.memory_space<vmem>>, %arg2: memref<36x8xf32, #tpu.memory_space<vmem>>, %arg3: memref<1x8xf32, #tpu.memory_space<vmem>>, %arg4: memref<1x8xf32, #tpu.memory_space<vmem>>, %arg5: memref<72x8xf32, #tpu.memory_space<vmem>>, %arg6: memref<1x8xf32, #tpu.memory_space<vmem>>, %arg7: memref<1x8xf32, #tpu.memory_space<vmem>>, %arg8: memref<1x8x8x8x8xf32, #tpu.memory_space<vmem>>, %arg9: memref<10x10x8x4xf32, #tpu.memory_space<vmem>>, %arg10: memref<512x36xf32, #tpu.memory_space<vmem>>, %arg11: memref<10x10x8x8xf32, #tpu.memory_space<vmem>>, %arg12: memref<512x72xf32, #tpu.memory_space<vmem>>) attributes {dimension_semantics = [#tpu.dimension_semantics<parallel>], iteration_bounds = array<i64: 2>, scalar_prefetch = 0 : i64, scratch_operands = 4 : i64, tpu.core_type = #tpu.core_type<tc>, window_params = [{transform_indices = @transform_0, window_bounds = array<i64: 1, 16, 16, 8, 4>}, {pipeline_mode = #tpu.pipeline_mode<synchronous>, transform_indices = @transform_1, window_bounds = array<i64: 36, 8>}, {pipeline_mode = #tpu.pipeline_mode<synchronous>, transform_indices = @transform_2, window_bounds = array<i64: 1, 8>}, {pipeline_mode = #tpu.pipeline_mode<synchronous>, transform_indices = @transform_3, window_bounds = array<i64: 1, 8>}, {pipeline_mode = #tpu.pipeline_mode<synchronous>, transform_indices = @transform_4, window_bounds = array<i64: 72, 8>}, {pipeline_mode = #tpu.pipeline_mode<synchronous>, transform_indices = @transform_5, window_bounds = array<i64: 1, 8>}, {pipeline_mode = #tpu.pipeline_mode<synchronous>, transform_indices = @transform_6, window_bounds = array<i64: 1, 8>}, {transform_indices = @transform_7, window_bounds = array<i64: 1, 8, 8, 8, 8>}]} {
    %c0 = arith.constant 0 : index
    %c0_0 = arith.constant 0 : index
    %c0_1 = arith.constant 0 : index
    %c0_2 = arith.constant 0 : index
    %c0_3 = arith.constant 0 : index
    %0 = vector.load %arg1[%c0, %c0_0, %c0_1, %c0_2, %c0_3] : memref<1x16x16x8x4xf32, #tpu.memory_space<vmem>>, vector<1x16x16x8x4xf32>
    %1 = vector.shape_cast %0 : vector<1x16x16x8x4xf32> to vector<16x16x8x4xf32>
    %2 = vector.shape_cast %1 : vector<16x16x8x4xf32> to vector<8x2x16x8x4xf32>
    %cst = arith.constant dense<0xFF800000> : vector<8x16x8x4xf32>
    %3 = vector.multi_reduction <maximumf>, %2, %cst [1] : vector<8x2x16x8x4xf32> to vector<8x16x8x4xf32>
    %4 = vector.shape_cast %3 : vector<8x16x8x4xf32> to vector<8x8x2x8x4xf32>
    %cst_4 = arith.constant dense<0xFF800000> : vector<8x8x8x4xf32>
    %5 = vector.multi_reduction <maximumf>, %4, %cst_4 [2] : vector<8x8x2x8x4xf32> to vector<8x8x8x4xf32>
    %cst_5 = arith.constant 0.000000e+00 : f32
    %6 = vector.broadcast %cst_5 : f32 to vector<10x10x8x4xf32>
    %c0_6 = arith.constant 0 : index
    %c0_7 = arith.constant 0 : index
    %c0_8 = arith.constant 0 : index
    %c0_9 = arith.constant 0 : index
    %7 = vector.load %arg9[%c0_6, %c0_7, %c0_8, %c0_9] : memref<10x10x8x4xf32, #tpu.memory_space<vmem>>, vector<10x10x8x4xf32>
    tpu.vector_store %arg9[%c0_6, %c0_7, %c0_8, %c0_9], %6 {strides = array<i32>} : memref<10x10x8x4xf32, #tpu.memory_space<vmem>>, vector<10x10x8x4xf32>,
    %c1 = arith.constant 1 : index
    %c1_10 = arith.constant 1 : index
    %c0_11 = arith.constant 0 : index
    %c0_12 = arith.constant 0 : index
    %8 = vector.load %arg9[%c1, %c1_10, %c0_11, %c0_12] : memref<10x10x8x4xf32, #tpu.memory_space<vmem>>, vector<8x8x8x4xf32>
    tpu.vector_store %arg9[%c1, %c1_10, %c0_11, %c0_12], %5 {strides = array<i32>} : memref<10x10x8x4xf32, #tpu.memory_space<vmem>>, vector<8x8x8x4xf32>,
    %c0_13 = arith.constant 0 : index
    %c0_14 = arith.constant 0 : index
    %c0_15 = arith.constant 0 : index
    %c0_16 = arith.constant 0 : index
    %9 = vector.load %arg9[%c0_13, %c0_14, %c0_15, %c0_16] : memref<10x10x8x4xf32, #tpu.memory_space<vmem>>, vector<8x8x8x4xf32>
    %10 = vector.shape_cast %9 : vector<8x8x8x4xf32> to vector<512x4xf32>
    %c0_17 = arith.constant 0 : index
    %c0_18 = arith.constant 0 : index
    %11 = vector.load %arg10[%c0_17, %c0_18] : memref<512x36xf32, #tpu.memory_space<vmem>>, vector<512x4xf32>
    tpu.vector_store %arg10[%c0_17, %c0_18], %10 {strides = array<i32>} : memref<512x36xf32, #tpu.memory_space<vmem>>, vector<512x4xf32>,
    %c0_19 = arith.constant 0 : index
    %c1_20 = arith.constant 1 : index
    %c0_21 = arith.constant 0 : index
    %c0_22 = arith.constant 0 : index
    %12 = vector.load %arg9[%c0_19, %c1_20, %c0_21, %c0_22] : memref<10x10x8x4xf32, #tpu.memory_space<vmem>>, vector<8x8x8x4xf32>
    %13 = vector.shape_cast %12 : vector<8x8x8x4xf32> to vector<512x4xf32>
    %c0_23 = arith.constant 0 : index
    %c4 = arith.constant 4 : index
    %14 = vector.load %arg10[%c0_23, %c4] : memref<512x36xf32, #tpu.memory_space<vmem>>, vector<512x4xf32>
    tpu.vector_store %arg10[%c0_23, %c4], %13 {strides = array<i32>} : memref<512x36xf32, #tpu.memory_space<vmem>>, vector<512x4xf32>,
    %c0_24 = arith.constant 0 : index
    %c2 = arith.constant 2 : index
    %c0_25 = arith.constant 0 : index
    %c0_26 = arith.constant 0 : index
    %15 = vector.load %arg9[%c0_24, %c2, %c0_25, %c0_26] : memref<10x10x8x4xf32, #tpu.memory_space<vmem>>, vector<8x8x8x4xf32>
    %16 = vector.shape_cast %15 : vector<8x8x8x4xf32> to vector<512x4xf32>
    %c0_27 = arith.constant 0 : index
    %c8 = arith.constant 8 : index
    %17 = vector.load %arg10[%c0_27, %c8] : memref<512x36xf32, #tpu.memory_space<vmem>>, vector<512x4xf32>
    tpu.vector_store %arg10[%c0_27, %c8], %16 {strides = array<i32>} : memref<512x36xf32, #tpu.memory_space<vmem>>, vector<512x4xf32>,
    %c1_28 = arith.constant 1 : index
    %c0_29 = arith.constant 0 : index
    %c0_30 = arith.constant 0 : index
    %c0_31 = arith.constant 0 : index
    %18 = vector.load %arg9[%c1_28, %c0_29, %c0_30, %c0_31] : memref<10x10x8x4xf32, #tpu.memory_space<vmem>>, vector<8x8x8x4xf32>
    %19 = vector.shape_cast %18 : vector<8x8x8x4xf32> to vector<512x4xf32>
    %c0_32 = arith.constant 0 : index
    %c12 = arith.constant 12 : index
    %20 = vector.load %arg10[%c0_32, %c12] : memref<512x36xf32, #tpu.memory_space<vmem>>, vector<512x4xf32>
    tpu.vector_store %arg10[%c0_32, %c12], %19 {strides = array<i32>} : memref<512x36xf32, #tpu.memory_space<vmem>>, vector<512x4xf32>,
    %c1_33 = arith.constant 1 : index
    %c1_34 = arith.constant 1 : index
    %c0_35 = arith.constant 0 : index
    %c0_36 = arith.constant 0 : index
    %21 = vector.load %arg9[%c1_33, %c1_34, %c0_35, %c0_36] : memref<10x10x8x4xf32, #tpu.memory_space<vmem>>, vector<8x8x8x4xf32>
    %22 = vector.shape_cast %21 : vector<8x8x8x4xf32> to vector<512x4xf32>
    %c0_37 = arith.constant 0 : index
    %c16 = arith.constant 16 : index
    %23 = vector.load %arg10[%c0_37, %c16] : memref<512x36xf32, #tpu.memory_space<vmem>>, vector<512x4xf32>
    tpu.vector_store %arg10[%c0_37, %c16], %22 {strides = array<i32>} : memref<512x36xf32, #tpu.memory_space<vmem>>, vector<512x4xf32>,
    %c1_38 = arith.constant 1 : index
    %c2_39 = arith.constant 2 : index
    %c0_40 = arith.constant 0 : index
    %c0_41 = arith.constant 0 : index
    %24 = vector.load %arg9[%c1_38, %c2_39, %c0_40, %c0_41] : memref<10x10x8x4xf32, #tpu.memory_space<vmem>>, vector<8x8x8x4xf32>
    %25 = vector.shape_cast %24 : vector<8x8x8x4xf32> to vector<512x4xf32>
    %c0_42 = arith.constant 0 : index
    %c20 = arith.constant 20 : index
    %26 = vector.load %arg10[%c0_42, %c20] : memref<512x36xf32, #tpu.memory_space<vmem>>, vector<512x4xf32>
    tpu.vector_store %arg10[%c0_42, %c20], %25 {strides = array<i32>} : memref<512x36xf32, #tpu.memory_space<vmem>>, vector<512x4xf32>,
    %c2_43 = arith.constant 2 : index
    %c0_44 = arith.constant 0 : index
    %c0_45 = arith.constant 0 : index
    %c0_46 = arith.constant 0 : index
    %27 = vector.load %arg9[%c2_43, %c0_44, %c0_45, %c0_46] : memref<10x10x8x4xf32, #tpu.memory_space<vmem>>, vector<8x8x8x4xf32>
    %28 = vector.shape_cast %27 : vector<8x8x8x4xf32> to vector<512x4xf32>
    %c0_47 = arith.constant 0 : index
    %c24 = arith.constant 24 : index
    %29 = vector.load %arg10[%c0_47, %c24] : memref<512x36xf32, #tpu.memory_space<vmem>>, vector<512x4xf32>
    tpu.vector_store %arg10[%c0_47, %c24], %28 {strides = array<i32>} : memref<512x36xf32, #tpu.memory_space<vmem>>, vector<512x4xf32>,
    %c2_48 = arith.constant 2 : index
    %c1_49 = arith.constant 1 : index
    %c0_50 = arith.constant 0 : index
    %c0_51 = arith.constant 0 : index
    %30 = vector.load %arg9[%c2_48, %c1_49, %c0_50, %c0_51] : memref<10x10x8x4xf32, #tpu.memory_space<vmem>>, vector<8x8x8x4xf32>
    %31 = vector.shape_cast %30 : vector<8x8x8x4xf32> to vector<512x4xf32>
    %c0_52 = arith.constant 0 : index
    %c28 = arith.constant 28 : index
    %32 = vector.load %arg10[%c0_52, %c28] : memref<512x36xf32, #tpu.memory_space<vmem>>, vector<512x4xf32>
    tpu.vector_store %arg10[%c0_52, %c28], %31 {strides = array<i32>} : memref<512x36xf32, #tpu.memory_space<vmem>>, vector<512x4xf32>,
    %c2_53 = arith.constant 2 : index
    %c2_54 = arith.constant 2 : index
    %c0_55 = arith.constant 0 : index
    %c0_56 = arith.constant 0 : index
    %33 = vector.load %arg9[%c2_53, %c2_54, %c0_55, %c0_56] : memref<10x10x8x4xf32, #tpu.memory_space<vmem>>, vector<8x8x8x4xf32>
    %34 = vector.shape_cast %33 : vector<8x8x8x4xf32> to vector<512x4xf32>
    %c0_57 = arith.constant 0 : index
    %c32 = arith.constant 32 : index
    %35 = vector.load %arg10[%c0_57, %c32] : memref<512x36xf32, #tpu.memory_space<vmem>>, vector<512x4xf32>
    tpu.vector_store %arg10[%c0_57, %c32], %34 {strides = array<i32>} : memref<512x36xf32, #tpu.memory_space<vmem>>, vector<512x4xf32>,
    %c0_58 = arith.constant 0 : index
    %c0_59 = arith.constant 0 : index
    %36 = vector.load %arg10[%c0_58, %c0_59] : memref<512x36xf32, #tpu.memory_space<vmem>>, vector<512x36xf32>
    %c0_60 = arith.constant 0 : index
    %c0_61 = arith.constant 0 : index
    %37 = vector.load %arg2[%c0_60, %c0_61] : memref<36x8xf32, #tpu.memory_space<vmem>>, vector<36x8xf32>
    %cst_62 = arith.constant dense<0.000000e+00> : vector<512x8xf32>
    %38 = tpu.matmul %36, %37, %cst_62 {dimension_numbers = #tpu.dot_dimension_numbers<[1], [0], [0], [1], [0, 0, 1, 1], [], []>} : vector<512x36xf32>, vector<36x8xf32>, vector<512x8xf32> -> vector<512x8xf32>
    %c0_63 = arith.constant 0 : index
    %c0_64 = arith.constant 0 : index
    %39 = vector.load %arg3[%c0_63, %c0_64] : memref<1x8xf32, #tpu.memory_space<vmem>>, vector<1x8xf32>
    %40 = vector.broadcast %39 : vector<1x8xf32> to vector<512x8xf32>
    %41 = arith.mulf %38, %40 : vector<512x8xf32>
    %c0_65 = arith.constant 0 : index
    %c0_66 = arith.constant 0 : index
    %42 = vector.load %arg4[%c0_65, %c0_66] : memref<1x8xf32, #tpu.memory_space<vmem>>, vector<1x8xf32>
    %43 = vector.broadcast %42 : vector<1x8xf32> to vector<512x8xf32>
    %44 = arith.addf %41, %43 : vector<512x8xf32>
    %cst_67 = arith.constant 0.000000e+00 : f32
    %45 = vector.broadcast %cst_67 : f32 to vector<512x8xf32>
    %46 = arith.maximumf %44, %45 : vector<512x8xf32>
    %47 = vector.shape_cast %46 : vector<512x8xf32> to vector<8x8x8x8xf32>
    %cst_68 = arith.constant 0.000000e+00 : f32
    %48 = vector.broadcast %cst_68 : f32 to vector<10x10x8x8xf32>
    %c0_69 = arith.constant 0 : index
    %c0_70 = arith.constant 0 : index
    %c0_71 = arith.constant 0 : index
    %c0_72 = arith.constant 0 : index
    %49 = vector.load %arg11[%c0_69, %c0_70, %c0_71, %c0_72] : memref<10x10x8x8xf32, #tpu.memory_space<vmem>>, vector<10x10x8x8xf32>
    tpu.vector_store %arg11[%c0_69, %c0_70, %c0_71, %c0_72], %48 {strides = array<i32>} : memref<10x10x8x8xf32, #tpu.memory_space<vmem>>, vector<10x10x8x8xf32>,
    %c1_73 = arith.constant 1 : index
    %c1_74 = arith.constant 1 : index
    %c0_75 = arith.constant 0 : index
    %c0_76 = arith.constant 0 : index
    %50 = vector.load %arg11[%c1_73, %c1_74, %c0_75, %c0_76] : memref<10x10x8x8xf32, #tpu.memory_space<vmem>>, vector<8x8x8x8xf32>
    tpu.vector_store %arg11[%c1_73, %c1_74, %c0_75, %c0_76], %47 {strides = array<i32>} : memref<10x10x8x8xf32, #tpu.memory_space<vmem>>, vector<8x8x8x8xf32>,
    %c0_77 = arith.constant 0 : index
    %c0_78 = arith.constant 0 : index
    %c0_79 = arith.constant 0 : index
    %c0_80 = arith.constant 0 : index
    %51 = vector.load %arg11[%c0_77, %c0_78, %c0_79, %c0_80] : memref<10x10x8x8xf32, #tpu.memory_space<vmem>>, vector<8x8x8x8xf32>
    %52 = vector.shape_cast %51 : vector<8x8x8x8xf32> to vector<512x8xf32>
    %c0_81 = arith.constant 0 : index
    %c0_82 = arith.constant 0 : index
    %53 = vector.load %arg12[%c0_81, %c0_82] : memref<512x72xf32, #tpu.memory_space<vmem>>, vector<512x8xf32>
    tpu.vector_store %arg12[%c0_81, %c0_82], %52 {strides = array<i32>} : memref<512x72xf32, #tpu.memory_space<vmem>>, vector<512x8xf32>,
    %c0_83 = arith.constant 0 : index
    %c1_84 = arith.constant 1 : index
    %c0_85 = arith.constant 0 : index
    %c0_86 = arith.constant 0 : index
    %54 = vector.load %arg11[%c0_83, %c1_84, %c0_85, %c0_86] : memref<10x10x8x8xf32, #tpu.memory_space<vmem>>, vector<8x8x8x8xf32>
    %55 = vector.shape_cast %54 : vector<8x8x8x8xf32> to vector<512x8xf32>
    %c0_87 = arith.constant 0 : index
    %c8_88 = arith.constant 8 : index
    %56 = vector.load %arg12[%c0_87, %c8_88] : memref<512x72xf32, #tpu.memory_space<vmem>>, vector<512x8xf32>
    tpu.vector_store %arg12[%c0_87, %c8_88], %55 {strides = array<i32>} : memref<512x72xf32, #tpu.memory_space<vmem>>, vector<512x8xf32>,
    %c0_89 = arith.constant 0 : index
    %c2_90 = arith.constant 2 : index
    %c0_91 = arith.constant 0 : index
    %c0_92 = arith.constant 0 : index
    %57 = vector.load %arg11[%c0_89, %c2_90, %c0_91, %c0_92] : memref<10x10x8x8xf32, #tpu.memory_space<vmem>>, vector<8x8x8x8xf32>
    %58 = vector.shape_cast %57 : vector<8x8x8x8xf32> to vector<512x8xf32>
    %c0_93 = arith.constant 0 : index
    %c16_94 = arith.constant 16 : index
    %59 = vector.load %arg12[%c0_93, %c16_94] : memref<512x72xf32, #tpu.memory_space<vmem>>, vector<512x8xf32>
    tpu.vector_store %arg12[%c0_93, %c16_94], %58 {strides = array<i32>} : memref<512x72xf32, #tpu.memory_space<vmem>>, vector<512x8xf32>,
    %c1_95 = arith.constant 1 : index
    %c0_96 = arith.constant 0 : index
    %c0_97 = arith.constant 0 : index
    %c0_98 = arith.constant 0 : index
    %60 = vector.load %arg11[%c1_95, %c0_96, %c0_97, %c0_98] : memref<10x10x8x8xf32, #tpu.memory_space<vmem>>, vector<8x8x8x8xf32>
    %61 = vector.shape_cast %60 : vector<8x8x8x8xf32> to vector<512x8xf32>
    %c0_99 = arith.constant 0 : index
    %c24_100 = arith.constant 24 : index
    %62 = vector.load %arg12[%c0_99, %c24_100] : memref<512x72xf32, #tpu.memory_space<vmem>>, vector<512x8xf32>
    tpu.vector_store %arg12[%c0_99, %c24_100], %61 {strides = array<i32>} : memref<512x72xf32, #tpu.memory_space<vmem>>, vector<512x8xf32>,
    %c1_101 = arith.constant 1 : index
    %c1_102 = arith.constant 1 : index
    %c0_103 = arith.constant 0 : index
    %c0_104 = arith.constant 0 : index
    %63 = vector.load %arg11[%c1_101, %c1_102, %c0_103, %c0_104] : memref<10x10x8x8xf32, #tpu.memory_space<vmem>>, vector<8x8x8x8xf32>
    %64 = vector.shape_cast %63 : vector<8x8x8x8xf32> to vector<512x8xf32>
    %c0_105 = arith.constant 0 : index
    %c32_106 = arith.constant 32 : index
    %65 = vector.load %arg12[%c0_105, %c32_106] : memref<512x72xf32, #tpu.memory_space<vmem>>, vector<512x8xf32>
    tpu.vector_store %arg12[%c0_105, %c32_106], %64 {strides = array<i32>} : memref<512x72xf32, #tpu.memory_space<vmem>>, vector<512x8xf32>,
    %c1_107 = arith.constant 1 : index
    %c2_108 = arith.constant 2 : index
    %c0_109 = arith.constant 0 : index
    %c0_110 = arith.constant 0 : index
    %66 = vector.load %arg11[%c1_107, %c2_108, %c0_109, %c0_110] : memref<10x10x8x8xf32, #tpu.memory_space<vmem>>, vector<8x8x8x8xf32>
    %67 = vector.shape_cast %66 : vector<8x8x8x8xf32> to vector<512x8xf32>
    %c0_111 = arith.constant 0 : index
    %c40 = arith.constant 40 : index
    %68 = vector.load %arg12[%c0_111, %c40] : memref<512x72xf32, #tpu.memory_space<vmem>>, vector<512x8xf32>
    tpu.vector_store %arg12[%c0_111, %c40], %67 {strides = array<i32>} : memref<512x72xf32, #tpu.memory_space<vmem>>, vector<512x8xf32>,
    %c2_112 = arith.constant 2 : index
    %c0_113 = arith.constant 0 : index
    %c0_114 = arith.constant 0 : index
    %c0_115 = arith.constant 0 : index
    %69 = vector.load %arg11[%c2_112, %c0_113, %c0_114, %c0_115] : memref<10x10x8x8xf32, #tpu.memory_space<vmem>>, vector<8x8x8x8xf32>
    %70 = vector.shape_cast %69 : vector<8x8x8x8xf32> to vector<512x8xf32>
    %c0_116 = arith.constant 0 : index
    %c48 = arith.constant 48 : index
    %71 = vector.load %arg12[%c0_116, %c48] : memref<512x72xf32, #tpu.memory_space<vmem>>, vector<512x8xf32>
    tpu.vector_store %arg12[%c0_116, %c48], %70 {strides = array<i32>} : memref<512x72xf32, #tpu.memory_space<vmem>>, vector<512x8xf32>,
    %c2_117 = arith.constant 2 : index
    %c1_118 = arith.constant 1 : index
    %c0_119 = arith.constant 0 : index
    %c0_120 = arith.constant 0 : index
    %72 = vector.load %arg11[%c2_117, %c1_118, %c0_119, %c0_120] : memref<10x10x8x8xf32, #tpu.memory_space<vmem>>, vector<8x8x8x8xf32>
    %73 = vector.shape_cast %72 : vector<8x8x8x8xf32> to vector<512x8xf32>
    %c0_121 = arith.constant 0 : index
    %c56 = arith.constant 56 : index
    %74 = vector.load %arg12[%c0_121, %c56] : memref<512x72xf32, #tpu.memory_space<vmem>>, vector<512x8xf32>
    tpu.vector_store %arg12[%c0_121, %c56], %73 {strides = array<i32>} : memref<512x72xf32, #tpu.memory_space<vmem>>, vector<512x8xf32>,
    %c2_122 = arith.constant 2 : index
    %c2_123 = arith.constant 2 : index
    %c0_124 = arith.constant 0 : index
    %c0_125 = arith.constant 0 : index
    %75 = vector.load %arg11[%c2_122, %c2_123, %c0_124, %c0_125] : memref<10x10x8x8xf32, #tpu.memory_space<vmem>>, vector<8x8x8x8xf32>
    %76 = vector.shape_cast %75 : vector<8x8x8x8xf32> to vector<512x8xf32>
    %c0_126 = arith.constant 0 : index
    %c64 = arith.constant 64 : index
    %77 = vector.load %arg12[%c0_126, %c64] : memref<512x72xf32, #tpu.memory_space<vmem>>, vector<512x8xf32>
    tpu.vector_store %arg12[%c0_126, %c64], %76 {strides = array<i32>} : memref<512x72xf32, #tpu.memory_space<vmem>>, vector<512x8xf32>,
    %c0_127 = arith.constant 0 : index
    %c0_128 = arith.constant 0 : index
    %78 = vector.load %arg12[%c0_127, %c0_128] : memref<512x72xf32, #tpu.memory_space<vmem>>, vector<512x72xf32>
    %c0_129 = arith.constant 0 : index
    %c0_130 = arith.constant 0 : index
    %79 = vector.load %arg5[%c0_129, %c0_130] : memref<72x8xf32, #tpu.memory_space<vmem>>, vector<72x8xf32>
    %cst_131 = arith.constant dense<0.000000e+00> : vector<512x8xf32>
    %80 = tpu.matmul %78, %79, %cst_131 {dimension_numbers = #tpu.dot_dimension_numbers<[1], [0], [0], [1], [0, 0, 1, 1], [], []>} : vector<512x72xf32>, vector<72x8xf32>, vector<512x8xf32> -> vector<512x8xf32>
    %c0_132 = arith.constant 0 : index
    %c0_133 = arith.constant 0 : index
    %81 = vector.load %arg6[%c0_132, %c0_133] : memref<1x8xf32, #tpu.memory_space<vmem>>, vector<1x8xf32>
    %82 = vector.broadcast %81 : vector<1x8xf32> to vector<512x8xf32>
    %83 = arith.mulf %80, %82 : vector<512x8xf32>
    %c0_134 = arith.constant 0 : index
    %c0_135 = arith.constant 0 : index
    %84 = vector.load %arg7[%c0_134, %c0_135] : memref<1x8xf32, #tpu.memory_space<vmem>>, vector<1x8xf32>
    %85 = vector.broadcast %84 : vector<1x8xf32> to vector<512x8xf32>
    %86 = arith.addf %83, %85 : vector<512x8xf32>
    %cst_136 = arith.constant 0.000000e+00 : f32
    %87 = vector.broadcast %cst_136 : f32 to vector<512x8xf32>
    %88 = arith.maximumf %86, %87 : vector<512x8xf32>
    %89 = vector.shape_cast %88 : vector<512x8xf32> to vector<8x8x8x8xf32>
    %c0_137 = arith.constant 0 : index
    %c0_138 = arith.constant 0 : index
    %c0_139 = arith.constant 0 : index
    %c0_140 = arith.constant 0 : index
    %c0_141 = arith.constant 0 : index
    %90 = vector.load %arg8[%c0_137, %c0_138, %c0_139, %c0_140, %c0_141] : memref<1x8x8x8x8xf32, #tpu.memory_space<vmem>>, vector<1x8x8x8x8xf32>
    %91 = vector.shape_cast %90 : vector<1x8x8x8x8xf32> to vector<8x8x8x8xf32>
    %92 = vector.shape_cast %89 : vector<8x8x8x8xf32> to vector<1x8x8x8x8xf32>
    tpu.vector_store %arg8[%c0_137, %c0_138, %c0_139, %c0_140, %c0_141], %92 {strides = array<i32>} : memref<1x8x8x8x8xf32, #tpu.memory_space<vmem>>, vector<1x8x8x8x8xf32>,
    return
  }
  func.func @transform_0(%arg0: i32) -> (i32, i32, i32, i32, i32) {
    %c0_i32 = arith.constant 0 : i32
    %c0_i32_0 = arith.constant 0 : i32
    %c0_i32_1 = arith.constant 0 : i32
    %c0_i32_2 = arith.constant 0 : i32
    %c0_i32_3 = arith.constant 0 : i32
    return %arg0, %c0_i32, %c0_i32_0, %c0_i32_1, %c0_i32_2 : i32, i32, i32, i32, i32
  }
  func.func @transform_1(%arg0: i32) -> (i32, i32) {
    %c0_i32 = arith.constant 0 : i32
    %c0_i32_0 = arith.constant 0 : i32
    %c0_i32_1 = arith.constant 0 : i32
    return %c0_i32, %c0_i32_0 : i32, i32
  }
  func.func @transform_2(%arg0: i32) -> (i32, i32) {
    %c0_i32 = arith.constant 0 : i32
    %c0_i32_0 = arith.constant 0 : i32
    %c0_i32_1 = arith.constant 0 : i32
    return %c0_i32, %c0_i32_0 : i32, i32
  }
  func.func @transform_3(%arg0: i32) -> (i32, i32) {
    %c0_i32 = arith.constant 0 : i32
    %c0_i32_0 = arith.constant 0 : i32
    %c0_i32_1 = arith.constant 0 : i32
    return %c0_i32, %c0_i32_0 : i32, i32
  }
  func.func @transform_4(%arg0: i32) -> (i32, i32) {
    %c0_i32 = arith.constant 0 : i32
    %c0_i32_0 = arith.constant 0 : i32
    %c0_i32_1 = arith.constant 0 : i32
    return %c0_i32, %c0_i32_0 : i32, i32
  }
  func.func @transform_5(%arg0: i32) -> (i32, i32) {
    %c0_i32 = arith.constant 0 : i32
    %c0_i32_0 = arith.constant 0 : i32
    %c0_i32_1 = arith.constant 0 : i32
    return %c0_i32, %c0_i32_0 : i32, i32
  }
  func.func @transform_6(%arg0: i32) -> (i32, i32) {
    %c0_i32 = arith.constant 0 : i32
    %c0_i32_0 = arith.constant 0 : i32
    %c0_i32_1 = arith.constant 0 : i32
    return %c0_i32, %c0_i32_0 : i32, i32
  }
  func.func @transform_7(%arg0: i32) -> (i32, i32, i32, i32, i32) {
    %c0_i32 = arith.constant 0 : i32
    %c0_i32_0 = arith.constant 0 : i32
    %c0_i32_1 = arith.constant 0 : i32
    %c0_i32_2 = arith.constant 0 : i32
    %c0_i32_3 = arith.constant 0 : i32
    return %arg0, %c0_i32, %c0_i32_0, %c0_i32_1, %c0_i32_2 : i32, i32, i32, i32, i32
  }
}

</mosaic_0001>

<llo_original>
// kernel: down_forward.1
$region0: #{down_forward.1}
  #allocation0 [shape = 'u32[]', space=smem, size = 0x4, offset = 0x4, fixed_abs, tag = 'smem constant byte address 0x4 - core index']
  #allocation1 [shape = 'u32[144,128]{1,0:T(1,128)}', space=vmem, size = 0x12000, scoped, tag = 'internal scratch']
  #allocation2 [shape = 'f32[10,10,8,4]{3,2,1,0:T(8,128)}', space=vmem, size = 0x64000, scoped, tag = 'scratch operand']
  #allocation3 [shape = 'f32[512,36]{1,0:T(8,128)}', space=vmem, size = 0x40000, scoped, tag = 'scratch operand']
  #allocation4 [shape = 'f32[10,10,8,8]{3,2,1,0:T(8,128)}', space=vmem, size = 0x64000, scoped, tag = 'scratch operand']
  #allocation5 [shape = 'f32[512,72]{1,0:T(8,128)}', space=vmem, size = 0x40000, scoped, tag = 'scratch operand']
  %s0 = inlined_call_operand.vmem [shape: f32[2,16,16,8,4], index: 0, kind: input, shape index: {}]
  %s1 = inlined_call_operand.vmem [shape: f32[36,8], index: 1, kind: input, shape index: {}]
  %s2 = inlined_call_operand.vmem [shape: f32[1,8], index: 2, kind: input, shape index: {}]
  %s3 = inlined_call_operand.vmem [shape: f32[1,8], index: 3, kind: input, shape index: {}]
  %s4 = inlined_call_operand.vmem [shape: f32[72,8], index: 4, kind: input, shape index: {}]
  %s5 = inlined_call_operand.vmem [shape: f32[1,8], index: 5, kind: input, shape index: {}]
  %s6 = inlined_call_operand.vmem [shape: f32[1,8], index: 6, kind: input, shape index: {}]
  %s7 = inlined_call_operand.vmem [shape: f32[2,8,8,8,8], index: 7, kind: output, shape index: {}]
  %s8 = sld [smem:[#allocation0]]
  $region61: #{down_forward.1} parent=0
    _
  %s10 = ssub.s32 1, %s8
  %s11 = scalar_select 0, %s10, %s8
  loop: start=0, step=1, limit=4
  $region2: #{down_forward.1} parent=0 // loop_pre_header
    _
  $region3: #{down_forward.1} parent=0 // loop_header
    %s13 = sphi 0, %s17
    %p14 = scmp.ge.s32.totalorder %s13, 4
    %s23 = sphi 0, %s25
    %s26 = sphi 0, %s23
    %s27 = sphi 0, %s26
    %s43 = sphi 0, %s27
    %s47 = sphi 0, %s47
    %s49 = sphi 0, %s47
    %s50 = sphi 0, %s49
    %s64 = sphi 0, %s50
    %s68 = sphi 0, %s68
    %s70 = sphi 0, %s68
    %s71 = sphi 0, %s70
    %s85 = sphi 0, %s71
    %s89 = sphi 0, %s89
    %s91 = sphi 0, %s89
    %s92 = sphi 0, %s91
    %s106 = sphi 0, %s92
    %s110 = sphi 0, %s110
    %s112 = sphi 0, %s110
    %s113 = sphi 0, %s112
    %s127 = sphi 0, %s113
    %s131 = sphi 0, %s131
    %s133 = sphi 0, %s131
    %s134 = sphi 0, %s133
    %s148 = sphi 0, %s134
    %s152 = sphi 0, %s152
    %s154 = sphi 0, %s152
    %s155 = sphi 0, %s154
    %s169 = sphi 0, %s155
    %s175 = sphi 0, %s177
    %s178 = sphi 0, %s175
    %s179 = sphi 0, %s178
    %s195 = sphi 0, %s179
  $region4: #{down_forward.1} parent=0 // loop_header_branch
    %16 = sbr.rel (%p14) target = $region8
  $region5: #{down_forward.1} parent=0 // loop_body
    %s18 = ssub.s32 %s13, 1
    %s19 = ssub.s32 %s13, 2
    %s20 = sadd.s32 %s13, 1
    %s21 = ssub.s32 %s13, %s20
    %p22 = scmp.eq.s32.totalorder %s21, 0
    %s24 = sadd.s32 %s23, 1
    %s25 = scalar_select %p22, %s23, %s24
    %p28 = pneg %p22
    %p29 = scmp.eq.s32.totalorder %s13, 1
    %p30 = por %p28, %p29
    %p31 = scmp.ne.s32.totalorder %s23, %s26
    %p32 = scmp.eq.s32.totalorder %s13, 0
    %p33 = por %p31, %p32
    %p34 = scmp.ne.s32.totalorder %s23, %s26
    %p35 = scmp.eq.s32.totalorder %s18, 1
    %p36 = por %p34, %p35
    %p37 = scmp.ne.s32.totalorder %s26, %s27
    %p38 = scmp.eq.s32.totalorder %s18, 0
    %p39 = por %p37, %p38
    %p40 = scmp.ne.s32.totalorder %s26, %s27
    %p41 = scmp.eq.s32.totalorder %s19, 1
    %p42 = por %p40, %p41
    %p44 = scmp.ne.s32.totalorder %s27, %s43
    %p45 = scmp.eq.s32.totalorder %s19, 0
    %p46 = por %p44, %p45
    %s48 = sadd.s32 %s47, 1
    %p51 = scmp.eq.s32.totalorder %s13, 1
    %p52 = scmp.ne.s32.totalorder %s47, %s49
    %p53 = scmp.eq.s32.totalorder %s13, 0
    %p54 = por %p52, %p53
    %p55 = scmp.ne.s32.totalorder %s47, %s49
    %p56 = scmp.eq.s32.totalorder %s18, 1
    %p57 = por %p55, %p56
    %p58 = scmp.ne.s32.totalorder %s49, %s50
    %p59 = scmp.eq.s32.totalorder %s18, 0
    %p60 = por %p58, %p59
    %p61 = scmp.ne.s32.totalorder %s49, %s50
    %p62 = scmp.eq.s32.totalorder %s19, 1
    %p63 = por %p61, %p62
    %p65 = scmp.ne.s32.totalorder %s50, %s64
    %p66 = scmp.eq.s32.totalorder %s19, 0
    %p67 = por %p65, %p66
    %s69 = sadd.s32 %s68, 1
    %p72 = scmp.eq.s32.totalorder %s13, 1
    %p73 = scmp.ne.s32.totalorder %s68, %s70
    %p74 = scmp.eq.s32.totalorder %s13, 0
    %p75 = por %p73, %p74
    %p76 = scmp.ne.s32.totalorder %s68, %s70
    %p77 = scmp.eq.s32.totalorder %s18, 1
    %p78 = por %p76, %p77
    %p79 = scmp.ne.s32.totalorder %s70, %s71
    %p80 = scmp.eq.s32.totalorder %s18, 0
    %p81 = por %p79, %p80
    %p82 = scmp.ne.s32.totalorder %s70, %s71
    %p83 = scmp.eq.s32.totalorder %s19, 1
    %p84 = por %p82, %p83
    %p86 = scmp.ne.s32.totalorder %s71, %s85
    %p87 = scmp.eq.s32.totalorder %s19, 0
    %p88 = por %p86, %p87
    %s90 = sadd.s32 %s89, 1
    %p93 = scmp.eq.s32.totalorder %s13, 1
    %p94 = scmp.ne.s32.totalorder %s89, %s91
    %p95 = scmp.eq.s32.totalorder %s13, 0
    %p96 = por %p94, %p95
    %p97 = scmp.ne.s32.totalorder %s89, %s91
    %p98 = scmp.eq.s32.totalorder %s18, 1
    %p99 = por %p97, %p98
    %p100 = scmp.ne.s32.totalorder %s91, %s92
    %p101 = scmp.eq.s32.totalorder %s18, 0
    %p102 = por %p100, %p101
    %p103 = scmp.ne.s32.totalorder %s91, %s92
    %p104 = scmp.eq.s32.totalorder %s19, 1
    %p105 = por %p103, %p104
    %p107 = scmp.ne.s32.totalorder %s92, %s106
    %p108 = scmp.eq.s32.totalorder %s19, 0
    %p109 = por %p107, %p108
    %s111 = sadd.s32 %s110, 1
    %p114 = scmp.eq.s32.totalorder %s13, 1
    %p115 = scmp.ne.s32.totalorder %s110, %s112
    %p116 = scmp.eq.s32.totalorder %s13, 0
    %p117 = por %p115, %p116
    %p118 = scmp.ne.s32.totalorder %s110, %s112
    %p119 = scmp.eq.s32.totalorder %s18, 1
    %p120 = por %p118, %p119
    %p121 = scmp.ne.s32.totalorder %s112, %s113
    %p122 = scmp.eq.s32.totalorder %s18, 0
    %p123 = por %p121, %p122
    %p124 = scmp.ne.s32.totalorder %s112, %s113
    %p125 = scmp.eq.s32.totalorder %s19, 1
    %p126 = por %p124, %p125
    %p128 = scmp.ne.s32.totalorder %s113, %s127
    %p129 = scmp.eq.s32.totalorder %s19, 0
    %p130 = por %p128, %p129
    %s132 = sadd.s32 %s131, 1
    %p135 = scmp.eq.s32.totalorder %s13, 1
    %p136 = scmp.ne.s32.totalorder %s131, %s133
    %p137 = scmp.eq.s32.totalorder %s13, 0
    %p138 = por %p136, %p137
    %p139 = scmp.ne.s32.totalorder %s131, %s133
    %p140 = scmp.eq.s32.totalorder %s18, 1
    %p141 = por %p139, %p140
    %p142 = scmp.ne.s32.totalorder %s133, %s134
    %p143 = scmp.eq.s32.totalorder %s18, 0
    %p144 = por %p142, %p143
    %p145 = scmp.ne.s32.totalorder %s133, %s134
    %p146 = scmp.eq.s32.totalorder %s19, 1
    %p147 = por %p145, %p146
    %p149 = scmp.ne.s32.totalorder %s134, %s148
    %p150 = scmp.eq.s32.totalorder %s19, 0
    %p151 = por %p149, %p150
    %s153 = sadd.s32 %s152, 1
    %p156 = scmp.eq.s32.totalorder %s13, 1
    %p157 = scmp.ne.s32.totalorder %s152, %s154
    %p158 = scmp.eq.s32.totalorder %s13, 0
    %p159 = por %p157, %p158
    %p160 = scmp.ne.s32.totalorder %s152, %s154
    %p161 = scmp.eq.s32.totalorder %s18, 1
    %p162 = por %p160, %p161
    %p163 = scmp.ne.s32.totalorder %s154, %s155
    %p164 = scmp.eq.s32.totalorder %s18, 0
    %p165 = por %p163, %p164
    %p166 = scmp.ne.s32.totalorder %s154, %s155
    %p167 = scmp.eq.s32.totalorder %s19, 1
    %p168 = por %p166, %p167
    %p170 = scmp.ne.s32.totalorder %s155, %s169
    %p171 = scmp.eq.s32.totalorder %s19, 0
    %p172 = por %p170, %p171
    %s173 = ssub.s32 %s13, %s20
    %p174 = scmp.eq.s32.totalorder %s173, 0
    %s176 = sadd.s32 %s175, 1
    %s177 = scalar_select %p174, %s175, %s176
    %p180 = pneg %p174
    %p181 = scmp.eq.s32.totalorder %s13, 1
    %p182 = por %p180, %p181
    %p183 = scmp.ne.s32.totalorder %s175, %s178
    %p184 = scmp.eq.s32.totalorder %s13, 0
    %p185 = por %p183, %p184
    %p186 = scmp.ne.s32.totalorder %s175, %s178
    %p187 = scmp.eq.s32.totalorder %s18, 1
    %p188 = por %p186, %p187
    %p189 = scmp.ne.s32.totalorder %s178, %s179
    %p190 = scmp.eq.s32.totalorder %s18, 0
    %p191 = por %p189, %p190
    %p192 = scmp.ne.s32.totalorder %s178, %s179
    %p193 = scmp.eq.s32.totalorder %s19, 1
    %p194 = por %p192, %p193
    %p196 = scmp.ne.s32.totalorder %s179, %s195
    %p197 = scmp.eq.s32.totalorder %s19, 0
    %p198 = por %p196, %p197
    %p199 = scmp.le.s32.totalorder 1, %s13
    %p200 = scmp.lt.s32.totalorder %s13, 3
    %p201 = pnand %p199, %p200
    %p202 = pneg %p201
    // Predicated region
    $region9: #{down_forward.1} parent=5 // pred_check
      _
    $region10: #{down_forward.1} parent=5 // pred_check_branch
      %204 = sbr.rel (%p201) target = $region12
    $region11: #{down_forward.1} parent=5 // pred_region
      %s205 = ssub.s32 %s13, 1
      // Predicated region
      $region13: #{down_forward.1} parent=11 // pred_check
        %p206 = pneg %p60
      $region14: #{down_forward.1} parent=11 // pred_check_branch
        %208 = sbr.rel (%p206) target = $region16
      $region15: #{down_forward.1} parent=11 // pred_region
        _
      $region16: #{down_forward.1} parent=11 // pred_fallthru
        _
      // Predicated region
      $region17: #{down_forward.1} parent=11 // pred_check
        %p209 = pneg %p81
      $region18: #{down_forward.1} parent=11 // pred_check_branch
        %211 = sbr.rel (%p209) target = $region20
      $region19: #{down_forward.1} parent=11 // pred_region
        _
      $region20: #{down_forward.1} parent=11 // pred_fallthru
        _
      // Predicated region
      $region21: #{down_forward.1} parent=11 // pred_check
        %p212 = pneg %p102
      $region22: #{down_forward.1} parent=11 // pred_check_branch
        %214 = sbr.rel (%p212) target = $region24
      $region23: #{down_forward.1} parent=11 // pred_region
        _
      $region24: #{down_forward.1} parent=11 // pred_fallthru
        _
      // Predicated region
      $region25: #{down_forward.1} parent=11 // pred_check
        %p215 = pneg %p123
      $region26: #{down_forward.1} parent=11 // pred_check_branch
        %217 = sbr.rel (%p215) target = $region28
      $region27: #{down_forward.1} parent=11 // pred_region
        _
      $region28: #{down_forward.1} parent=11 // pred_fallthru
        _
      // Predicated region
      $region29: #{down_forward.1} parent=11 // pred_check
        %p218 = pneg %p144
      $region30: #{down_forward.1} parent=11 // pred_check_branch
        %220 = sbr.rel (%p218) target = $region32
      $region31: #{down_forward.1} parent=11 // pred_region
        _
      $region32: #{down_forward.1} parent=11 // pred_fallthru
        _
      // Predicated region
      $region33: #{down_forward.1} parent=11 // pred_check
        %p221 = pneg %p165
      $region34: #{down_forward.1} parent=11 // pred_check_branch
        %223 = sbr.rel (%p221) target = $region36
      $region35: #{down_forward.1} parent=11 // pred_region
        _
      $region36: #{down_forward.1} parent=11 // pred_fallthru
        _
    $region12: #{down_forward.1} parent=5 // pred_fallthru
      _
    %p224 = scmp.lt.s32.totalorder %s13, 2
    // Predicated region
    $region37: #{down_forward.1} parent=5 // pred_check
      %p225 = pneg %p224
    $region38: #{down_forward.1} parent=5 // pred_check_branch
      %227 = sbr.rel (%p225) target = $region40
    $region39: #{down_forward.1} parent=5 // pred_region
      // Predicated region
      $region41: #{down_forward.1} parent=39 // pred_check
        %p228 = pneg %p33
      $region42: #{down_forward.1} parent=39 // pred_check_branch
        %230 = sbr.rel (%p228) target = $region44
      $region43: #{down_forward.1} parent=39 // pred_region
        %p231 = scmp.lt.s32.totalorder %s13, 1
        %s232 = scalar_select %p231, %s13, 1
        %s233 = smul.addr %s232, 256
        %s234 = smul.addr %s233, 8
        %s235 = scalar_lea.vmem %s0, %s234
      $region44: #{down_forward.1} parent=39 // pred_fallthru
        _
    $region40: #{down_forward.1} parent=5 // pred_fallthru
      _
    %p236 = scmp.le.s32.totalorder 1, %s13
    %p237 = scmp.lt.s32.totalorder %s13, 3
    %p238 = pnand %p236, %p237
    %p239 = pneg %p238
    // Predicated region
    $region45: #{down_forward.1} parent=5 // pred_check
      _
    $region46: #{down_forward.1} parent=5 // pred_check_branch
      %241 = sbr.rel (%p238) target = $region48
    $region47: #{down_forward.1} parent=5 // pred_region
      %s242 = ssub.s32 %s13, 1
      %p243 = scmp.lt.s32.totalorder %s18, 1
      %s244 = scalar_select %p243, %s18, 1
      %s245 = smul.addr %s244, 256
      %s246 = smul.addr %s245, 8
      %s247 = scalar_lea.vmem %s0, %s246
      %p248 = pneg %p39
      %p249 = pneg %p36
      %p250 = pneg %p60
      %p251 = pneg %p57
      %p252 = pneg %p81
      %p253 = pneg %p78
      %p254 = pneg %p102
      %p255 = pneg %p99
      %p256 = pneg %p123
      %p257 = pneg %p120
      %p258 = pneg %p144
      %p259 = pneg %p141
      %p260 = pneg %p165
      %p261 = pneg %p162
      %p262 = pneg %p191
      %p263 = pneg %p188
      %p264 = scmp.lt.s32.totalorder %s18, 1
      %s265 = scalar_select %p264, %s18, 1
      %s266 = smul.addr %s265, 64
      %s267 = smul.addr %s266, 8
      %s268 = scalar_lea.vmem %s7, %s267
      %p269 = scmp.lt.s32.totalorder %s18, 1
      %s270 = scalar_select %p269, %s18, 1
      %s271 = smul.addr %s270, 256
      %s272 = smul.addr %s271, 8
      %s273 = scalar_lea.vmem %s0, %s272
      %p274 = scmp.lt.s32.totalorder %s18, 1
      %s275 = scalar_select %p274, %s18, 1
      %s276 = smul.addr %s275, 64
      %s277 = smul.addr %s276, 8
      %s278 = scalar_lea.vmem %s7, %s277
      %v279 = vld [vmem:[%s273] sm:$0xff]
      %v280 = vld [vmem:[%s273 + $0x8] sm:$0xff]
      %v281 = vld [vmem:[%s273 + $0x10] sm:$0xff]
      %v282 = vld [vmem:[%s273 + $0x18] sm:$0xff]
      %v283 = vld [vmem:[%s273 + $0x20] sm:$0xff]
      %v284 = vld [vmem:[%s273 + $0x28] sm:$0xff]
      %v285 = vld [vmem:[%s273 + $0x30] sm:$0xff]
      %v286 = vld [vmem:[%s273 + $0x38] sm:$0xff]
      %v287 = vld [vmem:[%s273 + $0x40] sm:$0xff]
      %v288 = vld [vmem:[%s273 + $0x48] sm:$0xff]
      %v289 = vld [vmem:[%s273 + $0x50] sm:$0xff]
      %v290 = vld [vmem:[%s273 + $0x58] sm:$0xff]
      %v291 = vld [vmem:[%s273 + $0x60] sm:$0xff]
      %v292 = vld [vmem:[%s273 + $0x68] sm:$0xff]
      %v293 = vld [vmem:[%s273 + $0x70] sm:$0xff]
      %v294 = vld [vmem:[%s273 + $0x78] sm:$0xff]
      %v295 = vld [vmem:[%s273 + $0x80] sm:$0xff]
      %v296 = vld [vmem:[%s273 + $0x88] sm:$0xff]
      %v297 = vld [vmem:[%s273 + $0x90] sm:$0xff]
      %v298 = vld [vmem:[%s273 + $0x98] sm:$0xff]
      %v299 = vld [vmem:[%s273 + $0xa0] sm:$0xff]
      %v300 = vld [vmem:[%s273 + $0xa8] sm:$0xff]
      %v301 = vld [vmem:[%s273 + $0xb0] sm:$0xff]
      %v302 = vld [vmem:[%s273 + $0xb8] sm:$0xff]
      %v303 = vld [vmem:[%s273 + $0xc0] sm:$0xff]
      %v304 = vld [vmem:[%s273 + $0xc8] sm:$0xff]
      %v305 = vld [vmem:[%s273 + $0xd0] sm:$0xff]
      %v306 = vld [vmem:[%s273 + $0xd8] sm:$0xff]
      %v307 = vld [vmem:[%s273 + $0xe0] sm:$0xff]
      %v308 = vld [vmem:[%s273 + $0xe8] sm:$0xff]
      %v309 = vld [vmem:[%s273 + $0xf0] sm:$0xff]
      %v310 = vld [vmem:[%s273 + $0xf8] sm:$0xff]
      %v311 = vld [vmem:[%s273 + $0x100] sm:$0xff]
      %v312 = vld [vmem:[%s273 + $0x108] sm:$0xff]
      %v313 = vld [vmem:[%s273 + $0x110] sm:$0xff]
      %v314 = vld [vmem:[%s273 + $0x118] sm:$0xff]
      %v315 = vld [vmem:[%s273 + $0x120] sm:$0xff]
      %v316 = vld [vmem:[%s273 + $0x128] sm:$0xff]
      %v317 = vld [vmem:[%s273 + $0x130] sm:$0xff]
      %v318 = vld [vmem:[%s273 + $0x138] sm:$0xff]
      %v319 = vld [vmem:[%s273 + $0x140] sm:$0xff]
      %v320 = vld [vmem:[%s273 + $0x148] sm:$0xff]
      %v321 = vld [vmem:[%s273 + $0x150] sm:$0xff]
      %v322 = vld [vmem:[%s273 + $0x158] sm:$0xff]
      %v323 = vld [vmem:[%s273 + $0x160] sm:$0xff]
      %v324 = vld [vmem:[%s273 + $0x168] sm:$0xff]
      %v325 = vld [vmem:[%s273 + $0x170] sm:$0xff]
      %v326 = vld [vmem:[%s273 + $0x178] sm:$0xff]
      %v327 = vld [vmem:[%s273 + $0x180] sm:$0xff]
      %v328 = vld [vmem:[%s273 + $0x188] sm:$0xff]
      %v329 = vld [vmem:[%s273 + $0x190] sm:$0xff]
      %v330 = vld [vmem:[%s273 + $0x198] sm:$0xff]
      %v331 = vld [vmem:[%s273 + $0x1a0] sm:$0xff]
      %v332 = vld [vmem:[%s273 + $0x1a8] sm:$0xff]
      %v333 = vld [vmem:[%s273 + $0x1b0] sm:$0xff]
      %v334 = vld [vmem:[%s273 + $0x1b8] sm:$0xff]
      %v335 = vld [vmem:[%s273 + $0x1c0] sm:$0xff]
      %v336 = vld [vmem:[%s273 + $0x1c8] sm:$0xff]
      %v337 = vld [vmem:[%s273 + $0x1d0] sm:$0xff]
      %v338 = vld [vmem:[%s273 + $0x1d8] sm:$0xff]
      %v339 = vld [vmem:[%s273 + $0x1e0] sm:$0xff]
      %v340 = vld [vmem:[%s273 + $0x1e8] sm:$0xff]
      %v341 = vld [vmem:[%s273 + $0x1f0] sm:$0xff]
      %v342 = vld [vmem:[%s273 + $0x1f8] sm:$0xff]
      %v343 = vld [vmem:[%s273 + $0x200] sm:$0xff]
      %v344 = vld [vmem:[%s273 + $0x208] sm:$0xff]
      %v345 = vld [vmem:[%s273 + $0x210] sm:$0xff]
      %v346 = vld [vmem:[%s273 + $0x218] sm:$0xff]
      %v347 = vld [vmem:[%s273 + $0x220] sm:$0xff]
      %v348 = vld [vmem:[%s273 + $0x228] sm:$0xff]
      %v349 = vld [vmem:[%s273 + $0x230] sm:$0xff]
      %v350 = vld [vmem:[%s273 + $0x238] sm:$0xff]
      %v351 = vld [vmem:[%s273 + $0x240] sm:$0xff]
      %v352 = vld [vmem:[%s273 + $0x248] sm:$0xff]
      %v353 = vld [vmem:[%s273 + $0x250] sm:$0xff]
      %v354 = vld [vmem:[%s273 + $0x258] sm:$0xff]
      %v355 = vld [vmem:[%s273 + $0x260] sm:$0xff]
      %v356 = vld [vmem:[%s273 + $0x268] sm:$0xff]
      %v357 = vld [vmem:[%s273 + $0x270] sm:$0xff]
      %v358 = vld [vmem:[%s273 + $0x278] sm:$0xff]
      %v359 = vld [vmem:[%s273 + $0x280] sm:$0xff]
      %v360 = vld [vmem:[%s273 + $0x288] sm:$0xff]
      %v361 = vld [vmem:[%s273 + $0x290] sm:$0xff]
      %v362 = vld [vmem:[%s273 + $0x298] sm:$0xff]
      %v363 = vld [vmem:[%s273 + $0x2a0] sm:$0xff]
      %v364 = vld [vmem:[%s273 + $0x2a8] sm:$0xff]
      %v365 = vld [vmem:[%s273 + $0x2b0] sm:$0xff]
      %v366 = vld [vmem:[%s273 + $0x2b8] sm:$0xff]
      %v367 = vld [vmem:[%s273 + $0x2c0] sm:$0xff]
      %v368 = vld [vmem:[%s273 + $0x2c8] sm:$0xff]
      %v369 = vld [vmem:[%s273 + $0x2d0] sm:$0xff]
      %v370 = vld [vmem:[%s273 + $0x2d8] sm:$0xff]
      %v371 = vld [vmem:[%s273 + $0x2e0] sm:$0xff]
      %v372 = vld [vmem:[%s273 + $0x2e8] sm:$0xff]
      %v373 = vld [vmem:[%s273 + $0x2f0] sm:$0xff]
      %v374 = vld [vmem:[%s273 + $0x2f8] sm:$0xff]
      %v375 = vld [vmem:[%s273 + $0x300] sm:$0xff]
      %v376 = vld [vmem:[%s273 + $0x308] sm:$0xff]
      %v377 = vld [vmem:[%s273 + $0x310] sm:$0xff]
      %v378 = vld [vmem:[%s273 + $0x318] sm:$0xff]
      %v379 = vld [vmem:[%s273 + $0x320] sm:$0xff]
      %v380 = vld [vmem:[%s273 + $0x328] sm:$0xff]
      %v381 = vld [vmem:[%s273 + $0x330] sm:$0xff]
      %v382 = vld [vmem:[%s273 + $0x338] sm:$0xff]
      %v383 = vld [vmem:[%s273 + $0x340] sm:$0xff]
      %v384 = vld [vmem:[%s273 + $0x348] sm:$0xff]
      %v385 = vld [vmem:[%s273 + $0x350] sm:$0xff]
      %v386 = vld [vmem:[%s273 + $0x358] sm:$0xff]
      %v387 = vld [vmem:[%s273 + $0x360] sm:$0xff]
      %v388 = vld [vmem:[%s273 + $0x368] sm:$0xff]
      %v389 = vld [vmem:[%s273 + $0x370] sm:$0xff]
      %v390 = vld [vmem:[%s273 + $0x378] sm:$0xff]
      %v391 = vld [vmem:[%s273 + $0x380] sm:$0xff]
      %v392 = vld [vmem:[%s273 + $0x388] sm:$0xff]
      %v393 = vld [vmem:[%s273 + $0x390] sm:$0xff]
      %v394 = vld [vmem:[%s273 + $0x398] sm:$0xff]
      %v395 = vld [vmem:[%s273 + $0x3a0] sm:$0xff]
      %v396 = vld [vmem:[%s273 + $0x3a8] sm:$0xff]
      %v397 = vld [vmem:[%s273 + $0x3b0] sm:$0xff]
      %v398 = vld [vmem:[%s273 + $0x3b8] sm:$0xff]
      %v399 = vld [vmem:[%s273 + $0x3c0] sm:$0xff]
      %v400 = vld [vmem:[%s273 + $0x3c8] sm:$0xff]
      %v401 = vld [vmem:[%s273 + $0x3d0] sm:$0xff]
      %v402 = vld [vmem:[%s273 + $0x3d8] sm:$0xff]
      %v403 = vld [vmem:[%s273 + $0x3e0] sm:$0xff]
      %v404 = vld [vmem:[%s273 + $0x3e8] sm:$0xff]
      %v405 = vld [vmem:[%s273 + $0x3f0] sm:$0xff]
      %v406 = vld [vmem:[%s273 + $0x3f8] sm:$0xff]
      %v407 = vld [vmem:[%s273 + $0x400] sm:$0xff]
      %v408 = vld [vmem:[%s273 + $0x408] sm:$0xff]
      %v409 = vld [vmem:[%s273 + $0x410] sm:$0xff]
      %v410 = vld [vmem:[%s273 + $0x418] sm:$0xff]
      %v411 = vld [vmem:[%s273 + $0x420] sm:$0xff]
      %v412 = vld [vmem:[%s273 + $0x428] sm:$0xff]
      %v413 = vld [vmem:[%s273 + $0x430] sm:$0xff]
      %v414 = vld [vmem:[%s273 + $0x438] sm:$0xff]
      %v415 = vld [vmem:[%s273 + $0x440] sm:$0xff]
      %v416 = vld [vmem:[%s273 + $0x448] sm:$0xff]
      %v417 = vld [vmem:[%s273 + $0x450] sm:$0xff]
      %v418 = vld [vmem:[%s273 + $0x458] sm:$0xff]
      %v419 = vld [vmem:[%s273 + $0x460] sm:$0xff]
      %v420 = vld [vmem:[%s273 + $0x468] sm:$0xff]
      %v421 = vld [vmem:[%s273 + $0x470] sm:$0xff]
      %v422 = vld [vmem:[%s273 + $0x478] sm:$0xff]
      %v423 = vld [vmem:[%s273 + $0x480] sm:$0xff]
      %v424 = vld [vmem:[%s273 + $0x488] sm:$0xff]
      %v425 = vld [vmem:[%s273 + $0x490] sm:$0xff]
      %v426 = vld [vmem:[%s273 + $0x498] sm:$0xff]
      %v427 = vld [vmem:[%s273 + $0x4a0] sm:$0xff]
      %v428 = vld [vmem:[%s273 + $0x4a8] sm:$0xff]
      %v429 = vld [vmem:[%s273 + $0x4b0] sm:$0xff]
      %v430 = vld [vmem:[%s273 + $0x4b8] sm:$0xff]
      %v431 = vld [vmem:[%s273 + $0x4c0] sm:$0xff]
      %v432 = vld [vmem:[%s273 + $0x4c8] sm:$0xff]
      %v433 = vld [vmem:[%s273 + $0x4d0] sm:$0xff]
      %v434 = vld [vmem:[%s273 + $0x4d8] sm:$0xff]
      %v435 = vld [vmem:[%s273 + $0x4e0] sm:$0xff]
      %v436 = vld [vmem:[%s273 + $0x4e8] sm:$0xff]
      %v437 = vld [vmem:[%s273 + $0x4f0] sm:$0xff]
      %v438 = vld [vmem:[%s273 + $0x4f8] sm:$0xff]
      %v439 = vld [vmem:[%s273 + $0x500] sm:$0xff]
      %v440 = vld [vmem:[%s273 + $0x508] sm:$0xff]
      %v441 = vld [vmem:[%s273 + $0x510] sm:$0xff]
      %v442 = vld [vmem:[%s273 + $0x518] sm:$0xff]
      %v443 = vld [vmem:[%s273 + $0x520] sm:$0xff]
      %v444 = vld [vmem:[%s273 + $0x528] sm:$0xff]
      %v445 = vld [vmem:[%s273 + $0x530] sm:$0xff]
      %v446 = vld [vmem:[%s273 + $0x538] sm:$0xff]
      %v447 = vld [vmem:[%s273 + $0x540] sm:$0xff]
      %v448 = vld [vmem:[%s273 + $0x548] sm:$0xff]
      %v449 = vld [vmem:[%s273 + $0x550] sm:$0xff]
      %v450 = vld [vmem:[%s273 + $0x558] sm:$0xff]
      %v451 = vld [vmem:[%s273 + $0x560] sm:$0xff]
      %v452 = vld [vmem:[%s273 + $0x568] sm:$0xff]
      %v453 = vld [vmem:[%s273 + $0x570] sm:$0xff]
      %v454 = vld [vmem:[%s273 + $0x578] sm:$0xff]
      %v455 = vld [vmem:[%s273 + $0x580] sm:$0xff]
      %v456 = vld [vmem:[%s273 + $0x588] sm:$0xff]
      %v457 = vld [vmem:[%s273 + $0x590] sm:$0xff]
      %v458 = vld [vmem:[%s273 + $0x598] sm:$0xff]
      %v459 = vld [vmem:[%s273 + $0x5a0] sm:$0xff]
      %v460 = vld [vmem:[%s273 + $0x5a8] sm:$0xff]
      %v461 = vld [vmem:[%s273 + $0x5b0] sm:$0xff]
      %v462 = vld [vmem:[%s273 + $0x5b8] sm:$0xff]
      %v463 = vld [vmem:[%s273 + $0x5c0] sm:$0xff]
      %v464 = vld [vmem:[%s273 + $0x5c8] sm:$0xff]
      %v465 = vld [vmem:[%s273 + $0x5d0] sm:$0xff]
      %v466 = vld [vmem:[%s273 + $0x5d8] sm:$0xff]
      %v467 = vld [vmem:[%s273 + $0x5e0] sm:$0xff]
      %v468 = vld [vmem:[%s273 + $0x5e8] sm:$0xff]
      %v469 = vld [vmem:[%s273 + $0x5f0] sm:$0xff]
      %v470 = vld [vmem:[%s273 + $0x5f8] sm:$0xff]
      %v471 = vld [vmem:[%s273 + $0x600] sm:$0xff]
      %v472 = vld [vmem:[%s273 + $0x608] sm:$0xff]
      %v473 = vld [vmem:[%s273 + $0x610] sm:$0xff]
      %v474 = vld [vmem:[%s273 + $0x618] sm:$0xff]
      %v475 = vld [vmem:[%s273 + $0x620] sm:$0xff]
      %v476 = vld [vmem:[%s273 + $0x628] sm:$0xff]
      %v477 = vld [vmem:[%s273 + $0x630] sm:$0xff]
      %v478 = vld [vmem:[%s273 + $0x638] sm:$0xff]
      %v479 = vld [vmem:[%s273 + $0x640] sm:$0xff]
      %v480 = vld [vmem:[%s273 + $0x648] sm:$0xff]
      %v481 = vld [vmem:[%s273 + $0x650] sm:$0xff]
      %v482 = vld [vmem:[%s273 + $0x658] sm:$0xff]
      %v483 = vld [vmem:[%s273 + $0x660] sm:$0xff]
      %v484 = vld [vmem:[%s273 + $0x668] sm:$0xff]
      %v485 = vld [vmem:[%s273 + $0x670] sm:$0xff]
      %v486 = vld [vmem:[%s273 + $0x678] sm:$0xff]
      %v487 = vld [vmem:[%s273 + $0x680] sm:$0xff]
      %v488 = vld [vmem:[%s273 + $0x688] sm:$0xff]
      %v489 = vld [vmem:[%s273 + $0x690] sm:$0xff]
      %v490 = vld [vmem:[%s273 + $0x698] sm:$0xff]
      %v491 = vld [vmem:[%s273 + $0x6a0] sm:$0xff]
      %v492 = vld [vmem:[%s273 + $0x6a8] sm:$0xff]
      %v493 = vld [vmem:[%s273 + $0x6b0] sm:$0xff]
      %v494 = vld [vmem:[%s273 + $0x6b8] sm:$0xff]
      %v495 = vld [vmem:[%s273 + $0x6c0] sm:$0xff]
      %v496 = vld [vmem:[%s273 + $0x6c8] sm:$0xff]
      %v497 = vld [vmem:[%s273 + $0x6d0] sm:$0xff]
      %v498 = vld [vmem:[%s273 + $0x6d8] sm:$0xff]
      %v499 = vld [vmem:[%s273 + $0x6e0] sm:$0xff]
      %v500 = vld [vmem:[%s273 + $0x6e8] sm:$0xff]
      %v501 = vld [vmem:[%s273 + $0x6f0] sm:$0xff]
      %v502 = vld [vmem:[%s273 + $0x6f8] sm:$0xff]
      %v503 = vld [vmem:[%s273 + $0x700] sm:$0xff]
      %v504 = vld [vmem:[%s273 + $0x708] sm:$0xff]
      %v505 = vld [vmem:[%s273 + $0x710] sm:$0xff]
      %v506 = vld [vmem:[%s273 + $0x718] sm:$0xff]
      %v507 = vld [vmem:[%s273 + $0x720] sm:$0xff]
      %v508 = vld [vmem:[%s273 + $0x728] sm:$0xff]
      %v509 = vld [vmem:[%s273 + $0x730] sm:$0xff]
      %v510 = vld [vmem:[%s273 + $0x738] sm:$0xff]
      %v511 = vld [vmem:[%s273 + $0x740] sm:$0xff]
      %v512 = vld [vmem:[%s273 + $0x748] sm:$0xff]
      %v513 = vld [vmem:[%s273 + $0x750] sm:$0xff]
      %v514 = vld [vmem:[%s273 + $0x758] sm:$0xff]
      %v515 = vld [vmem:[%s273 + $0x760] sm:$0xff]
      %v516 = vld [vmem:[%s273 + $0x768] sm:$0xff]
      %v517 = vld [vmem:[%s273 + $0x770] sm:$0xff]
      %v518 = vld [vmem:[%s273 + $0x778] sm:$0xff]
      %v519 = vld [vmem:[%s273 + $0x780] sm:$0xff]
      %v520 = vld [vmem:[%s273 + $0x788] sm:$0xff]
      %v521 = vld [vmem:[%s273 + $0x790] sm:$0xff]
      %v522 = vld [vmem:[%s273 + $0x798] sm:$0xff]
      %v523 = vld [vmem:[%s273 + $0x7a0] sm:$0xff]
      %v524 = vld [vmem:[%s273 + $0x7a8] sm:$0xff]
      %v525 = vld [vmem:[%s273 + $0x7b0] sm:$0xff]
      %v526 = vld [vmem:[%s273 + $0x7b8] sm:$0xff]
      %v527 = vld [vmem:[%s273 + $0x7c0] sm:$0xff]
      %v528 = vld [vmem:[%s273 + $0x7c8] sm:$0xff]
      %v529 = vld [vmem:[%s273 + $0x7d0] sm:$0xff]
      %v530 = vld [vmem:[%s273 + $0x7d8] sm:$0xff]
      %v531 = vld [vmem:[%s273 + $0x7e0] sm:$0xff]
      %v532 = vld [vmem:[%s273 + $0x7e8] sm:$0xff]
      %v533 = vld [vmem:[%s273 + $0x7f0] sm:$0xff]
      %v534 = vld [vmem:[%s273 + $0x7f8] sm:$0xff]
      %vm535 = vcmask 31744
      %v536 = vsel %vm535, %v279, -inf
      %v537 = vsel %vm535, %v295, -inf
      %v538 = vmax.f32 %v536, %v537
      %v539 = vsel %vm535, %v280, -inf
      %v540 = vsel %vm535, %v296, -inf
      %v541 = vmax.f32 %v539, %v540
      %v542 = vsel %vm535, %v281, -inf
      %v543 = vsel %vm535, %v297, -inf
      %v544 = vmax.f32 %v542, %v543
      %v545 = vsel %vm535, %v282, -inf
      %v546 = vsel %vm535, %v298, -inf
      %v547 = vmax.f32 %v545, %v546
      %v548 = vsel %vm535, %v283, -inf
      %v549 = vsel %vm535, %v299, -inf
      %v550 = vmax.f32 %v548, %v549
      %v551 = vsel %vm535, %v284, -inf
      %v552 = vsel %vm535, %v300, -inf
      %v553 = vmax.f32 %v551, %v552
      %v554 = vsel %vm535, %v285, -inf
      %v555 = vsel %vm535, %v301, -inf
      %v556 = vmax.f32 %v554, %v555
      %v557 = vsel %vm535, %v286, -inf
      %v558 = vsel %vm535, %v302, -inf
      %v559 = vmax.f32 %v557, %v558
      %v560 = vsel %vm535, %v287, -inf
      %v561 = vsel %vm535, %v303, -inf
      %v562 = vmax.f32 %v560, %v561
      %v563 = vsel %vm535, %v288, -inf
      %v564 = vsel %vm535, %v304, -inf
      %v565 = vmax.f32 %v563, %v564
      %v566 = vsel %vm535, %v289, -inf
      %v567 = vsel %vm535, %v305, -inf
      %v568 = vmax.f32 %v566, %v567
      %v569 = vsel %vm535, %v290, -inf
      %v570 = vsel %vm535, %v306, -inf
      %v571 = vmax.f32 %v569, %v570
      %v572 = vsel %vm535, %v291, -inf
      %v573 = vsel %vm535, %v307, -inf
      %v574 = vmax.f32 %v572, %v573
      %v575 = vsel %vm535, %v292, -inf
      %v576 = vsel %vm535, %v308, -inf
      %v577 = vmax.f32 %v575, %v576
      %v578 = vsel %vm535, %v293, -inf
      %v579 = vsel %vm535, %v309, -inf
      %v580 = vmax.f32 %v578, %v579
      %v581 = vsel %vm535, %v294, -inf
      %v582 = vsel %vm535, %v310, -inf
      %v583 = vmax.f32 %v581, %v582
      %v584 = vsel %vm535, %v311, -inf
      %v585 = vsel %vm535, %v327, -inf
      %v586 = vmax.f32 %v584, %v585
      %v587 = vsel %vm535, %v312, -inf
      %v588 = vsel %vm535, %v328, -inf
      %v589 = vmax.f32 %v587, %v588
      %v590 = vsel %vm535, %v313, -inf
      %v591 = vsel %vm535, %v329, -inf
      %v592 = vmax.f32 %v590, %v591
      %v593 = vsel %vm535, %v314, -inf
      %v594 = vsel %vm535, %v330, -inf
      %v595 = vmax.f32 %v593, %v594
      %v596 = vsel %vm535, %v315, -inf
      %v597 = vsel %vm535, %v331, -inf
      %v598 = vmax.f32 %v596, %v597
      %v599 = vsel %vm535, %v316, -inf
      %v600 = vsel %vm535, %v332, -inf
      %v601 = vmax.f32 %v599, %v600
      %v602 = vsel %vm535, %v317, -inf
      %v603 = vsel %vm535, %v333, -inf
      %v604 = vmax.f32 %v602, %v603
      %v605 = vsel %vm535, %v318, -inf
      %v606 = vsel %vm535, %v334, -inf
      %v607 = vmax.f32 %v605, %v606
      %v608 = vsel %vm535, %v319, -inf
      %v609 = vsel %vm535, %v335, -inf
      %v610 = vmax.f32 %v608, %v609
      %v611 = vsel %vm535, %v320, -inf
      %v612 = vsel %vm535, %v336, -inf
      %v613 = vmax.f32 %v611, %v612
      %v614 = vsel %vm535, %v321, -inf
      %v615 = vsel %vm535, %v337, -inf
      %v616 = vmax.f32 %v614, %v615
      %v617 = vsel %vm535, %v322, -inf
      %v618 = vsel %vm535, %v338, -inf
      %v619 = vmax.f32 %v617, %v618
      %v620 = vsel %vm535, %v323, -inf
      %v621 = vsel %vm535, %v339, -inf
      %v622 = vmax.f32 %v620, %v621
      %v623 = vsel %vm535, %v324, -inf
      %v624 = vsel %vm535, %v340, -inf
      %v625 = vmax.f32 %v623, %v624
      %v626 = vsel %vm535, %v325, -inf
      %v627 = vsel %vm535, %v341, -inf
      %v628 = vmax.f32 %v626, %v627
      %v629 = vsel %vm535, %v326, -inf
      %v630 = vsel %vm535, %v342, -inf
      %v631 = vmax.f32 %v629, %v630
      %v632 = vsel %vm535, %v343, -inf
      %v633 = vsel %vm535, %v359, -inf
      %v634 = vmax.f32 %v632, %v633
      %v635 = vsel %vm535, %v344, -inf
      %v636 = vsel %vm535, %v360, -inf
      %v637 = vmax.f32 %v635, %v636
      %v638 = vsel %vm535, %v345, -inf
      %v639 = vsel %vm535, %v361, -inf
      %v640 = vmax.f32 %v638, %v639
      %v641 = vsel %vm535, %v346, -inf
      %v642 = vsel %vm535, %v362, -inf
      %v643 = vmax.f32 %v641, %v642
      %v644 = vsel %vm535, %v347, -inf
      %v645 = vsel %vm535, %v363, -inf
      %v646 = vmax.f32 %v644, %v645
      %v647 = vsel %vm535, %v348, -inf
      %v648 = vsel %vm535, %v364, -inf
      %v649 = vmax.f32 %v647, %v648
      %v650 = vsel %vm535, %v349, -inf
      %v651 = vsel %vm535, %v365, -inf
      %v652 = vmax.f32 %v650, %v651
      %v653 = vsel %vm535, %v350, -inf
      %v654 = vsel %vm535, %v366, -inf
      %v655 = vmax.f32 %v653, %v654
      %v656 = vsel %vm535, %v351, -inf
      %v657 = vsel %vm535, %v367, -inf
      %v658 = vmax.f32 %v656, %v657
      %v659 = vsel %vm535, %v352, -inf
      %v660 = vsel %vm535, %v368, -inf
      %v661 = vmax.f32 %v659, %v660
      %v662 = vsel %vm535, %v353, -inf
      %v663 = vsel %vm535, %v369, -inf
      %v664 = vmax.f32 %v662, %v663
      %v665 = vsel %vm535, %v354, -inf
      %v666 = vsel %vm535, %v370, -inf
      %v667 = vmax.f32 %v665, %v666
      %v668 = vsel %vm535, %v355, -inf
      %v669 = vsel %vm535, %v371, -inf
      %v670 = vmax.f32 %v668, %v669
      %v671 = vsel %vm535, %v356, -inf
      %v672 = vsel %vm535, %v372, -inf
      %v673 = vmax.f32 %v671, %v672
      %v674 = vsel %vm535, %v357, -inf
      %v675 = vsel %vm535, %v373, -inf
      %v676 = vmax.f32 %v674, %v675
      %v677 = vsel %vm535, %v358, -inf
      %v678 = vsel %vm535, %v374, -inf
      %v679 = vmax.f32 %v677, %v678
      %v680 = vsel %vm535, %v375, -inf
      %v681 = vsel %vm535, %v391, -inf
      %v682 = vmax.f32 %v680, %v681
      %v683 = vsel %vm535, %v376, -inf
      %v684 = vsel %vm535, %v392, -inf
      %v685 = vmax.f32 %v683, %v684
      %v686 = vsel %vm535, %v377, -inf
      %v687 = vsel %vm535, %v393, -inf
      %v688 = vmax.f32 %v686, %v687
      %v689 = vsel %vm535, %v378, -inf
      %v690 = vsel %vm535, %v394, -inf
      %v691 = vmax.f32 %v689, %v690
      %v692 = vsel %vm535, %v379, -inf
      %v693 = vsel %vm535, %v395, -inf
      %v694 = vmax.f32 %v692, %v693
      %v695 = vsel %vm535, %v380, -inf
      %v696 = vsel %vm535, %v396, -inf
      %v697 = vmax.f32 %v695, %v696
      %v698 = vsel %vm535, %v381, -inf
      %v699 = vsel %vm535, %v397, -inf
      %v700 = vmax.f32 %v698, %v699
      %v701 = vsel %vm535, %v382, -inf
      %v702 = vsel %vm535, %v398, -inf
      %v703 = vmax.f32 %v701, %v702
      %v704 = vsel %vm535, %v383, -inf
      %v705 = vsel %vm535, %v399, -inf
      %v706 = vmax.f32 %v704, %v705
      %v707 = vsel %vm535, %v384, -inf
      %v708 = vsel %vm535, %v400, -inf
      %v709 = vmax.f32 %v707, %v708
      %v710 = vsel %vm535, %v385, -inf
      %v711 = vsel %vm535, %v401, -inf
      %v712 = vmax.f32 %v710, %v711
      %v713 = vsel %vm535, %v386, -inf
      %v714 = vsel %vm535, %v402, -inf
      %v715 = vmax.f32 %v713, %v714
      %v716 = vsel %vm535, %v387, -inf
      %v717 = vsel %vm535, %v403, -inf
      %v718 = vmax.f32 %v716, %v717
      %v719 = vsel %vm535, %v388, -inf
      %v720 = vsel %vm535, %v404, -inf
      %v721 = vmax.f32 %v719, %v720
      %v722 = vsel %vm535, %v389, -inf
      %v723 = vsel %vm535, %v405, -inf
      %v724 = vmax.f32 %v722, %v723
      %v725 = vsel %vm535, %v390, -inf
      %v726 = vsel %vm535, %v406, -inf
      %v727 = vmax.f32 %v725, %v726
      %v728 = vsel %vm535, %v407, -inf
      %v729 = vsel %vm535, %v423, -inf
      %v730 = vmax.f32 %v728, %v729
      %v731 = vsel %vm535, %v408, -inf
      %v732 = vsel %vm535, %v424, -inf
      %v733 = vmax.f32 %v731, %v732
      %v734 = vsel %vm535, %v409, -inf
      %v735 = vsel %vm535, %v425, -inf
      %v736 = vmax.f32 %v734, %v735
      %v737 = vsel %vm535, %v410, -inf
      %v738 = vsel %vm535, %v426, -inf
      %v739 = vmax.f32 %v737, %v738
      %v740 = vsel %vm535, %v411, -inf
      %v741 = vsel %vm535, %v427, -inf
      %v742 = vmax.f32 %v740, %v741
      %v743 = vsel %vm535, %v412, -inf
      %v744 = vsel %vm535, %v428, -inf
      %v745 = vmax.f32 %v743, %v744
      %v746 = vsel %vm535, %v413, -inf
      %v747 = vsel %vm535, %v429, -inf
      %v748 = vmax.f32 %v746, %v747
      %v749 = vsel %vm535, %v414, -inf
      %v750 = vsel %vm535, %v430, -inf
      %v751 = vmax.f32 %v749, %v750
      %v752 = vsel %vm535, %v415, -inf
      %v753 = vsel %vm535, %v431, -inf
      %v754 = vmax.f32 %v752, %v753
      %v755 = vsel %vm535, %v416, -inf
      %v756 = vsel %vm535, %v432, -inf
      %v757 = vmax.f32 %v755, %v756
      %v758 = vsel %vm535, %v417, -inf
      %v759 = vsel %vm535, %v433, -inf
      %v760 = vmax.f32 %v758, %v759
      %v761 = vsel %vm535, %v418, -inf
      %v762 = vsel %vm535, %v434, -inf
      %v763 = vmax.f32 %v761, %v762
      %v764 = vsel %vm535, %v419, -inf
      %v765 = vsel %vm535, %v435, -inf
      %v766 = vmax.f32 %v764, %v765
      %v767 = vsel %vm535, %v420, -inf
      %v768 = vsel %vm535, %v436, -inf
      %v769 = vmax.f32 %v767, %v768
      %v770 = vsel %vm535, %v421, -inf
      %v771 = vsel %vm535, %v437, -inf
      %v772 = vmax.f32 %v770, %v771
      %v773 = vsel %vm535, %v422, -inf
      %v774 = vsel %vm535, %v438, -inf
      %v775 = vmax.f32 %v773, %v774
      %v776 = vsel %vm535, %v439, -inf
      %v777 = vsel %vm535, %v455, -inf
      %v778 = vmax.f32 %v776, %v777
      %v779 = vsel %vm535, %v440, -inf
      %v780 = vsel %vm535, %v456, -inf
      %v781 = vmax.f32 %v779, %v780
      %v782 = vsel %vm535, %v441, -inf
      %v783 = vsel %vm535, %v457, -inf
      %v784 = vmax.f32 %v782, %v783
      %v785 = vsel %vm535, %v442, -inf
      %v786 = vsel %vm535, %v458, -inf
      %v787 = vmax.f32 %v785, %v786
      %v788 = vsel %vm535, %v443, -inf
      %v789 = vsel %vm535, %v459, -inf
      %v790 = vmax.f32 %v788, %v789
      %v791 = vsel %vm535, %v444, -inf
      %v792 = vsel %vm535, %v460, -inf
      %v793 = vmax.f32 %v791, %v792
      %v794 = vsel %vm535, %v445, -inf
      %v795 = vsel %vm535, %v461, -inf
      %v796 = vmax.f32 %v794, %v795
      %v797 = vsel %vm535, %v446, -inf
      %v798 = vsel %vm535, %v462, -inf
      %v799 = vmax.f32 %v797, %v798
      %v800 = vsel %vm535, %v447, -inf
      %v801 = vsel %vm535, %v463, -inf
      %v802 = vmax.f32 %v800, %v801
      %v803 = vsel %vm535, %v448, -inf
      %v804 = vsel %vm535, %v464, -inf
      %v805 = vmax.f32 %v803, %v804
      %v806 = vsel %vm535, %v449, -inf
      %v807 = vsel %vm535, %v465, -inf
      %v808 = vmax.f32 %v806, %v807
      %v809 = vsel %vm535, %v450, -inf
      %v810 = vsel %vm535, %v466, -inf
      %v811 = vmax.f32 %v809, %v810
      %v812 = vsel %vm535, %v451, -inf
      %v813 = vsel %vm535, %v467, -inf
      %v814 = vmax.f32 %v812, %v813
      %v815 = vsel %vm535, %v452, -inf
      %v816 = vsel %vm535, %v468, -inf
      %v817 = vmax.f32 %v815, %v816
      %v818 = vsel %vm535, %v453, -inf
      %v819 = vsel %vm535, %v469, -inf
      %v820 = vmax.f32 %v818, %v819
      %v821 = vsel %vm535, %v454, -inf
      %v822 = vsel %vm535, %v470, -inf
      %v823 = vmax.f32 %v821, %v822
      %v824 = vsel %vm535, %v471, -inf
      %v825 = vsel %vm535, %v487, -inf
      %v826 = vmax.f32 %v824, %v825
      %v827 = vsel %vm535, %v472, -inf
      %v828 = vsel %vm535, %v488, -inf
      %v829 = vmax.f32 %v827, %v828
      %v830 = vsel %vm535, %v473, -inf
      %v831 = vsel %vm535, %v489, -inf
      %v832 = vmax.f32 %v830, %v831
      %v833 = vsel %vm535, %v474, -inf
      %v834 = vsel %vm535, %v490, -inf
      %v835 = vmax.f32 %v833, %v834
      %v836 = vsel %vm535, %v475, -inf
      %v837 = vsel %vm535, %v491, -inf
      %v838 = vmax.f32 %v836, %v837
      %v839 = vsel %vm535, %v476, -inf
      %v840 = vsel %vm535, %v492, -inf
      %v841 = vmax.f32 %v839, %v840
      %v842 = vsel %vm535, %v477, -inf
      %v843 = vsel %vm535, %v493, -inf
      %v844 = vmax.f32 %v842, %v843
      %v845 = vsel %vm535, %v478, -inf
      %v846 = vsel %vm535, %v494, -inf
      %v847 = vmax.f32 %v845, %v846
      %v848 = vsel %vm535, %v479, -inf
      %v849 = vsel %vm535, %v495, -inf
      %v850 = vmax.f32 %v848, %v849
      %v851 = vsel %vm535, %v480, -inf
      %v852 = vsel %vm535, %v496, -inf
      %v853 = vmax.f32 %v851, %v852
      %v854 = vsel %vm535, %v481, -inf
      %v855 = vsel %vm535, %v497, -inf
      %v856 = vmax.f32 %v854, %v855
      %v857 = vsel %vm535, %v482, -inf
      %v858 = vsel %vm535, %v498, -inf
      %v859 = vmax.f32 %v857, %v858
      %v860 = vsel %vm535, %v483, -inf
      %v861 = vsel %vm535, %v499, -inf
      %v862 = vmax.f32 %v860, %v861
      %v863 = vsel %vm535, %v484, -inf
      %v864 = vsel %vm535, %v500, -inf
      %v865 = vmax.f32 %v863, %v864
      %v866 = vsel %vm535, %v485, -inf
      %v867 = vsel %vm535, %v501, -inf
      %v868 = vmax.f32 %v866, %v867
      %v869 = vsel %vm535, %v486, -inf
      %v870 = vsel %vm535, %v502, -inf
      %v871 = vmax.f32 %v869, %v870
      %v872 = vsel %vm535, %v503, -inf
      %v873 = vsel %vm535, %v519, -inf
      %v874 = vmax.f32 %v872, %v873
      %v875 = vsel %vm535, %v504, -inf
      %v876 = vsel %vm535, %v520, -inf
      %v877 = vmax.f32 %v875, %v876
      %v878 = vsel %vm535, %v505, -inf
      %v879 = vsel %vm535, %v521, -inf
      %v880 = vmax.f32 %v878, %v879
      %v881 = vsel %vm535, %v506, -inf
      %v882 = vsel %vm535, %v522, -inf
      %v883 = vmax.f32 %v881, %v882
      %v884 = vsel %vm535, %v507, -inf
      %v885 = vsel %vm535, %v523, -inf
      %v886 = vmax.f32 %v884, %v885
      %v887 = vsel %vm535, %v508, -inf
      %v888 = vsel %vm535, %v524, -inf
      %v889 = vmax.f32 %v887, %v888
      %v890 = vsel %vm535, %v509, -inf
      %v891 = vsel %vm535, %v525, -inf
      %v892 = vmax.f32 %v890, %v891
      %v893 = vsel %vm535, %v510, -inf
      %v894 = vsel %vm535, %v526, -inf
      %v895 = vmax.f32 %v893, %v894
      %v896 = vsel %vm535, %v511, -inf
      %v897 = vsel %vm535, %v527, -inf
      %v898 = vmax.f32 %v896, %v897
      %v899 = vsel %vm535, %v512, -inf
      %v900 = vsel %vm535, %v528, -inf
      %v901 = vmax.f32 %v899, %v900
      %v902 = vsel %vm535, %v513, -inf
      %v903 = vsel %vm535, %v529, -inf
      %v904 = vmax.f32 %v902, %v903
      %v905 = vsel %vm535, %v514, -inf
      %v906 = vsel %vm535, %v530, -inf
      %v907 = vmax.f32 %v905, %v906
      %v908 = vsel %vm535, %v515, -inf
      %v909 = vsel %vm535, %v531, -inf
      %v910 = vmax.f32 %v908, %v909
      %v911 = vsel %vm535, %v516, -inf
      %v912 = vsel %vm535, %v532, -inf
      %v913 = vmax.f32 %v911, %v912
      %v914 = vsel %vm535, %v517, -inf
      %v915 = vsel %vm535, %v533, -inf
      %v916 = vmax.f32 %v914, %v915
      %v917 = vsel %vm535, %v518, -inf
      %v918 = vsel %vm535, %v534, -inf
      %v919 = vmax.f32 %v917, %v918
      %v920 = vsel %vm535, %v538, -inf
      %v921 = vsel %vm535, %v541, -inf
      %v922 = vmax.f32 %v920, %v921
      %v923 = vsel %vm535, %v544, -inf
      %v924 = vsel %vm535, %v547, -inf
      %v925 = vmax.f32 %v923, %v924
      %v926 = vsel %vm535, %v550, -inf
      %v927 = vsel %vm535, %v553, -inf
      %v928 = vmax.f32 %v926, %v927
      %v929 = vsel %vm535, %v556, -inf
      %v930 = vsel %vm535, %v559, -inf
      %v931 = vmax.f32 %v929, %v930
      %v932 = vsel %vm535, %v562, -inf
      %v933 = vsel %vm535, %v565, -inf
      %v934 = vmax.f32 %v932, %v933
      %v935 = vsel %vm535, %v568, -inf
      %v936 = vsel %vm535, %v571, -inf
      %v937 = vmax.f32 %v935, %v936
      %v938 = vsel %vm535, %v574, -inf
      %v939 = vsel %vm535, %v577, -inf
      %v940 = vmax.f32 %v938, %v939
      %v941 = vsel %vm535, %v580, -inf
      %v942 = vsel %vm535, %v583, -inf
      %v943 = vmax.f32 %v941, %v942
      %v944 = vsel %vm535, %v586, -inf
      %v945 = vsel %vm535, %v589, -inf
      %v946 = vmax.f32 %v944, %v945
      %v947 = vsel %vm535, %v592, -inf
      %v948 = vsel %vm535, %v595, -inf
      %v949 = vmax.f32 %v947, %v948
      %v950 = vsel %vm535, %v598, -inf
      %v951 = vsel %vm535, %v601, -inf
      %v952 = vmax.f32 %v950, %v951
      %v953 = vsel %vm535, %v604, -inf
      %v954 = vsel %vm535, %v607, -inf
      %v955 = vmax.f32 %v953, %v954
      %v956 = vsel %vm535, %v610, -inf
      %v957 = vsel %vm535, %v613, -inf
      %v958 = vmax.f32 %v956, %v957
      %v959 = vsel %vm535, %v616, -inf
      %v960 = vsel %vm535, %v619, -inf
      %v961 = vmax.f32 %v959, %v960
      %v962 = vsel %vm535, %v622, -inf
      %v963 = vsel %vm535, %v625, -inf
      %v964 = vmax.f32 %v962, %v963
      %v965 = vsel %vm535, %v628, -inf
      %v966 = vsel %vm535, %v631, -inf
      %v967 = vmax.f32 %v965, %v966
      %v968 = vsel %vm535, %v634, -inf
      %v969 = vsel %vm535, %v637, -inf
      %v970 = vmax.f32 %v968, %v969
      %v971 = vsel %vm535, %v640, -inf
      %v972 = vsel %vm535, %v643, -inf
      %v973 = vmax.f32 %v971, %v972
      %v974 = vsel %vm535, %v646, -inf
      %v975 = vsel %vm535, %v649, -inf
      %v976 = vmax.f32 %v974, %v975
      %v977 = vsel %vm535, %v652, -inf
      %v978 = vsel %vm535, %v655, -inf
      %v979 = vmax.f32 %v977, %v978
      %v980 = vsel %vm535, %v658, -inf
      %v981 = vsel %vm535, %v661, -inf
      %v982 = vmax.f32 %v980, %v981
      %v983 = vsel %vm535, %v664, -inf
      %v984 = vsel %vm535, %v667, -inf
      %v985 = vmax.f32 %v983, %v984
      %v986 = vsel %vm535, %v670, -inf
      %v987 = vsel %vm535, %v673, -inf
      %v988 = vmax.f32 %v986, %v987
      %v989 = vsel %vm535, %v676, -inf
      %v990 = vsel %vm535, %v679, -inf
      %v991 = vmax.f32 %v989, %v990
      %v992 = vsel %vm535, %v682, -inf
      %v993 = vsel %vm535, %v685, -inf
      %v994 = vmax.f32 %v992, %v993
      %v995 = vsel %vm535, %v688, -inf
      %v996 = vsel %vm535, %v691, -inf
      %v997 = vmax.f32 %v995, %v996
      %v998 = vsel %vm535, %v694, -inf
      %v999 = vsel %vm535, %v697, -inf
      %v1000 = vmax.f32 %v998, %v999
      %v1001 = vsel %vm535, %v700, -inf
      %v1002 = vsel %vm535, %v703, -inf
      %v1003 = vmax.f32 %v1001, %v1002
      %v1004 = vsel %vm535, %v706, -inf
      %v1005 = vsel %vm535, %v709, -inf
      %v1006 = vmax.f32 %v1004, %v1005
      %v1007 = vsel %vm535, %v712, -inf
      %v1008 = vsel %vm535, %v715, -inf
      %v1009 = vmax.f32 %v1007, %v1008
      %v1010 = vsel %vm535, %v718, -inf
      %v1011 = vsel %vm535, %v721, -inf
      %v1012 = vmax.f32 %v1010, %v1011
      %v1013 = vsel %vm535, %v724, -inf
      %v1014 = vsel %vm535, %v727, -inf
      %v1015 = vmax.f32 %v1013, %v1014
      %v1016 = vsel %vm535, %v730, -inf
      %v1017 = vsel %vm535, %v733, -inf
      %v1018 = vmax.f32 %v1016, %v1017
      %v1019 = vsel %vm535, %v736, -inf
      %v1020 = vsel %vm535, %v739, -inf
      %v1021 = vmax.f32 %v1019, %v1020
      %v1022 = vsel %vm535, %v742, -inf
      %v1023 = vsel %vm535, %v745, -inf
      %v1024 = vmax.f32 %v1022, %v1023
      %v1025 = vsel %vm535, %v748, -inf
      %v1026 = vsel %vm535, %v751, -inf
      %v1027 = vmax.f32 %v1025, %v1026
      %v1028 = vsel %vm535, %v754, -inf
      %v1029 = vsel %vm535, %v757, -inf
      %v1030 = vmax.f32 %v1028, %v1029
      %v1031 = vsel %vm535, %v760, -inf
      %v1032 = vsel %vm535, %v763, -inf
      %v1033 = vmax.f32 %v1031, %v1032
      %v1034 = vsel %vm535, %v766, -inf
      %v1035 = vsel %vm535, %v769, -inf
      %v1036 = vmax.f32 %v1034, %v1035
      %v1037 = vsel %vm535, %v772, -inf
      %v1038 = vsel %vm535, %v775, -inf
      %v1039 = vmax.f32 %v1037, %v1038
      %v1040 = vsel %vm535, %v778, -inf
      %v1041 = vsel %vm535, %v781, -inf
      %v1042 = vmax.f32 %v1040, %v1041
      %v1043 = vsel %vm535, %v784, -inf
      %v1044 = vsel %vm535, %v787, -inf
      %v1045 = vmax.f32 %v1043, %v1044
      %v1046 = vsel %vm535, %v790, -inf
      %v1047 = vsel %vm535, %v793, -inf
      %v1048 = vmax.f32 %v1046, %v1047
      %v1049 = vsel %vm535, %v796, -inf
      %v1050 = vsel %vm535, %v799, -inf
      %v1051 = vmax.f32 %v1049, %v1050
      %v1052 = vsel %vm535, %v802, -inf
      %v1053 = vsel %vm535, %v805, -inf
      %v1054 = vmax.f32 %v1052, %v1053
      %v1055 = vsel %vm535, %v808, -inf
      %v1056 = vsel %vm535, %v811, -inf
      %v1057 = vmax.f32 %v1055, %v1056
      %v1058 = vsel %vm535, %v814, -inf
      %v1059 = vsel %vm535, %v817, -inf
      %v1060 = vmax.f32 %v1058, %v1059
      %v1061 = vsel %vm535, %v820, -inf
      %v1062 = vsel %vm535, %v823, -inf
      %v1063 = vmax.f32 %v1061, %v1062
      %v1064 = vsel %vm535, %v826, -inf
      %v1065 = vsel %vm535, %v829, -inf
      %v1066 = vmax.f32 %v1064, %v1065
      %v1067 = vsel %vm535, %v832, -inf
      %v1068 = vsel %vm535, %v835, -inf
      %v1069 = vmax.f32 %v1067, %v1068
      %v1070 = vsel %vm535, %v838, -inf
      %v1071 = vsel %vm535, %v841, -inf
      %v1072 = vmax.f32 %v1070, %v1071
      %v1073 = vsel %vm535, %v844, -inf
      %v1074 = vsel %vm535, %v847, -inf
      %v1075 = vmax.f32 %v1073, %v1074
      %v1076 = vsel %vm535, %v850, -inf
      %v1077 = vsel %vm535, %v853, -inf
      %v1078 = vmax.f32 %v1076, %v1077
      %v1079 = vsel %vm535, %v856, -inf
      %v1080 = vsel %vm535, %v859, -inf
      %v1081 = vmax.f32 %v1079, %v1080
      %v1082 = vsel %vm535, %v862, -inf
      %v1083 = vsel %vm535, %v865, -inf
      %v1084 = vmax.f32 %v1082, %v1083
      %v1085 = vsel %vm535, %v868, -inf
      %v1086 = vsel %vm535, %v871, -inf
      %v1087 = vmax.f32 %v1085, %v1086
      %v1088 = vsel %vm535, %v874, -inf
      %v1089 = vsel %vm535, %v877, -inf
      %v1090 = vmax.f32 %v1088, %v1089
      %v1091 = vsel %vm535, %v880, -inf
      %v1092 = vsel %vm535, %v883, -inf
      %v1093 = vmax.f32 %v1091, %v1092
      %v1094 = vsel %vm535, %v886, -inf
      %v1095 = vsel %vm535, %v889, -inf
      %v1096 = vmax.f32 %v1094, %v1095
      %v1097 = vsel %vm535, %v892, -inf
      %v1098 = vsel %vm535, %v895, -inf
      %v1099 = vmax.f32 %v1097, %v1098
      %v1100 = vsel %vm535, %v898, -inf
      %v1101 = vsel %vm535, %v901, -inf
      %v1102 = vmax.f32 %v1100, %v1101
      %v1103 = vsel %vm535, %v904, -inf
      %v1104 = vsel %vm535, %v907, -inf
      %v1105 = vmax.f32 %v1103, %v1104
      %v1106 = vsel %vm535, %v910, -inf
      %v1107 = vsel %vm535, %v913, -inf
      %v1108 = vmax.f32 %v1106, %v1107
      %v1109 = vsel %vm535, %v916, -inf
      %v1110 = vsel %vm535, %v919, -inf
      %v1111 = vmax.f32 %v1109, %v1110
      %1112 = vst.msk [vmem:[#allocation2] sm:$0xff] %vm535, 0.0
      %1113 = vst.msk [vmem:[#allocation2 + $0x8] sm:$0xff] %vm535, 0.0
      %1114 = vst.msk [vmem:[#allocation2 + $0x10] sm:$0xff] %vm535, 0.0
      %1115 = vst.msk [vmem:[#allocation2 + $0x18] sm:$0xff] %vm535, 0.0
      %1116 = vst.msk [vmem:[#allocation2 + $0x20] sm:$0xff] %vm535, 0.0
      %1117 = vst.msk [vmem:[#allocation2 + $0x28] sm:$0xff] %vm535, 0.0
      %1118 = vst.msk [vmem:[#allocation2 + $0x30] sm:$0xff] %vm535, 0.0
      %1119 = vst.msk [vmem:[#allocation2 + $0x38] sm:$0xff] %vm535, 0.0
      %1120 = vst.msk [vmem:[#allocation2 + $0x40] sm:$0xff] %vm535, 0.0
      %1121 = vst.msk [vmem:[#allocation2 + $0x48] sm:$0xff] %vm535, 0.0
      %1122 = vst.msk [vmem:[#allocation2 + $0x50] sm:$0xff] %vm535, 0.0
      %1123 = vst.msk [vmem:[#allocation2 + $0x58] sm:$0xff] %vm535, 0.0
      %1124 = vst.msk [vmem:[#allocation2 + $0x60] sm:$0xff] %vm535, 0.0
      %1125 = vst.msk [vmem:[#allocation2 + $0x68] sm:$0xff] %vm535, 0.0
      %1126 = vst.msk [vmem:[#allocation2 + $0x70] sm:$0xff] %vm535, 0.0
      %1127 = vst.msk [vmem:[#allocation2 + $0x78] sm:$0xff] %vm535, 0.0
      %1128 = vst.msk [vmem:[#allocation2 + $0x80] sm:$0xff] %vm535, 0.0
      %1129 = vst.msk [vmem:[#allocation2 + $0x88] sm:$0xff] %vm535, 0.0
      %1130 = vst.msk [vmem:[#allocation2 + $0x90] sm:$0xff] %vm535, 0.0
      %1131 = vst.msk [vmem:[#allocation2 + $0x98] sm:$0xff] %vm535, 0.0
      %1132 = vst.msk [vmem:[#allocation2 + $0xa0] sm:$0xff] %vm535, 0.0
      %1133 = vst.msk [vmem:[#allocation2 + $0xa8] sm:$0xff] %vm535, 0.0
      %1134 = vst.msk [vmem:[#allocation2 + $0xb0] sm:$0xff] %vm535, 0.0
      %1135 = vst.msk [vmem:[#allocation2 + $0xb8] sm:$0xff] %vm535, 0.0
      %1136 = vst.msk [vmem:[#allocation2 + $0xc0] sm:$0xff] %vm535, 0.0
      %1137 = vst.msk [vmem:[#allocation2 + $0xc8] sm:$0xff] %vm535, 0.0
      %1138 = vst.msk [vmem:[#allocation2 + $0xd0] sm:$0xff] %vm535, 0.0
      %1139 = vst.msk [vmem:[#allocation2 + $0xd8] sm:$0xff] %vm535, 0.0
      %1140 = vst.msk [vmem:[#allocation2 + $0xe0] sm:$0xff] %vm535, 0.0
      %1141 = vst.msk [vmem:[#allocation2 + $0xe8] sm:$0xff] %vm535, 0.0
      %1142 = vst.msk [vmem:[#allocation2 + $0xf0] sm:$0xff] %vm535, 0.0
      %1143 = vst.msk [vmem:[#allocation2 + $0xf8] sm:$0xff] %vm535, 0.0
      %1144 = vst.msk [vmem:[#allocation2 + $0x100] sm:$0xff] %vm535, 0.0
      %1145 = vst.msk [vmem:[#allocation2 + $0x108] sm:$0xff] %vm535, 0.0
      %1146 = vst.msk [vmem:[#allocation2 + $0x110] sm:$0xff] %vm535, 0.0
      %1147 = vst.msk [vmem:[#allocation2 + $0x118] sm:$0xff] %vm535, 0.0
      %1148 = vst.msk [vmem:[#allocation2 + $0x120] sm:$0xff] %vm535, 0.0
      %1149 = vst.msk [vmem:[#allocation2 + $0x128] sm:$0xff] %vm535, 0.0
      %1150 = vst.msk [vmem:[#allocation2 + $0x130] sm:$0xff] %vm535, 0.0
      %1151 = vst.msk [vmem:[#allocation2 + $0x138] sm:$0xff] %vm535, 0.0
      %1152 = vst.msk [vmem:[#allocation2 + $0x140] sm:$0xff] %vm535, 0.0
      %1153 = vst.msk [vmem:[#allocation2 + $0x148] sm:$0xff] %vm535, 0.0
      %1154 = vst.msk [vmem:[#allocation2 + $0x150] sm:$0xff] %vm535, 0.0
      %1155 = vst.msk [vmem:[#allocation2 + $0x158] sm:$0xff] %vm535, 0.0
      %1156 = vst.msk [vmem:[#allocation2 + $0x160] sm:$0xff] %vm535, 0.0
      %1157 = vst.msk [vmem:[#allocation2 + $0x168] sm:$0xff] %vm535, 0.0
      %1158 = vst.msk [vmem:[#allocation2 + $0x170] sm:$0xff] %vm535, 0.0
      %1159 = vst.msk [vmem:[#allocation2 + $0x178] sm:$0xff] %vm535, 0.0
      %1160 = vst.msk [vmem:[#allocation2 + $0x180] sm:$0xff] %vm535, 0.0
      %1161 = vst.msk [vmem:[#allocation2 + $0x188] sm:$0xff] %vm535, 0.0
      %1162 = vst.msk [vmem:[#allocation2 + $0x190] sm:$0xff] %vm535, 0.0
      %1163 = vst.msk [vmem:[#allocation2 + $0x198] sm:$0xff] %vm535, 0.0
      %1164 = vst.msk [vmem:[#allocation2 + $0x1a0] sm:$0xff] %vm535, 0.0
      %1165 = vst.msk [vmem:[#allocation2 + $0x1a8] sm:$0xff] %vm535, 0.0
      %1166 = vst.msk [vmem:[#allocation2 + $0x1b0] sm:$0xff] %vm535, 0.0
      %1167 = vst.msk [vmem:[#allocation2 + $0x1b8] sm:$0xff] %vm535, 0.0
      %1168 = vst.msk [vmem:[#allocation2 + $0x1c0] sm:$0xff] %vm535, 0.0
      %1169 = vst.msk [vmem:[#allocation2 + $0x1c8] sm:$0xff] %vm535, 0.0
      %1170 = vst.msk [vmem:[#allocation2 + $0x1d0] sm:$0xff] %vm535, 0.0
      %1171 = vst.msk [vmem:[#allocation2 + $0x1d8] sm:$0xff] %vm535, 0.0
      %1172 = vst.msk [vmem:[#allocation2 + $0x1e0] sm:$0xff] %vm535, 0.0
      %1173 = vst.msk [vmem:[#allocation2 + $0x1e8] sm:$0xff] %vm535, 0.0
      %1174 = vst.msk [vmem:[#allocation2 + $0x1f0] sm:$0xff] %vm535, 0.0
      %1175 = vst.msk [vmem:[#allocation2 + $0x1f8] sm:$0xff] %vm535, 0.0
      %1176 = vst.msk [vmem:[#allocation2 + $0x200] sm:$0xff] %vm535, 0.0
      %1177 = vst.msk [vmem:[#allocation2 + $0x208] sm:$0xff] %vm535, 0.0
      %1178 = vst.msk [vmem:[#allocation2 + $0x210] sm:$0xff] %vm535, 0.0
      %1179 = vst.msk [vmem:[#allocation2 + $0x218] sm:$0xff] %vm535, 0.0
      %1180 = vst.msk [vmem:[#allocation2 + $0x220] sm:$0xff] %vm535, 0.0
      %1181 = vst.msk [vmem:[#allocation2 + $0x228] sm:$0xff] %vm535, 0.0
      %1182 = vst.msk [vmem:[#allocation2 + $0x230] sm:$0xff] %vm535, 0.0
      %1183 = vst.msk [vmem:[#allocation2 + $0x238] sm:$0xff] %vm535, 0.0
      %1184 = vst.msk [vmem:[#allocation2 + $0x240] sm:$0xff] %vm535, 0.0
      %1185 = vst.msk [vmem:[#allocation2 + $0x248] sm:$0xff] %vm535, 0.0
      %1186 = vst.msk [vmem:[#allocation2 + $0x250] sm:$0xff] %vm535, 0.0
      %1187 = vst.msk [vmem:[#allocation2 + $0x258] sm:$0xff] %vm535, 0.0
      %1188 = vst.msk [vmem:[#allocation2 + $0x260] sm:$0xff] %vm535, 0.0
      %1189 = vst.msk [vmem:[#allocation2 + $0x268] sm:$0xff] %vm535, 0.0
      %1190 = vst.msk [vmem:[#allocation2 + $0x270] sm:$0xff] %vm535, 0.0
      %1191 = vst.msk [vmem:[#allocation2 + $0x278] sm:$0xff] %vm535, 0.0
      %1192 = vst.msk [vmem:[#allocation2 + $0x280] sm:$0xff] %vm535, 0.0
      %1193 = vst.msk [vmem:[#allocation2 + $0x288] sm:$0xff] %vm535, 0.0
      %1194 = vst.msk [vmem:[#allocation2 + $0x290] sm:$0xff] %vm535, 0.0
      %1195 = vst.msk [vmem:[#allocation2 + $0x298] sm:$0xff] %vm535, 0.0
      %1196 = vst.msk [vmem:[#allocation2 + $0x2a0] sm:$0xff] %vm535, 0.0
      %1197 = vst.msk [vmem:[#allocation2 + $0x2a8] sm:$0xff] %vm535, 0.0
      %1198 = vst.msk [vmem:[#allocation2 + $0x2b0] sm:$0xff] %vm535, 0.0
      %1199 = vst.msk [vmem:[#allocation2 + $0x2b8] sm:$0xff] %vm535, 0.0
      %1200 = vst.msk [vmem:[#allocation2 + $0x2c0] sm:$0xff] %vm535, 0.0
      %1201 = vst.msk [vmem:[#allocation2 + $0x2c8] sm:$0xff] %vm535, 0.0
      %1202 = vst.msk [vmem:[#allocation2 + $0x2d0] sm:$0xff] %vm535, 0.0
      %1203 = vst.msk [vmem:[#allocation2 + $0x2d8] sm:$0xff] %vm535, 0.0
      %1204 = vst.msk [vmem:[#allocation2 + $0x2e0] sm:$0xff] %vm535, 0.0
      %1205 = vst.msk [vmem:[#allocation2 + $0x2e8] sm:$0xff] %vm535, 0.0
      %1206 = vst.msk [vmem:[#allocation2 + $0x2f0] sm:$0xff] %vm535, 0.0
      %1207 = vst.msk [vmem:[#allocation2 + $0x2f8] sm:$0xff] %vm535, 0.0
      %1208 = vst.msk [vmem:[#allocation2 + $0x300] sm:$0xff] %vm535, 0.0
      %1209 = vst.msk [vmem:[#allocation2 + $0x308] sm:$0xff] %vm535, 0.0
      %1210 = vst.msk [vmem:[#allocation2 + $0x310] sm:$0xff] %vm535, 0.0
      %1211 = vst.msk [vmem:[#allocation2 + $0x318] sm:$0xff] %vm535, 0.0
      %s1212 = scalar_lea.vmem [#allocation2], 88
      %1213 = vst.msk [vmem:[%s1212] sm:$0xff] %vm535, %v922
      %1214 = vst.msk [vmem:[%s1212 + $0x8] sm:$0xff] %vm535, %v925
      %1215 = vst.msk [vmem:[%s1212 + $0x10] sm:$0xff] %vm535, %v928
      %1216 = vst.msk [vmem:[%s1212 + $0x18] sm:$0xff] %vm535, %v931
      %1217 = vst.msk [vmem:[%s1212 + $0x20] sm:$0xff] %vm535, %v934
      %1218 = vst.msk [vmem:[%s1212 + $0x28] sm:$0xff] %vm535, %v937
      %1219 = vst.msk [vmem:[%s1212 + $0x30] sm:$0xff] %vm535, %v940
      %1220 = vst.msk [vmem:[%s1212 + $0x38] sm:$0xff] %vm535, %v943
      %1221 = vst.msk [vmem:[%s1212 + $0x50] sm:$0xff] %vm535, %v946
      %1222 = vst.msk [vmem:[%s1212 + $0x58] sm:$0xff] %vm535, %v949
      %1223 = vst.msk [vmem:[%s1212 + $0x60] sm:$0xff] %vm535, %v952
      %1224 = vst.msk [vmem:[%s1212 + $0x68] sm:$0xff] %vm535, %v955
      %1225 = vst.msk [vmem:[%s1212 + $0x70] sm:$0xff] %vm535, %v958
      %1226 = vst.msk [vmem:[%s1212 + $0x78] sm:$0xff] %vm535, %v961
      %1227 = vst.msk [vmem:[%s1212 + $0x80] sm:$0xff] %vm535, %v964
      %1228 = vst.msk [vmem:[%s1212 + $0x88] sm:$0xff] %vm535, %v967
      %1229 = vst.msk [vmem:[%s1212 + $0xa0] sm:$0xff] %vm535, %v970
      %1230 = vst.msk [vmem:[%s1212 + $0xa8] sm:$0xff] %vm535, %v973
      %1231 = vst.msk [vmem:[%s1212 + $0xb0] sm:$0xff] %vm535, %v976
      %1232 = vst.msk [vmem:[%s1212 + $0xb8] sm:$0xff] %vm535, %v979
      %1233 = vst.msk [vmem:[%s1212 + $0xc0] sm:$0xff] %vm535, %v982
      %1234 = vst.msk [vmem:[%s1212 + $0xc8] sm:$0xff] %vm535, %v985
      %1235 = vst.msk [vmem:[%s1212 + $0xd0] sm:$0xff] %vm535, %v988
      %1236 = vst.msk [vmem:[%s1212 + $0xd8] sm:$0xff] %vm535, %v991
      %1237 = vst.msk [vmem:[%s1212 + $0xf0] sm:$0xff] %vm535, %v994
      %1238 = vst.msk [vmem:[%s1212 + $0xf8] sm:$0xff] %vm535, %v997
      %1239 = vst.msk [vmem:[%s1212 + $0x100] sm:$0xff] %vm535, %v1000
      %1240 = vst.msk [vmem:[%s1212 + $0x108] sm:$0xff] %vm535, %v1003
      %1241 = vst.msk [vmem:[%s1212 + $0x110] sm:$0xff] %vm535, %v1006
      %1242 = vst.msk [vmem:[%s1212 + $0x118] sm:$0xff] %vm535, %v1009
      %1243 = vst.msk [vmem:[%s1212 + $0x120] sm:$0xff] %vm535, %v1012
      %1244 = vst.msk [vmem:[%s1212 + $0x128] sm:$0xff] %vm535, %v1015
      %1245 = vst.msk [vmem:[%s1212 + $0x140] sm:$0xff] %vm535, %v1018
      %1246 = vst.msk [vmem:[%s1212 + $0x148] sm:$0xff] %vm535, %v1021
      %1247 = vst.msk [vmem:[%s1212 + $0x150] sm:$0xff] %vm535, %v1024
      %1248 = vst.msk [vmem:[%s1212 + $0x158] sm:$0xff] %vm535, %v1027
      %1249 = vst.msk [vmem:[%s1212 + $0x160] sm:$0xff] %vm535, %v1030
      %1250 = vst.msk [vmem:[%s1212 + $0x168] sm:$0xff] %vm535, %v1033
      %1251 = vst.msk [vmem:[%s1212 + $0x170] sm:$0xff] %vm535, %v1036
      %1252 = vst.msk [vmem:[%s1212 + $0x178] sm:$0xff] %vm535, %v1039
      %1253 = vst.msk [vmem:[%s1212 + $0x190] sm:$0xff] %vm535, %v1042
      %1254 = vst.msk [vmem:[%s1212 + $0x198] sm:$0xff] %vm535, %v1045
      %1255 = vst.msk [vmem:[%s1212 + $0x1a0] sm:$0xff] %vm535, %v1048
      %1256 = vst.msk [vmem:[%s1212 + $0x1a8] sm:$0xff] %vm535, %v1051
      %1257 = vst.msk [vmem:[%s1212 + $0x1b0] sm:$0xff] %vm535, %v1054
      %1258 = vst.msk [vmem:[%s1212 + $0x1b8] sm:$0xff] %vm535, %v1057
      %1259 = vst.msk [vmem:[%s1212 + $0x1c0] sm:$0xff] %vm535, %v1060
      %1260 = vst.msk [vmem:[%s1212 + $0x1c8] sm:$0xff] %vm535, %v1063
      %1261 = vst.msk [vmem:[%s1212 + $0x1e0] sm:$0xff] %vm535, %v1066
      %1262 = vst.msk [vmem:[%s1212 + $0x1e8] sm:$0xff] %vm535, %v1069
      %1263 = vst.msk [vmem:[%s1212 + $0x1f0] sm:$0xff] %vm535, %v1072
      %1264 = vst.msk [vmem:[%s1212 + $0x1f8] sm:$0xff] %vm535, %v1075
      %1265 = vst.msk [vmem:[%s1212 + $0x200] sm:$0xff] %vm535, %v1078
      %1266 = vst.msk [vmem:[%s1212 + $0x208] sm:$0xff] %vm535, %v1081
      %1267 = vst.msk [vmem:[%s1212 + $0x210] sm:$0xff] %vm535, %v1084
      %1268 = vst.msk [vmem:[%s1212 + $0x218] sm:$0xff] %vm535, %v1087
      %1269 = vst.msk [vmem:[%s1212 + $0x230] sm:$0xff] %vm535, %v1090
      %1270 = vst.msk [vmem:[%s1212 + $0x238] sm:$0xff] %vm535, %v1093
      %1271 = vst.msk [vmem:[%s1212 + $0x240] sm:$0xff] %vm535, %v1096
      %1272 = vst.msk [vmem:[%s1212 + $0x248] sm:$0xff] %vm535, %v1099
      %1273 = vst.msk [vmem:[%s1212 + $0x250] sm:$0xff] %vm535, %v1102
      %1274 = vst.msk [vmem:[%s1212 + $0x258] sm:$0xff] %vm535, %v1105
      %1275 = vst.msk [vmem:[%s1212 + $0x260] sm:$0xff] %vm535, %v1108
      %1276 = vst.msk [vmem:[%s1212 + $0x268] sm:$0xff] %vm535, %v1111
      %v1277 = vld [vmem:[#allocation2] sm:$0xff]
      %v1278 = vld [vmem:[#allocation2 + $0x8] sm:$0xff]
      %v1279 = vld [vmem:[#allocation2 + $0x10] sm:$0xff]
      %v1280 = vld [vmem:[#allocation2 + $0x18] sm:$0xff]
      %v1281 = vld [vmem:[#allocation2 + $0x20] sm:$0xff]
      %v1282 = vld [vmem:[#allocation2 + $0x28] sm:$0xff]
      %v1283 = vld [vmem:[#allocation2 + $0x30] sm:$0xff]
      %v1284 = vld [vmem:[#allocation2 + $0x38] sm:$0xff]
      %v1285 = vld [vmem:[#allocation2 + $0x50] sm:$0xff]
      %v1286 = vld [vmem:[#allocation2 + $0x58] sm:$0xff]
      %v1287 = vld [vmem:[#allocation2 + $0x60] sm:$0xff]
      %v1288 = vld [vmem:[#allocation2 + $0x68] sm:$0xff]
      %v1289 = vld [vmem:[#allocation2 + $0x70] sm:$0xff]
      %v1290 = vld [vmem:[#allocation2 + $0x78] sm:$0xff]
      %v1291 = vld [vmem:[#allocation2 + $0x80] sm:$0xff]
      %v1292 = vld [vmem:[#allocation2 + $0x88] sm:$0xff]
      %v1293 = vld [vmem:[#allocation2 + $0xa0] sm:$0xff]
      %v1294 = vld [vmem:[#allocation2 + $0xa8] sm:$0xff]
      %v1295 = vld [vmem:[#allocation2 + $0xb0] sm:$0xff]
      %v1296 = vld [vmem:[#allocation2 + $0xb8] sm:$0xff]
      %v1297 = vld [vmem:[#allocation2 + $0xc0] sm:$0xff]
      %v1298 = vld [vmem:[#allocation2 + $0xc8] sm:$0xff]
      %v1299 = vld [vmem:[#allocation2 + $0xd0] sm:$0xff]
      %v1300 = vld [vmem:[#allocation2 + $0xd8] sm:$0xff]
      %v1301 = vld [vmem:[#allocation2 + $0xf0] sm:$0xff]
      %v1302 = vld [vmem:[#allocation2 + $0xf8] sm:$0xff]
      %v1303 = vld [vmem:[#allocation2 + $0x100] sm:$0xff]
      %v1304 = vld [vmem:[#allocation2 + $0x108] sm:$0xff]
      %v1305 = vld [vmem:[#allocation2 + $0x110] sm:$0xff]
      %v1306 = vld [vmem:[#allocation2 + $0x118] sm:$0xff]
      %v1307 = vld [vmem:[#allocation2 + $0x120] sm:$0xff]
      %v1308 = vld [vmem:[#allocation2 + $0x128] sm:$0xff]
      %v1309 = vld [vmem:[#allocation2 + $0x140] sm:$0xff]
      %v1310 = vld [vmem:[#allocation2 + $0x148] sm:$0xff]
      %v1311 = vld [vmem:[#allocation2 + $0x150] sm:$0xff]
      %v1312 = vld [vmem:[#allocation2 + $0x158] sm:$0xff]
      %v1313 = vld [vmem:[#allocation2 + $0x160] sm:$0xff]
      %v1314 = vld [vmem:[#allocation2 + $0x168] sm:$0xff]
      %v1315 = vld [vmem:[#allocation2 + $0x170] sm:$0xff]
      %v1316 = vld [vmem:[#allocation2 + $0x178] sm:$0xff]
      %v1317 = vld [vmem:[#allocation2 + $0x190] sm:$0xff]
      %v1318 = vld [vmem:[#allocation2 + $0x198] sm:$0xff]
      %v1319 = vld [vmem:[#allocation2 + $0x1a0] sm:$0xff]
      %v1320 = vld [vmem:[#allocation2 + $0x1a8] sm:$0xff]
      %v1321 = vld [vmem:[#allocation2 + $0x1b0] sm:$0xff]
      %v1322 = vld [vmem:[#allocation2 + $0x1b8] sm:$0xff]
      %v1323 = vld [vmem:[#allocation2 + $0x1c0] sm:$0xff]
      %v1324 = vld [vmem:[#allocation2 + $0x1c8] sm:$0xff]
      %v1325 = vld [vmem:[#allocation2 + $0x1e0] sm:$0xff]
      %v1326 = vld [vmem:[#allocation2 + $0x1e8] sm:$0xff]
      %v1327 = vld [vmem:[#allocation2 + $0x1f0] sm:$0xff]
      %v1328 = vld [vmem:[#allocation2 + $0x1f8] sm:$0xff]
      %v1329 = vld [vmem:[#allocation2 + $0x200] sm:$0xff]
      %v1330 = vld [vmem:[#allocation2 + $0x208] sm:$0xff]
      %v1331 = vld [vmem:[#allocation2 + $0x210] sm:$0xff]
      %v1332 = vld [vmem:[#allocation2 + $0x218] sm:$0xff]
      %v1333 = vld [vmem:[#allocation2 + $0x230] sm:$0xff]
      %v1334 = vld [vmem:[#allocation2 + $0x238] sm:$0xff]
      %v1335 = vld [vmem:[#allocation2 + $0x240] sm:$0xff]
      %v1336 = vld [vmem:[#allocation2 + $0x248] sm:$0xff]
      %v1337 = vld [vmem:[#allocation2 + $0x250] sm:$0xff]
      %v1338 = vld [vmem:[#allocation2 + $0x258] sm:$0xff]
      %v1339 = vld [vmem:[#allocation2 + $0x260] sm:$0xff]
      %v1340 = vld [vmem:[#allocation2 + $0x268] sm:$0xff]
      %1341 = vst.msk [vmem:[#allocation3] sm:$0xff] %vm535, %v1277
      %1342 = vst.msk [vmem:[#allocation3 + $0x8] sm:$0xff] %vm535, %v1278
      %1343 = vst.msk [vmem:[#allocation3 + $0x10] sm:$0xff] %vm535, %v1279
      %1344 = vst.msk [vmem:[#allocation3 + $0x18] sm:$0xff] %vm535, %v1280
      %1345 = vst.msk [vmem:[#allocation3 + $0x20] sm:$0xff] %vm535, %v1281
      %1346 = vst.msk [vmem:[#allocation3 + $0x28] sm:$0xff] %vm535, %v1282
      %1347 = vst.msk [vmem:[#allocation3 + $0x30] sm:$0xff] %vm535, %v1283
      %1348 = vst.msk [vmem:[#allocation3 + $0x38] sm:$0xff] %vm535, %v1284
      %1349 = vst.msk [vmem:[#allocation3 + $0x40] sm:$0xff] %vm535, %v1285
      %1350 = vst.msk [vmem:[#allocation3 + $0x48] sm:$0xff] %vm535, %v1286
      %1351 = vst.msk [vmem:[#allocation3 + $0x50] sm:$0xff] %vm535, %v1287
      %1352 = vst.msk [vmem:[#allocation3 + $0x58] sm:$0xff] %vm535, %v1288
      %1353 = vst.msk [vmem:[#allocation3 + $0x60] sm:$0xff] %vm535, %v1289
      %1354 = vst.msk [vmem:[#allocation3 + $0x68] sm:$0xff] %vm535, %v1290
      %1355 = vst.msk [vmem:[#allocation3 + $0x70] sm:$0xff] %vm535, %v1291
      %1356 = vst.msk [vmem:[#allocation3 + $0x78] sm:$0xff] %vm535, %v1292
      %1357 = vst.msk [vmem:[#allocation3 + $0x80] sm:$0xff] %vm535, %v1293
      %1358 = vst.msk [vmem:[#allocation3 + $0x88] sm:$0xff] %vm535, %v1294
      %1359 = vst.msk [vmem:[#allocation3 + $0x90] sm:$0xff] %vm535, %v1295
      %1360 = vst.msk [vmem:[#allocation3 + $0x98] sm:$0xff] %vm535, %v1296
      %1361 = vst.msk [vmem:[#allocation3 + $0xa0] sm:$0xff] %vm535, %v1297
      %1362 = vst.msk [vmem:[#allocation3 + $0xa8] sm:$0xff] %vm535, %v1298
      %1363 = vst.msk [vmem:[#allocation3 + $0xb0] sm:$0xff] %vm535, %v1299
      %1364 = vst.msk [vmem:[#allocation3 + $0xb8] sm:$0xff] %vm535, %v1300
      %1365 = vst.msk [vmem:[#allocation3 + $0xc0] sm:$0xff] %vm535, %v1301
      %1366 = vst.msk [vmem:[#allocation3 + $0xc8] sm:$0xff] %vm535, %v1302
      %1367 = vst.msk [vmem:[#allocation3 + $0xd0] sm:$0xff] %vm535, %v1303
      %1368 = vst.msk [vmem:[#allocation3 + $0xd8] sm:$0xff] %vm535, %v1304
      %1369 = vst.msk [vmem:[#allocation3 + $0xe0] sm:$0xff] %vm535, %v1305
      %1370 = vst.msk [vmem:[#allocation3 + $0xe8] sm:$0xff] %vm535, %v1306
      %1371 = vst.msk [vmem:[#allocation3 + $0xf0] sm:$0xff] %vm535, %v1307
      %1372 = vst.msk [vmem:[#allocation3 + $0xf8] sm:$0xff] %vm535, %v1308
      %1373 = vst.msk [vmem:[#allocation3 + $0x100] sm:$0xff] %vm535, %v1309
      %1374 = vst.msk [vmem:[#allocation3 + $0x108] sm:$0xff] %vm535, %v1310
      %1375 = vst.msk [vmem:[#allocation3 + $0x110] sm:$0xff] %vm535, %v1311
      %1376 = vst.msk [vmem:[#allocation3 + $0x118] sm:$0xff] %vm535, %v1312
      %1377 = vst.msk [vmem:[#allocation3 + $0x120] sm:$0xff] %vm535, %v1313
      %1378 = vst.msk [vmem:[#allocation3 + $0x128] sm:$0xff] %vm535, %v1314
      %1379 = vst.msk [vmem:[#allocation3 + $0x130] sm:$0xff] %vm535, %v1315
      %1380 = vst.msk [vmem:[#allocation3 + $0x138] sm:$0xff] %vm535, %v1316
      %1381 = vst.msk [vmem:[#allocation3 + $0x140] sm:$0xff] %vm535, %v1317
      %1382 = vst.msk [vmem:[#allocation3 + $0x148] sm:$0xff] %vm535, %v1318
      %1383 = vst.msk [vmem:[#allocation3 + $0x150] sm:$0xff] %vm535, %v1319
      %1384 = vst.msk [vmem:[#allocation3 + $0x158] sm:$0xff] %vm535, %v1320
      %1385 = vst.msk [vmem:[#allocation3 + $0x160] sm:$0xff] %vm535, %v1321
      %1386 = vst.msk [vmem:[#allocation3 + $0x168] sm:$0xff] %vm535, %v1322
      %1387 = vst.msk [vmem:[#allocation3 + $0x170] sm:$0xff] %vm535, %v1323
      %1388 = vst.msk [vmem:[#allocation3 + $0x178] sm:$0xff] %vm535, %v1324
      %1389 = vst.msk [vmem:[#allocation3 + $0x180] sm:$0xff] %vm535, %v1325
      %1390 = vst.msk [vmem:[#allocation3 + $0x188] sm:$0xff] %vm535, %v1326
      %1391 = vst.msk [vmem:[#allocation3 + $0x190] sm:$0xff] %vm535, %v1327
      %1392 = vst.msk [vmem:[#allocation3 + $0x198] sm:$0xff] %vm535, %v1328
      %1393 = vst.msk [vmem:[#allocation3 + $0x1a0] sm:$0xff] %vm535, %v1329
      %1394 = vst.msk [vmem:[#allocation3 + $0x1a8] sm:$0xff] %vm535, %v1330
      %1395 = vst.msk [vmem:[#allocation3 + $0x1b0] sm:$0xff] %vm535, %v1331
      %1396 = vst.msk [vmem:[#allocation3 + $0x1b8] sm:$0xff] %vm535, %v1332
      %1397 = vst.msk [vmem:[#allocation3 + $0x1c0] sm:$0xff] %vm535, %v1333
      %1398 = vst.msk [vmem:[#allocation3 + $0x1c8] sm:$0xff] %vm535, %v1334
      %1399 = vst.msk [vmem:[#allocation3 + $0x1d0] sm:$0xff] %vm535, %v1335
      %1400 = vst.msk [vmem:[#allocation3 + $0x1d8] sm:$0xff] %vm535, %v1336
      %1401 = vst.msk [vmem:[#allocation3 + $0x1e0] sm:$0xff] %vm535, %v1337
      %1402 = vst.msk [vmem:[#allocation3 + $0x1e8] sm:$0xff] %vm535, %v1338
      %1403 = vst.msk [vmem:[#allocation3 + $0x1f0] sm:$0xff] %vm535, %v1339
      %1404 = vst.msk [vmem:[#allocation3 + $0x1f8] sm:$0xff] %vm535, %v1340
      %s1405 = scalar_lea.vmem [#allocation2], 8
      %v1406 = vld [vmem:[%s1405] sm:$0xff]
      %v1407 = vld [vmem:[%s1405 + $0x8] sm:$0xff]
      %v1408 = vld [vmem:[%s1405 + $0x10] sm:$0xff]
      %v1409 = vld [vmem:[%s1405 + $0x18] sm:$0xff]
      %v1410 = vld [vmem:[%s1405 + $0x20] sm:$0xff]
      %v1411 = vld [vmem:[%s1405 + $0x28] sm:$0xff]
      %v1412 = vld [vmem:[%s1405 + $0x30] sm:$0xff]
      %v1413 = vld [vmem:[%s1405 + $0x38] sm:$0xff]
      %v1414 = vld [vmem:[%s1405 + $0x50] sm:$0xff]
      %v1415 = vld [vmem:[%s1405 + $0x58] sm:$0xff]
      %v1416 = vld [vmem:[%s1405 + $0x60] sm:$0xff]
      %v1417 = vld [vmem:[%s1405 + $0x68] sm:$0xff]
      %v1418 = vld [vmem:[%s1405 + $0x70] sm:$0xff]
      %v1419 = vld [vmem:[%s1405 + $0x78] sm:$0xff]
      %v1420 = vld [vmem:[%s1405 + $0x80] sm:$0xff]
      %v1421 = vld [vmem:[%s1405 + $0x88] sm:$0xff]
      %v1422 = vld [vmem:[%s1405 + $0xa0] sm:$0xff]
      %v1423 = vld [vmem:[%s1405 + $0xa8] sm:$0xff]
      %v1424 = vld [vmem:[%s1405 + $0xb0] sm:$0xff]
      %v1425 = vld [vmem:[%s1405 + $0xb8] sm:$0xff]
      %v1426 = vld [vmem:[%s1405 + $0xc0] sm:$0xff]
      %v1427 = vld [vmem:[%s1405 + $0xc8] sm:$0xff]
      %v1428 = vld [vmem:[%s1405 + $0xd0] sm:$0xff]
      %v1429 = vld [vmem:[%s1405 + $0xd8] sm:$0xff]
      %v1430 = vld [vmem:[%s1405 + $0xf0] sm:$0xff]
      %v1431 = vld [vmem:[%s1405 + $0xf8] sm:$0xff]
      %v1432 = vld [vmem:[%s1405 + $0x100] sm:$0xff]
      %v1433 = vld [vmem:[%s1405 + $0x108] sm:$0xff]
      %v1434 = vld [vmem:[%s1405 + $0x110] sm:$0xff]
      %v1435 = vld [vmem:[%s1405 + $0x118] sm:$0xff]
      %v1436 = vld [vmem:[%s1405 + $0x120] sm:$0xff]
      %v1437 = vld [vmem:[%s1405 + $0x128] sm:$0xff]
      %v1438 = vld [vmem:[%s1405 + $0x140] sm:$0xff]
      %v1439 = vld [vmem:[%s1405 + $0x148] sm:$0xff]
      %v1440 = vld [vmem:[%s1405 + $0x150] sm:$0xff]
      %v1441 = vld [vmem:[%s1405 + $0x158] sm:$0xff]
      %v1442 = vld [vmem:[%s1405 + $0x160] sm:$0xff]
      %v1443 = vld [vmem:[%s1405 + $0x168] sm:$0xff]
      %v1444 = vld [vmem:[%s1405 + $0x170] sm:$0xff]
      %v1445 = vld [vmem:[%s1405 + $0x178] sm:$0xff]
      %v1446 = vld [vmem:[%s1405 + $0x190] sm:$0xff]
      %v1447 = vld [vmem:[%s1405 + $0x198] sm:$0xff]
      %v1448 = vld [vmem:[%s1405 + $0x1a0] sm:$0xff]
      %v1449 = vld [vmem:[%s1405 + $0x1a8] sm:$0xff]
      %v1450 = vld [vmem:[%s1405 + $0x1b0] sm:$0xff]
      %v1451 = vld [vmem:[%s1405 + $0x1b8] sm:$0xff]
      %v1452 = vld [vmem:[%s1405 + $0x1c0] sm:$0xff]
      %v1453 = vld [vmem:[%s1405 + $0x1c8] sm:$0xff]
      %v1454 = vld [vmem:[%s1405 + $0x1e0] sm:$0xff]
      %v1455 = vld [vmem:[%s1405 + $0x1e8] sm:$0xff]
      %v1456 = vld [vmem:[%s1405 + $0x1f0] sm:$0xff]
      %v1457 = vld [vmem:[%s1405 + $0x1f8] sm:$0xff]
      %v1458 = vld [vmem:[%s1405 + $0x200] sm:$0xff]
      %v1459 = vld [vmem:[%s1405 + $0x208] sm:$0xff]
      %v1460 = vld [vmem:[%s1405 + $0x210] sm:$0xff]
      %v1461 = vld [vmem:[%s1405 + $0x218] sm:$0xff]
      %v1462 = vld [vmem:[%s1405 + $0x230] sm:$0xff]
      %v1463 = vld [vmem:[%s1405 + $0x238] sm:$0xff]
      %v1464 = vld [vmem:[%s1405 + $0x240] sm:$0xff]
      %v1465 = vld [vmem:[%s1405 + $0x248] sm:$0xff]
      %v1466 = vld [vmem:[%s1405 + $0x250] sm:$0xff]
      %v1467 = vld [vmem:[%s1405 + $0x258] sm:$0xff]
      %v1468 = vld [vmem:[%s1405 + $0x260] sm:$0xff]
      %v1469 = vld [vmem:[%s1405 + $0x268] sm:$0xff]
      %1534 = vrot.lane.b32.xlu0 %v1406, 4
      %v1535 = vpop.permute.xlu0 %1534
      %1536 = vrot.lane.b32.xlu0 %v1407, 4
      %v1537 = vpop.permute.xlu0 %1536
      %1538 = vrot.lane.b32.xlu0 %v1408, 4
      %v1539 = vpop.permute.xlu0 %1538
      %1540 = vrot.lane.b32.xlu0 %v1409, 4
      %v1541 = vpop.permute.xlu0 %1540
      %1542 = vrot.lane.b32.xlu0 %v1410, 4
      %v1543 = vpop.permute.xlu0 %1542
      %1544 = vrot.lane.b32.xlu0 %v1411, 4
      %v1545 = vpop.permute.xlu0 %1544
      %1546 = vrot.lane.b32.xlu0 %v1412, 4
      %v1547 = vpop.permute.xlu0 %1546
      %1548 = vrot.lane.b32.xlu0 %v1413, 4
      %v1549 = vpop.permute.xlu0 %1548
      %1550 = vrot.lane.b32.xlu0 %v1414, 4
      %v1551 = vpop.permute.xlu0 %1550
      %1552 = vrot.lane.b32.xlu0 %v1415, 4
      %v1553 = vpop.permute.xlu0 %1552
      %1554 = vrot.lane.b32.xlu0 %v1416, 4
      %v1555 = vpop.permute.xlu0 %1554
      %1556 = vrot.lane.b32.xlu0 %v1417, 4
      %v1557 = vpop.permute.xlu0 %1556
      %1558 = vrot.lane.b32.xlu0 %v1418, 4
      %v1559 = vpop.permute.xlu0 %1558
      %1560 = vrot.lane.b32.xlu0 %v1419, 4
      %v1561 = vpop.permute.xlu0 %1560
      %1562 = vrot.lane.b32.xlu0 %v1420, 4
      %v1563 = vpop.permute.xlu0 %1562
      %1564 = vrot.lane.b32.xlu0 %v1421, 4
      %v1565 = vpop.permute.xlu0 %1564
      %1566 = vrot.lane.b32.xlu0 %v1422, 4
      %v1567 = vpop.permute.xlu0 %1566
      %1568 = vrot.lane.b32.xlu0 %v1423, 4
      %v1569 = vpop.permute.xlu0 %1568
      %1570 = vrot.lane.b32.xlu0 %v1424, 4
      %v1571 = vpop.permute.xlu0 %1570
      %1572 = vrot.lane.b32.xlu0 %v1425, 4
      %v1573 = vpop.permute.xlu0 %1572
      %1574 = vrot.lane.b32.xlu0 %v1426, 4
      %v1575 = vpop.permute.xlu0 %1574
      %1576 = vrot.lane.b32.xlu0 %v1427, 4
      %v1577 = vpop.permute.xlu0 %1576
      %1578 = vrot.lane.b32.xlu0 %v1428, 4
      %v1579 = vpop.permute.xlu0 %1578
      %1580 = vrot.lane.b32.xlu0 %v1429, 4
      %v1581 = vpop.permute.xlu0 %1580
      %1582 = vrot.lane.b32.xlu0 %v1430, 4
      %v1583 = vpop.permute.xlu0 %1582
      %1584 = vrot.lane.b32.xlu0 %v1431, 4
      %v1585 = vpop.permute.xlu0 %1584
      %1586 = vrot.lane.b32.xlu0 %v1432, 4
      %v1587 = vpop.permute.xlu0 %1586
      %1588 = vrot.lane.b32.xlu0 %v1433, 4
      %v1589 = vpop.permute.xlu0 %1588
      %1590 = vrot.lane.b32.xlu0 %v1434, 4
      %v1591 = vpop.permute.xlu0 %1590
      %1592 = vrot.lane.b32.xlu0 %v1435, 4
      %v1593 = vpop.permute.xlu0 %1592
      %1594 = vrot.lane.b32.xlu0 %v1436, 4
      %v1595 = vpop.permute.xlu0 %1594
      %1596 = vrot.lane.b32.xlu0 %v1437, 4
      %v1597 = vpop.permute.xlu0 %1596
      %1598 = vrot.lane.b32.xlu0 %v1438, 4
      %v1599 = vpop.permute.xlu0 %1598
      %1600 = vrot.lane.b32.xlu0 %v1439, 4
      %v1601 = vpop.permute.xlu0 %1600
      %1602 = vrot.lane.b32.xlu0 %v1440, 4
      %v1603 = vpop.permute.xlu0 %1602
      %1604 = vrot.lane.b32.xlu0 %v1441, 4
      %v1605 = vpop.permute.xlu0 %1604
      %1606 = vrot.lane.b32.xlu0 %v1442, 4
      %v1607 = vpop.permute.xlu0 %1606
      %1608 = vrot.lane.b32.xlu0 %v1443, 4
      %v1609 = vpop.permute.xlu0 %1608
      %1610 = vrot.lane.b32.xlu0 %v1444, 4
      %v1611 = vpop.permute.xlu0 %1610
      %1612 = vrot.lane.b32.xlu0 %v1445, 4
      %v1613 = vpop.permute.xlu0 %1612
      %1614 = vrot.lane.b32.xlu0 %v1446, 4
      %v1615 = vpop.permute.xlu0 %1614
      %1616 = vrot.lane.b32.xlu0 %v1447, 4
      %v1617 = vpop.permute.xlu0 %1616
      %1618 = vrot.lane.b32.xlu0 %v1448, 4
      %v1619 = vpop.permute.xlu0 %1618
      %1620 = vrot.lane.b32.xlu0 %v1449, 4
      %v1621 = vpop.permute.xlu0 %1620
      %1622 = vrot.lane.b32.xlu0 %v1450, 4
      %v1623 = vpop.permute.xlu0 %1622
      %1624 = vrot.lane.b32.xlu0 %v1451, 4
      %v1625 = vpop.permute.xlu0 %1624
      %1626 = vrot.lane.b32.xlu0 %v1452, 4
      %v1627 = vpop.permute.xlu0 %1626
      %1628 = vrot.lane.b32.xlu0 %v1453, 4
      %v1629 = vpop.permute.xlu0 %1628
      %1630 = vrot.lane.b32.xlu0 %v1454, 4
      %v1631 = vpop.permute.xlu0 %1630
      %1632 = vrot.lane.b32.xlu0 %v1455, 4
      %v1633 = vpop.permute.xlu0 %1632
      %1634 = vrot.lane.b32.xlu0 %v1456, 4
      %v1635 = vpop.permute.xlu0 %1634
      %1636 = vrot.lane.b32.xlu0 %v1457, 4
      %v1637 = vpop.permute.xlu0 %1636
      %1638 = vrot.lane.b32.xlu0 %v1458, 4
      %v1639 = vpop.permute.xlu0 %1638
      %1640 = vrot.lane.b32.xlu0 %v1459, 4
      %v1641 = vpop.permute.xlu0 %1640
      %1642 = vrot.lane.b32.xlu0 %v1460, 4
      %v1643 = vpop.permute.xlu0 %1642
      %1644 = vrot.lane.b32.xlu0 %v1461, 4
      %v1645 = vpop.permute.xlu0 %1644
      %1646 = vrot.lane.b32.xlu0 %v1462, 4
      %v1647 = vpop.permute.xlu0 %1646
      %1648 = vrot.lane.b32.xlu0 %v1463, 4
      %v1649 = vpop.permute.xlu0 %1648
      %1650 = vrot.lane.b32.xlu0 %v1464, 4
      %v1651 = vpop.permute.xlu0 %1650
      %1652 = vrot.lane.b32.xlu0 %v1465, 4
      %v1653 = vpop.permute.xlu0 %1652
      %1654 = vrot.lane.b32.xlu0 %v1466, 4
      %v1655 = vpop.permute.xlu0 %1654
      %1656 = vrot.lane.b32.xlu0 %v1467, 4
      %v1657 = vpop.permute.xlu0 %1656
      %1658 = vrot.lane.b32.xlu0 %v1468, 4
      %v1659 = vpop.permute.xlu0 %1658
      %1660 = vrot.lane.b32.xlu0 %v1469, 4
      %v1661 = vpop.permute.xlu0 %1660
      %vm1726 = vcmask 64544
      %1727 = vst.msk [vmem:[#allocation3] sm:$0xff] %vm1726, %v1535
      %1728 = vst.msk [vmem:[#allocation3 + $0x8] sm:$0xff] %vm1726, %v1537
      %1729 = vst.msk [vmem:[#allocation3 + $0x10] sm:$0xff] %vm1726, %v1539
      %1730 = vst.msk [vmem:[#allocation3 + $0x18] sm:$0xff] %vm1726, %v1541
      %1731 = vst.msk [vmem:[#allocation3 + $0x20] sm:$0xff] %vm1726, %v1543
      %1732 = vst.msk [vmem:[#allocation3 + $0x28] sm:$0xff] %vm1726, %v1545
      %1733 = vst.msk [vmem:[#allocation3 + $0x30] sm:$0xff] %vm1726, %v1547
      %1734 = vst.msk [vmem:[#allocation3 + $0x38] sm:$0xff] %vm1726, %v1549
      %1735 = vst.msk [vmem:[#allocation3 + $0x40] sm:$0xff] %vm1726, %v1551
      %1736 = vst.msk [vmem:[#allocation3 + $0x48] sm:$0xff] %vm1726, %v1553
      %1737 = vst.msk [vmem:[#allocation3 + $0x50] sm:$0xff] %vm1726, %v1555
      %1738 = vst.msk [vmem:[#allocation3 + $0x58] sm:$0xff] %vm1726, %v1557
      %1739 = vst.msk [vmem:[#allocation3 + $0x60] sm:$0xff] %vm1726, %v1559
      %1740 = vst.msk [vmem:[#allocation3 + $0x68] sm:$0xff] %vm1726, %v1561
      %1741 = vst.msk [vmem:[#allocation3 + $0x70] sm:$0xff] %vm1726, %v1563
      %1742 = vst.msk [vmem:[#allocation3 + $0x78] sm:$0xff] %vm1726, %v1565
      %1743 = vst.msk [vmem:[#allocation3 + $0x80] sm:$0xff] %vm1726, %v1567
      %1744 = vst.msk [vmem:[#allocation3 + $0x88] sm:$0xff] %vm1726, %v1569
      %1745 = vst.msk [vmem:[#allocation3 + $0x90] sm:$0xff] %vm1726, %v1571
      %1746 = vst.msk [vmem:[#allocation3 + $0x98] sm:$0xff] %vm1726, %v1573
      %1747 = vst.msk [vmem:[#allocation3 + $0xa0] sm:$0xff] %vm1726, %v1575
      %1748 = vst.msk [vmem:[#allocation3 + $0xa8] sm:$0xff] %vm1726, %v1577
      %1749 = vst.msk [vmem:[#allocation3 + $0xb0] sm:$0xff] %vm1726, %v1579
      %1750 = vst.msk [vmem:[#allocation3 + $0xb8] sm:$0xff] %vm1726, %v1581
      %1751 = vst.msk [vmem:[#allocation3 + $0xc0] sm:$0xff] %vm1726, %v1583
      %1752 = vst.msk [vmem:[#allocation3 + $0xc8] sm:$0xff] %vm1726, %v1585
      %1753 = vst.msk [vmem:[#allocation3 + $0xd0] sm:$0xff] %vm1726, %v1587
      %1754 = vst.msk [vmem:[#allocation3 + $0xd8] sm:$0xff] %vm1726, %v1589
      %1755 = vst.msk [vmem:[#allocation3 + $0xe0] sm:$0xff] %vm1726, %v1591
      %1756 = vst.msk [vmem:[#allocation3 + $0xe8] sm:$0xff] %vm1726, %v1593
      %1757 = vst.msk [vmem:[#allocation3 + $0xf0] sm:$0xff] %vm1726, %v1595
      %1758 = vst.msk [vmem:[#allocation3 + $0xf8] sm:$0xff] %vm1726, %v1597
      %1759 = vst.msk [vmem:[#allocation3 + $0x100] sm:$0xff] %vm1726, %v1599
      %1760 = vst.msk [vmem:[#allocation3 + $0x108] sm:$0xff] %vm1726, %v1601
      %1761 = vst.msk [vmem:[#allocation3 + $0x110] sm:$0xff] %vm1726, %v1603
      %1762 = vst.msk [vmem:[#allocation3 + $0x118] sm:$0xff] %vm1726, %v1605
      %1763 = vst.msk [vmem:[#allocation3 + $0x120] sm:$0xff] %vm1726, %v1607
      %1764 = vst.msk [vmem:[#allocation3 + $0x128] sm:$0xff] %vm1726, %v1609
      %1765 = vst.msk [vmem:[#allocation3 + $0x130] sm:$0xff] %vm1726, %v1611
      %1766 = vst.msk [vmem:[#allocation3 + $0x138] sm:$0xff] %vm1726, %v1613
      %1767 = vst.msk [vmem:[#allocation3 + $0x140] sm:$0xff] %vm1726, %v1615
      %1768 = vst.msk [vmem:[#allocation3 + $0x148] sm:$0xff] %vm1726, %v1617
      %1769 = vst.msk [vmem:[#allocation3 + $0x150] sm:$0xff] %vm1726, %v1619
      %1770 = vst.msk [vmem:[#allocation3 + $0x158] sm:$0xff] %vm1726, %v1621
      %1771 = vst.msk [vmem:[#allocation3 + $0x160] sm:$0xff] %vm1726, %v1623
      %1772 = vst.msk [vmem:[#allocation3 + $0x168] sm:$0xff] %vm1726, %v1625
      %1773 = vst.msk [vmem:[#allocation3 + $0x170] sm:$0xff] %vm1726, %v1627
      %1774 = vst.msk [vmem:[#allocation3 + $0x178] sm:$0xff] %vm1726, %v1629
      %1775 = vst.msk [vmem:[#allocation3 + $0x180] sm:$0xff] %vm1726, %v1631
      %1776 = vst.msk [vmem:[#allocation3 + $0x188] sm:$0xff] %vm1726, %v1633
      %1777 = vst.msk [vmem:[#allocation3 + $0x190] sm:$0xff] %vm1726, %v1635
      %1778 = vst.msk [vmem:[#allocation3 + $0x198] sm:$0xff] %vm1726, %v1637
      %1779 = vst.msk [vmem:[#allocation3 + $0x1a0] sm:$0xff] %vm1726, %v1639
      %1780 = vst.msk [vmem:[#allocation3 + $0x1a8] sm:$0xff] %vm1726, %v1641
      %1781 = vst.msk [vmem:[#allocation3 + $0x1b0] sm:$0xff] %vm1726, %v1643
      %1782 = vst.msk [vmem:[#allocation3 + $0x1b8] sm:$0xff] %vm1726, %v1645
      %1783 = vst.msk [vmem:[#allocation3 + $0x1c0] sm:$0xff] %vm1726, %v1647
      %1784 = vst.msk [vmem:[#allocation3 + $0x1c8] sm:$0xff] %vm1726, %v1649
      %1785 = vst.msk [vmem:[#allocation3 + $0x1d0] sm:$0xff] %vm1726, %v1651
      %1786 = vst.msk [vmem:[#allocation3 + $0x1d8] sm:$0xff] %vm1726, %v1653
      %1787 = vst.msk [vmem:[#allocation3 + $0x1e0] sm:$0xff] %vm1726, %v1655
      %1788 = vst.msk [vmem:[#allocation3 + $0x1e8] sm:$0xff] %vm1726, %v1657
      %1789 = vst.msk [vmem:[#allocation3 + $0x1f0] sm:$0xff] %vm1726, %v1659
      %1790 = vst.msk [vmem:[#allocation3 + $0x1f8] sm:$0xff] %vm1726, %v1661
      %s1791 = scalar_lea.vmem [#allocation2], 16
      %v1792 = vld [vmem:[%s1791] sm:$0xff]
      %v1793 = vld [vmem:[%s1791 + $0x8] sm:$0xff]
      %v1794 = vld [vmem:[%s1791 + $0x10] sm:$0xff]
      %v1795 = vld [vmem:[%s1791 + $0x18] sm:$0xff]
      %v1796 = vld [vmem:[%s1791 + $0x20] sm:$0xff]
      %v1797 = vld [vmem:[%s1791 + $0x28] sm:$0xff]
      %v1798 = vld [vmem:[%s1791 + $0x30] sm:$0xff]
      %v1799 = vld [vmem:[%s1791 + $0x38] sm:$0xff]
      %v1800 = vld [vmem:[%s1791 + $0x50] sm:$0xff]
      %v1801 = vld [vmem:[%s1791 + $0x58] sm:$0xff]
      %v1802 = vld [vmem:[%s1791 + $0x60] sm:$0xff]
      %v1803 = vld [vmem:[%s1791 + $0x68] sm:$0xff]
      %v1804 = vld [vmem:[%s1791 + $0x70] sm:$0xff]
      %v1805 = vld [vmem:[%s1791 + $0x78] sm:$0xff]
      %v1806 = vld [vmem:[%s1791 + $0x80] sm:$0xff]
      %v1807 = vld [vmem:[%s1791 + $0x88] sm:$0xff]
      %v1808 = vld [vmem:[%s1791 + $0xa0] sm:$0xff]
      %v1809 = vld [vmem:[%s1791 + $0xa8] sm:$0xff]
      %v1810 = vld [vmem:[%s1791 + $0xb0] sm:$0xff]
      %v1811 = vld [vmem:[%s1791 + $0xb8] sm:$0xff]
      %v1812 = vld [vmem:[%s1791 + $0xc0] sm:$0xff]
      %v1813 = vld [vmem:[%s1791 + $0xc8] sm:$0xff]
      %v1814 = vld [vmem:[%s1791 + $0xd0] sm:$0xff]
      %v1815 = vld [vmem:[%s1791 + $0xd8] sm:$0xff]
      %v1816 = vld [vmem:[%s1791 + $0xf0] sm:$0xff]
      %v1817 = vld [vmem:[%s1791 + $0xf8] sm:$0xff]
      %v1818 = vld [vmem:[%s1791 + $0x100] sm:$0xff]
      %v1819 = vld [vmem:[%s1791 + $0x108] sm:$0xff]
      %v1820 = vld [vmem:[%s1791 + $0x110] sm:$0xff]
      %v1821 = vld [vmem:[%s1791 + $0x118] sm:$0xff]
      %v1822 = vld [vmem:[%s1791 + $0x120] sm:$0xff]
      %v1823 = vld [vmem:[%s1791 + $0x128] sm:$0xff]
      %v1824 = vld [vmem:[%s1791 + $0x140] sm:$0xff]
      %v1825 = vld [vmem:[%s1791 + $0x148] sm:$0xff]
      %v1826 = vld [vmem:[%s1791 + $0x150] sm:$0xff]
      %v1827 = vld [vmem:[%s1791 + $0x158] sm:$0xff]
      %v1828 = vld [vmem:[%s1791 + $0x160] sm:$0xff]
      %v1829 = vld [vmem:[%s1791 + $0x168] sm:$0xff]
      %v1830 = vld [vmem:[%s1791 + $0x170] sm:$0xff]
      %v1831 = vld [vmem:[%s1791 + $0x178] sm:$0xff]
      %v1832 = vld [vmem:[%s1791 + $0x190] sm:$0xff]
      %v1833 = vld [vmem:[%s1791 + $0x198] sm:$0xff]
      %v1834 = vld [vmem:[%s1791 + $0x1a0] sm:$0xff]
      %v1835 = vld [vmem:[%s1791 + $0x1a8] sm:$0xff]
      %v1836 = vld [vmem:[%s1791 + $0x1b0] sm:$0xff]
      %v1837 = vld [vmem:[%s1791 + $0x1b8] sm:$0xff]
      %v1838 = vld [vmem:[%s1791 + $0x1c0] sm:$0xff]
      %v1839 = vld [vmem:[%s1791 + $0x1c8] sm:$0xff]
      %v1840 = vld [vmem:[%s1791 + $0x1e0] sm:$0xff]
      %v1841 = vld [vmem:[%s1791 + $0x1e8] sm:$0xff]
      %v1842 = vld [vmem:[%s1791 + $0x1f0] sm:$0xff]
      %v1843 = vld [vmem:[%s1791 + $0x1f8] sm:$0xff]
      %v1844 = vld [vmem:[%s1791 + $0x200] sm:$0xff]
      %v1845 = vld [vmem:[%s1791 + $0x208] sm:$0xff]
      %v1846 = vld [vmem:[%s1791 + $0x210] sm:$0xff]
      %v1847 = vld [vmem:[%s1791 + $0x218] sm:$0xff]
      %v1848 = vld [vmem:[%s1791 + $0x230] sm:$0xff]
      %v1849 = vld [vmem:[%s1791 + $0x238] sm:$0xff]
      %v1850 = vld [vmem:[%s1791 + $0x240] sm:$0xff]
      %v1851 = vld [vmem:[%s1791 + $0x248] sm:$0xff]
      %v1852 = vld [vmem:[%s1791 + $0x250] sm:$0xff]
      %v1853 = vld [vmem:[%s1791 + $0x258] sm:$0xff]
      %v1854 = vld [vmem:[%s1791 + $0x260] sm:$0xff]
      %v1855 = vld [vmem:[%s1791 + $0x268] sm:$0xff]
      %1920 = vrot.lane.b32.xlu0 %v1792, 8
      %v1921 = vpop.permute.xlu0 %1920
      %1922 = vrot.lane.b32.xlu0 %v1793, 8
      %v1923 = vpop.permute.xlu0 %1922
      %1924 = vrot.lane.b32.xlu0 %v1794, 8
      %v1925 = vpop.permute.xlu0 %1924
      %1926 = vrot.lane.b32.xlu0 %v1795, 8
      %v1927 = vpop.permute.xlu0 %1926
      %1928 = vrot.lane.b32.xlu0 %v1796, 8
      %v1929 = vpop.permute.xlu0 %1928
      %1930 = vrot.lane.b32.xlu0 %v1797, 8
      %v1931 = vpop.permute.xlu0 %1930
      %1932 = vrot.lane.b32.xlu0 %v1798, 8
      %v1933 = vpop.permute.xlu0 %1932
      %1934 = vrot.lane.b32.xlu0 %v1799, 8
      %v1935 = vpop.permute.xlu0 %1934
      %1936 = vrot.lane.b32.xlu0 %v1800, 8
      %v1937 = vpop.permute.xlu0 %1936
      %1938 = vrot.lane.b32.xlu0 %v1801, 8
      %v1939 = vpop.permute.xlu0 %1938
      %1940 = vrot.lane.b32.xlu0 %v1802, 8
      %v1941 = vpop.permute.xlu0 %1940
      %1942 = vrot.lane.b32.xlu0 %v1803, 8
      %v1943 = vpop.permute.xlu0 %1942
      %1944 = vrot.lane.b32.xlu0 %v1804, 8
      %v1945 = vpop.permute.xlu0 %1944
      %1946 = vrot.lane.b32.xlu0 %v1805, 8
      %v1947 = vpop.permute.xlu0 %1946
      %1948 = vrot.lane.b32.xlu0 %v1806, 8
      %v1949 = vpop.permute.xlu0 %1948
      %1950 = vrot.lane.b32.xlu0 %v1807, 8
      %v1951 = vpop.permute.xlu0 %1950
      %1952 = vrot.lane.b32.xlu0 %v1808, 8
      %v1953 = vpop.permute.xlu0 %1952
      %1954 = vrot.lane.b32.xlu0 %v1809, 8
      %v1955 = vpop.permute.xlu0 %1954
      %1956 = vrot.lane.b32.xlu0 %v1810, 8
      %v1957 = vpop.permute.xlu0 %1956
      %1958 = vrot.lane.b32.xlu0 %v1811, 8
      %v1959 = vpop.permute.xlu0 %1958
      %1960 = vrot.lane.b32.xlu0 %v1812, 8
      %v1961 = vpop.permute.xlu0 %1960
      %1962 = vrot.lane.b32.xlu0 %v1813, 8
      %v1963 = vpop.permute.xlu0 %1962
      %1964 = vrot.lane.b32.xlu0 %v1814, 8
      %v1965 = vpop.permute.xlu0 %1964
      %1966 = vrot.lane.b32.xlu0 %v1815, 8
      %v1967 = vpop.permute.xlu0 %1966
      %1968 = vrot.lane.b32.xlu0 %v1816, 8
      %v1969 = vpop.permute.xlu0 %1968
      %1970 = vrot.lane.b32.xlu0 %v1817, 8
      %v1971 = vpop.permute.xlu0 %1970
      %1972 = vrot.lane.b32.xlu0 %v1818, 8
      %v1973 = vpop.permute.xlu0 %1972
      %1974 = vrot.lane.b32.xlu0 %v1819, 8
      %v1975 = vpop.permute.xlu0 %1974
      %1976 = vrot.lane.b32.xlu0 %v1820, 8
      %v1977 = vpop.permute.xlu0 %1976
      %1978 = vrot.lane.b32.xlu0 %v1821, 8
      %v1979 = vpop.permute.xlu0 %1978
      %1980 = vrot.lane.b32.xlu0 %v1822, 8
      %v1981 = vpop.permute.xlu0 %1980
      %1982 = vrot.lane.b32.xlu0 %v1823, 8
      %v1983 = vpop.permute.xlu0 %1982
      %1984 = vrot.lane.b32.xlu0 %v1824, 8
      %v1985 = vpop.permute.xlu0 %1984
      %1986 = vrot.lane.b32.xlu0 %v1825, 8
      %v1987 = vpop.permute.xlu0 %1986
      %1988 = vrot.lane.b32.xlu0 %v1826, 8
      %v1989 = vpop.permute.xlu0 %1988
      %1990 = vrot.lane.b32.xlu0 %v1827, 8
      %v1991 = vpop.permute.xlu0 %1990
      %1992 = vrot.lane.b32.xlu0 %v1828, 8
      %v1993 = vpop.permute.xlu0 %1992
      %1994 = vrot.lane.b32.xlu0 %v1829, 8
      %v1995 = vpop.permute.xlu0 %1994
      %1996 = vrot.lane.b32.xlu0 %v1830, 8
      %v1997 = vpop.permute.xlu0 %1996
      %1998 = vrot.lane.b32.xlu0 %v1831, 8
      %v1999 = vpop.permute.xlu0 %1998
      %2000 = vrot.lane.b32.xlu0 %v1832, 8
      %v2001 = vpop.permute.xlu0 %2000
      %2002 = vrot.lane.b32.xlu0 %v1833, 8
      %v2003 = vpop.permute.xlu0 %2002
      %2004 = vrot.lane.b32.xlu0 %v1834, 8
      %v2005 = vpop.permute.xlu0 %2004
      %2006 = vrot.lane.b32.xlu0 %v1835, 8
      %v2007 = vpop.permute.xlu0 %2006
      %2008 = vrot.lane.b32.xlu0 %v1836, 8
      %v2009 = vpop.permute.xlu0 %2008
      %2010 = vrot.lane.b32.xlu0 %v1837, 8
      %v2011 = vpop.permute.xlu0 %2010
      %2012 = vrot.lane.b32.xlu0 %v1838, 8
      %v2013 = vpop.permute.xlu0 %2012
      %2014 = vrot.lane.b32.xlu0 %v1839, 8
      %v2015 = vpop.permute.xlu0 %2014
      %2016 = vrot.lane.b32.xlu0 %v1840, 8
      %v2017 = vpop.permute.xlu0 %2016
      %2018 = vrot.lane.b32.xlu0 %v1841, 8
      %v2019 = vpop.permute.xlu0 %2018
      %2020 = vrot.lane.b32.xlu0 %v1842, 8
      %v2021 = vpop.permute.xlu0 %2020
      %2022 = vrot.lane.b32.xlu0 %v1843, 8
      %v2023 = vpop.permute.xlu0 %2022
      %2024 = vrot.lane.b32.xlu0 %v1844, 8
      %v2025 = vpop.permute.xlu0 %2024
      %2026 = vrot.lane.b32.xlu0 %v1845, 8
      %v2027 = vpop.permute.xlu0 %2026
      %2028 = vrot.lane.b32.xlu0 %v1846, 8
      %v2029 = vpop.permute.xlu0 %2028
      %2030 = vrot.lane.b32.xlu0 %v1847, 8
      %v2031 = vpop.permute.xlu0 %2030
      %2032 = vrot.lane.b32.xlu0 %v1848, 8
      %v2033 = vpop.permute.xlu0 %2032
      %2034 = vrot.lane.b32.xlu0 %v1849, 8
      %v2035 = vpop.permute.xlu0 %2034
      %2036 = vrot.lane.b32.xlu0 %v1850, 8
      %v2037 = vpop.permute.xlu0 %2036
      %2038 = vrot.lane.b32.xlu0 %v1851, 8
      %v2039 = vpop.permute.xlu0 %2038
      %2040 = vrot.lane.b32.xlu0 %v1852, 8
      %v2041 = vpop.permute.xlu0 %2040
      %2042 = vrot.lane.b32.xlu0 %v1853, 8
      %v2043 = vpop.permute.xlu0 %2042
      %2044 = vrot.lane.b32.xlu0 %v1854, 8
      %v2045 = vpop.permute.xlu0 %2044
      %2046 = vrot.lane.b32.xlu0 %v1855, 8
      %v2047 = vpop.permute.xlu0 %2046
      %vm2112 = vcmask 97344
      %2113 = vst.msk [vmem:[#allocation3] sm:$0xff] %vm2112, %v1921
      %2114 = vst.msk [vmem:[#allocation3 + $0x8] sm:$0xff] %vm2112, %v1923
      %2115 = vst.msk [vmem:[#allocation3 + $0x10] sm:$0xff] %vm2112, %v1925
      %2116 = vst.msk [vmem:[#allocation3 + $0x18] sm:$0xff] %vm2112, %v1927
      %2117 = vst.msk [vmem:[#allocation3 + $0x20] sm:$0xff] %vm2112, %v1929
      %2118 = vst.msk [vmem:[#allocation3 + $0x28] sm:$0xff] %vm2112, %v1931
      %2119 = vst.msk [vmem:[#allocation3 + $0x30] sm:$0xff] %vm2112, %v1933
      %2120 = vst.msk [vmem:[#allocation3 + $0x38] sm:$0xff] %vm2112, %v1935
      %2121 = vst.msk [vmem:[#allocation3 + $0x40] sm:$0xff] %vm2112, %v1937
      %2122 = vst.msk [vmem:[#allocation3 + $0x48] sm:$0xff] %vm2112, %v1939
      %2123 = vst.msk [vmem:[#allocation3 + $0x50] sm:$0xff] %vm2112, %v1941
      %2124 = vst.msk [vmem:[#allocation3 + $0x58] sm:$0xff] %vm2112, %v1943
      %2125 = vst.msk [vmem:[#allocation3 + $0x60] sm:$0xff] %vm2112, %v1945
      %2126 = vst.msk [vmem:[#allocation3 + $0x68] sm:$0xff] %vm2112, %v1947
      %2127 = vst.msk [vmem:[#allocation3 + $0x70] sm:$0xff] %vm2112, %v1949
      %2128 = vst.msk [vmem:[#allocation3 + $0x78] sm:$0xff] %vm2112, %v1951
      %2129 = vst.msk [vmem:[#allocation3 + $0x80] sm:$0xff] %vm2112, %v1953
      %2130 = vst.msk [vmem:[#allocation3 + $0x88] sm:$0xff] %vm2112, %v1955
      %2131 = vst.msk [vmem:[#allocation3 + $0x90] sm:$0xff] %vm2112, %v1957
      %2132 = vst.msk [vmem:[#allocation3 + $0x98] sm:$0xff] %vm2112, %v1959
      %2133 = vst.msk [vmem:[#allocation3 + $0xa0] sm:$0xff] %vm2112, %v1961
      %2134 = vst.msk [vmem:[#allocation3 + $0xa8] sm:$0xff] %vm2112, %v1963
      %2135 = vst.msk [vmem:[#allocation3 + $0xb0] sm:$0xff] %vm2112, %v1965
      %2136 = vst.msk [vmem:[#allocation3 + $0xb8] sm:$0xff] %vm2112, %v1967
      %2137 = vst.msk [vmem:[#allocation3 + $0xc0] sm:$0xff] %vm2112, %v1969
      %2138 = vst.msk [vmem:[#allocation3 + $0xc8] sm:$0xff] %vm2112, %v1971
      %2139 = vst.msk [vmem:[#allocation3 + $0xd0] sm:$0xff] %vm2112, %v1973
      %2140 = vst.msk [vmem:[#allocation3 + $0xd8] sm:$0xff] %vm2112, %v1975
      %2141 = vst.msk [vmem:[#allocation3 + $0xe0] sm:$0xff] %vm2112, %v1977
      %2142 = vst.msk [vmem:[#allocation3 + $0xe8] sm:$0xff] %vm2112, %v1979
      %2143 = vst.msk [vmem:[#allocation3 + $0xf0] sm:$0xff] %vm2112, %v1981
      %2144 = vst.msk [vmem:[#allocation3 + $0xf8] sm:$0xff] %vm2112, %v1983
      %2145 = vst.msk [vmem:[#allocation3 + $0x100] sm:$0xff] %vm2112, %v1985
      %2146 = vst.msk [vmem:[#allocation3 + $0x108] sm:$0xff] %vm2112, %v1987
      %2147 = vst.msk [vmem:[#allocation3 + $0x110] sm:$0xff] %vm2112, %v1989
      %2148 = vst.msk [vmem:[#allocation3 + $0x118] sm:$0xff] %vm2112, %v1991
      %2149 = vst.msk [vmem:[#allocation3 + $0x120] sm:$0xff] %vm2112, %v1993
      %2150 = vst.msk [vmem:[#allocation3 + $0x128] sm:$0xff] %vm2112, %v1995
      %2151 = vst.msk [vmem:[#allocation3 + $0x130] sm:$0xff] %vm2112, %v1997
      %2152 = vst.msk [vmem:[#allocation3 + $0x138] sm:$0xff] %vm2112, %v1999
      %2153 = vst.msk [vmem:[#allocation3 + $0x140] sm:$0xff] %vm2112, %v2001
      %2154 = vst.msk [vmem:[#allocation3 + $0x148] sm:$0xff] %vm2112, %v2003
      %2155 = vst.msk [vmem:[#allocation3 + $0x150] sm:$0xff] %vm2112, %v2005
      %2156 = vst.msk [vmem:[#allocation3 + $0x158] sm:$0xff] %vm2112, %v2007
      %2157 = vst.msk [vmem:[#allocation3 + $0x160] sm:$0xff] %vm2112, %v2009
      %2158 = vst.msk [vmem:[#allocation3 + $0x168] sm:$0xff] %vm2112, %v2011
      %2159 = vst.msk [vmem:[#allocation3 + $0x170] sm:$0xff] %vm2112, %v2013
      %2160 = vst.msk [vmem:[#allocation3 + $0x178] sm:$0xff] %vm2112, %v2015
      %2161 = vst.msk [vmem:[#allocation3 + $0x180] sm:$0xff] %vm2112, %v2017
      %2162 = vst.msk [vmem:[#allocation3 + $0x188] sm:$0xff] %vm2112, %v2019
      %2163 = vst.msk [vmem:[#allocation3 + $0x190] sm:$0xff] %vm2112, %v2021
      %2164 = vst.msk [vmem:[#allocation3 + $0x198] sm:$0xff] %vm2112, %v2023
      %2165 = vst.msk [vmem:[#allocation3 + $0x1a0] sm:$0xff] %vm2112, %v2025
      %2166 = vst.msk [vmem:[#allocation3 + $0x1a8] sm:$0xff] %vm2112, %v2027
      %2167 = vst.msk [vmem:[#allocation3 + $0x1b0] sm:$0xff] %vm2112, %v2029
      %2168 = vst.msk [vmem:[#allocation3 + $0x1b8] sm:$0xff] %vm2112, %v2031
      %2169 = vst.msk [vmem:[#allocation3 + $0x1c0] sm:$0xff] %vm2112, %v2033
      %2170 = vst.msk [vmem:[#allocation3 + $0x1c8] sm:$0xff] %vm2112, %v2035
      %2171 = vst.msk [vmem:[#allocation3 + $0x1d0] sm:$0xff] %vm2112, %v2037
      %2172 = vst.msk [vmem:[#allocation3 + $0x1d8] sm:$0xff] %vm2112, %v2039
      %2173 = vst.msk [vmem:[#allocation3 + $0x1e0] sm:$0xff] %vm2112, %v2041
      %2174 = vst.msk [vmem:[#allocation3 + $0x1e8] sm:$0xff] %vm2112, %v2043
      %2175 = vst.msk [vmem:[#allocation3 + $0x1f0] sm:$0xff] %vm2112, %v2045
      %2176 = vst.msk [vmem:[#allocation3 + $0x1f8] sm:$0xff] %vm2112, %v2047
      %s2177 = scalar_lea.vmem [#allocation2], 80
      %v2178 = vld [vmem:[%s2177] sm:$0xff]
      %v2179 = vld [vmem:[%s2177 + $0x8] sm:$0xff]
      %v2180 = vld [vmem:[%s2177 + $0x10] sm:$0xff]
      %v2181 = vld [vmem:[%s2177 + $0x18] sm:$0xff]
      %v2182 = vld [vmem:[%s2177 + $0x20] sm:$0xff]
      %v2183 = vld [vmem:[%s2177 + $0x28] sm:$0xff]
      %v2184 = vld [vmem:[%s2177 + $0x30] sm:$0xff]
      %v2185 = vld [vmem:[%s2177 + $0x38] sm:$0xff]
      %v2186 = vld [vmem:[%s2177 + $0x50] sm:$0xff]
      %v2187 = vld [vmem:[%s2177 + $0x58] sm:$0xff]
      %v2188 = vld [vmem:[%s2177 + $0x60] sm:$0xff]
      %v2189 = vld [vmem:[%s2177 + $0x68] sm:$0xff]
      %v2190 = vld [vmem:[%s2177 + $0x70] sm:$0xff]
      %v2191 = vld [vmem:[%s2177 + $0x78] sm:$0xff]
      %v2192 = vld [vmem:[%s2177 + $0x80] sm:$0xff]
      %v2193 = vld [vmem:[%s2177 + $0x88] sm:$0xff]
      %v2194 = vld [vmem:[%s2177 + $0xa0] sm:$0xff]
      %v2195 = vld [vmem:[%s2177 + $0xa8] sm:$0xff]
      %v2196 = vld [vmem:[%s2177 + $0xb0] sm:$0xff]
      %v2197 = vld [vmem:[%s2177 + $0xb8] sm:$0xff]
      %v2198 = vld [vmem:[%s2177 + $0xc0] sm:$0xff]
      %v2199 = vld [vmem:[%s2177 + $0xc8] sm:$0xff]
      %v2200 = vld [vmem:[%s2177 + $0xd0] sm:$0xff]
      %v2201 = vld [vmem:[%s2177 + $0xd8] sm:$0xff]
      %v2202 = vld [vmem:[%s2177 + $0xf0] sm:$0xff]
      %v2203 = vld [vmem:[%s2177 + $0xf8] sm:$0xff]
      %v2204 = vld [vmem:[%s2177 + $0x100] sm:$0xff]
      %v2205 = vld [vmem:[%s2177 + $0x108] sm:$0xff]
      %v2206 = vld [vmem:[%s2177 + $0x110] sm:$0xff]
      %v2207 = vld [vmem:[%s2177 + $0x118] sm:$0xff]
      %v2208 = vld [vmem:[%s2177 + $0x120] sm:$0xff]
      %v2209 = vld [vmem:[%s2177 + $0x128] sm:$0xff]
      %v2210 = vld [vmem:[%s2177 + $0x140] sm:$0xff]
      %v2211 = vld [vmem:[%s2177 + $0x148] sm:$0xff]
      %v2212 = vld [vmem:[%s2177 + $0x150] sm:$0xff]
      %v2213 = vld [vmem:[%s2177 + $0x158] sm:$0xff]
      %v2214 = vld [vmem:[%s2177 + $0x160] sm:$0xff]
      %v2215 = vld [vmem:[%s2177 + $0x168] sm:$0xff]
      %v2216 = vld [vmem:[%s2177 + $0x170] sm:$0xff]
      %v2217 = vld [vmem:[%s2177 + $0x178] sm:$0xff]
      %v2218 = vld [vmem:[%s2177 + $0x190] sm:$0xff]
      %v2219 = vld [vmem:[%s2177 + $0x198] sm:$0xff]
      %v2220 = vld [vmem:[%s2177 + $0x1a0] sm:$0xff]
      %v2221 = vld [vmem:[%s2177 + $0x1a8] sm:$0xff]
      %v2222 = vld [vmem:[%s2177 + $0x1b0] sm:$0xff]
      %v2223 = vld [vmem:[%s2177 + $0x1b8] sm:$0xff]
      %v2224 = vld [vmem:[%s2177 + $0x1c0] sm:$0xff]
      %v2225 = vld [vmem:[%s2177 + $0x1c8] sm:$0xff]
      %v2226 = vld [vmem:[%s2177 + $0x1e0] sm:$0xff]
      %v2227 = vld [vmem:[%s2177 + $0x1e8] sm:$0xff]
      %v2228 = vld [vmem:[%s2177 + $0x1f0] sm:$0xff]
      %v2229 = vld [vmem:[%s2177 + $0x1f8] sm:$0xff]
      %v2230 = vld [vmem:[%s2177 + $0x200] sm:$0xff]
      %v2231 = vld [vmem:[%s2177 + $0x208] sm:$0xff]
      %v2232 = vld [vmem:[%s2177 + $0x210] sm:$0xff]
      %v2233 = vld [vmem:[%s2177 + $0x218] sm:$0xff]
      %v2234 = vld [vmem:[%s2177 + $0x230] sm:$0xff]
      %v2235 = vld [vmem:[%s2177 + $0x238] sm:$0xff]
      %v2236 = vld [vmem:[%s2177 + $0x240] sm:$0xff]
      %v2237 = vld [vmem:[%s2177 + $0x248] sm:$0xff]
      %v2238 = vld [vmem:[%s2177 + $0x250] sm:$0xff]
      %v2239 = vld [vmem:[%s2177 + $0x258] sm:$0xff]
      %v2240 = vld [vmem:[%s2177 + $0x260] sm:$0xff]
      %v2241 = vld [vmem:[%s2177 + $0x268] sm:$0xff]
      %2306 = vrot.lane.b32.xlu0 %v2178, 12
      %v2307 = vpop.permute.xlu0 %2306
      %2308 = vrot.lane.b32.xlu0 %v2179, 12
      %v2309 = vpop.permute.xlu0 %2308
      %2310 = vrot.lane.b32.xlu0 %v2180, 12
      %v2311 = vpop.permute.xlu0 %2310
      %2312 = vrot.lane.b32.xlu0 %v2181, 12
      %v2313 = vpop.permute.xlu0 %2312
      %2314 = vrot.lane.b32.xlu0 %v2182, 12
      %v2315 = vpop.permute.xlu0 %2314
      %2316 = vrot.lane.b32.xlu0 %v2183, 12
      %v2317 = vpop.permute.xlu0 %2316
      %2318 = vrot.lane.b32.xlu0 %v2184, 12
      %v2319 = vpop.permute.xlu0 %2318
      %2320 = vrot.lane.b32.xlu0 %v2185, 12
      %v2321 = vpop.permute.xlu0 %2320
      %2322 = vrot.lane.b32.xlu0 %v2186, 12
      %v2323 = vpop.permute.xlu0 %2322
      %2324 = vrot.lane.b32.xlu0 %v2187, 12
      %v2325 = vpop.permute.xlu0 %2324
      %2326 = vrot.lane.b32.xlu0 %v2188, 12
      %v2327 = vpop.permute.xlu0 %2326
      %2328 = vrot.lane.b32.xlu0 %v2189, 12
      %v2329 = vpop.permute.xlu0 %2328
      %2330 = vrot.lane.b32.xlu0 %v2190, 12
      %v2331 = vpop.permute.xlu0 %2330
      %2332 = vrot.lane.b32.xlu0 %v2191, 12
      %v2333 = vpop.permute.xlu0 %2332
      %2334 = vrot.lane.b32.xlu0 %v2192, 12
      %v2335 = vpop.permute.xlu0 %2334
      %2336 = vrot.lane.b32.xlu0 %v2193, 12
      %v2337 = vpop.permute.xlu0 %2336
      %2338 = vrot.lane.b32.xlu0 %v2194, 12
      %v2339 = vpop.permute.xlu0 %2338
      %2340 = vrot.lane.b32.xlu0 %v2195, 12
      %v2341 = vpop.permute.xlu0 %2340
      %2342 = vrot.lane.b32.xlu0 %v2196, 12
      %v2343 = vpop.permute.xlu0 %2342
      %2344 = vrot.lane.b32.xlu0 %v2197, 12
      %v2345 = vpop.permute.xlu0 %2344
      %2346 = vrot.lane.b32.xlu0 %v2198, 12
      %v2347 = vpop.permute.xlu0 %2346
      %2348 = vrot.lane.b32.xlu0 %v2199, 12
      %v2349 = vpop.permute.xlu0 %2348
      %2350 = vrot.lane.b32.xlu0 %v2200, 12
      %v2351 = vpop.permute.xlu0 %2350
      %2352 = vrot.lane.b32.xlu0 %v2201, 12
      %v2353 = vpop.permute.xlu0 %2352
      %2354 = vrot.lane.b32.xlu0 %v2202, 12
      %v2355 = vpop.permute.xlu0 %2354
      %2356 = vrot.lane.b32.xlu0 %v2203, 12
      %v2357 = vpop.permute.xlu0 %2356
      %2358 = vrot.lane.b32.xlu0 %v2204, 12
      %v2359 = vpop.permute.xlu0 %2358
      %2360 = vrot.lane.b32.xlu0 %v2205, 12
      %v2361 = vpop.permute.xlu0 %2360
      %2362 = vrot.lane.b32.xlu0 %v2206, 12
      %v2363 = vpop.permute.xlu0 %2362
      %2364 = vrot.lane.b32.xlu0 %v2207, 12
      %v2365 = vpop.permute.xlu0 %2364
      %2366 = vrot.lane.b32.xlu0 %v2208, 12
      %v2367 = vpop.permute.xlu0 %2366
      %2368 = vrot.lane.b32.xlu0 %v2209, 12
      %v2369 = vpop.permute.xlu0 %2368
      %2370 = vrot.lane.b32.xlu0 %v2210, 12
      %v2371 = vpop.permute.xlu0 %2370
      %2372 = vrot.lane.b32.xlu0 %v2211, 12
      %v2373 = vpop.permute.xlu0 %2372
      %2374 = vrot.lane.b32.xlu0 %v2212, 12
      %v2375 = vpop.permute.xlu0 %2374
      %2376 = vrot.lane.b32.xlu0 %v2213, 12
      %v2377 = vpop.permute.xlu0 %2376
      %2378 = vrot.lane.b32.xlu0 %v2214, 12
      %v2379 = vpop.permute.xlu0 %2378
      %2380 = vrot.lane.b32.xlu0 %v2215, 12
      %v2381 = vpop.permute.xlu0 %2380
      %2382 = vrot.lane.b32.xlu0 %v2216, 12
      %v2383 = vpop.permute.xlu0 %2382
      %2384 = vrot.lane.b32.xlu0 %v2217, 12
      %v2385 = vpop.permute.xlu0 %2384
      %2386 = vrot.lane.b32.xlu0 %v2218, 12
      %v2387 = vpop.permute.xlu0 %2386
      %2388 = vrot.lane.b32.xlu0 %v2219, 12
      %v2389 = vpop.permute.xlu0 %2388
      %2390 = vrot.lane.b32.xlu0 %v2220, 12
      %v2391 = vpop.permute.xlu0 %2390
      %2392 = vrot.lane.b32.xlu0 %v2221, 12
      %v2393 = vpop.permute.xlu0 %2392
      %2394 = vrot.lane.b32.xlu0 %v2222, 12
      %v2395 = vpop.permute.xlu0 %2394
      %2396 = vrot.lane.b32.xlu0 %v2223, 12
      %v2397 = vpop.permute.xlu0 %2396
      %2398 = vrot.lane.b32.xlu0 %v2224, 12
      %v2399 = vpop.permute.xlu0 %2398
      %2400 = vrot.lane.b32.xlu0 %v2225, 12
      %v2401 = vpop.permute.xlu0 %2400
      %2402 = vrot.lane.b32.xlu0 %v2226, 12
      %v2403 = vpop.permute.xlu0 %2402
      %2404 = vrot.lane.b32.xlu0 %v2227, 12
      %v2405 = vpop.permute.xlu0 %2404
      %2406 = vrot.lane.b32.xlu0 %v2228, 12
      %v2407 = vpop.permute.xlu0 %2406
      %2408 = vrot.lane.b32.xlu0 %v2229, 12
      %v2409 = vpop.permute.xlu0 %2408
      %2410 = vrot.lane.b32.xlu0 %v2230, 12
      %v2411 = vpop.permute.xlu0 %2410
      %2412 = vrot.lane.b32.xlu0 %v2231, 12
      %v2413 = vpop.permute.xlu0 %2412
      %2414 = vrot.lane.b32.xlu0 %v2232, 12
      %v2415 = vpop.permute.xlu0 %2414
      %2416 = vrot.lane.b32.xlu0 %v2233, 12
      %v2417 = vpop.permute.xlu0 %2416
      %2418 = vrot.lane.b32.xlu0 %v2234, 12
      %v2419 = vpop.permute.xlu0 %2418
      %2420 = vrot.lane.b32.xlu0 %v2235, 12
      %v2421 = vpop.permute.xlu0 %2420
      %2422 = vrot.lane.b32.xlu0 %v2236, 12
      %v2423 = vpop.permute.xlu0 %2422
      %2424 = vrot.lane.b32.xlu0 %v2237, 12
      %v2425 = vpop.permute.xlu0 %2424
      %2426 = vrot.lane.b32.xlu0 %v2238, 12
      %v2427 = vpop.permute.xlu0 %2426
      %2428 = vrot.lane.b32.xlu0 %v2239, 12
      %v2429 = vpop.permute.xlu0 %2428
      %2430 = vrot.lane.b32.xlu0 %v2240, 12
      %v2431 = vpop.permute.xlu0 %2430
      %2432 = vrot.lane.b32.xlu0 %v2241, 12
      %v2433 = vpop.permute.xlu0 %2432
      %vm2498 = vcmask 130144
      %2499 = vst.msk [vmem:[#allocation3] sm:$0xff] %vm2498, %v2307
      %2500 = vst.msk [vmem:[#allocation3 + $0x8] sm:$0xff] %vm2498, %v2309
      %2501 = vst.msk [vmem:[#allocation3 + $0x10] sm:$0xff] %vm2498, %v2311
      %2502 = vst.msk [vmem:[#allocation3 + $0x18] sm:$0xff] %vm2498, %v2313
      %2503 = vst.msk [vmem:[#allocation3 + $0x20] sm:$0xff] %vm2498, %v2315
      %2504 = vst.msk [vmem:[#allocation3 + $0x28] sm:$0xff] %vm2498, %v2317
      %2505 = vst.msk [vmem:[#allocation3 + $0x30] sm:$0xff] %vm2498, %v2319
      %2506 = vst.msk [vmem:[#allocation3 + $0x38] sm:$0xff] %vm2498, %v2321
      %2507 = vst.msk [vmem:[#allocation3 + $0x40] sm:$0xff] %vm2498, %v2323
      %2508 = vst.msk [vmem:[#allocation3 + $0x48] sm:$0xff] %vm2498, %v2325
      %2509 = vst.msk [vmem:[#allocation3 + $0x50] sm:$0xff] %vm2498, %v2327
      %2510 = vst.msk [vmem:[#allocation3 + $0x58] sm:$0xff] %vm2498, %v2329
      %2511 = vst.msk [vmem:[#allocation3 + $0x60] sm:$0xff] %vm2498, %v2331
      %2512 = vst.msk [vmem:[#allocation3 + $0x68] sm:$0xff] %vm2498, %v2333
      %2513 = vst.msk [vmem:[#allocation3 + $0x70] sm:$0xff] %vm2498, %v2335
      %2514 = vst.msk [vmem:[#allocation3 + $0x78] sm:$0xff] %vm2498, %v2337
      %2515 = vst.msk [vmem:[#allocation3 + $0x80] sm:$0xff] %vm2498, %v2339
      %2516 = vst.msk [vmem:[#allocation3 + $0x88] sm:$0xff] %vm2498, %v2341
      %2517 = vst.msk [vmem:[#allocation3 + $0x90] sm:$0xff] %vm2498, %v2343
      %2518 = vst.msk [vmem:[#allocation3 + $0x98] sm:$0xff] %vm2498, %v2345
      %2519 = vst.msk [vmem:[#allocation3 + $0xa0] sm:$0xff] %vm2498, %v2347
      %2520 = vst.msk [vmem:[#allocation3 + $0xa8] sm:$0xff] %vm2498, %v2349
      %2521 = vst.msk [vmem:[#allocation3 + $0xb0] sm:$0xff] %vm2498, %v2351
      %2522 = vst.msk [vmem:[#allocation3 + $0xb8] sm:$0xff] %vm2498, %v2353
      %2523 = vst.msk [vmem:[#allocation3 + $0xc0] sm:$0xff] %vm2498, %v2355
      %2524 = vst.msk [vmem:[#allocation3 + $0xc8] sm:$0xff] %vm2498, %v2357
      %2525 = vst.msk [vmem:[#allocation3 + $0xd0] sm:$0xff] %vm2498, %v2359
      %2526 = vst.msk [vmem:[#allocation3 + $0xd8] sm:$0xff] %vm2498, %v2361
      %2527 = vst.msk [vmem:[#allocation3 + $0xe0] sm:$0xff] %vm2498, %v2363
      %2528 = vst.msk [vmem:[#allocation3 + $0xe8] sm:$0xff] %vm2498, %v2365
      %2529 = vst.msk [vmem:[#allocation3 + $0xf0] sm:$0xff] %vm2498, %v2367
      %2530 = vst.msk [vmem:[#allocation3 + $0xf8] sm:$0xff] %vm2498, %v2369
      %2531 = vst.msk [vmem:[#allocation3 + $0x100] sm:$0xff] %vm2498, %v2371
      %2532 = vst.msk [vmem:[#allocation3 + $0x108] sm:$0xff] %vm2498, %v2373
      %2533 = vst.msk [vmem:[#allocation3 + $0x110] sm:$0xff] %vm2498, %v2375
      %2534 = vst.msk [vmem:[#allocation3 + $0x118] sm:$0xff] %vm2498, %v2377
      %2535 = vst.msk [vmem:[#allocation3 + $0x120] sm:$0xff] %vm2498, %v2379
      %2536 = vst.msk [vmem:[#allocation3 + $0x128] sm:$0xff] %vm2498, %v2381
      %2537 = vst.msk [vmem:[#allocation3 + $0x130] sm:$0xff] %vm2498, %v2383
      %2538 = vst.msk [vmem:[#allocation3 + $0x138] sm:$0xff] %vm2498, %v2385
      %2539 = vst.msk [vmem:[#allocation3 + $0x140] sm:$0xff] %vm2498, %v2387
      %2540 = vst.msk [vmem:[#allocation3 + $0x148] sm:$0xff] %vm2498, %v2389
      %2541 = vst.msk [vmem:[#allocation3 + $0x150] sm:$0xff] %vm2498, %v2391
      %2542 = vst.msk [vmem:[#allocation3 + $0x158] sm:$0xff] %vm2498, %v2393
      %2543 = vst.msk [vmem:[#allocation3 + $0x160] sm:$0xff] %vm2498, %v2395
      %2544 = vst.msk [vmem:[#allocation3 + $0x168] sm:$0xff] %vm2498, %v2397
      %2545 = vst.msk [vmem:[#allocation3 + $0x170] sm:$0xff] %vm2498, %v2399
      %2546 = vst.msk [vmem:[#allocation3 + $0x178] sm:$0xff] %vm2498, %v2401
      %2547 = vst.msk [vmem:[#allocation3 + $0x180] sm:$0xff] %vm2498, %v2403
      %2548 = vst.msk [vmem:[#allocation3 + $0x188] sm:$0xff] %vm2498, %v2405
      %2549 = vst.msk [vmem:[#allocation3 + $0x190] sm:$0xff] %vm2498, %v2407
      %2550 = vst.msk [vmem:[#allocation3 + $0x198] sm:$0xff] %vm2498, %v2409
      %2551 = vst.msk [vmem:[#allocation3 + $0x1a0] sm:$0xff] %vm2498, %v2411
      %2552 = vst.msk [vmem:[#allocation3 + $0x1a8] sm:$0xff] %vm2498, %v2413
      %2553 = vst.msk [vmem:[#allocation3 + $0x1b0] sm:$0xff] %vm2498, %v2415
      %2554 = vst.msk [vmem:[#allocation3 + $0x1b8] sm:$0xff] %vm2498, %v2417
      %2555 = vst.msk [vmem:[#allocation3 + $0x1c0] sm:$0xff] %vm2498, %v2419
      %2556 = vst.msk [vmem:[#allocation3 + $0x1c8] sm:$0xff] %vm2498, %v2421
      %2557 = vst.msk [vmem:[#allocation3 + $0x1d0] sm:$0xff] %vm2498, %v2423
      %2558 = vst.msk [vmem:[#allocation3 + $0x1d8] sm:$0xff] %vm2498, %v2425
      %2559 = vst.msk [vmem:[#allocation3 + $0x1e0] sm:$0xff] %vm2498, %v2427
      %2560 = vst.msk [vmem:[#allocation3 + $0x1e8] sm:$0xff] %vm2498, %v2429
      %2561 = vst.msk [vmem:[#allocation3 + $0x1f0] sm:$0xff] %vm2498, %v2431
      %2562 = vst.msk [vmem:[#allocation3 + $0x1f8] sm:$0xff] %vm2498, %v2433
      %v2563 = vld [vmem:[%s1212] sm:$0xff]
      %v2564 = vld [vmem:[%s1212 + $0x8] sm:$0xff]
      %v2565 = vld [vmem:[%s1212 + $0x10] sm:$0xff]
      %v2566 = vld [vmem:[%s1212 + $0x18] sm:$0xff]
      %v2567 = vld [vmem:[%s1212 + $0x20] sm:$0xff]
      %v2568 = vld [vmem:[%s1212 + $0x28] sm:$0xff]
      %v2569 = vld [vmem:[%s1212 + $0x30] sm:$0xff]
      %v2570 = vld [vmem:[%s1212 + $0x38] sm:$0xff]
      %v2571 = vld [vmem:[%s1212 + $0x50] sm:$0xff]
      %v2572 = vld [vmem:[%s1212 + $0x58] sm:$0xff]
      %v2573 = vld [vmem:[%s1212 + $0x60] sm:$0xff]
      %v2574 = vld [vmem:[%s1212 + $0x68] sm:$0xff]
      %v2575 = vld [vmem:[%s1212 + $0x70] sm:$0xff]
      %v2576 = vld [vmem:[%s1212 + $0x78] sm:$0xff]
      %v2577 = vld [vmem:[%s1212 + $0x80] sm:$0xff]
      %v2578 = vld [vmem:[%s1212 + $0x88] sm:$0xff]
      %v2579 = vld [vmem:[%s1212 + $0xa0] sm:$0xff]
      %v2580 = vld [vmem:[%s1212 + $0xa8] sm:$0xff]
      %v2581 = vld [vmem:[%s1212 + $0xb0] sm:$0xff]
      %v2582 = vld [vmem:[%s1212 + $0xb8] sm:$0xff]
      %v2583 = vld [vmem:[%s1212 + $0xc0] sm:$0xff]
      %v2584 = vld [vmem:[%s1212 + $0xc8] sm:$0xff]
      %v2585 = vld [vmem:[%s1212 + $0xd0] sm:$0xff]
      %v2586 = vld [vmem:[%s1212 + $0xd8] sm:$0xff]
      %v2587 = vld [vmem:[%s1212 + $0xf0] sm:$0xff]
      %v2588 = vld [vmem:[%s1212 + $0xf8] sm:$0xff]
      %v2589 = vld [vmem:[%s1212 + $0x100] sm:$0xff]
      %v2590 = vld [vmem:[%s1212 + $0x108] sm:$0xff]
      %v2591 = vld [vmem:[%s1212 + $0x110] sm:$0xff]
      %v2592 = vld [vmem:[%s1212 + $0x118] sm:$0xff]
      %v2593 = vld [vmem:[%s1212 + $0x120] sm:$0xff]
      %v2594 = vld [vmem:[%s1212 + $0x128] sm:$0xff]
      %v2595 = vld [vmem:[%s1212 + $0x140] sm:$0xff]
      %v2596 = vld [vmem:[%s1212 + $0x148] sm:$0xff]
      %v2597 = vld [vmem:[%s1212 + $0x150] sm:$0xff]
      %v2598 = vld [vmem:[%s1212 + $0x158] sm:$0xff]
      %v2599 = vld [vmem:[%s1212 + $0x160] sm:$0xff]
      %v2600 = vld [vmem:[%s1212 + $0x168] sm:$0xff]
      %v2601 = vld [vmem:[%s1212 + $0x170] sm:$0xff]
      %v2602 = vld [vmem:[%s1212 + $0x178] sm:$0xff]
      %v2603 = vld [vmem:[%s1212 + $0x190] sm:$0xff]
      %v2604 = vld [vmem:[%s1212 + $0x198] sm:$0xff]
      %v2605 = vld [vmem:[%s1212 + $0x1a0] sm:$0xff]
      %v2606 = vld [vmem:[%s1212 + $0x1a8] sm:$0xff]
      %v2607 = vld [vmem:[%s1212 + $0x1b0] sm:$0xff]
      %v2608 = vld [vmem:[%s1212 + $0x1b8] sm:$0xff]
      %v2609 = vld [vmem:[%s1212 + $0x1c0] sm:$0xff]
      %v2610 = vld [vmem:[%s1212 + $0x1c8] sm:$0xff]
      %v2611 = vld [vmem:[%s1212 + $0x1e0] sm:$0xff]
      %v2612 = vld [vmem:[%s1212 + $0x1e8] sm:$0xff]
      %v2613 = vld [vmem:[%s1212 + $0x1f0] sm:$0xff]
      %v2614 = vld [vmem:[%s1212 + $0x1f8] sm:$0xff]
      %v2615 = vld [vmem:[%s1212 + $0x200] sm:$0xff]
      %v2616 = vld [vmem:[%s1212 + $0x208] sm:$0xff]
      %v2617 = vld [vmem:[%s1212 + $0x210] sm:$0xff]
      %v2618 = vld [vmem:[%s1212 + $0x218] sm:$0xff]
      %v2619 = vld [vmem:[%s1212 + $0x230] sm:$0xff]
      %v2620 = vld [vmem:[%s1212 + $0x238] sm:$0xff]
      %v2621 = vld [vmem:[%s1212 + $0x240] sm:$0xff]
      %v2622 = vld [vmem:[%s1212 + $0x248] sm:$0xff]
      %v2623 = vld [vmem:[%s1212 + $0x250] sm:$0xff]
      %v2624 = vld [vmem:[%s1212 + $0x258] sm:$0xff]
      %v2625 = vld [vmem:[%s1212 + $0x260] sm:$0xff]
      %v2626 = vld [vmem:[%s1212 + $0x268] sm:$0xff]
      %2691 = vrot.lane.b32.xlu0 %v2563, 16
      %v2692 = vpop.permute.xlu0 %2691
      %2693 = vrot.lane.b32.xlu0 %v2564, 16
      %v2694 = vpop.permute.xlu0 %2693
      %2695 = vrot.lane.b32.xlu0 %v2565, 16
      %v2696 = vpop.permute.xlu0 %2695
      %2697 = vrot.lane.b32.xlu0 %v2566, 16
      %v2698 = vpop.permute.xlu0 %2697
      %2699 = vrot.lane.b32.xlu0 %v2567, 16
      %v2700 = vpop.permute.xlu0 %2699
      %2701 = vrot.lane.b32.xlu0 %v2568, 16
      %v2702 = vpop.permute.xlu0 %2701
      %2703 = vrot.lane.b32.xlu0 %v2569, 16
      %v2704 = vpop.permute.xlu0 %2703
      %2705 = vrot.lane.b32.xlu0 %v2570, 16
      %v2706 = vpop.permute.xlu0 %2705
      %2707 = vrot.lane.b32.xlu0 %v2571, 16
      %v2708 = vpop.permute.xlu0 %2707
      %2709 = vrot.lane.b32.xlu0 %v2572, 16
      %v2710 = vpop.permute.xlu0 %2709
      %2711 = vrot.lane.b32.xlu0 %v2573, 16
      %v2712 = vpop.permute.xlu0 %2711
      %2713 = vrot.lane.b32.xlu0 %v2574, 16
      %v2714 = vpop.permute.xlu0 %2713
      %2715 = vrot.lane.b32.xlu0 %v2575, 16
      %v2716 = vpop.permute.xlu0 %2715
      %2717 = vrot.lane.b32.xlu0 %v2576, 16
      %v2718 = vpop.permute.xlu0 %2717
      %2719 = vrot.lane.b32.xlu0 %v2577, 16
      %v2720 = vpop.permute.xlu0 %2719
      %2721 = vrot.lane.b32.xlu0 %v2578, 16
      %v2722 = vpop.permute.xlu0 %2721
      %2723 = vrot.lane.b32.xlu0 %v2579, 16
      %v2724 = vpop.permute.xlu0 %2723
      %2725 = vrot.lane.b32.xlu0 %v2580, 16
      %v2726 = vpop.permute.xlu0 %2725
      %2727 = vrot.lane.b32.xlu0 %v2581, 16
      %v2728 = vpop.permute.xlu0 %2727
      %2729 = vrot.lane.b32.xlu0 %v2582, 16
      %v2730 = vpop.permute.xlu0 %2729
      %2731 = vrot.lane.b32.xlu0 %v2583, 16
      %v2732 = vpop.permute.xlu0 %2731
      %2733 = vrot.lane.b32.xlu0 %v2584, 16
      %v2734 = vpop.permute.xlu0 %2733
      %2735 = vrot.lane.b32.xlu0 %v2585, 16
      %v2736 = vpop.permute.xlu0 %2735
      %2737 = vrot.lane.b32.xlu0 %v2586, 16
      %v2738 = vpop.permute.xlu0 %2737
      %2739 = vrot.lane.b32.xlu0 %v2587, 16
      %v2740 = vpop.permute.xlu0 %2739
      %2741 = vrot.lane.b32.xlu0 %v2588, 16
      %v2742 = vpop.permute.xlu0 %2741
      %2743 = vrot.lane.b32.xlu0 %v2589, 16
      %v2744 = vpop.permute.xlu0 %2743
      %2745 = vrot.lane.b32.xlu0 %v2590, 16
      %v2746 = vpop.permute.xlu0 %2745
      %2747 = vrot.lane.b32.xlu0 %v2591, 16
      %v2748 = vpop.permute.xlu0 %2747
      %2749 = vrot.lane.b32.xlu0 %v2592, 16
      %v2750 = vpop.permute.xlu0 %2749
      %2751 = vrot.lane.b32.xlu0 %v2593, 16
      %v2752 = vpop.permute.xlu0 %2751
      %2753 = vrot.lane.b32.xlu0 %v2594, 16
      %v2754 = vpop.permute.xlu0 %2753
      %2755 = vrot.lane.b32.xlu0 %v2595, 16
      %v2756 = vpop.permute.xlu0 %2755
      %2757 = vrot.lane.b32.xlu0 %v2596, 16
      %v2758 = vpop.permute.xlu0 %2757
      %2759 = vrot.lane.b32.xlu0 %v2597, 16
      %v2760 = vpop.permute.xlu0 %2759
      %2761 = vrot.lane.b32.xlu0 %v2598, 16
      %v2762 = vpop.permute.xlu0 %2761
      %2763 = vrot.lane.b32.xlu0 %v2599, 16
      %v2764 = vpop.permute.xlu0 %2763
      %2765 = vrot.lane.b32.xlu0 %v2600, 16
      %v2766 = vpop.permute.xlu0 %2765
      %2767 = vrot.lane.b32.xlu0 %v2601, 16
      %v2768 = vpop.permute.xlu0 %2767
      %2769 = vrot.lane.b32.xlu0 %v2602, 16
      %v2770 = vpop.permute.xlu0 %2769
      %2771 = vrot.lane.b32.xlu0 %v2603, 16
      %v2772 = vpop.permute.xlu0 %2771
      %2773 = vrot.lane.b32.xlu0 %v2604, 16
      %v2774 = vpop.permute.xlu0 %2773
      %2775 = vrot.lane.b32.xlu0 %v2605, 16
      %v2776 = vpop.permute.xlu0 %2775
      %2777 = vrot.lane.b32.xlu0 %v2606, 16
      %v2778 = vpop.permute.xlu0 %2777
      %2779 = vrot.lane.b32.xlu0 %v2607, 16
      %v2780 = vpop.permute.xlu0 %2779
      %2781 = vrot.lane.b32.xlu0 %v2608, 16
      %v2782 = vpop.permute.xlu0 %2781
      %2783 = vrot.lane.b32.xlu0 %v2609, 16
      %v2784 = vpop.permute.xlu0 %2783
      %2785 = vrot.lane.b32.xlu0 %v2610, 16
      %v2786 = vpop.permute.xlu0 %2785
      %2787 = vrot.lane.b32.xlu0 %v2611, 16
      %v2788 = vpop.permute.xlu0 %2787
      %2789 = vrot.lane.b32.xlu0 %v2612, 16
      %v2790 = vpop.permute.xlu0 %2789
      %2791 = vrot.lane.b32.xlu0 %v2613, 16
      %v2792 = vpop.permute.xlu0 %2791
      %2793 = vrot.lane.b32.xlu0 %v2614, 16
      %v2794 = vpop.permute.xlu0 %2793
      %2795 = vrot.lane.b32.xlu0 %v2615, 16
      %v2796 = vpop.permute.xlu0 %2795
      %2797 = vrot.lane.b32.xlu0 %v2616, 16
      %v2798 = vpop.permute.xlu0 %2797
      %2799 = vrot.lane.b32.xlu0 %v2617, 16
      %v2800 = vpop.permute.xlu0 %2799
      %2801 = vrot.lane.b32.xlu0 %v2618, 16
      %v2802 = vpop.permute.xlu0 %2801
      %2803 = vrot.lane.b32.xlu0 %v2619, 16
      %v2804 = vpop.permute.xlu0 %2803
      %2805 = vrot.lane.b32.xlu0 %v2620, 16
      %v2806 = vpop.permute.xlu0 %2805
      %2807 = vrot.lane.b32.xlu0 %v2621, 16
      %v2808 = vpop.permute.xlu0 %2807
      %2809 = vrot.lane.b32.xlu0 %v2622, 16
      %v2810 = vpop.permute.xlu0 %2809
      %2811 = vrot.lane.b32.xlu0 %v2623, 16
      %v2812 = vpop.permute.xlu0 %2811
      %2813 = vrot.lane.b32.xlu0 %v2624, 16
      %v2814 = vpop.permute.xlu0 %2813
      %2815 = vrot.lane.b32.xlu0 %v2625, 16
      %v2816 = vpop.permute.xlu0 %2815
      %2817 = vrot.lane.b32.xlu0 %v2626, 16
      %v2818 = vpop.permute.xlu0 %2817
      %vm2883 = vcmask 162944
      %2884 = vst.msk [vmem:[#allocation3] sm:$0xff] %vm2883, %v2692
      %2885 = vst.msk [vmem:[#allocation3 + $0x8] sm:$0xff] %vm2883, %v2694
      %2886 = vst.msk [vmem:[#allocation3 + $0x10] sm:$0xff] %vm2883, %v2696
      %2887 = vst.msk [vmem:[#allocation3 + $0x18] sm:$0xff] %vm2883, %v2698
      %2888 = vst.msk [vmem:[#allocation3 + $0x20] sm:$0xff] %vm2883, %v2700
      %2889 = vst.msk [vmem:[#allocation3 + $0x28] sm:$0xff] %vm2883, %v2702
      %2890 = vst.msk [vmem:[#allocation3 + $0x30] sm:$0xff] %vm2883, %v2704
      %2891 = vst.msk [vmem:[#allocation3 + $0x38] sm:$0xff] %vm2883, %v2706
      %2892 = vst.msk [vmem:[#allocation3 + $0x40] sm:$0xff] %vm2883, %v2708
      %2893 = vst.msk [vmem:[#allocation3 + $0x48] sm:$0xff] %vm2883, %v2710
      %2894 = vst.msk [vmem:[#allocation3 + $0x50] sm:$0xff] %vm2883, %v2712
      %2895 = vst.msk [vmem:[#allocation3 + $0x58] sm:$0xff] %vm2883, %v2714
      %2896 = vst.msk [vmem:[#allocation3 + $0x60] sm:$0xff] %vm2883, %v2716
      %2897 = vst.msk [vmem:[#allocation3 + $0x68] sm:$0xff] %vm2883, %v2718
      %2898 = vst.msk [vmem:[#allocation3 + $0x70] sm:$0xff] %vm2883, %v2720
      %2899 = vst.msk [vmem:[#allocation3 + $0x78] sm:$0xff] %vm2883, %v2722
      %2900 = vst.msk [vmem:[#allocation3 + $0x80] sm:$0xff] %vm2883, %v2724
      %2901 = vst.msk [vmem:[#allocation3 + $0x88] sm:$0xff] %vm2883, %v2726
      %2902 = vst.msk [vmem:[#allocation3 + $0x90] sm:$0xff] %vm2883, %v2728
      %2903 = vst.msk [vmem:[#allocation3 + $0x98] sm:$0xff] %vm2883, %v2730
      %2904 = vst.msk [vmem:[#allocation3 + $0xa0] sm:$0xff] %vm2883, %v2732
      %2905 = vst.msk [vmem:[#allocation3 + $0xa8] sm:$0xff] %vm2883, %v2734
      %2906 = vst.msk [vmem:[#allocation3 + $0xb0] sm:$0xff] %vm2883, %v2736
      %2907 = vst.msk [vmem:[#allocation3 + $0xb8] sm:$0xff] %vm2883, %v2738
      %2908 = vst.msk [vmem:[#allocation3 + $0xc0] sm:$0xff] %vm2883, %v2740
      %2909 = vst.msk [vmem:[#allocation3 + $0xc8] sm:$0xff] %vm2883, %v2742
      %2910 = vst.msk [vmem:[#allocation3 + $0xd0] sm:$0xff] %vm2883, %v2744
      %2911 = vst.msk [vmem:[#allocation3 + $0xd8] sm:$0xff] %vm2883, %v2746
      %2912 = vst.msk [vmem:[#allocation3 + $0xe0] sm:$0xff] %vm2883, %v2748
      %2913 = vst.msk [vmem:[#allocation3 + $0xe8] sm:$0xff] %vm2883, %v2750
      %2914 = vst.msk [vmem:[#allocation3 + $0xf0] sm:$0xff] %vm2883, %v2752
      %2915 = vst.msk [vmem:[#allocation3 + $0xf8] sm:$0xff] %vm2883, %v2754
      %2916 = vst.msk [vmem:[#allocation3 + $0x100] sm:$0xff] %vm2883, %v2756
      %2917 = vst.msk [vmem:[#allocation3 + $0x108] sm:$0xff] %vm2883, %v2758
      %2918 = vst.msk [vmem:[#allocation3 + $0x110] sm:$0xff] %vm2883, %v2760
      %2919 = vst.msk [vmem:[#allocation3 + $0x118] sm:$0xff] %vm2883, %v2762
      %2920 = vst.msk [vmem:[#allocation3 + $0x120] sm:$0xff] %vm2883, %v2764
      %2921 = vst.msk [vmem:[#allocation3 + $0x128] sm:$0xff] %vm2883, %v2766
      %2922 = vst.msk [vmem:[#allocation3 + $0x130] sm:$0xff] %vm2883, %v2768
      %2923 = vst.msk [vmem:[#allocation3 + $0x138] sm:$0xff] %vm2883, %v2770
      %2924 = vst.msk [vmem:[#allocation3 + $0x140] sm:$0xff] %vm2883, %v2772
      %2925 = vst.msk [vmem:[#allocation3 + $0x148] sm:$0xff] %vm2883, %v2774
      %2926 = vst.msk [vmem:[#allocation3 + $0x150] sm:$0xff] %vm2883, %v2776
      %2927 = vst.msk [vmem:[#allocation3 + $0x158] sm:$0xff] %vm2883, %v2778
      %2928 = vst.msk [vmem:[#allocation3 + $0x160] sm:$0xff] %vm2883, %v2780
      %2929 = vst.msk [vmem:[#allocation3 + $0x168] sm:$0xff] %vm2883, %v2782
      %2930 = vst.msk [vmem:[#allocation3 + $0x170] sm:$0xff] %vm2883, %v2784
      %2931 = vst.msk [vmem:[#allocation3 + $0x178] sm:$0xff] %vm2883, %v2786
      %2932 = vst.msk [vmem:[#allocation3 + $0x180] sm:$0xff] %vm2883, %v2788
      %2933 = vst.msk [vmem:[#allocation3 + $0x188] sm:$0xff] %vm2883, %v2790
      %2934 = vst.msk [vmem:[#allocation3 + $0x190] sm:$0xff] %vm2883, %v2792
      %2935 = vst.msk [vmem:[#allocation3 + $0x198] sm:$0xff] %vm2883, %v2794
      %2936 = vst.msk [vmem:[#allocation3 + $0x1a0] sm:$0xff] %vm2883, %v2796
      %2937 = vst.msk [vmem:[#allocation3 + $0x1a8] sm:$0xff] %vm2883, %v2798
      %2938 = vst.msk [vmem:[#allocation3 + $0x1b0] sm:$0xff] %vm2883, %v2800
      %2939 = vst.msk [vmem:[#allocation3 + $0x1b8] sm:$0xff] %vm2883, %v2802
      %2940 = vst.msk [vmem:[#allocation3 + $0x1c0] sm:$0xff] %vm2883, %v2804
      %2941 = vst.msk [vmem:[#allocation3 + $0x1c8] sm:$0xff] %vm2883, %v2806
      %2942 = vst.msk [vmem:[#allocation3 + $0x1d0] sm:$0xff] %vm2883, %v2808
      %2943 = vst.msk [vmem:[#allocation3 + $0x1d8] sm:$0xff] %vm2883, %v2810
      %2944 = vst.msk [vmem:[#allocation3 + $0x1e0] sm:$0xff] %vm2883, %v2812
      %2945 = vst.msk [vmem:[#allocation3 + $0x1e8] sm:$0xff] %vm2883, %v2814
      %2946 = vst.msk [vmem:[#allocation3 + $0x1f0] sm:$0xff] %vm2883, %v2816
      %2947 = vst.msk [vmem:[#allocation3 + $0x1f8] sm:$0xff] %vm2883, %v2818
      %s2948 = scalar_lea.vmem [#allocation2], 96
      %v2949 = vld [vmem:[%s2948] sm:$0xff]
      %v2950 = vld [vmem:[%s2948 + $0x8] sm:$0xff]
      %v2951 = vld [vmem:[%s2948 + $0x10] sm:$0xff]
      %v2952 = vld [vmem:[%s2948 + $0x18] sm:$0xff]
      %v2953 = vld [vmem:[%s2948 + $0x20] sm:$0xff]
      %v2954 = vld [vmem:[%s2948 + $0x28] sm:$0xff]
      %v2955 = vld [vmem:[%s2948 + $0x30] sm:$0xff]
      %v2956 = vld [vmem:[%s2948 + $0x38] sm:$0xff]
      %v2957 = vld [vmem:[%s2948 + $0x50] sm:$0xff]
      %v2958 = vld [vmem:[%s2948 + $0x58] sm:$0xff]
      %v2959 = vld [vmem:[%s2948 + $0x60] sm:$0xff]
      %v2960 = vld [vmem:[%s2948 + $0x68] sm:$0xff]
      %v2961 = vld [vmem:[%s2948 + $0x70] sm:$0xff]
      %v2962 = vld [vmem:[%s2948 + $0x78] sm:$0xff]
      %v2963 = vld [vmem:[%s2948 + $0x80] sm:$0xff]
      %v2964 = vld [vmem:[%s2948 + $0x88] sm:$0xff]
      %v2965 = vld [vmem:[%s2948 + $0xa0] sm:$0xff]
      %v2966 = vld [vmem:[%s2948 + $0xa8] sm:$0xff]
      %v2967 = vld [vmem:[%s2948 + $0xb0] sm:$0xff]
      %v2968 = vld [vmem:[%s2948 + $0xb8] sm:$0xff]
      %v2969 = vld [vmem:[%s2948 + $0xc0] sm:$0xff]
      %v2970 = vld [vmem:[%s2948 + $0xc8] sm:$0xff]
      %v2971 = vld [vmem:[%s2948 + $0xd0] sm:$0xff]
      %v2972 = vld [vmem:[%s2948 + $0xd8] sm:$0xff]
      %v2973 = vld [vmem:[%s2948 + $0xf0] sm:$0xff]
      %v2974 = vld [vmem:[%s2948 + $0xf8] sm:$0xff]
      %v2975 = vld [vmem:[%s2948 + $0x100] sm:$0xff]
      %v2976 = vld [vmem:[%s2948 + $0x108] sm:$0xff]
      %v2977 = vld [vmem:[%s2948 + $0x110] sm:$0xff]
      %v2978 = vld [vmem:[%s2948 + $0x118] sm:$0xff]
      %v2979 = vld [vmem:[%s2948 + $0x120] sm:$0xff]
      %v2980 = vld [vmem:[%s2948 + $0x128] sm:$0xff]
      %v2981 = vld [vmem:[%s2948 + $0x140] sm:$0xff]
      %v2982 = vld [vmem:[%s2948 + $0x148] sm:$0xff]
      %v2983 = vld [vmem:[%s2948 + $0x150] sm:$0xff]
      %v2984 = vld [vmem:[%s2948 + $0x158] sm:$0xff]
      %v2985 = vld [vmem:[%s2948 + $0x160] sm:$0xff]
      %v2986 = vld [vmem:[%s2948 + $0x168] sm:$0xff]
      %v2987 = vld [vmem:[%s2948 + $0x170] sm:$0xff]
      %v2988 = vld [vmem:[%s2948 + $0x178] sm:$0xff]
      %v2989 = vld [vmem:[%s2948 + $0x190] sm:$0xff]
      %v2990 = vld [vmem:[%s2948 + $0x198] sm:$0xff]
      %v2991 = vld [vmem:[%s2948 + $0x1a0] sm:$0xff]
      %v2992 = vld [vmem:[%s2948 + $0x1a8] sm:$0xff]
      %v2993 = vld [vmem:[%s2948 + $0x1b0] sm:$0xff]
      %v2994 = vld [vmem:[%s2948 + $0x1b8] sm:$0xff]
      %v2995 = vld [vmem:[%s2948 + $0x1c0] sm:$0xff]
      %v2996 = vld [vmem:[%s2948 + $0x1c8] sm:$0xff]
      %v2997 = vld [vmem:[%s2948 + $0x1e0] sm:$0xff]
      %v2998 = vld [vmem:[%s2948 + $0x1e8] sm:$0xff]
      %v2999 = vld [vmem:[%s2948 + $0x1f0] sm:$0xff]
      %v3000 = vld [vmem:[%s2948 + $0x1f8] sm:$0xff]
      %v3001 = vld [vmem:[%s2948 + $0x200] sm:$0xff]
      %v3002 = vld [vmem:[%s2948 + $0x208] sm:$0xff]
      %v3003 = vld [vmem:[%s2948 + $0x210] sm:$0xff]
      %v3004 = vld [vmem:[%s2948 + $0x218] sm:$0xff]
      %v3005 = vld [vmem:[%s2948 + $0x230] sm:$0xff]
      %v3006 = vld [vmem:[%s2948 + $0x238] sm:$0xff]
      %v3007 = vld [vmem:[%s2948 + $0x240] sm:$0xff]
      %v3008 = vld [vmem:[%s2948 + $0x248] sm:$0xff]
      %v3009 = vld [vmem:[%s2948 + $0x250] sm:$0xff]
      %v3010 = vld [vmem:[%s2948 + $0x258] sm:$0xff]
      %v3011 = vld [vmem:[%s2948 + $0x260] sm:$0xff]
      %v3012 = vld [vmem:[%s2948 + $0x268] sm:$0xff]
      %3077 = vrot.lane.b32.xlu0 %v2949, 20
      %v3078 = vpop.permute.xlu0 %3077
      %3079 = vrot.lane.b32.xlu0 %v2950, 20
      %v3080 = vpop.permute.xlu0 %3079
      %3081 = vrot.lane.b32.xlu0 %v2951, 20
      %v3082 = vpop.permute.xlu0 %3081
      %3083 = vrot.lane.b32.xlu0 %v2952, 20
      %v3084 = vpop.permute.xlu0 %3083
      %3085 = vrot.lane.b32.xlu0 %v2953, 20
      %v3086 = vpop.permute.xlu0 %3085
      %3087 = vrot.lane.b32.xlu0 %v2954, 20
      %v3088 = vpop.permute.xlu0 %3087
      %3089 = vrot.lane.b32.xlu0 %v2955, 20
      %v3090 = vpop.permute.xlu0 %3089
      %3091 = vrot.lane.b32.xlu0 %v2956, 20
      %v3092 = vpop.permute.xlu0 %3091
      %3093 = vrot.lane.b32.xlu0 %v2957, 20
      %v3094 = vpop.permute.xlu0 %3093
      %3095 = vrot.lane.b32.xlu0 %v2958, 20
      %v3096 = vpop.permute.xlu0 %3095
      %3097 = vrot.lane.b32.xlu0 %v2959, 20
      %v3098 = vpop.permute.xlu0 %3097
      %3099 = vrot.lane.b32.xlu0 %v2960, 20
      %v3100 = vpop.permute.xlu0 %3099
      %3101 = vrot.lane.b32.xlu0 %v2961, 20
      %v3102 = vpop.permute.xlu0 %3101
      %3103 = vrot.lane.b32.xlu0 %v2962, 20
      %v3104 = vpop.permute.xlu0 %3103
      %3105 = vrot.lane.b32.xlu0 %v2963, 20
      %v3106 = vpop.permute.xlu0 %3105
      %3107 = vrot.lane.b32.xlu0 %v2964, 20
      %v3108 = vpop.permute.xlu0 %3107
      %3109 = vrot.lane.b32.xlu0 %v2965, 20
      %v3110 = vpop.permute.xlu0 %3109
      %3111 = vrot.lane.b32.xlu0 %v2966, 20
      %v3112 = vpop.permute.xlu0 %3111
      %3113 = vrot.lane.b32.xlu0 %v2967, 20
      %v3114 = vpop.permute.xlu0 %3113
      %3115 = vrot.lane.b32.xlu0 %v2968, 20
      %v3116 = vpop.permute.xlu0 %3115
      %3117 = vrot.lane.b32.xlu0 %v2969, 20
      %v3118 = vpop.permute.xlu0 %3117
      %3119 = vrot.lane.b32.xlu0 %v2970, 20
      %v3120 = vpop.permute.xlu0 %3119
      %3121 = vrot.lane.b32.xlu0 %v2971, 20
      %v3122 = vpop.permute.xlu0 %3121
      %3123 = vrot.lane.b32.xlu0 %v2972, 20
      %v3124 = vpop.permute.xlu0 %3123
      %3125 = vrot.lane.b32.xlu0 %v2973, 20
      %v3126 = vpop.permute.xlu0 %3125
      %3127 = vrot.lane.b32.xlu0 %v2974, 20
      %v3128 = vpop.permute.xlu0 %3127
      %3129 = vrot.lane.b32.xlu0 %v2975, 20
      %v3130 = vpop.permute.xlu0 %3129
      %3131 = vrot.lane.b32.xlu0 %v2976, 20
      %v3132 = vpop.permute.xlu0 %3131
      %3133 = vrot.lane.b32.xlu0 %v2977, 20
      %v3134 = vpop.permute.xlu0 %3133
      %3135 = vrot.lane.b32.xlu0 %v2978, 20
      %v3136 = vpop.permute.xlu0 %3135
      %3137 = vrot.lane.b32.xlu0 %v2979, 20
      %v3138 = vpop.permute.xlu0 %3137
      %3139 = vrot.lane.b32.xlu0 %v2980, 20
      %v3140 = vpop.permute.xlu0 %3139
      %3141 = vrot.lane.b32.xlu0 %v2981, 20
      %v3142 = vpop.permute.xlu0 %3141
      %3143 = vrot.lane.b32.xlu0 %v2982, 20
      %v3144 = vpop.permute.xlu0 %3143
      %3145 = vrot.lane.b32.xlu0 %v2983, 20
      %v3146 = vpop.permute.xlu0 %3145
      %3147 = vrot.lane.b32.xlu0 %v2984, 20
      %v3148 = vpop.permute.xlu0 %3147
      %3149 = vrot.lane.b32.xlu0 %v2985, 20
      %v3150 = vpop.permute.xlu0 %3149
      %3151 = vrot.lane.b32.xlu0 %v2986, 20
      %v3152 = vpop.permute.xlu0 %3151
      %3153 = vrot.lane.b32.xlu0 %v2987, 20
      %v3154 = vpop.permute.xlu0 %3153
      %3155 = vrot.lane.b32.xlu0 %v2988, 20
      %v3156 = vpop.permute.xlu0 %3155
      %3157 = vrot.lane.b32.xlu0 %v2989, 20
      %v3158 = vpop.permute.xlu0 %3157
      %3159 = vrot.lane.b32.xlu0 %v2990, 20
      %v3160 = vpop.permute.xlu0 %3159
      %3161 = vrot.lane.b32.xlu0 %v2991, 20
      %v3162 = vpop.permute.xlu0 %3161
      %3163 = vrot.lane.b32.xlu0 %v2992, 20
      %v3164 = vpop.permute.xlu0 %3163
      %3165 = vrot.lane.b32.xlu0 %v2993, 20
      %v3166 = vpop.permute.xlu0 %3165
      %3167 = vrot.lane.b32.xlu0 %v2994, 20
      %v3168 = vpop.permute.xlu0 %3167
      %3169 = vrot.lane.b32.xlu0 %v2995, 20
      %v3170 = vpop.permute.xlu0 %3169
      %3171 = vrot.lane.b32.xlu0 %v2996, 20
      %v3172 = vpop.permute.xlu0 %3171
      %3173 = vrot.lane.b32.xlu0 %v2997, 20
      %v3174 = vpop.permute.xlu0 %3173
      %3175 = vrot.lane.b32.xlu0 %v2998, 20
      %v3176 = vpop.permute.xlu0 %3175
      %3177 = vrot.lane.b32.xlu0 %v2999, 20
      %v3178 = vpop.permute.xlu0 %3177
      %3179 = vrot.lane.b32.xlu0 %v3000, 20
      %v3180 = vpop.permute.xlu0 %3179
      %3181 = vrot.lane.b32.xlu0 %v3001, 20
      %v3182 = vpop.permute.xlu0 %3181
      %3183 = vrot.lane.b32.xlu0 %v3002, 20
      %v3184 = vpop.permute.xlu0 %3183
      %3185 = vrot.lane.b32.xlu0 %v3003, 20
      %v3186 = vpop.permute.xlu0 %3185
      %3187 = vrot.lane.b32.xlu0 %v3004, 20
      %v3188 = vpop.permute.xlu0 %3187
      %3189 = vrot.lane.b32.xlu0 %v3005, 20
      %v3190 = vpop.permute.xlu0 %3189
      %3191 = vrot.lane.b32.xlu0 %v3006, 20
      %v3192 = vpop.permute.xlu0 %3191
      %3193 = vrot.lane.b32.xlu0 %v3007, 20
      %v3194 = vpop.permute.xlu0 %3193
      %3195 = vrot.lane.b32.xlu0 %v3008, 20
      %v3196 = vpop.permute.xlu0 %3195
      %3197 = vrot.lane.b32.xlu0 %v3009, 20
      %v3198 = vpop.permute.xlu0 %3197
      %3199 = vrot.lane.b32.xlu0 %v3010, 20
      %v3200 = vpop.permute.xlu0 %3199
      %3201 = vrot.lane.b32.xlu0 %v3011, 20
      %v3202 = vpop.permute.xlu0 %3201
      %3203 = vrot.lane.b32.xlu0 %v3012, 20
      %v3204 = vpop.permute.xlu0 %3203
      %vm3269 = vcmask 195744
      %3270 = vst.msk [vmem:[#allocation3] sm:$0xff] %vm3269, %v3078
      %3271 = vst.msk [vmem:[#allocation3 + $0x8] sm:$0xff] %vm3269, %v3080
      %3272 = vst.msk [vmem:[#allocation3 + $0x10] sm:$0xff] %vm3269, %v3082
      %3273 = vst.msk [vmem:[#allocation3 + $0x18] sm:$0xff] %vm3269, %v3084
      %3274 = vst.msk [vmem:[#allocation3 + $0x20] sm:$0xff] %vm3269, %v3086
      %3275 = vst.msk [vmem:[#allocation3 + $0x28] sm:$0xff] %vm3269, %v3088
      %3276 = vst.msk [vmem:[#allocation3 + $0x30] sm:$0xff] %vm3269, %v3090
      %3277 = vst.msk [vmem:[#allocation3 + $0x38] sm:$0xff] %vm3269, %v3092
      %3278 = vst.msk [vmem:[#allocation3 + $0x40] sm:$0xff] %vm3269, %v3094
      %3279 = vst.msk [vmem:[#allocation3 + $0x48] sm:$0xff] %vm3269, %v3096
      %3280 = vst.msk [vmem:[#allocation3 + $0x50] sm:$0xff] %vm3269, %v3098
      %3281 = vst.msk [vmem:[#allocation3 + $0x58] sm:$0xff] %vm3269, %v3100
      %3282 = vst.msk [vmem:[#allocation3 + $0x60] sm:$0xff] %vm3269, %v3102
      %3283 = vst.msk [vmem:[#allocation3 + $0x68] sm:$0xff] %vm3269, %v3104
      %3284 = vst.msk [vmem:[#allocation3 + $0x70] sm:$0xff] %vm3269, %v3106
      %3285 = vst.msk [vmem:[#allocation3 + $0x78] sm:$0xff] %vm3269, %v3108
      %3286 = vst.msk [vmem:[#allocation3 + $0x80] sm:$0xff] %vm3269, %v3110
      %3287 = vst.msk [vmem:[#allocation3 + $0x88] sm:$0xff] %vm3269, %v3112
      %3288 = vst.msk [vmem:[#allocation3 + $0x90] sm:$0xff] %vm3269, %v3114
      %3289 = vst.msk [vmem:[#allocation3 + $0x98] sm:$0xff] %vm3269, %v3116
      %3290 = vst.msk [vmem:[#allocation3 + $0xa0] sm:$0xff] %vm3269, %v3118
      %3291 = vst.msk [vmem:[#allocation3 + $0xa8] sm:$0xff] %vm3269, %v3120
      %3292 = vst.msk [vmem:[#allocation3 + $0xb0] sm:$0xff] %vm3269, %v3122
      %3293 = vst.msk [vmem:[#allocation3 + $0xb8] sm:$0xff] %vm3269, %v3124
      %3294 = vst.msk [vmem:[#allocation3 + $0xc0] sm:$0xff] %vm3269, %v3126
      %3295 = vst.msk [vmem:[#allocation3 + $0xc8] sm:$0xff] %vm3269, %v3128
      %3296 = vst.msk [vmem:[#allocation3 + $0xd0] sm:$0xff] %vm3269, %v3130
      %3297 = vst.msk [vmem:[#allocation3 + $0xd8] sm:$0xff] %vm3269, %v3132
      %3298 = vst.msk [vmem:[#allocation3 + $0xe0] sm:$0xff] %vm3269, %v3134
      %3299 = vst.msk [vmem:[#allocation3 + $0xe8] sm:$0xff] %vm3269, %v3136
      %3300 = vst.msk [vmem:[#allocation3 + $0xf0] sm:$0xff] %vm3269, %v3138
      %3301 = vst.msk [vmem:[#allocation3 + $0xf8] sm:$0xff] %vm3269, %v3140
      %3302 = vst.msk [vmem:[#allocation3 + $0x100] sm:$0xff] %vm3269, %v3142
      %3303 = vst.msk [vmem:[#allocation3 + $0x108] sm:$0xff] %vm3269, %v3144
      %3304 = vst.msk [vmem:[#allocation3 + $0x110] sm:$0xff] %vm3269, %v3146
      %3305 = vst.msk [vmem:[#allocation3 + $0x118] sm:$0xff] %vm3269, %v3148
      %3306 = vst.msk [vmem:[#allocation3 + $0x120] sm:$0xff] %vm3269, %v3150
      %3307 = vst.msk [vmem:[#allocation3 + $0x128] sm:$0xff] %vm3269, %v3152
      %3308 = vst.msk [vmem:[#allocation3 + $0x130] sm:$0xff] %vm3269, %v3154
      %3309 = vst.msk [vmem:[#allocation3 + $0x138] sm:$0xff] %vm3269, %v3156
      %3310 = vst.msk [vmem:[#allocation3 + $0x140] sm:$0xff] %vm3269, %v3158
      %3311 = vst.msk [vmem:[#allocation3 + $0x148] sm:$0xff] %vm3269, %v3160
      %3312 = vst.msk [vmem:[#allocation3 + $0x150] sm:$0xff] %vm3269, %v3162
      %3313 = vst.msk [vmem:[#allocation3 + $0x158] sm:$0xff] %vm3269, %v3164
      %3314 = vst.msk [vmem:[#allocation3 + $0x160] sm:$0xff] %vm3269, %v3166
      %3315 = vst.msk [vmem:[#allocation3 + $0x168] sm:$0xff] %vm3269, %v3168
      %3316 = vst.msk [vmem:[#allocation3 + $0x170] sm:$0xff] %vm3269, %v3170
      %3317 = vst.msk [vmem:[#allocation3 + $0x178] sm:$0xff] %vm3269, %v3172
      %3318 = vst.msk [vmem:[#allocation3 + $0x180] sm:$0xff] %vm3269, %v3174
      %3319 = vst.msk [vmem:[#allocation3 + $0x188] sm:$0xff] %vm3269, %v3176
      %3320 = vst.msk [vmem:[#allocation3 + $0x190] sm:$0xff] %vm3269, %v3178
      %3321 = vst.msk [vmem:[#allocation3 + $0x198] sm:$0xff] %vm3269, %v3180
      %3322 = vst.msk [vmem:[#allocation3 + $0x1a0] sm:$0xff] %vm3269, %v3182
      %3323 = vst.msk [vmem:[#allocation3 + $0x1a8] sm:$0xff] %vm3269, %v3184
      %3324 = vst.msk [vmem:[#allocation3 + $0x1b0] sm:$0xff] %vm3269, %v3186
      %3325 = vst.msk [vmem:[#allocation3 + $0x1b8] sm:$0xff] %vm3269, %v3188
      %3326 = vst.msk [vmem:[#allocation3 + $0x1c0] sm:$0xff] %vm3269, %v3190
      %3327 = vst.msk [vmem:[#allocation3 + $0x1c8] sm:$0xff] %vm3269, %v3192
      %3328 = vst.msk [vmem:[#allocation3 + $0x1d0] sm:$0xff] %vm3269, %v3194
      %3329 = vst.msk [vmem:[#allocation3 + $0x1d8] sm:$0xff] %vm3269, %v3196
      %3330 = vst.msk [vmem:[#allocation3 + $0x1e0] sm:$0xff] %vm3269, %v3198
      %3331 = vst.msk [vmem:[#allocation3 + $0x1e8] sm:$0xff] %vm3269, %v3200
      %3332 = vst.msk [vmem:[#allocation3 + $0x1f0] sm:$0xff] %vm3269, %v3202
      %3333 = vst.msk [vmem:[#allocation3 + $0x1f8] sm:$0xff] %vm3269, %v3204
      %s3334 = scalar_lea.vmem [#allocation2], 160
      %v3335 = vld [vmem:[%s3334] sm:$0xff]
      %v3336 = vld [vmem:[%s3334 + $0x8] sm:$0xff]
      %v3337 = vld [vmem:[%s3334 + $0x10] sm:$0xff]
      %v3338 = vld [vmem:[%s3334 + $0x18] sm:$0xff]
      %v3339 = vld [vmem:[%s3334 + $0x20] sm:$0xff]
      %v3340 = vld [vmem:[%s3334 + $0x28] sm:$0xff]
      %v3341 = vld [vmem:[%s3334 + $0x30] sm:$0xff]
      %v3342 = vld [vmem:[%s3334 + $0x38] sm:$0xff]
      %v3343 = vld [vmem:[%s3334 + $0x50] sm:$0xff]
      %v3344 = vld [vmem:[%s3334 + $0x58] sm:$0xff]
      %v3345 = vld [vmem:[%s3334 + $0x60] sm:$0xff]
      %v3346 = vld [vmem:[%s3334 + $0x68] sm:$0xff]
      %v3347 = vld [vmem:[%s3334 + $0x70] sm:$0xff]
      %v3348 = vld [vmem:[%s3334 + $0x78] sm:$0xff]
      %v3349 = vld [vmem:[%s3334 + $0x80] sm:$0xff]
      %v3350 = vld [vmem:[%s3334 + $0x88] sm:$0xff]
      %v3351 = vld [vmem:[%s3334 + $0xa0] sm:$0xff]
      %v3352 = vld [vmem:[%s3334 + $0xa8] sm:$0xff]
      %v3353 = vld [vmem:[%s3334 + $0xb0] sm:$0xff]
      %v3354 = vld [vmem:[%s3334 + $0xb8] sm:$0xff]
      %v3355 = vld [vmem:[%s3334 + $0xc0] sm:$0xff]
      %v3356 = vld [vmem:[%s3334 + $0xc8] sm:$0xff]
      %v3357 = vld [vmem:[%s3334 + $0xd0] sm:$0xff]
      %v3358 = vld [vmem:[%s3334 + $0xd8] sm:$0xff]
      %v3359 = vld [vmem:[%s3334 + $0xf0] sm:$0xff]
      %v3360 = vld [vmem:[%s3334 + $0xf8] sm:$0xff]
      %v3361 = vld [vmem:[%s3334 + $0x100] sm:$0xff]
      %v3362 = vld [vmem:[%s3334 + $0x108] sm:$0xff]
      %v3363 = vld [vmem:[%s3334 + $0x110] sm:$0xff]
      %v3364 = vld [vmem:[%s3334 + $0x118] sm:$0xff]
      %v3365 = vld [vmem:[%s3334 + $0x120] sm:$0xff]
      %v3366 = vld [vmem:[%s3334 + $0x128] sm:$0xff]
      %v3367 = vld [vmem:[%s3334 + $0x140] sm:$0xff]
      %v3368 = vld [vmem:[%s3334 + $0x148] sm:$0xff]
      %v3369 = vld [vmem:[%s3334 + $0x150] sm:$0xff]
      %v3370 = vld [vmem:[%s3334 + $0x158] sm:$0xff]
      %v3371 = vld [vmem:[%s3334 + $0x160] sm:$0xff]
      %v3372 = vld [vmem:[%s3334 + $0x168] sm:$0xff]
      %v3373 = vld [vmem:[%s3334 + $0x170] sm:$0xff]
      %v3374 = vld [vmem:[%s3334 + $0x178] sm:$0xff]
      %v3375 = vld [vmem:[%s3334 + $0x190] sm:$0xff]
      %v3376 = vld [vmem:[%s3334 + $0x198] sm:$0xff]
      %v3377 = vld [vmem:[%s3334 + $0x1a0] sm:$0xff]
      %v3378 = vld [vmem:[%s3334 + $0x1a8] sm:$0xff]
      %v3379 = vld [vmem:[%s3334 + $0x1b0] sm:$0xff]
      %v3380 = vld [vmem:[%s3334 + $0x1b8] sm:$0xff]
      %v3381 = vld [vmem:[%s3334 + $0x1c0] sm:$0xff]
      %v3382 = vld [vmem:[%s3334 + $0x1c8] sm:$0xff]
      %v3383 = vld [vmem:[%s3334 + $0x1e0] sm:$0xff]
      %v3384 = vld [vmem:[%s3334 + $0x1e8] sm:$0xff]
      %v3385 = vld [vmem:[%s3334 + $0x1f0] sm:$0xff]
      %v3386 = vld [vmem:[%s3334 + $0x1f8] sm:$0xff]
      %v3387 = vld [vmem:[%s3334 + $0x200] sm:$0xff]
      %v3388 = vld [vmem:[%s3334 + $0x208] sm:$0xff]
      %v3389 = vld [vmem:[%s3334 + $0x210] sm:$0xff]
      %v3390 = vld [vmem:[%s3334 + $0x218] sm:$0xff]
      %v3391 = vld [vmem:[%s3334 + $0x230] sm:$0xff]
      %v3392 = vld [vmem:[%s3334 + $0x238] sm:$0xff]
      %v3393 = vld [vmem:[%s3334 + $0x240] sm:$0xff]
      %v3394 = vld [vmem:[%s3334 + $0x248] sm:$0xff]
      %v3395 = vld [vmem:[%s3334 + $0x250] sm:$0xff]
      %v3396 = vld [vmem:[%s3334 + $0x258] sm:$0xff]
      %v3397 = vld [vmem:[%s3334 + $0x260] sm:$0xff]
      %v3398 = vld [vmem:[%s3334 + $0x268] sm:$0xff]
      %3463 = vrot.lane.b32.xlu0 %v3335, 24
      %v3464 = vpop.permute.xlu0 %3463
      %3465 = vrot.lane.b32.xlu0 %v3336, 24
      %v3466 = vpop.permute.xlu0 %3465
      %3467 = vrot.lane.b32.xlu0 %v3337, 24
      %v3468 = vpop.permute.xlu0 %3467
      %3469 = vrot.lane.b32.xlu0 %v3338, 24
      %v3470 = vpop.permute.xlu0 %3469
      %3471 = vrot.lane.b32.xlu0 %v3339, 24
      %v3472 = vpop.permute.xlu0 %3471
      %3473 = vrot.lane.b32.xlu0 %v3340, 24
      %v3474 = vpop.permute.xlu0 %3473
      %3475 = vrot.lane.b32.xlu0 %v3341, 24
      %v3476 = vpop.permute.xlu0 %3475
      %3477 = vrot.lane.b32.xlu0 %v3342, 24
      %v3478 = vpop.permute.xlu0 %3477
      %3479 = vrot.lane.b32.xlu0 %v3343, 24
      %v3480 = vpop.permute.xlu0 %3479
      %3481 = vrot.lane.b32.xlu0 %v3344, 24
      %v3482 = vpop.permute.xlu0 %3481
      %3483 = vrot.lane.b32.xlu0 %v3345, 24
      %v3484 = vpop.permute.xlu0 %3483
      %3485 = vrot.lane.b32.xlu0 %v3346, 24
      %v3486 = vpop.permute.xlu0 %3485
      %3487 = vrot.lane.b32.xlu0 %v3347, 24
      %v3488 = vpop.permute.xlu0 %3487
      %3489 = vrot.lane.b32.xlu0 %v3348, 24
      %v3490 = vpop.permute.xlu0 %3489
      %3491 = vrot.lane.b32.xlu0 %v3349, 24
      %v3492 = vpop.permute.xlu0 %3491
      %3493 = vrot.lane.b32.xlu0 %v3350, 24
      %v3494 = vpop.permute.xlu0 %3493
      %3495 = vrot.lane.b32.xlu0 %v3351, 24
      %v3496 = vpop.permute.xlu0 %3495
      %3497 = vrot.lane.b32.xlu0 %v3352, 24
      %v3498 = vpop.permute.xlu0 %3497
      %3499 = vrot.lane.b32.xlu0 %v3353, 24
      %v3500 = vpop.permute.xlu0 %3499
      %3501 = vrot.lane.b32.xlu0 %v3354, 24
      %v3502 = vpop.permute.xlu0 %3501
      %3503 = vrot.lane.b32.xlu0 %v3355, 24
      %v3504 = vpop.permute.xlu0 %3503
      %3505 = vrot.lane.b32.xlu0 %v3356, 24
      %v3506 = vpop.permute.xlu0 %3505
      %3507 = vrot.lane.b32.xlu0 %v3357, 24
      %v3508 = vpop.permute.xlu0 %3507
      %3509 = vrot.lane.b32.xlu0 %v3358, 24
      %v3510 = vpop.permute.xlu0 %3509
      %3511 = vrot.lane.b32.xlu0 %v3359, 24
      %v3512 = vpop.permute.xlu0 %3511
      %3513 = vrot.lane.b32.xlu0 %v3360, 24
      %v3514 = vpop.permute.xlu0 %3513
      %3515 = vrot.lane.b32.xlu0 %v3361, 24
      %v3516 = vpop.permute.xlu0 %3515
      %3517 = vrot.lane.b32.xlu0 %v3362, 24
      %v3518 = vpop.permute.xlu0 %3517
      %3519 = vrot.lane.b32.xlu0 %v3363, 24
      %v3520 = vpop.permute.xlu0 %3519
      %3521 = vrot.lane.b32.xlu0 %v3364, 24
      %v3522 = vpop.permute.xlu0 %3521
      %3523 = vrot.lane.b32.xlu0 %v3365, 24
      %v3524 = vpop.permute.xlu0 %3523
      %3525 = vrot.lane.b32.xlu0 %v3366, 24
      %v3526 = vpop.permute.xlu0 %3525
      %3527 = vrot.lane.b32.xlu0 %v3367, 24
      %v3528 = vpop.permute.xlu0 %3527
      %3529 = vrot.lane.b32.xlu0 %v3368, 24
      %v3530 = vpop.permute.xlu0 %3529
      %3531 = vrot.lane.b32.xlu0 %v3369, 24
      %v3532 = vpop.permute.xlu0 %3531
      %3533 = vrot.lane.b32.xlu0 %v3370, 24
      %v3534 = vpop.permute.xlu0 %3533
      %3535 = vrot.lane.b32.xlu0 %v3371, 24
      %v3536 = vpop.permute.xlu0 %3535
      %3537 = vrot.lane.b32.xlu0 %v3372, 24
      %v3538 = vpop.permute.xlu0 %3537
      %3539 = vrot.lane.b32.xlu0 %v3373, 24
      %v3540 = vpop.permute.xlu0 %3539
      %3541 = vrot.lane.b32.xlu0 %v3374, 24
      %v3542 = vpop.permute.xlu0 %3541
      %3543 = vrot.lane.b32.xlu0 %v3375, 24
      %v3544 = vpop.permute.xlu0 %3543
      %3545 = vrot.lane.b32.xlu0 %v3376, 24
      %v3546 = vpop.permute.xlu0 %3545
      %3547 = vrot.lane.b32.xlu0 %v3377, 24
      %v3548 = vpop.permute.xlu0 %3547
      %3549 = vrot.lane.b32.xlu0 %v3378, 24
      %v3550 = vpop.permute.xlu0 %3549
      %3551 = vrot.lane.b32.xlu0 %v3379, 24
      %v3552 = vpop.permute.xlu0 %3551
      %3553 = vrot.lane.b32.xlu0 %v3380, 24
      %v3554 = vpop.permute.xlu0 %3553
      %3555 = vrot.lane.b32.xlu0 %v3381, 24
      %v3556 = vpop.permute.xlu0 %3555
      %3557 = vrot.lane.b32.xlu0 %v3382, 24
      %v3558 = vpop.permute.xlu0 %3557
      %3559 = vrot.lane.b32.xlu0 %v3383, 24
      %v3560 = vpop.permute.xlu0 %3559
      %3561 = vrot.lane.b32.xlu0 %v3384, 24
      %v3562 = vpop.permute.xlu0 %3561
      %3563 = vrot.lane.b32.xlu0 %v3385, 24
      %v3564 = vpop.permute.xlu0 %3563
      %3565 = vrot.lane.b32.xlu0 %v3386, 24
      %v3566 = vpop.permute.xlu0 %3565
      %3567 = vrot.lane.b32.xlu0 %v3387, 24
      %v3568 = vpop.permute.xlu0 %3567
      %3569 = vrot.lane.b32.xlu0 %v3388, 24
      %v3570 = vpop.permute.xlu0 %3569
      %3571 = vrot.lane.b32.xlu0 %v3389, 24
      %v3572 = vpop.permute.xlu0 %3571
      %3573 = vrot.lane.b32.xlu0 %v3390, 24
      %v3574 = vpop.permute.xlu0 %3573
      %3575 = vrot.lane.b32.xlu0 %v3391, 24
      %v3576 = vpop.permute.xlu0 %3575
      %3577 = vrot.lane.b32.xlu0 %v3392, 24
      %v3578 = vpop.permute.xlu0 %3577
      %3579 = vrot.lane.b32.xlu0 %v3393, 24
      %v3580 = vpop.permute.xlu0 %3579
      %3581 = vrot.lane.b32.xlu0 %v3394, 24
      %v3582 = vpop.permute.xlu0 %3581
      %3583 = vrot.lane.b32.xlu0 %v3395, 24
      %v3584 = vpop.permute.xlu0 %3583
      %3585 = vrot.lane.b32.xlu0 %v3396, 24
      %v3586 = vpop.permute.xlu0 %3585
      %3587 = vrot.lane.b32.xlu0 %v3397, 24
      %v3588 = vpop.permute.xlu0 %3587
      %3589 = vrot.lane.b32.xlu0 %v3398, 24
      %v3590 = vpop.permute.xlu0 %3589
      %vm3655 = vcmask 228544
      %3656 = vst.msk [vmem:[#allocation3] sm:$0xff] %vm3655, %v3464
      %3657 = vst.msk [vmem:[#allocation3 + $0x8] sm:$0xff] %vm3655, %v3466
      %3658 = vst.msk [vmem:[#allocation3 + $0x10] sm:$0xff] %vm3655, %v3468
      %3659 = vst.msk [vmem:[#allocation3 + $0x18] sm:$0xff] %vm3655, %v3470
      %3660 = vst.msk [vmem:[#allocation3 + $0x20] sm:$0xff] %vm3655, %v3472
      %3661 = vst.msk [vmem:[#allocation3 + $0x28] sm:$0xff] %vm3655, %v3474
      %3662 = vst.msk [vmem:[#allocation3 + $0x30] sm:$0xff] %vm3655, %v3476
      %3663 = vst.msk [vmem:[#allocation3 + $0x38] sm:$0xff] %vm3655, %v3478
      %3664 = vst.msk [vmem:[#allocation3 + $0x40] sm:$0xff] %vm3655, %v3480
      %3665 = vst.msk [vmem:[#allocation3 + $0x48] sm:$0xff] %vm3655, %v3482
      %3666 = vst.msk [vmem:[#allocation3 + $0x50] sm:$0xff] %vm3655, %v3484
      %3667 = vst.msk [vmem:[#allocation3 + $0x58] sm:$0xff] %vm3655, %v3486
      %3668 = vst.msk [vmem:[#allocation3 + $0x60] sm:$0xff] %vm3655, %v3488
      %3669 = vst.msk [vmem:[#allocation3 + $0x68] sm:$0xff] %vm3655, %v3490
      %3670 = vst.msk [vmem:[#allocation3 + $0x70] sm:$0xff] %vm3655, %v3492
      %3671 = vst.msk [vmem:[#allocation3 + $0x78] sm:$0xff] %vm3655, %v3494
      %3672 = vst.msk [vmem:[#allocation3 + $0x80] sm:$0xff] %vm3655, %v3496
      %3673 = vst.msk [vmem:[#allocation3 + $0x88] sm:$0xff] %vm3655, %v3498
      %3674 = vst.msk [vmem:[#allocation3 + $0x90] sm:$0xff] %vm3655, %v3500
      %3675 = vst.msk [vmem:[#allocation3 + $0x98] sm:$0xff] %vm3655, %v3502
      %3676 = vst.msk [vmem:[#allocation3 + $0xa0] sm:$0xff] %vm3655, %v3504
      %3677 = vst.msk [vmem:[#allocation3 + $0xa8] sm:$0xff] %vm3655, %v3506
      %3678 = vst.msk [vmem:[#allocation3 + $0xb0] sm:$0xff] %vm3655, %v3508
      %3679 = vst.msk [vmem:[#allocation3 + $0xb8] sm:$0xff] %vm3655, %v3510
      %3680 = vst.msk [vmem:[#allocation3 + $0xc0] sm:$0xff] %vm3655, %v3512
      %3681 = vst.msk [vmem:[#allocation3 + $0xc8] sm:$0xff] %vm3655, %v3514
      %3682 = vst.msk [vmem:[#allocation3 + $0xd0] sm:$0xff] %vm3655, %v3516
      %3683 = vst.msk [vmem:[#allocation3 + $0xd8] sm:$0xff] %vm3655, %v3518
      %3684 = vst.msk [vmem:[#allocation3 + $0xe0] sm:$0xff] %vm3655, %v3520
      %3685 = vst.msk [vmem:[#allocation3 + $0xe8] sm:$0xff] %vm3655, %v3522
      %3686 = vst.msk [vmem:[#allocation3 + $0xf0] sm:$0xff] %vm3655, %v3524
      %3687 = vst.msk [vmem:[#allocation3 + $0xf8] sm:$0xff] %vm3655, %v3526
      %3688 = vst.msk [vmem:[#allocation3 + $0x100] sm:$0xff] %vm3655, %v3528
      %3689 = vst.msk [vmem:[#allocation3 + $0x108] sm:$0xff] %vm3655, %v3530
      %3690 = vst.msk [vmem:[#allocation3 + $0x110] sm:$0xff] %vm3655, %v3532
      %3691 = vst.msk [vmem:[#allocation3 + $0x118] sm:$0xff] %vm3655, %v3534
      %3692 = vst.msk [vmem:[#allocation3 + $0x120] sm:$0xff] %vm3655, %v3536
      %3693 = vst.msk [vmem:[#allocation3 + $0x128] sm:$0xff] %vm3655, %v3538
      %3694 = vst.msk [vmem:[#allocation3 + $0x130] sm:$0xff] %vm3655, %v3540
      %3695 = vst.msk [vmem:[#allocation3 + $0x138] sm:$0xff] %vm3655, %v3542
      %3696 = vst.msk [vmem:[#allocation3 + $0x140] sm:$0xff] %vm3655, %v3544
      %3697 = vst.msk [vmem:[#allocation3 + $0x148] sm:$0xff] %vm3655, %v3546
      %3698 = vst.msk [vmem:[#allocation3 + $0x150] sm:$0xff] %vm3655, %v3548
      %3699 = vst.msk [vmem:[#allocation3 + $0x158] sm:$0xff] %vm3655, %v3550
      %3700 = vst.msk [vmem:[#allocation3 + $0x160] sm:$0xff] %vm3655, %v3552
      %3701 = vst.msk [vmem:[#allocation3 + $0x168] sm:$0xff] %vm3655, %v3554
      %3702 = vst.msk [vmem:[#allocation3 + $0x170] sm:$0xff] %vm3655, %v3556
      %3703 = vst.msk [vmem:[#allocation3 + $0x178] sm:$0xff] %vm3655, %v3558
      %3704 = vst.msk [vmem:[#allocation3 + $0x180] sm:$0xff] %vm3655, %v3560
      %3705 = vst.msk [vmem:[#allocation3 + $0x188] sm:$0xff] %vm3655, %v3562
      %3706 = vst.msk [vmem:[#allocation3 + $0x190] sm:$0xff] %vm3655, %v3564
      %3707 = vst.msk [vmem:[#allocation3 + $0x198] sm:$0xff] %vm3655, %v3566
      %3708 = vst.msk [vmem:[#allocation3 + $0x1a0] sm:$0xff] %vm3655, %v3568
      %3709 = vst.msk [vmem:[#allocation3 + $0x1a8] sm:$0xff] %vm3655, %v3570
      %3710 = vst.msk [vmem:[#allocation3 + $0x1b0] sm:$0xff] %vm3655, %v3572
      %3711 = vst.msk [vmem:[#allocation3 + $0x1b8] sm:$0xff] %vm3655, %v3574
      %3712 = vst.msk [vmem:[#allocation3 + $0x1c0] sm:$0xff] %vm3655, %v3576
      %3713 = vst.msk [vmem:[#allocation3 + $0x1c8] sm:$0xff] %vm3655, %v3578
      %3714 = vst.msk [vmem:[#allocation3 + $0x1d0] sm:$0xff] %vm3655, %v3580
      %3715 = vst.msk [vmem:[#allocation3 + $0x1d8] sm:$0xff] %vm3655, %v3582
      %3716 = vst.msk [vmem:[#allocation3 + $0x1e0] sm:$0xff] %vm3655, %v3584
      %3717 = vst.msk [vmem:[#allocation3 + $0x1e8] sm:$0xff] %vm3655, %v3586
      %3718 = vst.msk [vmem:[#allocation3 + $0x1f0] sm:$0xff] %vm3655, %v3588
      %3719 = vst.msk [vmem:[#allocation3 + $0x1f8] sm:$0xff] %vm3655, %v3590
      %s3720 = scalar_lea.vmem [#allocation2], 168
      %v3721 = vld [vmem:[%s3720] sm:$0xff]
      %v3722 = vld [vmem:[%s3720 + $0x8] sm:$0xff]
      %v3723 = vld [vmem:[%s3720 + $0x10] sm:$0xff]
      %v3724 = vld [vmem:[%s3720 + $0x18] sm:$0xff]
      %v3725 = vld [vmem:[%s3720 + $0x20] sm:$0xff]
      %v3726 = vld [vmem:[%s3720 + $0x28] sm:$0xff]
      %v3727 = vld [vmem:[%s3720 + $0x30] sm:$0xff]
      %v3728 = vld [vmem:[%s3720 + $0x38] sm:$0xff]
      %v3729 = vld [vmem:[%s3720 + $0x50] sm:$0xff]
      %v3730 = vld [vmem:[%s3720 + $0x58] sm:$0xff]
      %v3731 = vld [vmem:[%s3720 + $0x60] sm:$0xff]
      %v3732 = vld [vmem:[%s3720 + $0x68] sm:$0xff]
      %v3733 = vld [vmem:[%s3720 + $0x70] sm:$0xff]
      %v3734 = vld [vmem:[%s3720 + $0x78] sm:$0xff]
      %v3735 = vld [vmem:[%s3720 + $0x80] sm:$0xff]
      %v3736 = vld [vmem:[%s3720 + $0x88] sm:$0xff]
      %v3737 = vld [vmem:[%s3720 + $0xa0] sm:$0xff]
      %v3738 = vld [vmem:[%s3720 + $0xa8] sm:$0xff]
      %v3739 = vld [vmem:[%s3720 + $0xb0] sm:$0xff]
      %v3740 = vld [vmem:[%s3720 + $0xb8] sm:$0xff]
      %v3741 = vld [vmem:[%s3720 + $0xc0] sm:$0xff]
      %v3742 = vld [vmem:[%s3720 + $0xc8] sm:$0xff]
      %v3743 = vld [vmem:[%s3720 + $0xd0] sm:$0xff]
      %v3744 = vld [vmem:[%s3720 + $0xd8] sm:$0xff]
      %v3745 = vld [vmem:[%s3720 + $0xf0] sm:$0xff]
      %v3746 = vld [vmem:[%s3720 + $0xf8] sm:$0xff]
      %v3747 = vld [vmem:[%s3720 + $0x100] sm:$0xff]
      %v3748 = vld [vmem:[%s3720 + $0x108] sm:$0xff]
      %v3749 = vld [vmem:[%s3720 + $0x110] sm:$0xff]
      %v3750 = vld [vmem:[%s3720 + $0x118] sm:$0xff]
      %v3751 = vld [vmem:[%s3720 + $0x120] sm:$0xff]
      %v3752 = vld [vmem:[%s3720 + $0x128] sm:$0xff]
      %v3753 = vld [vmem:[%s3720 + $0x140] sm:$0xff]
      %v3754 = vld [vmem:[%s3720 + $0x148] sm:$0xff]
      %v3755 = vld [vmem:[%s3720 + $0x150] sm:$0xff]
      %v3756 = vld [vmem:[%s3720 + $0x158] sm:$0xff]
      %v3757 = vld [vmem:[%s3720 + $0x160] sm:$0xff]
      %v3758 = vld [vmem:[%s3720 + $0x168] sm:$0xff]
      %v3759 = vld [vmem:[%s3720 + $0x170] sm:$0xff]
      %v3760 = vld [vmem:[%s3720 + $0x178] sm:$0xff]
      %v3761 = vld [vmem:[%s3720 + $0x190] sm:$0xff]
      %v3762 = vld [vmem:[%s3720 + $0x198] sm:$0xff]
      %v3763 = vld [vmem:[%s3720 + $0x1a0] sm:$0xff]
      %v3764 = vld [vmem:[%s3720 + $0x1a8] sm:$0xff]
      %v3765 = vld [vmem:[%s3720 + $0x1b0] sm:$0xff]
      %v3766 = vld [vmem:[%s3720 + $0x1b8] sm:$0xff]
      %v3767 = vld [vmem:[%s3720 + $0x1c0] sm:$0xff]
      %v3768 = vld [vmem:[%s3720 + $0x1c8] sm:$0xff]
      %v3769 = vld [vmem:[%s3720 + $0x1e0] sm:$0xff]
      %v3770 = vld [vmem:[%s3720 + $0x1e8] sm:$0xff]
      %v3771 = vld [vmem:[%s3720 + $0x1f0] sm:$0xff]
      %v3772 = vld [vmem:[%s3720 + $0x1f8] sm:$0xff]
      %v3773 = vld [vmem:[%s3720 + $0x200] sm:$0xff]
      %v3774 = vld [vmem:[%s3720 + $0x208] sm:$0xff]
      %v3775 = vld [vmem:[%s3720 + $0x210] sm:$0xff]
      %v3776 = vld [vmem:[%s3720 + $0x218] sm:$0xff]
      %v3777 = vld [vmem:[%s3720 + $0x230] sm:$0xff]
      %v3778 = vld [vmem:[%s3720 + $0x238] sm:$0xff]
      %v3779 = vld [vmem:[%s3720 + $0x240] sm:$0xff]
      %v3780 = vld [vmem:[%s3720 + $0x248] sm:$0xff]
      %v3781 = vld [vmem:[%s3720 + $0x250] sm:$0xff]
      %v3782 = vld [vmem:[%s3720 + $0x258] sm:$0xff]
      %v3783 = vld [vmem:[%s3720 + $0x260] sm:$0xff]
      %v3784 = vld [vmem:[%s3720 + $0x268] sm:$0xff]
      %3849 = vrot.lane.b32.xlu0 %v3721, 28
      %v3850 = vpop.permute.xlu0 %3849
      %3851 = vrot.lane.b32.xlu0 %v3722, 28
      %v3852 = vpop.permute.xlu0 %3851
      %3853 = vrot.lane.b32.xlu0 %v3723, 28
      %v3854 = vpop.permute.xlu0 %3853
      %3855 = vrot.lane.b32.xlu0 %v3724, 28
      %v3856 = vpop.permute.xlu0 %3855
      %3857 = vrot.lane.b32.xlu0 %v3725, 28
      %v3858 = vpop.permute.xlu0 %3857
      %3859 = vrot.lane.b32.xlu0 %v3726, 28
      %v3860 = vpop.permute.xlu0 %3859
      %3861 = vrot.lane.b32.xlu0 %v3727, 28
      %v3862 = vpop.permute.xlu0 %3861
      %3863 = vrot.lane.b32.xlu0 %v3728, 28
      %v3864 = vpop.permute.xlu0 %3863
      %3865 = vrot.lane.b32.xlu0 %v3729, 28
      %v3866 = vpop.permute.xlu0 %3865
      %3867 = vrot.lane.b32.xlu0 %v3730, 28
      %v3868 = vpop.permute.xlu0 %3867
      %3869 = vrot.lane.b32.xlu0 %v3731, 28
      %v3870 = vpop.permute.xlu0 %3869
      %3871 = vrot.lane.b32.xlu0 %v3732, 28
      %v3872 = vpop.permute.xlu0 %3871
      %3873 = vrot.lane.b32.xlu0 %v3733, 28
      %v3874 = vpop.permute.xlu0 %3873
      %3875 = vrot.lane.b32.xlu0 %v3734, 28
      %v3876 = vpop.permute.xlu0 %3875
      %3877 = vrot.lane.b32.xlu0 %v3735, 28
      %v3878 = vpop.permute.xlu0 %3877
      %3879 = vrot.lane.b32.xlu0 %v3736, 28
      %v3880 = vpop.permute.xlu0 %3879
      %3881 = vrot.lane.b32.xlu0 %v3737, 28
      %v3882 = vpop.permute.xlu0 %3881
      %3883 = vrot.lane.b32.xlu0 %v3738, 28
      %v3884 = vpop.permute.xlu0 %3883
      %3885 = vrot.lane.b32.xlu0 %v3739, 28
      %v3886 = vpop.permute.xlu0 %3885
      %3887 = vrot.lane.b32.xlu0 %v3740, 28
      %v3888 = vpop.permute.xlu0 %3887
      %3889 = vrot.lane.b32.xlu0 %v3741, 28
      %v3890 = vpop.permute.xlu0 %3889
      %3891 = vrot.lane.b32.xlu0 %v3742, 28
      %v3892 = vpop.permute.xlu0 %3891
      %3893 = vrot.lane.b32.xlu0 %v3743, 28
      %v3894 = vpop.permute.xlu0 %3893
      %3895 = vrot.lane.b32.xlu0 %v3744, 28
      %v3896 = vpop.permute.xlu0 %3895
      %3897 = vrot.lane.b32.xlu0 %v3745, 28
      %v3898 = vpop.permute.xlu0 %3897
      %3899 = vrot.lane.b32.xlu0 %v3746, 28
      %v3900 = vpop.permute.xlu0 %3899
      %3901 = vrot.lane.b32.xlu0 %v3747, 28
      %v3902 = vpop.permute.xlu0 %3901
      %3903 = vrot.lane.b32.xlu0 %v3748, 28
      %v3904 = vpop.permute.xlu0 %3903
      %3905 = vrot.lane.b32.xlu0 %v3749, 28
      %v3906 = vpop.permute.xlu0 %3905
      %3907 = vrot.lane.b32.xlu0 %v3750, 28
      %v3908 = vpop.permute.xlu0 %3907
      %3909 = vrot.lane.b32.xlu0 %v3751, 28
      %v3910 = vpop.permute.xlu0 %3909
      %3911 = vrot.lane.b32.xlu0 %v3752, 28
      %v3912 = vpop.permute.xlu0 %3911
      %3913 = vrot.lane.b32.xlu0 %v3753, 28
      %v3914 = vpop.permute.xlu0 %3913
      %3915 = vrot.lane.b32.xlu0 %v3754, 28
      %v3916 = vpop.permute.xlu0 %3915
      %3917 = vrot.lane.b32.xlu0 %v3755, 28
      %v3918 = vpop.permute.xlu0 %3917
      %3919 = vrot.lane.b32.xlu0 %v3756, 28
      %v3920 = vpop.permute.xlu0 %3919
      %3921 = vrot.lane.b32.xlu0 %v3757, 28
      %v3922 = vpop.permute.xlu0 %3921
      %3923 = vrot.lane.b32.xlu0 %v3758, 28
      %v3924 = vpop.permute.xlu0 %3923
      %3925 = vrot.lane.b32.xlu0 %v3759, 28
      %v3926 = vpop.permute.xlu0 %3925
      %3927 = vrot.lane.b32.xlu0 %v3760, 28
      %v3928 = vpop.permute.xlu0 %3927
      %3929 = vrot.lane.b32.xlu0 %v3761, 28
      %v3930 = vpop.permute.xlu0 %3929
      %3931 = vrot.lane.b32.xlu0 %v3762, 28
      %v3932 = vpop.permute.xlu0 %3931
      %3933 = vrot.lane.b32.xlu0 %v3763, 28
      %v3934 = vpop.permute.xlu0 %3933
      %3935 = vrot.lane.b32.xlu0 %v3764, 28
      %v3936 = vpop.permute.xlu0 %3935
      %3937 = vrot.lane.b32.xlu0 %v3765, 28
      %v3938 = vpop.permute.xlu0 %3937
      %3939 = vrot.lane.b32.xlu0 %v3766, 28
      %v3940 = vpop.permute.xlu0 %3939
      %3941 = vrot.lane.b32.xlu0 %v3767, 28
      %v3942 = vpop.permute.xlu0 %3941
      %3943 = vrot.lane.b32.xlu0 %v3768, 28
      %v3944 = vpop.permute.xlu0 %3943
      %3945 = vrot.lane.b32.xlu0 %v3769, 28
      %v3946 = vpop.permute.xlu0 %3945
      %3947 = vrot.lane.b32.xlu0 %v3770, 28
      %v3948 = vpop.permute.xlu0 %3947
      %3949 = vrot.lane.b32.xlu0 %v3771, 28
      %v3950 = vpop.permute.xlu0 %3949
      %3951 = vrot.lane.b32.xlu0 %v3772, 28
      %v3952 = vpop.permute.xlu0 %3951
      %3953 = vrot.lane.b32.xlu0 %v3773, 28
      %v3954 = vpop.permute.xlu0 %3953
      %3955 = vrot.lane.b32.xlu0 %v3774, 28
      %v3956 = vpop.permute.xlu0 %3955
      %3957 = vrot.lane.b32.xlu0 %v3775, 28
      %v3958 = vpop.permute.xlu0 %3957
      %3959 = vrot.lane.b32.xlu0 %v3776, 28
      %v3960 = vpop.permute.xlu0 %3959
      %3961 = vrot.lane.b32.xlu0 %v3777, 28
      %v3962 = vpop.permute.xlu0 %3961
      %3963 = vrot.lane.b32.xlu0 %v3778, 28
      %v3964 = vpop.permute.xlu0 %3963
      %3965 = vrot.lane.b32.xlu0 %v3779, 28
      %v3966 = vpop.permute.xlu0 %3965
      %3967 = vrot.lane.b32.xlu0 %v3780, 28
      %v3968 = vpop.permute.xlu0 %3967
      %3969 = vrot.lane.b32.xlu0 %v3781, 28
      %v3970 = vpop.permute.xlu0 %3969
      %3971 = vrot.lane.b32.xlu0 %v3782, 28
      %v3972 = vpop.permute.xlu0 %3971
      %3973 = vrot.lane.b32.xlu0 %v3783, 28
      %v3974 = vpop.permute.xlu0 %3973
      %3975 = vrot.lane.b32.xlu0 %v3784, 28
      %v3976 = vpop.permute.xlu0 %3975
      %vm4041 = vcmask 261344
      %4042 = vst.msk [vmem:[#allocation3] sm:$0xff] %vm4041, %v3850
      %4043 = vst.msk [vmem:[#allocation3 + $0x8] sm:$0xff] %vm4041, %v3852
      %4044 = vst.msk [vmem:[#allocation3 + $0x10] sm:$0xff] %vm4041, %v3854
      %4045 = vst.msk [vmem:[#allocation3 + $0x18] sm:$0xff] %vm4041, %v3856
      %4046 = vst.msk [vmem:[#allocation3 + $0x20] sm:$0xff] %vm4041, %v3858
      %4047 = vst.msk [vmem:[#allocation3 + $0x28] sm:$0xff] %vm4041, %v3860
      %4048 = vst.msk [vmem:[#allocation3 + $0x30] sm:$0xff] %vm4041, %v3862
      %4049 = vst.msk [vmem:[#allocation3 + $0x38] sm:$0xff] %vm4041, %v3864
      %4050 = vst.msk [vmem:[#allocation3 + $0x40] sm:$0xff] %vm4041, %v3866
      %4051 = vst.msk [vmem:[#allocation3 + $0x48] sm:$0xff] %vm4041, %v3868
      %4052 = vst.msk [vmem:[#allocation3 + $0x50] sm:$0xff] %vm4041, %v3870
      %4053 = vst.msk [vmem:[#allocation3 + $0x58] sm:$0xff] %vm4041, %v3872
      %4054 = vst.msk [vmem:[#allocation3 + $0x60] sm:$0xff] %vm4041, %v3874
      %4055 = vst.msk [vmem:[#allocation3 + $0x68] sm:$0xff] %vm4041, %v3876
      %4056 = vst.msk [vmem:[#allocation3 + $0x70] sm:$0xff] %vm4041, %v3878
      %4057 = vst.msk [vmem:[#allocation3 + $0x78] sm:$0xff] %vm4041, %v3880
      %4058 = vst.msk [vmem:[#allocation3 + $0x80] sm:$0xff] %vm4041, %v3882
      %4059 = vst.msk [vmem:[#allocation3 + $0x88] sm:$0xff] %vm4041, %v3884
      %4060 = vst.msk [vmem:[#allocation3 + $0x90] sm:$0xff] %vm4041, %v3886
      %4061 = vst.msk [vmem:[#allocation3 + $0x98] sm:$0xff] %vm4041, %v3888
      %4062 = vst.msk [vmem:[#allocation3 + $0xa0] sm:$0xff] %vm4041, %v3890
      %4063 = vst.msk [vmem:[#allocation3 + $0xa8] sm:$0xff] %vm4041, %v3892
      %4064 = vst.msk [vmem:[#allocation3 + $0xb0] sm:$0xff] %vm4041, %v3894
      %4065 = vst.msk [vmem:[#allocation3 + $0xb8] sm:$0xff] %vm4041, %v3896
      %4066 = vst.msk [vmem:[#allocation3 + $0xc0] sm:$0xff] %vm4041, %v3898
      %4067 = vst.msk [vmem:[#allocation3 + $0xc8] sm:$0xff] %vm4041, %v3900
      %4068 = vst.msk [vmem:[#allocation3 + $0xd0] sm:$0xff] %vm4041, %v3902
      %4069 = vst.msk [vmem:[#allocation3 + $0xd8] sm:$0xff] %vm4041, %v3904
      %4070 = vst.msk [vmem:[#allocation3 + $0xe0] sm:$0xff] %vm4041, %v3906
      %4071 = vst.msk [vmem:[#allocation3 + $0xe8] sm:$0xff] %vm4041, %v3908
      %4072 = vst.msk [vmem:[#allocation3 + $0xf0] sm:$0xff] %vm4041, %v3910
      %4073 = vst.msk [vmem:[#allocation3 + $0xf8] sm:$0xff] %vm4041, %v3912
      %4074 = vst.msk [vmem:[#allocation3 + $0x100] sm:$0xff] %vm4041, %v3914
      %4075 = vst.msk [vmem:[#allocation3 + $0x108] sm:$0xff] %vm4041, %v3916
      %4076 = vst.msk [vmem:[#allocation3 + $0x110] sm:$0xff] %vm4041, %v3918
      %4077 = vst.msk [vmem:[#allocation3 + $0x118] sm:$0xff] %vm4041, %v3920
      %4078 = vst.msk [vmem:[#allocation3 + $0x120] sm:$0xff] %vm4041, %v3922
      %4079 = vst.msk [vmem:[#allocation3 + $0x128] sm:$0xff] %vm4041, %v3924
      %4080 = vst.msk [vmem:[#allocation3 + $0x130] sm:$0xff] %vm4041, %v3926
      %4081 = vst.msk [vmem:[#allocation3 + $0x138] sm:$0xff] %vm4041, %v3928
      %4082 = vst.msk [vmem:[#allocation3 + $0x140] sm:$0xff] %vm4041, %v3930
      %4083 = vst.msk [vmem:[#allocation3 + $0x148] sm:$0xff] %vm4041, %v3932
      %4084 = vst.msk [vmem:[#allocation3 + $0x150] sm:$0xff] %vm4041, %v3934
      %4085 = vst.msk [vmem:[#allocation3 + $0x158] sm:$0xff] %vm4041, %v3936
      %4086 = vst.msk [vmem:[#allocation3 + $0x160] sm:$0xff] %vm4041, %v3938
      %4087 = vst.msk [vmem:[#allocation3 + $0x168] sm:$0xff] %vm4041, %v3940
      %4088 = vst.msk [vmem:[#allocation3 + $0x170] sm:$0xff] %vm4041, %v3942
      %4089 = vst.msk [vmem:[#allocation3 + $0x178] sm:$0xff] %vm4041, %v3944
      %4090 = vst.msk [vmem:[#allocation3 + $0x180] sm:$0xff] %vm4041, %v3946
      %4091 = vst.msk [vmem:[#allocation3 + $0x188] sm:$0xff] %vm4041, %v3948
      %4092 = vst.msk [vmem:[#allocation3 + $0x190] sm:$0xff] %vm4041, %v3950
      %4093 = vst.msk [vmem:[#allocation3 + $0x198] sm:$0xff] %vm4041, %v3952
      %4094 = vst.msk [vmem:[#allocation3 + $0x1a0] sm:$0xff] %vm4041, %v3954
      %4095 = vst.msk [vmem:[#allocation3 + $0x1a8] sm:$0xff] %vm4041, %v3956
      %4096 = vst.msk [vmem:[#allocation3 + $0x1b0] sm:$0xff] %vm4041, %v3958
      %4097 = vst.msk [vmem:[#allocation3 + $0x1b8] sm:$0xff] %vm4041, %v3960
      %4098 = vst.msk [vmem:[#allocation3 + $0x1c0] sm:$0xff] %vm4041, %v3962
      %4099 = vst.msk [vmem:[#allocation3 + $0x1c8] sm:$0xff] %vm4041, %v3964
      %4100 = vst.msk [vmem:[#allocation3 + $0x1d0] sm:$0xff] %vm4041, %v3966
      %4101 = vst.msk [vmem:[#allocation3 + $0x1d8] sm:$0xff] %vm4041, %v3968
      %4102 = vst.msk [vmem:[#allocation3 + $0x1e0] sm:$0xff] %vm4041, %v3970
      %4103 = vst.msk [vmem:[#allocation3 + $0x1e8] sm:$0xff] %vm4041, %v3972
      %4104 = vst.msk [vmem:[#allocation3 + $0x1f0] sm:$0xff] %vm4041, %v3974
      %4105 = vst.msk [vmem:[#allocation3 + $0x1f8] sm:$0xff] %vm4041, %v3976
      %s4106 = scalar_lea.vmem [#allocation2], 176
      %v4107 = vld [vmem:[%s4106] sm:$0xff]
      %v4108 = vld [vmem:[%s4106 + $0x8] sm:$0xff]
      %v4109 = vld [vmem:[%s4106 + $0x10] sm:$0xff]
      %v4110 = vld [vmem:[%s4106 + $0x18] sm:$0xff]
      %v4111 = vld [vmem:[%s4106 + $0x20] sm:$0xff]
      %v4112 = vld [vmem:[%s4106 + $0x28] sm:$0xff]
      %v4113 = vld [vmem:[%s4106 + $0x30] sm:$0xff]
      %v4114 = vld [vmem:[%s4106 + $0x38] sm:$0xff]
      %v4115 = vld [vmem:[%s4106 + $0x50] sm:$0xff]
      %v4116 = vld [vmem:[%s4106 + $0x58] sm:$0xff]
      %v4117 = vld [vmem:[%s4106 + $0x60] sm:$0xff]
      %v4118 = vld [vmem:[%s4106 + $0x68] sm:$0xff]
      %v4119 = vld [vmem:[%s4106 + $0x70] sm:$0xff]
      %v4120 = vld [vmem:[%s4106 + $0x78] sm:$0xff]
      %v4121 = vld [vmem:[%s4106 + $0x80] sm:$0xff]
      %v4122 = vld [vmem:[%s4106 + $0x88] sm:$0xff]
      %v4123 = vld [vmem:[%s4106 + $0xa0] sm:$0xff]
      %v4124 = vld [vmem:[%s4106 + $0xa8] sm:$0xff]
      %v4125 = vld [vmem:[%s4106 + $0xb0] sm:$0xff]
      %v4126 = vld [vmem:[%s4106 + $0xb8] sm:$0xff]
      %v4127 = vld [vmem:[%s4106 + $0xc0] sm:$0xff]
      %v4128 = vld [vmem:[%s4106 + $0xc8] sm:$0xff]
      %v4129 = vld [vmem:[%s4106 + $0xd0] sm:$0xff]
      %v4130 = vld [vmem:[%s4106 + $0xd8] sm:$0xff]
      %v4131 = vld [vmem:[%s4106 + $0xf0] sm:$0xff]
      %v4132 = vld [vmem:[%s4106 + $0xf8] sm:$0xff]
      %v4133 = vld [vmem:[%s4106 + $0x100] sm:$0xff]
      %v4134 = vld [vmem:[%s4106 + $0x108] sm:$0xff]
      %v4135 = vld [vmem:[%s4106 + $0x110] sm:$0xff]
      %v4136 = vld [vmem:[%s4106 + $0x118] sm:$0xff]
      %v4137 = vld [vmem:[%s4106 + $0x120] sm:$0xff]
      %v4138 = vld [vmem:[%s4106 + $0x128] sm:$0xff]
      %v4139 = vld [vmem:[%s4106 + $0x140] sm:$0xff]
      %v4140 = vld [vmem:[%s4106 + $0x148] sm:$0xff]
      %v4141 = vld [vmem:[%s4106 + $0x150] sm:$0xff]
      %v4142 = vld [vmem:[%s4106 + $0x158] sm:$0xff]
      %v4143 = vld [vmem:[%s4106 + $0x160] sm:$0xff]
      %v4144 = vld [vmem:[%s4106 + $0x168] sm:$0xff]
      %v4145 = vld [vmem:[%s4106 + $0x170] sm:$0xff]
      %v4146 = vld [vmem:[%s4106 + $0x178] sm:$0xff]
      %v4147 = vld [vmem:[%s4106 + $0x190] sm:$0xff]
      %v4148 = vld [vmem:[%s4106 + $0x198] sm:$0xff]
      %v4149 = vld [vmem:[%s4106 + $0x1a0] sm:$0xff]
      %v4150 = vld [vmem:[%s4106 + $0x1a8] sm:$0xff]
      %v4151 = vld [vmem:[%s4106 + $0x1b0] sm:$0xff]
      %v4152 = vld [vmem:[%s4106 + $0x1b8] sm:$0xff]
      %v4153 = vld [vmem:[%s4106 + $0x1c0] sm:$0xff]
      %v4154 = vld [vmem:[%s4106 + $0x1c8] sm:$0xff]
      %v4155 = vld [vmem:[%s4106 + $0x1e0] sm:$0xff]
      %v4156 = vld [vmem:[%s4106 + $0x1e8] sm:$0xff]
      %v4157 = vld [vmem:[%s4106 + $0x1f0] sm:$0xff]
      %v4158 = vld [vmem:[%s4106 + $0x1f8] sm:$0xff]
      %v4159 = vld [vmem:[%s4106 + $0x200] sm:$0xff]
      %v4160 = vld [vmem:[%s4106 + $0x208] sm:$0xff]
      %v4161 = vld [vmem:[%s4106 + $0x210] sm:$0xff]
      %v4162 = vld [vmem:[%s4106 + $0x218] sm:$0xff]
      %v4163 = vld [vmem:[%s4106 + $0x230] sm:$0xff]
      %v4164 = vld [vmem:[%s4106 + $0x238] sm:$0xff]
      %v4165 = vld [vmem:[%s4106 + $0x240] sm:$0xff]
      %v4166 = vld [vmem:[%s4106 + $0x248] sm:$0xff]
      %v4167 = vld [vmem:[%s4106 + $0x250] sm:$0xff]
      %v4168 = vld [vmem:[%s4106 + $0x258] sm:$0xff]
      %v4169 = vld [vmem:[%s4106 + $0x260] sm:$0xff]
      %v4170 = vld [vmem:[%s4106 + $0x268] sm:$0xff]
      %4235 = vrot.lane.b32.xlu0 %v4107, 32
      %v4236 = vpop.permute.xlu0 %4235
      %4237 = vrot.lane.b32.xlu0 %v4108, 32
      %v4238 = vpop.permute.xlu0 %4237
      %4239 = vrot.lane.b32.xlu0 %v4109, 32
      %v4240 = vpop.permute.xlu0 %4239
      %4241 = vrot.lane.b32.xlu0 %v4110, 32
      %v4242 = vpop.permute.xlu0 %4241
      %4243 = vrot.lane.b32.xlu0 %v4111, 32
      %v4244 = vpop.permute.xlu0 %4243
      %4245 = vrot.lane.b32.xlu0 %v4112, 32
      %v4246 = vpop.permute.xlu0 %4245
      %4247 = vrot.lane.b32.xlu0 %v4113, 32
      %v4248 = vpop.permute.xlu0 %4247
      %4249 = vrot.lane.b32.xlu0 %v4114, 32
      %v4250 = vpop.permute.xlu0 %4249
      %4251 = vrot.lane.b32.xlu0 %v4115, 32
      %v4252 = vpop.permute.xlu0 %4251
      %4253 = vrot.lane.b32.xlu0 %v4116, 32
      %v4254 = vpop.permute.xlu0 %4253
      %4255 = vrot.lane.b32.xlu0 %v4117, 32
      %v4256 = vpop.permute.xlu0 %4255
      %4257 = vrot.lane.b32.xlu0 %v4118, 32
      %v4258 = vpop.permute.xlu0 %4257
      %4259 = vrot.lane.b32.xlu0 %v4119, 32
      %v4260 = vpop.permute.xlu0 %4259
      %4261 = vrot.lane.b32.xlu0 %v4120, 32
      %v4262 = vpop.permute.xlu0 %4261
      %4263 = vrot.lane.b32.xlu0 %v4121, 32
      %v4264 = vpop.permute.xlu0 %4263
      %4265 = vrot.lane.b32.xlu0 %v4122, 32
      %v4266 = vpop.permute.xlu0 %4265
      %4267 = vrot.lane.b32.xlu0 %v4123, 32
      %v4268 = vpop.permute.xlu0 %4267
      %4269 = vrot.lane.b32.xlu0 %v4124, 32
      %v4270 = vpop.permute.xlu0 %4269
      %4271 = vrot.lane.b32.xlu0 %v4125, 32
      %v4272 = vpop.permute.xlu0 %4271
      %4273 = vrot.lane.b32.xlu0 %v4126, 32
      %v4274 = vpop.permute.xlu0 %4273
      %4275 = vrot.lane.b32.xlu0 %v4127, 32
      %v4276 = vpop.permute.xlu0 %4275
      %4277 = vrot.lane.b32.xlu0 %v4128, 32
      %v4278 = vpop.permute.xlu0 %4277
      %4279 = vrot.lane.b32.xlu0 %v4129, 32
      %v4280 = vpop.permute.xlu0 %4279
      %4281 = vrot.lane.b32.xlu0 %v4130, 32
      %v4282 = vpop.permute.xlu0 %4281
      %4283 = vrot.lane.b32.xlu0 %v4131, 32
      %v4284 = vpop.permute.xlu0 %4283
      %4285 = vrot.lane.b32.xlu0 %v4132, 32
      %v4286 = vpop.permute.xlu0 %4285
      %4287 = vrot.lane.b32.xlu0 %v4133, 32
      %v4288 = vpop.permute.xlu0 %4287
      %4289 = vrot.lane.b32.xlu0 %v4134, 32
      %v4290 = vpop.permute.xlu0 %4289
      %4291 = vrot.lane.b32.xlu0 %v4135, 32
      %v4292 = vpop.permute.xlu0 %4291
      %4293 = vrot.lane.b32.xlu0 %v4136, 32
      %v4294 = vpop.permute.xlu0 %4293
      %4295 = vrot.lane.b32.xlu0 %v4137, 32
      %v4296 = vpop.permute.xlu0 %4295
      %4297 = vrot.lane.b32.xlu0 %v4138, 32
      %v4298 = vpop.permute.xlu0 %4297
      %4299 = vrot.lane.b32.xlu0 %v4139, 32
      %v4300 = vpop.permute.xlu0 %4299
      %4301 = vrot.lane.b32.xlu0 %v4140, 32
      %v4302 = vpop.permute.xlu0 %4301
      %4303 = vrot.lane.b32.xlu0 %v4141, 32
      %v4304 = vpop.permute.xlu0 %4303
      %4305 = vrot.lane.b32.xlu0 %v4142, 32
      %v4306 = vpop.permute.xlu0 %4305
      %4307 = vrot.lane.b32.xlu0 %v4143, 32
      %v4308 = vpop.permute.xlu0 %4307
      %4309 = vrot.lane.b32.xlu0 %v4144, 32
      %v4310 = vpop.permute.xlu0 %4309
      %4311 = vrot.lane.b32.xlu0 %v4145, 32
      %v4312 = vpop.permute.xlu0 %4311
      %4313 = vrot.lane.b32.xlu0 %v4146, 32
      %v4314 = vpop.permute.xlu0 %4313
      %4315 = vrot.lane.b32.xlu0 %v4147, 32
      %v4316 = vpop.permute.xlu0 %4315
      %4317 = vrot.lane.b32.xlu0 %v4148, 32
      %v4318 = vpop.permute.xlu0 %4317
      %4319 = vrot.lane.b32.xlu0 %v4149, 32
      %v4320 = vpop.permute.xlu0 %4319
      %4321 = vrot.lane.b32.xlu0 %v4150, 32
      %v4322 = vpop.permute.xlu0 %4321
      %4323 = vrot.lane.b32.xlu0 %v4151, 32
      %v4324 = vpop.permute.xlu0 %4323
      %4325 = vrot.lane.b32.xlu0 %v4152, 32
      %v4326 = vpop.permute.xlu0 %4325
      %4327 = vrot.lane.b32.xlu0 %v4153, 32
      %v4328 = vpop.permute.xlu0 %4327
      %4329 = vrot.lane.b32.xlu0 %v4154, 32
      %v4330 = vpop.permute.xlu0 %4329
      %4331 = vrot.lane.b32.xlu0 %v4155, 32
      %v4332 = vpop.permute.xlu0 %4331
      %4333 = vrot.lane.b32.xlu0 %v4156, 32
      %v4334 = vpop.permute.xlu0 %4333
      %4335 = vrot.lane.b32.xlu0 %v4157, 32
      %v4336 = vpop.permute.xlu0 %4335
      %4337 = vrot.lane.b32.xlu0 %v4158, 32
      %v4338 = vpop.permute.xlu0 %4337
      %4339 = vrot.lane.b32.xlu0 %v4159, 32
      %v4340 = vpop.permute.xlu0 %4339
      %4341 = vrot.lane.b32.xlu0 %v4160, 32
      %v4342 = vpop.permute.xlu0 %4341
      %4343 = vrot.lane.b32.xlu0 %v4161, 32
      %v4344 = vpop.permute.xlu0 %4343
      %4345 = vrot.lane.b32.xlu0 %v4162, 32
      %v4346 = vpop.permute.xlu0 %4345
      %4347 = vrot.lane.b32.xlu0 %v4163, 32
      %v4348 = vpop.permute.xlu0 %4347
      %4349 = vrot.lane.b32.xlu0 %v4164, 32
      %v4350 = vpop.permute.xlu0 %4349
      %4351 = vrot.lane.b32.xlu0 %v4165, 32
      %v4352 = vpop.permute.xlu0 %4351
      %4353 = vrot.lane.b32.xlu0 %v4166, 32
      %v4354 = vpop.permute.xlu0 %4353
      %4355 = vrot.lane.b32.xlu0 %v4167, 32
      %v4356 = vpop.permute.xlu0 %4355
      %4357 = vrot.lane.b32.xlu0 %v4168, 32
      %v4358 = vpop.permute.xlu0 %4357
      %4359 = vrot.lane.b32.xlu0 %v4169, 32
      %v4360 = vpop.permute.xlu0 %4359
      %4361 = vrot.lane.b32.xlu0 %v4170, 32
      %v4362 = vpop.permute.xlu0 %4361
      %vm4427 = vcmask 294144
      %4428 = vst.msk [vmem:[#allocation3] sm:$0xff] %vm4427, %v4236
      %4429 = vst.msk [vmem:[#allocation3 + $0x8] sm:$0xff] %vm4427, %v4238
      %4430 = vst.msk [vmem:[#allocation3 + $0x10] sm:$0xff] %vm4427, %v4240
      %4431 = vst.msk [vmem:[#allocation3 + $0x18] sm:$0xff] %vm4427, %v4242
      %4432 = vst.msk [vmem:[#allocation3 + $0x20] sm:$0xff] %vm4427, %v4244
      %4433 = vst.msk [vmem:[#allocation3 + $0x28] sm:$0xff] %vm4427, %v4246
      %4434 = vst.msk [vmem:[#allocation3 + $0x30] sm:$0xff] %vm4427, %v4248
      %4435 = vst.msk [vmem:[#allocation3 + $0x38] sm:$0xff] %vm4427, %v4250
      %4436 = vst.msk [vmem:[#allocation3 + $0x40] sm:$0xff] %vm4427, %v4252
      %4437 = vst.msk [vmem:[#allocation3 + $0x48] sm:$0xff] %vm4427, %v4254
      %4438 = vst.msk [vmem:[#allocation3 + $0x50] sm:$0xff] %vm4427, %v4256
      %4439 = vst.msk [vmem:[#allocation3 + $0x58] sm:$0xff] %vm4427, %v4258
      %4440 = vst.msk [vmem:[#allocation3 + $0x60] sm:$0xff] %vm4427, %v4260
      %4441 = vst.msk [vmem:[#allocation3 + $0x68] sm:$0xff] %vm4427, %v4262
      %4442 = vst.msk [vmem:[#allocation3 + $0x70] sm:$0xff] %vm4427, %v4264
      %4443 = vst.msk [vmem:[#allocation3 + $0x78] sm:$0xff] %vm4427, %v4266
      %4444 = vst.msk [vmem:[#allocation3 + $0x80] sm:$0xff] %vm4427, %v4268
      %4445 = vst.msk [vmem:[#allocation3 + $0x88] sm:$0xff] %vm4427, %v4270
      %4446 = vst.msk [vmem:[#allocation3 + $0x90] sm:$0xff] %vm4427, %v4272
      %4447 = vst.msk [vmem:[#allocation3 + $0x98] sm:$0xff] %vm4427, %v4274
      %4448 = vst.msk [vmem:[#allocation3 + $0xa0] sm:$0xff] %vm4427, %v4276
      %4449 = vst.msk [vmem:[#allocation3 + $0xa8] sm:$0xff] %vm4427, %v4278
      %4450 = vst.msk [vmem:[#allocation3 + $0xb0] sm:$0xff] %vm4427, %v4280
      %4451 = vst.msk [vmem:[#allocation3 + $0xb8] sm:$0xff] %vm4427, %v4282
      %4452 = vst.msk [vmem:[#allocation3 + $0xc0] sm:$0xff] %vm4427, %v4284
      %4453 = vst.msk [vmem:[#allocation3 + $0xc8] sm:$0xff] %vm4427, %v4286
      %4454 = vst.msk [vmem:[#allocation3 + $0xd0] sm:$0xff] %vm4427, %v4288
      %4455 = vst.msk [vmem:[#allocation3 + $0xd8] sm:$0xff] %vm4427, %v4290
      %4456 = vst.msk [vmem:[#allocation3 + $0xe0] sm:$0xff] %vm4427, %v4292
      %4457 = vst.msk [vmem:[#allocation3 + $0xe8] sm:$0xff] %vm4427, %v4294
      %4458 = vst.msk [vmem:[#allocation3 + $0xf0] sm:$0xff] %vm4427, %v4296
      %4459 = vst.msk [vmem:[#allocation3 + $0xf8] sm:$0xff] %vm4427, %v4298
      %4460 = vst.msk [vmem:[#allocation3 + $0x100] sm:$0xff] %vm4427, %v4300
      %4461 = vst.msk [vmem:[#allocation3 + $0x108] sm:$0xff] %vm4427, %v4302
      %4462 = vst.msk [vmem:[#allocation3 + $0x110] sm:$0xff] %vm4427, %v4304
      %4463 = vst.msk [vmem:[#allocation3 + $0x118] sm:$0xff] %vm4427, %v4306
      %4464 = vst.msk [vmem:[#allocation3 + $0x120] sm:$0xff] %vm4427, %v4308
      %4465 = vst.msk [vmem:[#allocation3 + $0x128] sm:$0xff] %vm4427, %v4310
      %4466 = vst.msk [vmem:[#allocation3 + $0x130] sm:$0xff] %vm4427, %v4312
      %4467 = vst.msk [vmem:[#allocation3 + $0x138] sm:$0xff] %vm4427, %v4314
      %4468 = vst.msk [vmem:[#allocation3 + $0x140] sm:$0xff] %vm4427, %v4316
      %4469 = vst.msk [vmem:[#allocation3 + $0x148] sm:$0xff] %vm4427, %v4318
      %4470 = vst.msk [vmem:[#allocation3 + $0x150] sm:$0xff] %vm4427, %v4320
      %4471 = vst.msk [vmem:[#allocation3 + $0x158] sm:$0xff] %vm4427, %v4322
      %4472 = vst.msk [vmem:[#allocation3 + $0x160] sm:$0xff] %vm4427, %v4324
      %4473 = vst.msk [vmem:[#allocation3 + $0x168] sm:$0xff] %vm4427, %v4326
      %4474 = vst.msk [vmem:[#allocation3 + $0x170] sm:$0xff] %vm4427, %v4328
      %4475 = vst.msk [vmem:[#allocation3 + $0x178] sm:$0xff] %vm4427, %v4330
      %4476 = vst.msk [vmem:[#allocation3 + $0x180] sm:$0xff] %vm4427, %v4332
      %4477 = vst.msk [vmem:[#allocation3 + $0x188] sm:$0xff] %vm4427, %v4334
      %4478 = vst.msk [vmem:[#allocation3 + $0x190] sm:$0xff] %vm4427, %v4336
      %4479 = vst.msk [vmem:[#allocation3 + $0x198] sm:$0xff] %vm4427, %v4338
      %4480 = vst.msk [vmem:[#allocation3 + $0x1a0] sm:$0xff] %vm4427, %v4340
      %4481 = vst.msk [vmem:[#allocation3 + $0x1a8] sm:$0xff] %vm4427, %v4342
      %4482 = vst.msk [vmem:[#allocation3 + $0x1b0] sm:$0xff] %vm4427, %v4344
      %4483 = vst.msk [vmem:[#allocation3 + $0x1b8] sm:$0xff] %vm4427, %v4346
      %4484 = vst.msk [vmem:[#allocation3 + $0x1c0] sm:$0xff] %vm4427, %v4348
      %4485 = vst.msk [vmem:[#allocation3 + $0x1c8] sm:$0xff] %vm4427, %v4350
      %4486 = vst.msk [vmem:[#allocation3 + $0x1d0] sm:$0xff] %vm4427, %v4352
      %4487 = vst.msk [vmem:[#allocation3 + $0x1d8] sm:$0xff] %vm4427, %v4354
      %4488 = vst.msk [vmem:[#allocation3 + $0x1e0] sm:$0xff] %vm4427, %v4356
      %4489 = vst.msk [vmem:[#allocation3 + $0x1e8] sm:$0xff] %vm4427, %v4358
      %4490 = vst.msk [vmem:[#allocation3 + $0x1f0] sm:$0xff] %vm4427, %v4360
      %4491 = vst.msk [vmem:[#allocation3 + $0x1f8] sm:$0xff] %vm4427, %v4362
      %v4492 = vld [vmem:[#allocation3] sm:$0xff]
      %v4493 = vld [vmem:[#allocation3 + $0x8] sm:$0xff]
      %v4494 = vld [vmem:[#allocation3 + $0x10] sm:$0xff]
      %v4495 = vld [vmem:[#allocation3 + $0x18] sm:$0xff]
      %v4496 = vld [vmem:[#allocation3 + $0x20] sm:$0xff]
      %v4497 = vld [vmem:[#allocation3 + $0x28] sm:$0xff]
      %v4498 = vld [vmem:[#allocation3 + $0x30] sm:$0xff]
      %v4499 = vld [vmem:[#allocation3 + $0x38] sm:$0xff]
      %v4500 = vld [vmem:[#allocation3 + $0x40] sm:$0xff]
      %v4501 = vld [vmem:[#allocation3 + $0x48] sm:$0xff]
      %v4502 = vld [vmem:[#allocation3 + $0x50] sm:$0xff]
      %v4503 = vld [vmem:[#allocation3 + $0x58] sm:$0xff]
      %v4504 = vld [vmem:[#allocation3 + $0x60] sm:$0xff]
      %v4505 = vld [vmem:[#allocation3 + $0x68] sm:$0xff]
      %v4506 = vld [vmem:[#allocation3 + $0x70] sm:$0xff]
      %v4507 = vld [vmem:[#allocation3 + $0x78] sm:$0xff]
      %v4508 = vld [vmem:[#allocation3 + $0x80] sm:$0xff]
      %v4509 = vld [vmem:[#allocation3 + $0x88] sm:$0xff]
      %v4510 = vld [vmem:[#allocation3 + $0x90] sm:$0xff]
      %v4511 = vld [vmem:[#allocation3 + $0x98] sm:$0xff]
      %v4512 = vld [vmem:[#allocation3 + $0xa0] sm:$0xff]
      %v4513 = vld [vmem:[#allocation3 + $0xa8] sm:$0xff]
      %v4514 = vld [vmem:[#allocation3 + $0xb0] sm:$0xff]
      %v4515 = vld [vmem:[#allocation3 + $0xb8] sm:$0xff]
      %v4516 = vld [vmem:[#allocation3 + $0xc0] sm:$0xff]
      %v4517 = vld [vmem:[#allocation3 + $0xc8] sm:$0xff]
      %v4518 = vld [vmem:[#allocation3 + $0xd0] sm:$0xff]
      %v4519 = vld [vmem:[#allocation3 + $0xd8] sm:$0xff]
      %v4520 = vld [vmem:[#allocation3 + $0xe0] sm:$0xff]
      %v4521 = vld [vmem:[#allocation3 + $0xe8] sm:$0xff]
      %v4522 = vld [vmem:[#allocation3 + $0xf0] sm:$0xff]
      %v4523 = vld [vmem:[#allocation3 + $0xf8] sm:$0xff]
      %v4524 = vld [vmem:[#allocation3 + $0x100] sm:$0xff]
      %v4525 = vld [vmem:[#allocation3 + $0x108] sm:$0xff]
      %v4526 = vld [vmem:[#allocation3 + $0x110] sm:$0xff]
      %v4527 = vld [vmem:[#allocation3 + $0x118] sm:$0xff]
      %v4528 = vld [vmem:[#allocation3 + $0x120] sm:$0xff]
      %v4529 = vld [vmem:[#allocation3 + $0x128] sm:$0xff]
      %v4530 = vld [vmem:[#allocation3 + $0x130] sm:$0xff]
      %v4531 = vld [vmem:[#allocation3 + $0x138] sm:$0xff]
      %v4532 = vld [vmem:[#allocation3 + $0x140] sm:$0xff]
      %v4533 = vld [vmem:[#allocation3 + $0x148] sm:$0xff]
      %v4534 = vld [vmem:[#allocation3 + $0x150] sm:$0xff]
      %v4535 = vld [vmem:[#allocation3 + $0x158] sm:$0xff]
      %v4536 = vld [vmem:[#allocation3 + $0x160] sm:$0xff]
      %v4537 = vld [vmem:[#allocation3 + $0x168] sm:$0xff]
      %v4538 = vld [vmem:[#allocation3 + $0x170] sm:$0xff]
      %v4539 = vld [vmem:[#allocation3 + $0x178] sm:$0xff]
      %v4540 = vld [vmem:[#allocation3 + $0x180] sm:$0xff]
      %v4541 = vld [vmem:[#allocation3 + $0x188] sm:$0xff]
      %v4542 = vld [vmem:[#allocation3 + $0x190] sm:$0xff]
      %v4543 = vld [vmem:[#allocation3 + $0x198] sm:$0xff]
      %v4544 = vld [vmem:[#allocation3 + $0x1a0] sm:$0xff]
      %v4545 = vld [vmem:[#allocation3 + $0x1a8] sm:$0xff]
      %v4546 = vld [vmem:[#allocation3 + $0x1b0] sm:$0xff]
      %v4547 = vld [vmem:[#allocation3 + $0x1b8] sm:$0xff]
      %v4548 = vld [vmem:[#allocation3 + $0x1c0] sm:$0xff]
      %v4549 = vld [vmem:[#allocation3 + $0x1c8] sm:$0xff]
      %v4550 = vld [vmem:[#allocation3 + $0x1d0] sm:$0xff]
      %v4551 = vld [vmem:[#allocation3 + $0x1d8] sm:$0xff]
      %v4552 = vld [vmem:[#allocation3 + $0x1e0] sm:$0xff]
      %v4553 = vld [vmem:[#allocation3 + $0x1e8] sm:$0xff]
      %v4554 = vld [vmem:[#allocation3 + $0x1f0] sm:$0xff]
      %v4555 = vld [vmem:[#allocation3 + $0x1f8] sm:$0xff]
      %v4556 = vld [vmem:[%s1] sm:$0xff]
      %v4557 = vld [vmem:[%s1 + $0x8] sm:$0xff]
      %v4558 = vld [vmem:[%s1 + $0x10] sm:$0xff]
      %v4559 = vld [vmem:[%s1 + $0x18] sm:$0xff]
      %v4560 = vld [vmem:[%s1 + $0x20] sm:$0xf]
      %vm4561 = vcmask 293888
      %v4563 = vsel %vm4561, %v4492, 0
      %v4566 = vsel %vm4561, %v4493, 0
      %v4569 = vsel %vm4561, %v4494, 0
      %v4572 = vsel %vm4561, %v4495, 0
      %v4575 = vsel %vm4561, %v4496, 0
      %v4578 = vsel %vm4561, %v4497, 0
      %v4581 = vsel %vm4561, %v4498, 0
      %v4584 = vsel %vm4561, %v4499, 0
      %v4587 = vsel %vm4561, %v4500, 0
      %v4590 = vsel %vm4561, %v4501, 0
      %v4593 = vsel %vm4561, %v4502, 0
      %v4596 = vsel %vm4561, %v4503, 0
      %v4599 = vsel %vm4561, %v4504, 0
      %v4602 = vsel %vm4561, %v4505, 0
      %v4605 = vsel %vm4561, %v4506, 0
      %v4608 = vsel %vm4561, %v4507, 0
      %v4611 = vsel %vm4561, %v4508, 0
      %v4614 = vsel %vm4561, %v4509, 0
      %v4617 = vsel %vm4561, %v4510, 0
      %v4620 = vsel %vm4561, %v4511, 0
      %v4623 = vsel %vm4561, %v4512, 0
      %v4626 = vsel %vm4561, %v4513, 0
      %v4629 = vsel %vm4561, %v4514, 0
      %v4632 = vsel %vm4561, %v4515, 0
      %v4635 = vsel %vm4561, %v4516, 0
      %v4638 = vsel %vm4561, %v4517, 0
      %v4641 = vsel %vm4561, %v4518, 0
      %v4644 = vsel %vm4561, %v4519, 0
      %v4647 = vsel %vm4561, %v4520, 0
      %v4650 = vsel %vm4561, %v4521, 0
      %v4653 = vsel %vm4561, %v4522, 0
      %v4656 = vsel %vm4561, %v4523, 0
      %v4659 = vsel %vm4561, %v4524, 0
      %v4662 = vsel %vm4561, %v4525, 0
      %v4665 = vsel %vm4561, %v4526, 0
      %v4668 = vsel %vm4561, %v4527, 0
      %v4671 = vsel %vm4561, %v4528, 0
      %v4674 = vsel %vm4561, %v4529, 0
      %v4677 = vsel %vm4561, %v4530, 0
      %v4680 = vsel %vm4561, %v4531, 0
      %v4683 = vsel %vm4561, %v4532, 0
      %v4686 = vsel %vm4561, %v4533, 0
      %v4689 = vsel %vm4561, %v4534, 0
      %v4692 = vsel %vm4561, %v4535, 0
      %v4695 = vsel %vm4561, %v4536, 0
      %v4698 = vsel %vm4561, %v4537, 0
      %v4701 = vsel %vm4561, %v4538, 0
      %v4704 = vsel %vm4561, %v4539, 0
      %v4707 = vsel %vm4561, %v4540, 0
      %v4710 = vsel %vm4561, %v4541, 0
      %v4713 = vsel %vm4561, %v4542, 0
      %v4716 = vsel %vm4561, %v4543, 0
      %v4719 = vsel %vm4561, %v4544, 0
      %v4722 = vsel %vm4561, %v4545, 0
      %v4725 = vsel %vm4561, %v4546, 0
      %v4728 = vsel %vm4561, %v4547, 0
      %v4731 = vsel %vm4561, %v4548, 0
      %v4734 = vsel %vm4561, %v4549, 0
      %v4737 = vsel %vm4561, %v4550, 0
      %v4740 = vsel %vm4561, %v4551, 0
      %v4743 = vsel %vm4561, %v4552, 0
      %v4746 = vsel %vm4561, %v4553, 0
      %v4749 = vsel %vm4561, %v4554, 0
      %v4752 = vsel %vm4561, %v4555, 0
      %vm4754 = vcmask 1043456
      %v4756 = vsel %vm4754, %v4560, 0
      %4758 = vmatprep.subr.mxu0 0.0
      %4759 = vmatpush1.msra.mxu0 %v4556
      %4760 = vmatprep.subr.mxu0 0.0
      %4761 = vmatpush1.msra.mxu0 %v4557
      %4762 = vmatprep.subr.mxu0 0.0
      %4763 = vmatpush1.msra.mxu0 %v4558
      %4764 = vmatprep.subr.mxu0 0.0
      %4765 = vmatpush1.msra.mxu0 %v4559
      %4766 = vmatprep.subr.mxu0 0.0
      %4767 = vmatpush1.msra.mxu0 %v4756
      %4768 = vmatprep.subr.mxu0 0.0
      %4769 = vmatpush1.msra.mxu0 0.0
      %4770 = vmatprep.subr.mxu0 0.0
      %4771 = vmatpush1.msra.mxu0 0.0
      %4772 = vmatprep.subr.mxu0 0.0
      %4773 = vmatpush1.msra.mxu0 0.0
      %4774 = vmatprep.subr.mxu0 0.0
      %4775 = vmatpush1.msra.mxu0 0.0
      %4776 = vmatprep.subr.mxu0 0.0
      %4777 = vmatpush1.msra.mxu0 0.0
      %4778 = vmatprep.subr.mxu0 0.0
      %4779 = vmatpush1.msra.mxu0 0.0
      %4780 = vmatprep.subr.mxu0 0.0
      %4781 = vmatpush1.msra.mxu0 0.0
      %4782 = vmatprep.subr.mxu0 0.0
      %4783 = vmatpush1.msra.mxu0 0.0
      %4784 = vmatprep.subr.mxu0 0.0
      %4785 = vmatpush1.msra.mxu0 0.0
      %4786 = vmatprep.subr.mxu0 0.0
      %4787 = vmatpush1.msra.mxu0 0.0
      %4788 = vmatprep.subr.mxu0 0.0
      %4789 = vmatpush1.msra.mxu0 0.0
      %4790 = vmatprep.subr.mxu0 0.0
      %4791 = vmatpush1.msra.mxu0 0.0
      %4792 = vmatprep.subr.mxu0 0.0
      %4793 = vmatpush1.msra.mxu0 0.0
      %4794 = vmatprep.subr.mxu0 0.0
      %4795 = vmatpush1.msra.mxu0 0.0
      %4796 = vmatprep.subr.mxu0 0.0
      %4797 = vmatpush1.msra.mxu0 0.0
      %4798 = vmatprep.subr.mxu0 0.0
      %4799 = vmatpush1.msra.mxu0 0.0
      %4800 = vmatprep.subr.mxu0 0.0
      %4801 = vmatpush1.msra.mxu0 0.0
      %4802 = vmatprep.subr.mxu0 0.0
      %4803 = vmatpush1.msra.mxu0 0.0
      %4804 = vmatprep.subr.mxu0 0.0
      %4805 = vmatpush1.msra.mxu0 0.0
      %4806 = vmatprep.subr.mxu0 0.0
      %4807 = vmatpush1.msra.mxu0 0.0
      %4808 = vmatprep.subr.mxu0 0.0
      %4809 = vmatpush1.msra.mxu0 0.0
      %4810 = vmatprep.subr.mxu0 0.0
      %4811 = vmatpush1.msra.mxu0 0.0
      %4812 = vmatprep.subr.mxu0 0.0
      %4813 = vmatpush1.msra.mxu0 0.0
      %4814 = vmatprep.subr.mxu0 0.0
      %4815 = vmatpush1.msra.mxu0 0.0
      %4816 = vmatprep.subr.mxu0 0.0
      %4817 = vmatpush1.msra.mxu0 0.0
      %4818 = vmatprep.subr.mxu0 0.0
      %4819 = vmatpush1.msra.mxu0 0.0
      %4820 = vmatprep.subr.mxu0 0.0
      %4821 = vmatpush1.msra.mxu0 0.0
      %4822 = vmatprep.mubr.f32.mxu0 0.0
      %4823 = vmatmul.mubr.f32.gmra.mrb[0].mxu0 %v4563
      %v4824 = vpop.f32.mrb[0].mxu0
      %v4825 = vadd.f32 0.0, %v4824
      %v4826 = vpop.f32.mrb[0].mxu0
      %4827 = vmatprep.mubr.f32.mxu0 0.0
      %4828 = vmatmul.mubr.f32.gmra.mrb[0].mxu0 %v4566
      %v4829 = vpop.f32.mrb[0].mxu0
      %v4830 = vadd.f32 0.0, %v4829
      %v4831 = vpop.f32.mrb[0].mxu0
      %4832 = vmatprep.mubr.f32.mxu0 0.0
      %4833 = vmatmul.mubr.f32.gmra.mrb[0].mxu0 %v4569
      %v4834 = vpop.f32.mrb[0].mxu0
      %v4835 = vadd.f32 0.0, %v4834
      %v4836 = vpop.f32.mrb[0].mxu0
      %4837 = vmatprep.mubr.f32.mxu0 0.0
      %4838 = vmatmul.mubr.f32.gmra.mrb[0].mxu0 %v4572
      %v4839 = vpop.f32.mrb[0].mxu0
      %v4840 = vadd.f32 0.0, %v4839
      %v4841 = vpop.f32.mrb[0].mxu0
      %4842 = vmatprep.mubr.f32.mxu0 0.0
      %4843 = vmatmul.mubr.f32.gmra.mrb[0].mxu0 %v4575
      %v4844 = vpop.f32.mrb[0].mxu0
      %v4845 = vadd.f32 0.0, %v4844
      %v4846 = vpop.f32.mrb[0].mxu0
      %4847 = vmatprep.mubr.f32.mxu0 0.0
      %4848 = vmatmul.mubr.f32.gmra.mrb[0].mxu0 %v4578
      %v4849 = vpop.f32.mrb[0].mxu0
      %v4850 = vadd.f32 0.0, %v4849
      %v4851 = vpop.f32.mrb[0].mxu0
      %4852 = vmatprep.mubr.f32.mxu0 0.0
      %4853 = vmatmul.mubr.f32.gmra.mrb[0].mxu0 %v4581
      %v4854 = vpop.f32.mrb[0].mxu0
      %v4855 = vadd.f32 0.0, %v4854
      %v4856 = vpop.f32.mrb[0].mxu0
      %4857 = vmatprep.mubr.f32.mxu0 0.0
      %4858 = vmatmul.mubr.f32.gmra.mrb[0].mxu0 %v4584
      %v4859 = vpop.f32.mrb[0].mxu0
      %v4860 = vadd.f32 0.0, %v4859
      %v4861 = vpop.f32.mrb[0].mxu0
      %4862 = vmatprep.mubr.f32.mxu0 0.0
      %4863 = vmatmul.mubr.f32.gmra.mrb[0].mxu0 %v4587
      %v4864 = vpop.f32.mrb[0].mxu0
      %v4865 = vadd.f32 0.0, %v4864
      %v4866 = vpop.f32.mrb[0].mxu0
      %4867 = vmatprep.mubr.f32.mxu0 0.0
      %4868 = vmatmul.mubr.f32.gmra.mrb[0].mxu0 %v4590
      %v4869 = vpop.f32.mrb[0].mxu0
      %v4870 = vadd.f32 0.0, %v4869
      %v4871 = vpop.f32.mrb[0].mxu0
      %4872 = vmatprep.mubr.f32.mxu0 0.0
      %4873 = vmatmul.mubr.f32.gmra.mrb[0].mxu0 %v4593
      %v4874 = vpop.f32.mrb[0].mxu0
      %v4875 = vadd.f32 0.0, %v4874
      %v4876 = vpop.f32.mrb[0].mxu0
      %4877 = vmatprep.mubr.f32.mxu0 0.0
      %4878 = vmatmul.mubr.f32.gmra.mrb[0].mxu0 %v4596
      %v4879 = vpop.f32.mrb[0].mxu0
      %v4880 = vadd.f32 0.0, %v4879
      %v4881 = vpop.f32.mrb[0].mxu0
      %4882 = vmatprep.mubr.f32.mxu0 0.0
      %4883 = vmatmul.mubr.f32.gmra.mrb[0].mxu0 %v4599
      %v4884 = vpop.f32.mrb[0].mxu0
      %v4885 = vadd.f32 0.0, %v4884
      %v4886 = vpop.f32.mrb[0].mxu0
      %4887 = vmatprep.mubr.f32.mxu0 0.0
      %4888 = vmatmul.mubr.f32.gmra.mrb[0].mxu0 %v4602
      %v4889 = vpop.f32.mrb[0].mxu0
      %v4890 = vadd.f32 0.0, %v4889
      %v4891 = vpop.f32.mrb[0].mxu0
      %4892 = vmatprep.mubr.f32.mxu0 0.0
      %4893 = vmatmul.mubr.f32.gmra.mrb[0].mxu0 %v4605
      %v4894 = vpop.f32.mrb[0].mxu0
      %v4895 = vadd.f32 0.0, %v4894
      %v4896 = vpop.f32.mrb[0].mxu0
      %4897 = vmatprep.mubr.f32.mxu0 0.0
      %4898 = vmatmul.mubr.f32.gmra.mrb[0].mxu0 %v4608
      %v4899 = vpop.f32.mrb[0].mxu0
      %v4900 = vadd.f32 0.0, %v4899
      %v4901 = vpop.f32.mrb[0].mxu0
      %4902 = vmatprep.mubr.f32.mxu0 0.0
      %4903 = vmatmul.mubr.f32.gmra.mrb[0].mxu0 %v4611
      %v4904 = vpop.f32.mrb[0].mxu0
      %v4905 = vadd.f32 0.0, %v4904
      %v4906 = vpop.f32.mrb[0].mxu0
      %4907 = vmatprep.mubr.f32.mxu0 0.0
      %4908 = vmatmul.mubr.f32.gmra.mrb[0].mxu0 %v4614
      %v4909 = vpop.f32.mrb[0].mxu0
      %v4910 = vadd.f32 0.0, %v4909
      %v4911 = vpop.f32.mrb[0].mxu0
      %4912 = vmatprep.mubr.f32.mxu0 0.0
      %4913 = vmatmul.mubr.f32.gmra.mrb[0].mxu0 %v4617
      %v4914 = vpop.f32.mrb[0].mxu0
      %v4915 = vadd.f32 0.0, %v4914
      %v4916 = vpop.f32.mrb[0].mxu0
      %4917 = vmatprep.mubr.f32.mxu0 0.0
      %4918 = vmatmul.mubr.f32.gmra.mrb[0].mxu0 %v4620
      %v4919 = vpop.f32.mrb[0].mxu0
      %v4920 = vadd.f32 0.0, %v4919
      %v4921 = vpop.f32.mrb[0].mxu0
      %4922 = vmatprep.mubr.f32.mxu0 0.0
      %4923 = vmatmul.mubr.f32.gmra.mrb[0].mxu0 %v4623
      %v4924 = vpop.f32.mrb[0].mxu0
      %v4925 = vadd.f32 0.0, %v4924
      %v4926 = vpop.f32.mrb[0].mxu0
      %4927 = vmatprep.mubr.f32.mxu0 0.0
      %4928 = vmatmul.mubr.f32.gmra.mrb[0].mxu0 %v4626
      %v4929 = vpop.f32.mrb[0].mxu0
      %v4930 = vadd.f32 0.0, %v4929
      %v4931 = vpop.f32.mrb[0].mxu0
      %4932 = vmatprep.mubr.f32.mxu0 0.0
      %4933 = vmatmul.mubr.f32.gmra.mrb[0].mxu0 %v4629
      %v4934 = vpop.f32.mrb[0].mxu0
      %v4935 = vadd.f32 0.0, %v4934
      %v4936 = vpop.f32.mrb[0].mxu0
      %4937 = vmatprep.mubr.f32.mxu0 0.0
      %4938 = vmatmul.mubr.f32.gmra.mrb[0].mxu0 %v4632
      %v4939 = vpop.f32.mrb[0].mxu0
      %v4940 = vadd.f32 0.0, %v4939
      %v4941 = vpop.f32.mrb[0].mxu0
      %4942 = vmatprep.mubr.f32.mxu0 0.0
      %4943 = vmatmul.mubr.f32.gmra.mrb[0].mxu0 %v4635
      %v4944 = vpop.f32.mrb[0].mxu0
      %v4945 = vadd.f32 0.0, %v4944
      %v4946 = vpop.f32.mrb[0].mxu0
      %4947 = vmatprep.mubr.f32.mxu0 0.0
      %4948 = vmatmul.mubr.f32.gmra.mrb[0].mxu0 %v4638
      %v4949 = vpop.f32.mrb[0].mxu0
      %v4950 = vadd.f32 0.0, %v4949
      %v4951 = vpop.f32.mrb[0].mxu0
      %4952 = vmatprep.mubr.f32.mxu0 0.0
      %4953 = vmatmul.mubr.f32.gmra.mrb[0].mxu0 %v4641
      %v4954 = vpop.f32.mrb[0].mxu0
      %v4955 = vadd.f32 0.0, %v4954
      %v4956 = vpop.f32.mrb[0].mxu0
      %4957 = vmatprep.mubr.f32.mxu0 0.0
      %4958 = vmatmul.mubr.f32.gmra.mrb[0].mxu0 %v4644
      %v4959 = vpop.f32.mrb[0].mxu0
      %v4960 = vadd.f32 0.0, %v4959
      %v4961 = vpop.f32.mrb[0].mxu0
      %4962 = vmatprep.mubr.f32.mxu0 0.0
      %4963 = vmatmul.mubr.f32.gmra.mrb[0].mxu0 %v4647
      %v4964 = vpop.f32.mrb[0].mxu0
      %v4965 = vadd.f32 0.0, %v4964
      %v4966 = vpop.f32.mrb[0].mxu0
      %4967 = vmatprep.mubr.f32.mxu0 0.0
      %4968 = vmatmul.mubr.f32.gmra.mrb[0].mxu0 %v4650
      %v4969 = vpop.f32.mrb[0].mxu0
      %v4970 = vadd.f32 0.0, %v4969
      %v4971 = vpop.f32.mrb[0].mxu0
      %4972 = vmatprep.mubr.f32.mxu0 0.0
      %4973 = vmatmul.mubr.f32.gmra.mrb[0].mxu0 %v4653
      %v4974 = vpop.f32.mrb[0].mxu0
      %v4975 = vadd.f32 0.0, %v4974
      %v4976 = vpop.f32.mrb[0].mxu0
      %4977 = vmatprep.mubr.f32.mxu0 0.0
      %4978 = vmatmul.mubr.f32.gmra.mrb[0].mxu0 %v4656
      %v4979 = vpop.f32.mrb[0].mxu0
      %v4980 = vadd.f32 0.0, %v4979
      %v4981 = vpop.f32.mrb[0].mxu0
      %4982 = vmatprep.mubr.f32.mxu0 0.0
      %4983 = vmatmul.mubr.f32.gmra.mrb[0].mxu0 %v4659
      %v4984 = vpop.f32.mrb[0].mxu0
      %v4985 = vadd.f32 0.0, %v4984
      %v4986 = vpop.f32.mrb[0].mxu0
      %4987 = vmatprep.mubr.f32.mxu0 0.0
      %4988 = vmatmul.mubr.f32.gmra.mrb[0].mxu0 %v4662
      %v4989 = vpop.f32.mrb[0].mxu0
      %v4990 = vadd.f32 0.0, %v4989
      %v4991 = vpop.f32.mrb[0].mxu0
      %4992 = vmatprep.mubr.f32.mxu0 0.0
      %4993 = vmatmul.mubr.f32.gmra.mrb[0].mxu0 %v4665
      %v4994 = vpop.f32.mrb[0].mxu0
      %v4995 = vadd.f32 0.0, %v4994
      %v4996 = vpop.f32.mrb[0].mxu0
      %4997 = vmatprep.mubr.f32.mxu0 0.0
      %4998 = vmatmul.mubr.f32.gmra.mrb[0].mxu0 %v4668
      %v4999 = vpop.f32.mrb[0].mxu0
      %v5000 = vadd.f32 0.0, %v4999
      %v5001 = vpop.f32.mrb[0].mxu0
      %5002 = vmatprep.mubr.f32.mxu0 0.0
      %5003 = vmatmul.mubr.f32.gmra.mrb[0].mxu0 %v4671
      %v5004 = vpop.f32.mrb[0].mxu0
      %v5005 = vadd.f32 0.0, %v5004
      %v5006 = vpop.f32.mrb[0].mxu0
      %5007 = vmatprep.mubr.f32.mxu0 0.0
      %5008 = vmatmul.mubr.f32.gmra.mrb[0].mxu0 %v4674
      %v5009 = vpop.f32.mrb[0].mxu0
      %v5010 = vadd.f32 0.0, %v5009
      %v5011 = vpop.f32.mrb[0].mxu0
      %5012 = vmatprep.mubr.f32.mxu0 0.0
      %5013 = vmatmul.mubr.f32.gmra.mrb[0].mxu0 %v4677
      %v5014 = vpop.f32.mrb[0].mxu0
      %v5015 = vadd.f32 0.0, %v5014
      %v5016 = vpop.f32.mrb[0].mxu0
      %5017 = vmatprep.mubr.f32.mxu0 0.0
      %5018 = vmatmul.mubr.f32.gmra.mrb[0].mxu0 %v4680
      %v5019 = vpop.f32.mrb[0].mxu0
      %v5020 = vadd.f32 0.0, %v5019
      %v5021 = vpop.f32.mrb[0].mxu0
      %5022 = vmatprep.mubr.f32.mxu0 0.0
      %5023 = vmatmul.mubr.f32.gmra.mrb[0].mxu0 %v4683
      %v5024 = vpop.f32.mrb[0].mxu0
      %v5025 = vadd.f32 0.0, %v5024
      %v5026 = vpop.f32.mrb[0].mxu0
      %5027 = vmatprep.mubr.f32.mxu0 0.0
      %5028 = vmatmul.mubr.f32.gmra.mrb[0].mxu0 %v4686
      %v5029 = vpop.f32.mrb[0].mxu0
      %v5030 = vadd.f32 0.0, %v5029
      %v5031 = vpop.f32.mrb[0].mxu0
      %5032 = vmatprep.mubr.f32.mxu0 0.0
      %5033 = vmatmul.mubr.f32.gmra.mrb[0].mxu0 %v4689
      %v5034 = vpop.f32.mrb[0].mxu0
      %v5035 = vadd.f32 0.0, %v5034
      %v5036 = vpop.f32.mrb[0].mxu0
      %5037 = vmatprep.mubr.f32.mxu0 0.0
      %5038 = vmatmul.mubr.f32.gmra.mrb[0].mxu0 %v4692
      %v5039 = vpop.f32.mrb[0].mxu0
      %v5040 = vadd.f32 0.0, %v5039
      %v5041 = vpop.f32.mrb[0].mxu0
      %5042 = vmatprep.mubr.f32.mxu0 0.0
      %5043 = vmatmul.mubr.f32.gmra.mrb[0].mxu0 %v4695
      %v5044 = vpop.f32.mrb[0].mxu0
      %v5045 = vadd.f32 0.0, %v5044
      %v5046 = vpop.f32.mrb[0].mxu0
      %5047 = vmatprep.mubr.f32.mxu0 0.0
      %5048 = vmatmul.mubr.f32.gmra.mrb[0].mxu0 %v4698
      %v5049 = vpop.f32.mrb[0].mxu0
      %v5050 = vadd.f32 0.0, %v5049
      %v5051 = vpop.f32.mrb[0].mxu0
      %5052 = vmatprep.mubr.f32.mxu0 0.0
      %5053 = vmatmul.mubr.f32.gmra.mrb[0].mxu0 %v4701
      %v5054 = vpop.f32.mrb[0].mxu0
      %v5055 = vadd.f32 0.0, %v5054
      %v5056 = vpop.f32.mrb[0].mxu0
      %5057 = vmatprep.mubr.f32.mxu0 0.0
      %5058 = vmatmul.mubr.f32.gmra.mrb[0].mxu0 %v4704
      %v5059 = vpop.f32.mrb[0].mxu0
      %v5060 = vadd.f32 0.0, %v5059
      %v5061 = vpop.f32.mrb[0].mxu0
      %5062 = vmatprep.mubr.f32.mxu0 0.0
      %5063 = vmatmul.mubr.f32.gmra.mrb[0].mxu0 %v4707
      %v5064 = vpop.f32.mrb[0].mxu0
      %v5065 = vadd.f32 0.0, %v5064
      %v5066 = vpop.f32.mrb[0].mxu0
      %5067 = vmatprep.mubr.f32.mxu0 0.0
      %5068 = vmatmul.mubr.f32.gmra.mrb[0].mxu0 %v4710
      %v5069 = vpop.f32.mrb[0].mxu0
      %v5070 = vadd.f32 0.0, %v5069
      %v5071 = vpop.f32.mrb[0].mxu0
      %5072 = vmatprep.mubr.f32.mxu0 0.0
      %5073 = vmatmul.mubr.f32.gmra.mrb[0].mxu0 %v4713
      %v5074 = vpop.f32.mrb[0].mxu0
      %v5075 = vadd.f32 0.0, %v5074
      %v5076 = vpop.f32.mrb[0].mxu0
      %5077 = vmatprep.mubr.f32.mxu0 0.0
      %5078 = vmatmul.mubr.f32.gmra.mrb[0].mxu0 %v4716
      %v5079 = vpop.f32.mrb[0].mxu0
      %v5080 = vadd.f32 0.0, %v5079
      %v5081 = vpop.f32.mrb[0].mxu0
      %5082 = vmatprep.mubr.f32.mxu0 0.0
      %5083 = vmatmul.mubr.f32.gmra.mrb[0].mxu0 %v4719
      %v5084 = vpop.f32.mrb[0].mxu0
      %v5085 = vadd.f32 0.0, %v5084
      %v5086 = vpop.f32.mrb[0].mxu0
      %5087 = vmatprep.mubr.f32.mxu0 0.0
      %5088 = vmatmul.mubr.f32.gmra.mrb[0].mxu0 %v4722
      %v5089 = vpop.f32.mrb[0].mxu0
      %v5090 = vadd.f32 0.0, %v5089
      %v5091 = vpop.f32.mrb[0].mxu0
      %5092 = vmatprep.mubr.f32.mxu0 0.0
      %5093 = vmatmul.mubr.f32.gmra.mrb[0].mxu0 %v4725
      %v5094 = vpop.f32.mrb[0].mxu0
      %v5095 = vadd.f32 0.0, %v5094
      %v5096 = vpop.f32.mrb[0].mxu0
      %5097 = vmatprep.mubr.f32.mxu0 0.0
      %5098 = vmatmul.mubr.f32.gmra.mrb[0].mxu0 %v4728
      %v5099 = vpop.f32.mrb[0].mxu0
      %v5100 = vadd.f32 0.0, %v5099
      %v5101 = vpop.f32.mrb[0].mxu0
      %5102 = vmatprep.mubr.f32.mxu0 0.0
      %5103 = vmatmul.mubr.f32.gmra.mrb[0].mxu0 %v4731
      %v5104 = vpop.f32.mrb[0].mxu0
      %v5105 = vadd.f32 0.0, %v5104
      %v5106 = vpop.f32.mrb[0].mxu0
      %5107 = vmatprep.mubr.f32.mxu0 0.0
      %5108 = vmatmul.mubr.f32.gmra.mrb[0].mxu0 %v4734
      %v5109 = vpop.f32.mrb[0].mxu0
      %v5110 = vadd.f32 0.0, %v5109
      %v5111 = vpop.f32.mrb[0].mxu0
      %5112 = vmatprep.mubr.f32.mxu0 0.0
      %5113 = vmatmul.mubr.f32.gmra.mrb[0].mxu0 %v4737
      %v5114 = vpop.f32.mrb[0].mxu0
      %v5115 = vadd.f32 0.0, %v5114
      %v5116 = vpop.f32.mrb[0].mxu0
      %5117 = vmatprep.mubr.f32.mxu0 0.0
      %5118 = vmatmul.mubr.f32.gmra.mrb[0].mxu0 %v4740
      %v5119 = vpop.f32.mrb[0].mxu0
      %v5120 = vadd.f32 0.0, %v5119
      %v5121 = vpop.f32.mrb[0].mxu0
      %5122 = vmatprep.mubr.f32.mxu0 0.0
      %5123 = vmatmul.mubr.f32.gmra.mrb[0].mxu0 %v4743
      %v5124 = vpop.f32.mrb[0].mxu0
      %v5125 = vadd.f32 0.0, %v5124
      %v5126 = vpop.f32.mrb[0].mxu0
      %5127 = vmatprep.mubr.f32.mxu0 0.0
      %5128 = vmatmul.mubr.f32.gmra.mrb[0].mxu0 %v4746
      %v5129 = vpop.f32.mrb[0].mxu0
      %v5130 = vadd.f32 0.0, %v5129
      %v5131 = vpop.f32.mrb[0].mxu0
      %5132 = vmatprep.mubr.f32.mxu0 0.0
      %5133 = vmatmul.mubr.f32.gmra.mrb[0].mxu0 %v4749
      %v5134 = vpop.f32.mrb[0].mxu0
      %v5135 = vadd.f32 0.0, %v5134
      %v5136 = vpop.f32.mrb[0].mxu0
      %5137 = vmatprep.mubr.f32.mxu0 0.0
      %5138 = vmatmul.mubr.f32.gmra.mrb[0].mxu0 %v4752
      %v5139 = vpop.f32.mrb[0].mxu0
      %v5140 = vadd.f32 0.0, %v5139
      %v5141 = vpop.f32.mrb[0].mxu0
      %5142 = vdwg.mxu0
      %v5143 = vld [vmem:[%s2] sm:$0x1]
      %v5145 = vlaneseq
      %v5146 = vshrl.u32 %v5145, 7
      %v5147 = vsub.s32 0, %v5146
      %v5148 = vrot.slane %v5143, %v5147
      %v5150 = vmul.f32 %v4825, %v5148
      %v5151 = vmul.f32 %v4830, %v5148
      %v5152 = vmul.f32 %v4835, %v5148
      %v5153 = vmul.f32 %v4840, %v5148
      %v5154 = vmul.f32 %v4845, %v5148
      %v5155 = vmul.f32 %v4850, %v5148
      %v5156 = vmul.f32 %v4855, %v5148
      %v5157 = vmul.f32 %v4860, %v5148
      %v5158 = vmul.f32 %v4865, %v5148
      %v5159 = vmul.f32 %v4870, %v5148
      %v5160 = vmul.f32 %v4875, %v5148
      %v5161 = vmul.f32 %v4880, %v5148
      %v5162 = vmul.f32 %v4885, %v5148
      %v5163 = vmul.f32 %v4890, %v5148
      %v5164 = vmul.f32 %v4895, %v5148
      %v5165 = vmul.f32 %v4900, %v5148
      %v5166 = vmul.f32 %v4905, %v5148
      %v5167 = vmul.f32 %v4910, %v5148
      %v5168 = vmul.f32 %v4915, %v5148
      %v5169 = vmul.f32 %v4920, %v5148
      %v5170 = vmul.f32 %v4925, %v5148
      %v5171 = vmul.f32 %v4930, %v5148
      %v5172 = vmul.f32 %v4935, %v5148
      %v5173 = vmul.f32 %v4940, %v5148
      %v5174 = vmul.f32 %v4945, %v5148
      %v5175 = vmul.f32 %v4950, %v5148
      %v5176 = vmul.f32 %v4955, %v5148
      %v5177 = vmul.f32 %v4960, %v5148
      %v5178 = vmul.f32 %v4965, %v5148
      %v5179 = vmul.f32 %v4970, %v5148
      %v5180 = vmul.f32 %v4975, %v5148
      %v5181 = vmul.f32 %v4980, %v5148
      %v5182 = vmul.f32 %v4985, %v5148
      %v5183 = vmul.f32 %v4990, %v5148
      %v5184 = vmul.f32 %v4995, %v5148
      %v5185 = vmul.f32 %v5000, %v5148
      %v5186 = vmul.f32 %v5005, %v5148
      %v5187 = vmul.f32 %v5010, %v5148
      %v5188 = vmul.f32 %v5015, %v5148
      %v5189 = vmul.f32 %v5020, %v5148
      %v5190 = vmul.f32 %v5025, %v5148
      %v5191 = vmul.f32 %v5030, %v5148
      %v5192 = vmul.f32 %v5035, %v5148
      %v5193 = vmul.f32 %v5040, %v5148
      %v5194 = vmul.f32 %v5045, %v5148
      %v5195 = vmul.f32 %v5050, %v5148
      %v5196 = vmul.f32 %v5055, %v5148
      %v5197 = vmul.f32 %v5060, %v5148
      %v5198 = vmul.f32 %v5065, %v5148
      %v5199 = vmul.f32 %v5070, %v5148
      %v5200 = vmul.f32 %v5075, %v5148
      %v5201 = vmul.f32 %v5080, %v5148
      %v5202 = vmul.f32 %v5085, %v5148
      %v5203 = vmul.f32 %v5090, %v5148
      %v5204 = vmul.f32 %v5095, %v5148
      %v5205 = vmul.f32 %v5100, %v5148
      %v5206 = vmul.f32 %v5105, %v5148
      %v5207 = vmul.f32 %v5110, %v5148
      %v5208 = vmul.f32 %v5115, %v5148
      %v5209 = vmul.f32 %v5120, %v5148
      %v5210 = vmul.f32 %v5125, %v5148
      %v5211 = vmul.f32 %v5130, %v5148
      %v5212 = vmul.f32 %v5135, %v5148
      %v5213 = vmul.f32 %v5140, %v5148
      %v5214 = vld [vmem:[%s3] sm:$0x1]
      %v5216 = vlaneseq
      %v5217 = vshrl.u32 %v5216, 7
      %v5218 = vsub.s32 0, %v5217
      %v5219 = vrot.slane %v5214, %v5218
      %v5221 = vadd.f32 %v5150, %v5219
      %v5222 = vadd.f32 %v5151, %v5219
      %v5223 = vadd.f32 %v5152, %v5219
      %v5224 = vadd.f32 %v5153, %v5219
      %v5225 = vadd.f32 %v5154, %v5219
      %v5226 = vadd.f32 %v5155, %v5219
      %v5227 = vadd.f32 %v5156, %v5219
      %v5228 = vadd.f32 %v5157, %v5219
      %v5229 = vadd.f32 %v5158, %v5219
      %v5230 = vadd.f32 %v5159, %v5219
      %v5231 = vadd.f32 %v5160, %v5219
      %v5232 = vadd.f32 %v5161, %v5219
      %v5233 = vadd.f32 %v5162, %v5219
      %v5234 = vadd.f32 %v5163, %v5219
      %v5235 = vadd.f32 %v5164, %v5219
      %v5236 = vadd.f32 %v5165, %v5219
      %v5237 = vadd.f32 %v5166, %v5219
      %v5238 = vadd.f32 %v5167, %v5219
      %v5239 = vadd.f32 %v5168, %v5219
      %v5240 = vadd.f32 %v5169, %v5219
      %v5241 = vadd.f32 %v5170, %v5219
      %v5242 = vadd.f32 %v5171, %v5219
      %v5243 = vadd.f32 %v5172, %v5219
      %v5244 = vadd.f32 %v5173, %v5219
      %v5245 = vadd.f32 %v5174, %v5219
      %v5246 = vadd.f32 %v5175, %v5219
      %v5247 = vadd.f32 %v5176, %v5219
      %v5248 = vadd.f32 %v5177, %v5219
      %v5249 = vadd.f32 %v5178, %v5219
      %v5250 = vadd.f32 %v5179, %v5219
      %v5251 = vadd.f32 %v5180, %v5219
      %v5252 = vadd.f32 %v5181, %v5219
      %v5253 = vadd.f32 %v5182, %v5219
      %v5254 = vadd.f32 %v5183, %v5219
      %v5255 = vadd.f32 %v5184, %v5219
      %v5256 = vadd.f32 %v5185, %v5219
      %v5257 = vadd.f32 %v5186, %v5219
      %v5258 = vadd.f32 %v5187, %v5219
      %v5259 = vadd.f32 %v5188, %v5219
      %v5260 = vadd.f32 %v5189, %v5219
      %v5261 = vadd.f32 %v5190, %v5219
      %v5262 = vadd.f32 %v5191, %v5219
      %v5263 = vadd.f32 %v5192, %v5219
      %v5264 = vadd.f32 %v5193, %v5219
      %v5265 = vadd.f32 %v5194, %v5219
      %v5266 = vadd.f32 %v5195, %v5219
      %v5267 = vadd.f32 %v5196, %v5219
      %v5268 = vadd.f32 %v5197, %v5219
      %v5269 = vadd.f32 %v5198, %v5219
      %v5270 = vadd.f32 %v5199, %v5219
      %v5271 = vadd.f32 %v5200, %v5219
      %v5272 = vadd.f32 %v5201, %v5219
      %v5273 = vadd.f32 %v5202, %v5219
      %v5274 = vadd.f32 %v5203, %v5219
      %v5275 = vadd.f32 %v5204, %v5219
      %v5276 = vadd.f32 %v5205, %v5219
      %v5277 = vadd.f32 %v5206, %v5219
      %v5278 = vadd.f32 %v5207, %v5219
      %v5279 = vadd.f32 %v5208, %v5219
      %v5280 = vadd.f32 %v5209, %v5219
      %v5281 = vadd.f32 %v5210, %v5219
      %v5282 = vadd.f32 %v5211, %v5219
      %v5283 = vadd.f32 %v5212, %v5219
      %v5284 = vadd.f32 %v5213, %v5219
      %v5285 = vmax.f32 %v5221, 0.0
      %v5286 = vmax.f32 %v5222, 0.0
      %v5287 = vmax.f32 %v5223, 0.0
      %v5288 = vmax.f32 %v5224, 0.0
      %v5289 = vmax.f32 %v5225, 0.0
      %v5290 = vmax.f32 %v5226, 0.0
      %v5291 = vmax.f32 %v5227, 0.0
      %v5292 = vmax.f32 %v5228, 0.0
      %v5293 = vmax.f32 %v5229, 0.0
      %v5294 = vmax.f32 %v5230, 0.0
      %v5295 = vmax.f32 %v5231, 0.0
      %v5296 = vmax.f32 %v5232, 0.0
      %v5297 = vmax.f32 %v5233, 0.0
      %v5298 = vmax.f32 %v5234, 0.0
      %v5299 = vmax.f32 %v5235, 0.0
      %v5300 = vmax.f32 %v5236, 0.0
      %v5301 = vmax.f32 %v5237, 0.0
      %v5302 = vmax.f32 %v5238, 0.0
      %v5303 = vmax.f32 %v5239, 0.0
      %v5304 = vmax.f32 %v5240, 0.0
      %v5305 = vmax.f32 %v5241, 0.0
      %v5306 = vmax.f32 %v5242, 0.0
      %v5307 = vmax.f32 %v5243, 0.0
      %v5308 = vmax.f32 %v5244, 0.0
      %v5309 = vmax.f32 %v5245, 0.0
      %v5310 = vmax.f32 %v5246, 0.0
      %v5311 = vmax.f32 %v5247, 0.0
      %v5312 = vmax.f32 %v5248, 0.0
      %v5313 = vmax.f32 %v5249, 0.0
      %v5314 = vmax.f32 %v5250, 0.0
      %v5315 = vmax.f32 %v5251, 0.0
      %v5316 = vmax.f32 %v5252, 0.0
      %v5317 = vmax.f32 %v5253, 0.0
      %v5318 = vmax.f32 %v5254, 0.0
      %v5319 = vmax.f32 %v5255, 0.0
      %v5320 = vmax.f32 %v5256, 0.0
      %v5321 = vmax.f32 %v5257, 0.0
      %v5322 = vmax.f32 %v5258, 0.0
      %v5323 = vmax.f32 %v5259, 0.0
      %v5324 = vmax.f32 %v5260, 0.0
      %v5325 = vmax.f32 %v5261, 0.0
      %v5326 = vmax.f32 %v5262, 0.0
      %v5327 = vmax.f32 %v5263, 0.0
      %v5328 = vmax.f32 %v5264, 0.0
      %v5329 = vmax.f32 %v5265, 0.0
      %v5330 = vmax.f32 %v5266, 0.0
      %v5331 = vmax.f32 %v5267, 0.0
      %v5332 = vmax.f32 %v5268, 0.0
      %v5333 = vmax.f32 %v5269, 0.0
      %v5334 = vmax.f32 %v5270, 0.0
      %v5335 = vmax.f32 %v5271, 0.0
      %v5336 = vmax.f32 %v5272, 0.0
      %v5337 = vmax.f32 %v5273, 0.0
      %v5338 = vmax.f32 %v5274, 0.0
      %v5339 = vmax.f32 %v5275, 0.0
      %v5340 = vmax.f32 %v5276, 0.0
      %v5341 = vmax.f32 %v5277, 0.0
      %v5342 = vmax.f32 %v5278, 0.0
      %v5343 = vmax.f32 %v5279, 0.0
      %v5344 = vmax.f32 %v5280, 0.0
      %v5345 = vmax.f32 %v5281, 0.0
      %v5346 = vmax.f32 %v5282, 0.0
      %v5347 = vmax.f32 %v5283, 0.0
      %v5348 = vmax.f32 %v5284, 0.0
      %vm5349 = vcmask 64512
      %5350 = vst.msk [vmem:[#allocation4] sm:$0xff] %vm5349, 0.0
      %5351 = vst.msk [vmem:[#allocation4 + $0x8] sm:$0xff] %vm5349, 0.0
      %5352 = vst.msk [vmem:[#allocation4 + $0x10] sm:$0xff] %vm5349, 0.0
      %5353 = vst.msk [vmem:[#allocation4 + $0x18] sm:$0xff] %vm5349, 0.0
      %5354 = vst.msk [vmem:[#allocation4 + $0x20] sm:$0xff] %vm5349, 0.0
      %5355 = vst.msk [vmem:[#allocation4 + $0x28] sm:$0xff] %vm5349, 0.0
      %5356 = vst.msk [vmem:[#allocation4 + $0x30] sm:$0xff] %vm5349, 0.0
      %5357 = vst.msk [vmem:[#allocation4 + $0x38] sm:$0xff] %vm5349, 0.0
      %5358 = vst.msk [vmem:[#allocation4 + $0x40] sm:$0xff] %vm5349, 0.0
      %5359 = vst.msk [vmem:[#allocation4 + $0x48] sm:$0xff] %vm5349, 0.0
      %5360 = vst.msk [vmem:[#allocation4 + $0x50] sm:$0xff] %vm5349, 0.0
      %5361 = vst.msk [vmem:[#allocation4 + $0x58] sm:$0xff] %vm5349, 0.0
      %5362 = vst.msk [vmem:[#allocation4 + $0x60] sm:$0xff] %vm5349, 0.0
      %5363 = vst.msk [vmem:[#allocation4 + $0x68] sm:$0xff] %vm5349, 0.0
      %5364 = vst.msk [vmem:[#allocation4 + $0x70] sm:$0xff] %vm5349, 0.0
      %5365 = vst.msk [vmem:[#allocation4 + $0x78] sm:$0xff] %vm5349, 0.0
      %5366 = vst.msk [vmem:[#allocation4 + $0x80] sm:$0xff] %vm5349, 0.0
      %5367 = vst.msk [vmem:[#allocation4 + $0x88] sm:$0xff] %vm5349, 0.0
      %5368 = vst.msk [vmem:[#allocation4 + $0x90] sm:$0xff] %vm5349, 0.0
      %5369 = vst.msk [vmem:[#allocation4 + $0x98] sm:$0xff] %vm5349, 0.0
      %5370 = vst.msk [vmem:[#allocation4 + $0xa0] sm:$0xff] %vm5349, 0.0
      %5371 = vst.msk [vmem:[#allocation4 + $0xa8] sm:$0xff] %vm5349, 0.0
      %5372 = vst.msk [vmem:[#allocation4 + $0xb0] sm:$0xff] %vm5349, 0.0
      %5373 = vst.msk [vmem:[#allocation4 + $0xb8] sm:$0xff] %vm5349, 0.0
      %5374 = vst.msk [vmem:[#allocation4 + $0xc0] sm:$0xff] %vm5349, 0.0
      %5375 = vst.msk [vmem:[#allocation4 + $0xc8] sm:$0xff] %vm5349, 0.0
      %5376 = vst.msk [vmem:[#allocation4 + $0xd0] sm:$0xff] %vm5349, 0.0
      %5377 = vst.msk [vmem:[#allocation4 + $0xd8] sm:$0xff] %vm5349, 0.0
      %5378 = vst.msk [vmem:[#allocation4 + $0xe0] sm:$0xff] %vm5349, 0.0
      %5379 = vst.msk [vmem:[#allocation4 + $0xe8] sm:$0xff] %vm5349, 0.0
      %5380 = vst.msk [vmem:[#allocation4 + $0xf0] sm:$0xff] %vm5349, 0.0
      %5381 = vst.msk [vmem:[#allocation4 + $0xf8] sm:$0xff] %vm5349, 0.0
      %5382 = vst.msk [vmem:[#allocation4 + $0x100] sm:$0xff] %vm5349, 0.0
      %5383 = vst.msk [vmem:[#allocation4 + $0x108] sm:$0xff] %vm5349, 0.0
      %5384 = vst.msk [vmem:[#allocation4 + $0x110] sm:$0xff] %vm5349, 0.0
      %5385 = vst.msk [vmem:[#allocation4 + $0x118] sm:$0xff] %vm5349, 0.0
      %5386 = vst.msk [vmem:[#allocation4 + $0x120] sm:$0xff] %vm5349, 0.0
      %5387 = vst.msk [vmem:[#allocation4 + $0x128] sm:$0xff] %vm5349, 0.0
      %5388 = vst.msk [vmem:[#allocation4 + $0x130] sm:$0xff] %vm5349, 0.0
      %5389 = vst.msk [vmem:[#allocation4 + $0x138] sm:$0xff] %vm5349, 0.0
      %5390 = vst.msk [vmem:[#allocation4 + $0x140] sm:$0xff] %vm5349, 0.0
      %5391 = vst.msk [vmem:[#allocation4 + $0x148] sm:$0xff] %vm5349, 0.0
      %5392 = vst.msk [vmem:[#allocation4 + $0x150] sm:$0xff] %vm5349, 0.0
      %5393 = vst.msk [vmem:[#allocation4 + $0x158] sm:$0xff] %vm5349, 0.0
      %5394 = vst.msk [vmem:[#allocation4 + $0x160] sm:$0xff] %vm5349, 0.0
      %5395 = vst.msk [vmem:[#allocation4 + $0x168] sm:$0xff] %vm5349, 0.0
      %5396 = vst.msk [vmem:[#allocation4 + $0x170] sm:$0xff] %vm5349, 0.0
      %5397 = vst.msk [vmem:[#allocation4 + $0x178] sm:$0xff] %vm5349, 0.0
      %5398 = vst.msk [vmem:[#allocation4 + $0x180] sm:$0xff] %vm5349, 0.0
      %5399 = vst.msk [vmem:[#allocation4 + $0x188] sm:$0xff] %vm5349, 0.0
      %5400 = vst.msk [vmem:[#allocation4 + $0x190] sm:$0xff] %vm5349, 0.0
      %5401 = vst.msk [vmem:[#allocation4 + $0x198] sm:$0xff] %vm5349, 0.0
      %5402 = vst.msk [vmem:[#allocation4 + $0x1a0] sm:$0xff] %vm5349, 0.0
      %5403 = vst.msk [vmem:[#allocation4 + $0x1a8] sm:$0xff] %vm5349, 0.0
      %5404 = vst.msk [vmem:[#allocation4 + $0x1b0] sm:$0xff] %vm5349, 0.0
      %5405 = vst.msk [vmem:[#allocation4 + $0x1b8] sm:$0xff] %vm5349, 0.0
      %5406 = vst.msk [vmem:[#allocation4 + $0x1c0] sm:$0xff] %vm5349, 0.0
      %5407 = vst.msk [vmem:[#allocation4 + $0x1c8] sm:$0xff] %vm5349, 0.0
      %5408 = vst.msk [vmem:[#allocation4 + $0x1d0] sm:$0xff] %vm5349, 0.0
      %5409 = vst.msk [vmem:[#allocation4 + $0x1d8] sm:$0xff] %vm5349, 0.0
      %5410 = vst.msk [vmem:[#allocation4 + $0x1e0] sm:$0xff] %vm5349, 0.0
      %5411 = vst.msk [vmem:[#allocation4 + $0x1e8] sm:$0xff] %vm5349, 0.0
      %5412 = vst.msk [vmem:[#allocation4 + $0x1f0] sm:$0xff] %vm5349, 0.0
      %5413 = vst.msk [vmem:[#allocation4 + $0x1f8] sm:$0xff] %vm5349, 0.0
      %5414 = vst.msk [vmem:[#allocation4 + $0x200] sm:$0xff] %vm5349, 0.0
      %5415 = vst.msk [vmem:[#allocation4 + $0x208] sm:$0xff] %vm5349, 0.0
      %5416 = vst.msk [vmem:[#allocation4 + $0x210] sm:$0xff] %vm5349, 0.0
      %5417 = vst.msk [vmem:[#allocation4 + $0x218] sm:$0xff] %vm5349, 0.0
      %5418 = vst.msk [vmem:[#allocation4 + $0x220] sm:$0xff] %vm5349, 0.0
      %5419 = vst.msk [vmem:[#allocation4 + $0x228] sm:$0xff] %vm5349, 0.0
      %5420 = vst.msk [vmem:[#allocation4 + $0x230] sm:$0xff] %vm5349, 0.0
      %5421 = vst.msk [vmem:[#allocation4 + $0x238] sm:$0xff] %vm5349, 0.0
      %5422 = vst.msk [vmem:[#allocation4 + $0x240] sm:$0xff] %vm5349, 0.0
      %5423 = vst.msk [vmem:[#allocation4 + $0x248] sm:$0xff] %vm5349, 0.0
      %5424 = vst.msk [vmem:[#allocation4 + $0x250] sm:$0xff] %vm5349, 0.0
      %5425 = vst.msk [vmem:[#allocation4 + $0x258] sm:$0xff] %vm5349, 0.0
      %5426 = vst.msk [vmem:[#allocation4 + $0x260] sm:$0xff] %vm5349, 0.0
      %5427 = vst.msk [vmem:[#allocation4 + $0x268] sm:$0xff] %vm5349, 0.0
      %5428 = vst.msk [vmem:[#allocation4 + $0x270] sm:$0xff] %vm5349, 0.0
      %5429 = vst.msk [vmem:[#allocation4 + $0x278] sm:$0xff] %vm5349, 0.0
      %5430 = vst.msk [vmem:[#allocation4 + $0x280] sm:$0xff] %vm5349, 0.0
      %5431 = vst.msk [vmem:[#allocation4 + $0x288] sm:$0xff] %vm5349, 0.0
      %5432 = vst.msk [vmem:[#allocation4 + $0x290] sm:$0xff] %vm5349, 0.0
      %5433 = vst.msk [vmem:[#allocation4 + $0x298] sm:$0xff] %vm5349, 0.0
      %5434 = vst.msk [vmem:[#allocation4 + $0x2a0] sm:$0xff] %vm5349, 0.0
      %5435 = vst.msk [vmem:[#allocation4 + $0x2a8] sm:$0xff] %vm5349, 0.0
      %5436 = vst.msk [vmem:[#allocation4 + $0x2b0] sm:$0xff] %vm5349, 0.0
      %5437 = vst.msk [vmem:[#allocation4 + $0x2b8] sm:$0xff] %vm5349, 0.0
      %5438 = vst.msk [vmem:[#allocation4 + $0x2c0] sm:$0xff] %vm5349, 0.0
      %5439 = vst.msk [vmem:[#allocation4 + $0x2c8] sm:$0xff] %vm5349, 0.0
      %5440 = vst.msk [vmem:[#allocation4 + $0x2d0] sm:$0xff] %vm5349, 0.0
      %5441 = vst.msk [vmem:[#allocation4 + $0x2d8] sm:$0xff] %vm5349, 0.0
      %5442 = vst.msk [vmem:[#allocation4 + $0x2e0] sm:$0xff] %vm5349, 0.0
      %5443 = vst.msk [vmem:[#allocation4 + $0x2e8] sm:$0xff] %vm5349, 0.0
      %5444 = vst.msk [vmem:[#allocation4 + $0x2f0] sm:$0xff] %vm5349, 0.0
      %5445 = vst.msk [vmem:[#allocation4 + $0x2f8] sm:$0xff] %vm5349, 0.0
      %5446 = vst.msk [vmem:[#allocation4 + $0x300] sm:$0xff] %vm5349, 0.0
      %5447 = vst.msk [vmem:[#allocation4 + $0x308] sm:$0xff] %vm5349, 0.0
      %5448 = vst.msk [vmem:[#allocation4 + $0x310] sm:$0xff] %vm5349, 0.0
      %5449 = vst.msk [vmem:[#allocation4 + $0x318] sm:$0xff] %vm5349, 0.0
      %s5450 = scalar_lea.vmem [#allocation4], 88
      %5451 = vst.msk [vmem:[%s5450] sm:$0xff] %vm5349, %v5285
      %5452 = vst.msk [vmem:[%s5450 + $0x8] sm:$0xff] %vm5349, %v5286
      %5453 = vst.msk [vmem:[%s5450 + $0x10] sm:$0xff] %vm5349, %v5287
      %5454 = vst.msk [vmem:[%s5450 + $0x18] sm:$0xff] %vm5349, %v5288
      %5455 = vst.msk [vmem:[%s5450 + $0x20] sm:$0xff] %vm5349, %v5289
      %5456 = vst.msk [vmem:[%s5450 + $0x28] sm:$0xff] %vm5349, %v5290
      %5457 = vst.msk [vmem:[%s5450 + $0x30] sm:$0xff] %vm5349, %v5291
      %5458 = vst.msk [vmem:[%s5450 + $0x38] sm:$0xff] %vm5349, %v5292
      %5459 = vst.msk [vmem:[%s5450 + $0x50] sm:$0xff] %vm5349, %v5293
      %5460 = vst.msk [vmem:[%s5450 + $0x58] sm:$0xff] %vm5349, %v5294
      %5461 = vst.msk [vmem:[%s5450 + $0x60] sm:$0xff] %vm5349, %v5295
      %5462 = vst.msk [vmem:[%s5450 + $0x68] sm:$0xff] %vm5349, %v5296
      %5463 = vst.msk [vmem:[%s5450 + $0x70] sm:$0xff] %vm5349, %v5297
      %5464 = vst.msk [vmem:[%s5450 + $0x78] sm:$0xff] %vm5349, %v5298
      %5465 = vst.msk [vmem:[%s5450 + $0x80] sm:$0xff] %vm5349, %v5299
      %5466 = vst.msk [vmem:[%s5450 + $0x88] sm:$0xff] %vm5349, %v5300
      %5467 = vst.msk [vmem:[%s5450 + $0xa0] sm:$0xff] %vm5349, %v5301
      %5468 = vst.msk [vmem:[%s5450 + $0xa8] sm:$0xff] %vm5349, %v5302
      %5469 = vst.msk [vmem:[%s5450 + $0xb0] sm:$0xff] %vm5349, %v5303
      %5470 = vst.msk [vmem:[%s5450 + $0xb8] sm:$0xff] %vm5349, %v5304
      %5471 = vst.msk [vmem:[%s5450 + $0xc0] sm:$0xff] %vm5349, %v5305
      %5472 = vst.msk [vmem:[%s5450 + $0xc8] sm:$0xff] %vm5349, %v5306
      %5473 = vst.msk [vmem:[%s5450 + $0xd0] sm:$0xff] %vm5349, %v5307
      %5474 = vst.msk [vmem:[%s5450 + $0xd8] sm:$0xff] %vm5349, %v5308
      %5475 = vst.msk [vmem:[%s5450 + $0xf0] sm:$0xff] %vm5349, %v5309
      %5476 = vst.msk [vmem:[%s5450 + $0xf8] sm:$0xff] %vm5349, %v5310
      %5477 = vst.msk [vmem:[%s5450 + $0x100] sm:$0xff] %vm5349, %v5311
      %5478 = vst.msk [vmem:[%s5450 + $0x108] sm:$0xff] %vm5349, %v5312
      %5479 = vst.msk [vmem:[%s5450 + $0x110] sm:$0xff] %vm5349, %v5313
      %5480 = vst.msk [vmem:[%s5450 + $0x118] sm:$0xff] %vm5349, %v5314
      %5481 = vst.msk [vmem:[%s5450 + $0x120] sm:$0xff] %vm5349, %v5315
      %5482 = vst.msk [vmem:[%s5450 + $0x128] sm:$0xff] %vm5349, %v5316
      %5483 = vst.msk [vmem:[%s5450 + $0x140] sm:$0xff] %vm5349, %v5317
      %5484 = vst.msk [vmem:[%s5450 + $0x148] sm:$0xff] %vm5349, %v5318
      %5485 = vst.msk [vmem:[%s5450 + $0x150] sm:$0xff] %vm5349, %v5319
      %5486 = vst.msk [vmem:[%s5450 + $0x158] sm:$0xff] %vm5349, %v5320
      %5487 = vst.msk [vmem:[%s5450 + $0x160] sm:$0xff] %vm5349, %v5321
      %5488 = vst.msk [vmem:[%s5450 + $0x168] sm:$0xff] %vm5349, %v5322
      %5489 = vst.msk [vmem:[%s5450 + $0x170] sm:$0xff] %vm5349, %v5323
      %5490 = vst.msk [vmem:[%s5450 + $0x178] sm:$0xff] %vm5349, %v5324
      %5491 = vst.msk [vmem:[%s5450 + $0x190] sm:$0xff] %vm5349, %v5325
      %5492 = vst.msk [vmem:[%s5450 + $0x198] sm:$0xff] %vm5349, %v5326
      %5493 = vst.msk [vmem:[%s5450 + $0x1a0] sm:$0xff] %vm5349, %v5327
      %5494 = vst.msk [vmem:[%s5450 + $0x1a8] sm:$0xff] %vm5349, %v5328
      %5495 = vst.msk [vmem:[%s5450 + $0x1b0] sm:$0xff] %vm5349, %v5329
      %5496 = vst.msk [vmem:[%s5450 + $0x1b8] sm:$0xff] %vm5349, %v5330
      %5497 = vst.msk [vmem:[%s5450 + $0x1c0] sm:$0xff] %vm5349, %v5331
      %5498 = vst.msk [vmem:[%s5450 + $0x1c8] sm:$0xff] %vm5349, %v5332
      %5499 = vst.msk [vmem:[%s5450 + $0x1e0] sm:$0xff] %vm5349, %v5333
      %5500 = vst.msk [vmem:[%s5450 + $0x1e8] sm:$0xff] %vm5349, %v5334
      %5501 = vst.msk [vmem:[%s5450 + $0x1f0] sm:$0xff] %vm5349, %v5335
      %5502 = vst.msk [vmem:[%s5450 + $0x1f8] sm:$0xff] %vm5349, %v5336
      %5503 = vst.msk [vmem:[%s5450 + $0x200] sm:$0xff] %vm5349, %v5337
      %5504 = vst.msk [vmem:[%s5450 + $0x208] sm:$0xff] %vm5349, %v5338
      %5505 = vst.msk [vmem:[%s5450 + $0x210] sm:$0xff] %vm5349, %v5339
      %5506 = vst.msk [vmem:[%s5450 + $0x218] sm:$0xff] %vm5349, %v5340
      %5507 = vst.msk [vmem:[%s5450 + $0x230] sm:$0xff] %vm5349, %v5341
      %5508 = vst.msk [vmem:[%s5450 + $0x238] sm:$0xff] %vm5349, %v5342
      %5509 = vst.msk [vmem:[%s5450 + $0x240] sm:$0xff] %vm5349, %v5343
      %5510 = vst.msk [vmem:[%s5450 + $0x248] sm:$0xff] %vm5349, %v5344
      %5511 = vst.msk [vmem:[%s5450 + $0x250] sm:$0xff] %vm5349, %v5345
      %5512 = vst.msk [vmem:[%s5450 + $0x258] sm:$0xff] %vm5349, %v5346
      %5513 = vst.msk [vmem:[%s5450 + $0x260] sm:$0xff] %vm5349, %v5347
      %5514 = vst.msk [vmem:[%s5450 + $0x268] sm:$0xff] %vm5349, %v5348
      %v5515 = vld [vmem:[#allocation4] sm:$0xff]
      %v5516 = vld [vmem:[#allocation4 + $0x8] sm:$0xff]
      %v5517 = vld [vmem:[#allocation4 + $0x10] sm:$0xff]
      %v5518 = vld [vmem:[#allocation4 + $0x18] sm:$0xff]
      %v5519 = vld [vmem:[#allocation4 + $0x20] sm:$0xff]
      %v5520 = vld [vmem:[#allocation4 + $0x28] sm:$0xff]
      %v5521 = vld [vmem:[#allocation4 + $0x30] sm:$0xff]
      %v5522 = vld [vmem:[#allocation4 + $0x38] sm:$0xff]
      %v5523 = vld [vmem:[#allocation4 + $0x50] sm:$0xff]
      %v5524 = vld [vmem:[#allocation4 + $0x58] sm:$0xff]
      %v5525 = vld [vmem:[#allocation4 + $0x60] sm:$0xff]
      %v5526 = vld [vmem:[#allocation4 + $0x68] sm:$0xff]
      %v5527 = vld [vmem:[#allocation4 + $0x70] sm:$0xff]
      %v5528 = vld [vmem:[#allocation4 + $0x78] sm:$0xff]
      %v5529 = vld [vmem:[#allocation4 + $0x80] sm:$0xff]
      %v5530 = vld [vmem:[#allocation4 + $0x88] sm:$0xff]
      %v5531 = vld [vmem:[#allocation4 + $0xa0] sm:$0xff]
      %v5532 = vld [vmem:[#allocation4 + $0xa8] sm:$0xff]
      %v5533 = vld [vmem:[#allocation4 + $0xb0] sm:$0xff]
      %v5534 = vld [vmem:[#allocation4 + $0xb8] sm:$0xff]
      %v5535 = vld [vmem:[#allocation4 + $0xc0] sm:$0xff]
      %v5536 = vld [vmem:[#allocation4 + $0xc8] sm:$0xff]
      %v5537 = vld [vmem:[#allocation4 + $0xd0] sm:$0xff]
      %v5538 = vld [vmem:[#allocation4 + $0xd8] sm:$0xff]
      %v5539 = vld [vmem:[#allocation4 + $0xf0] sm:$0xff]
      %v5540 = vld [vmem:[#allocation4 + $0xf8] sm:$0xff]
      %v5541 = vld [vmem:[#allocation4 + $0x100] sm:$0xff]
      %v5542 = vld [vmem:[#allocation4 + $0x108] sm:$0xff]
      %v5543 = vld [vmem:[#allocation4 + $0x110] sm:$0xff]
      %v5544 = vld [vmem:[#allocation4 + $0x118] sm:$0xff]
      %v5545 = vld [vmem:[#allocation4 + $0x120] sm:$0xff]
      %v5546 = vld [vmem:[#allocation4 + $0x128] sm:$0xff]
      %v5547 = vld [vmem:[#allocation4 + $0x140] sm:$0xff]
      %v5548 = vld [vmem:[#allocation4 + $0x148] sm:$0xff]
      %v5549 = vld [vmem:[#allocation4 + $0x150] sm:$0xff]
      %v5550 = vld [vmem:[#allocation4 + $0x158] sm:$0xff]
      %v5551 = vld [vmem:[#allocation4 + $0x160] sm:$0xff]
      %v5552 = vld [vmem:[#allocation4 + $0x168] sm:$0xff]
      %v5553 = vld [vmem:[#allocation4 + $0x170] sm:$0xff]
      %v5554 = vld [vmem:[#allocation4 + $0x178] sm:$0xff]
      %v5555 = vld [vmem:[#allocation4 + $0x190] sm:$0xff]
      %v5556 = vld [vmem:[#allocation4 + $0x198] sm:$0xff]
      %v5557 = vld [vmem:[#allocation4 + $0x1a0] sm:$0xff]
      %v5558 = vld [vmem:[#allocation4 + $0x1a8] sm:$0xff]
      %v5559 = vld [vmem:[#allocation4 + $0x1b0] sm:$0xff]
      %v5560 = vld [vmem:[#allocation4 + $0x1b8] sm:$0xff]
      %v5561 = vld [vmem:[#allocation4 + $0x1c0] sm:$0xff]
      %v5562 = vld [vmem:[#allocation4 + $0x1c8] sm:$0xff]
      %v5563 = vld [vmem:[#allocation4 + $0x1e0] sm:$0xff]
      %v5564 = vld [vmem:[#allocation4 + $0x1e8] sm:$0xff]
      %v5565 = vld [vmem:[#allocation4 + $0x1f0] sm:$0xff]
      %v5566 = vld [vmem:[#allocation4 + $0x1f8] sm:$0xff]
      %v5567 = vld [vmem:[#allocation4 + $0x200] sm:$0xff]
      %v5568 = vld [vmem:[#allocation4 + $0x208] sm:$0xff]
      %v5569 = vld [vmem:[#allocation4 + $0x210] sm:$0xff]
      %v5570 = vld [vmem:[#allocation4 + $0x218] sm:$0xff]
      %v5571 = vld [vmem:[#allocation4 + $0x230] sm:$0xff]
      %v5572 = vld [vmem:[#allocation4 + $0x238] sm:$0xff]
      %v5573 = vld [vmem:[#allocation4 + $0x240] sm:$0xff]
      %v5574 = vld [vmem:[#allocation4 + $0x248] sm:$0xff]
      %v5575 = vld [vmem:[#allocation4 + $0x250] sm:$0xff]
      %v5576 = vld [vmem:[#allocation4 + $0x258] sm:$0xff]
      %v5577 = vld [vmem:[#allocation4 + $0x260] sm:$0xff]
      %v5578 = vld [vmem:[#allocation4 + $0x268] sm:$0xff]
      %5579 = vst.msk [vmem:[#allocation5] sm:$0xff] %vm5349, %v5515
      %5580 = vst.msk [vmem:[#allocation5 + $0x8] sm:$0xff] %vm5349, %v5516
      %5581 = vst.msk [vmem:[#allocation5 + $0x10] sm:$0xff] %vm5349, %v5517
      %5582 = vst.msk [vmem:[#allocation5 + $0x18] sm:$0xff] %vm5349, %v5518
      %5583 = vst.msk [vmem:[#allocation5 + $0x20] sm:$0xff] %vm5349, %v5519
      %5584 = vst.msk [vmem:[#allocation5 + $0x28] sm:$0xff] %vm5349, %v5520
      %5585 = vst.msk [vmem:[#allocation5 + $0x30] sm:$0xff] %vm5349, %v5521
      %5586 = vst.msk [vmem:[#allocation5 + $0x38] sm:$0xff] %vm5349, %v5522
      %5587 = vst.msk [vmem:[#allocation5 + $0x40] sm:$0xff] %vm5349, %v5523
      %5588 = vst.msk [vmem:[#allocation5 + $0x48] sm:$0xff] %vm5349, %v5524
      %5589 = vst.msk [vmem:[#allocation5 + $0x50] sm:$0xff] %vm5349, %v5525
      %5590 = vst.msk [vmem:[#allocation5 + $0x58] sm:$0xff] %vm5349, %v5526
      %5591 = vst.msk [vmem:[#allocation5 + $0x60] sm:$0xff] %vm5349, %v5527
      %5592 = vst.msk [vmem:[#allocation5 + $0x68] sm:$0xff] %vm5349, %v5528
      %5593 = vst.msk [vmem:[#allocation5 + $0x70] sm:$0xff] %vm5349, %v5529
      %5594 = vst.msk [vmem:[#allocation5 + $0x78] sm:$0xff] %vm5349, %v5530
      %5595 = vst.msk [vmem:[#allocation5 + $0x80] sm:$0xff] %vm5349, %v5531
      %5596 = vst.msk [vmem:[#allocation5 + $0x88] sm:$0xff] %vm5349, %v5532
      %5597 = vst.msk [vmem:[#allocation5 + $0x90] sm:$0xff] %vm5349, %v5533
      %5598 = vst.msk [vmem:[#allocation5 + $0x98] sm:$0xff] %vm5349, %v5534
      %5599 = vst.msk [vmem:[#allocation5 + $0xa0] sm:$0xff] %vm5349, %v5535
      %5600 = vst.msk [vmem:[#allocation5 + $0xa8] sm:$0xff] %vm5349, %v5536
      %5601 = vst.msk [vmem:[#allocation5 + $0xb0] sm:$0xff] %vm5349, %v5537
      %5602 = vst.msk [vmem:[#allocation5 + $0xb8] sm:$0xff] %vm5349, %v5538
      %5603 = vst.msk [vmem:[#allocation5 + $0xc0] sm:$0xff] %vm5349, %v5539
      %5604 = vst.msk [vmem:[#allocation5 + $0xc8] sm:$0xff] %vm5349, %v5540
      %5605 = vst.msk [vmem:[#allocation5 + $0xd0] sm:$0xff] %vm5349, %v5541
      %5606 = vst.msk [vmem:[#allocation5 + $0xd8] sm:$0xff] %vm5349, %v5542
      %5607 = vst.msk [vmem:[#allocation5 + $0xe0] sm:$0xff] %vm5349, %v5543
      %5608 = vst.msk [vmem:[#allocation5 + $0xe8] sm:$0xff] %vm5349, %v5544
      %5609 = vst.msk [vmem:[#allocation5 + $0xf0] sm:$0xff] %vm5349, %v5545
      %5610 = vst.msk [vmem:[#allocation5 + $0xf8] sm:$0xff] %vm5349, %v5546
      %5611 = vst.msk [vmem:[#allocation5 + $0x100] sm:$0xff] %vm5349, %v5547
      %5612 = vst.msk [vmem:[#allocation5 + $0x108] sm:$0xff] %vm5349, %v5548
      %5613 = vst.msk [vmem:[#allocation5 + $0x110] sm:$0xff] %vm5349, %v5549
      %5614 = vst.msk [vmem:[#allocation5 + $0x118] sm:$0xff] %vm5349, %v5550
      %5615 = vst.msk [vmem:[#allocation5 + $0x120] sm:$0xff] %vm5349, %v5551
      %5616 = vst.msk [vmem:[#allocation5 + $0x128] sm:$0xff] %vm5349, %v5552
      %5617 = vst.msk [vmem:[#allocation5 + $0x130] sm:$0xff] %vm5349, %v5553
      %5618 = vst.msk [vmem:[#allocation5 + $0x138] sm:$0xff] %vm5349, %v5554
      %5619 = vst.msk [vmem:[#allocation5 + $0x140] sm:$0xff] %vm5349, %v5555
      %5620 = vst.msk [vmem:[#allocation5 + $0x148] sm:$0xff] %vm5349, %v5556
      %5621 = vst.msk [vmem:[#allocation5 + $0x150] sm:$0xff] %vm5349, %v5557
      %5622 = vst.msk [vmem:[#allocation5 + $0x158] sm:$0xff] %vm5349, %v5558
      %5623 = vst.msk [vmem:[#allocation5 + $0x160] sm:$0xff] %vm5349, %v5559
      %5624 = vst.msk [vmem:[#allocation5 + $0x168] sm:$0xff] %vm5349, %v5560
      %5625 = vst.msk [vmem:[#allocation5 + $0x170] sm:$0xff] %vm5349, %v5561
      %5626 = vst.msk [vmem:[#allocation5 + $0x178] sm:$0xff] %vm5349, %v5562
      %5627 = vst.msk [vmem:[#allocation5 + $0x180] sm:$0xff] %vm5349, %v5563
      %5628 = vst.msk [vmem:[#allocation5 + $0x188] sm:$0xff] %vm5349, %v5564
      %5629 = vst.msk [vmem:[#allocation5 + $0x190] sm:$0xff] %vm5349, %v5565
      %5630 = vst.msk [vmem:[#allocation5 + $0x198] sm:$0xff] %vm5349, %v5566
      %5631 = vst.msk [vmem:[#allocation5 + $0x1a0] sm:$0xff] %vm5349, %v5567
      %5632 = vst.msk [vmem:[#allocation5 + $0x1a8] sm:$0xff] %vm5349, %v5568
      %5633 = vst.msk [vmem:[#allocation5 + $0x1b0] sm:$0xff] %vm5349, %v5569
      %5634 = vst.msk [vmem:[#allocation5 + $0x1b8] sm:$0xff] %vm5349, %v5570
      %5635 = vst.msk [vmem:[#allocation5 + $0x1c0] sm:$0xff] %vm5349, %v5571
      %5636 = vst.msk [vmem:[#allocation5 + $0x1c8] sm:$0xff] %vm5349, %v5572
      %5637 = vst.msk [vmem:[#allocation5 + $0x1d0] sm:$0xff] %vm5349, %v5573
      %5638 = vst.msk [vmem:[#allocation5 + $0x1d8] sm:$0xff] %vm5349, %v5574
      %5639 = vst.msk [vmem:[#allocation5 + $0x1e0] sm:$0xff] %vm5349, %v5575
      %5640 = vst.msk [vmem:[#allocation5 + $0x1e8] sm:$0xff] %vm5349, %v5576
      %5641 = vst.msk [vmem:[#allocation5 + $0x1f0] sm:$0xff] %vm5349, %v5577
      %5642 = vst.msk [vmem:[#allocation5 + $0x1f8] sm:$0xff] %vm5349, %v5578
      %s5643 = scalar_lea.vmem [#allocation4], 8
      %v5644 = vld [vmem:[%s5643] sm:$0xff]
      %v5645 = vld [vmem:[%s5643 + $0x8] sm:$0xff]
      %v5646 = vld [vmem:[%s5643 + $0x10] sm:$0xff]
      %v5647 = vld [vmem:[%s5643 + $0x18] sm:$0xff]
      %v5648 = vld [vmem:[%s5643 + $0x20] sm:$0xff]
      %v5649 = vld [vmem:[%s5643 + $0x28] sm:$0xff]
      %v5650 = vld [vmem:[%s5643 + $0x30] sm:$0xff]
      %v5651 = vld [vmem:[%s5643 + $0x38] sm:$0xff]
      %v5652 = vld [vmem:[%s5643 + $0x50] sm:$0xff]
      %v5653 = vld [vmem:[%s5643 + $0x58] sm:$0xff]
      %v5654 = vld [vmem:[%s5643 + $0x60] sm:$0xff]
      %v5655 = vld [vmem:[%s5643 + $0x68] sm:$0xff]
      %v5656 = vld [vmem:[%s5643 + $0x70] sm:$0xff]
      %v5657 = vld [vmem:[%s5643 + $0x78] sm:$0xff]
      %v5658 = vld [vmem:[%s5643 + $0x80] sm:$0xff]
      %v5659 = vld [vmem:[%s5643 + $0x88] sm:$0xff]
      %v5660 = vld [vmem:[%s5643 + $0xa0] sm:$0xff]
      %v5661 = vld [vmem:[%s5643 + $0xa8] sm:$0xff]
      %v5662 = vld [vmem:[%s5643 + $0xb0] sm:$0xff]
      %v5663 = vld [vmem:[%s5643 + $0xb8] sm:$0xff]
      %v5664 = vld [vmem:[%s5643 + $0xc0] sm:$0xff]
      %v5665 = vld [vmem:[%s5643 + $0xc8] sm:$0xff]
      %v5666 = vld [vmem:[%s5643 + $0xd0] sm:$0xff]
      %v5667 = vld [vmem:[%s5643 + $0xd8] sm:$0xff]
      %v5668 = vld [vmem:[%s5643 + $0xf0] sm:$0xff]
      %v5669 = vld [vmem:[%s5643 + $0xf8] sm:$0xff]
      %v5670 = vld [vmem:[%s5643 + $0x100] sm:$0xff]
      %v5671 = vld [vmem:[%s5643 + $0x108] sm:$0xff]
      %v5672 = vld [vmem:[%s5643 + $0x110] sm:$0xff]
      %v5673 = vld [vmem:[%s5643 + $0x118] sm:$0xff]
      %v5674 = vld [vmem:[%s5643 + $0x120] sm:$0xff]
      %v5675 = vld [vmem:[%s5643 + $0x128] sm:$0xff]
      %v5676 = vld [vmem:[%s5643 + $0x140] sm:$0xff]
      %v5677 = vld [vmem:[%s5643 + $0x148] sm:$0xff]
      %v5678 = vld [vmem:[%s5643 + $0x150] sm:$0xff]
      %v5679 = vld [vmem:[%s5643 + $0x158] sm:$0xff]
      %v5680 = vld [vmem:[%s5643 + $0x160] sm:$0xff]
      %v5681 = vld [vmem:[%s5643 + $0x168] sm:$0xff]
      %v5682 = vld [vmem:[%s5643 + $0x170] sm:$0xff]
      %v5683 = vld [vmem:[%s5643 + $0x178] sm:$0xff]
      %v5684 = vld [vmem:[%s5643 + $0x190] sm:$0xff]
      %v5685 = vld [vmem:[%s5643 + $0x198] sm:$0xff]
      %v5686 = vld [vmem:[%s5643 + $0x1a0] sm:$0xff]
      %v5687 = vld [vmem:[%s5643 + $0x1a8] sm:$0xff]
      %v5688 = vld [vmem:[%s5643 + $0x1b0] sm:$0xff]
      %v5689 = vld [vmem:[%s5643 + $0x1b8] sm:$0xff]
      %v5690 = vld [vmem:[%s5643 + $0x1c0] sm:$0xff]
      %v5691 = vld [vmem:[%s5643 + $0x1c8] sm:$0xff]
      %v5692 = vld [vmem:[%s5643 + $0x1e0] sm:$0xff]
      %v5693 = vld [vmem:[%s5643 + $0x1e8] sm:$0xff]
      %v5694 = vld [vmem:[%s5643 + $0x1f0] sm:$0xff]
      %v5695 = vld [vmem:[%s5643 + $0x1f8] sm:$0xff]
      %v5696 = vld [vmem:[%s5643 + $0x200] sm:$0xff]
      %v5697 = vld [vmem:[%s5643 + $0x208] sm:$0xff]
      %v5698 = vld [vmem:[%s5643 + $0x210] sm:$0xff]
      %v5699 = vld [vmem:[%s5643 + $0x218] sm:$0xff]
      %v5700 = vld [vmem:[%s5643 + $0x230] sm:$0xff]
      %v5701 = vld [vmem:[%s5643 + $0x238] sm:$0xff]
      %v5702 = vld [vmem:[%s5643 + $0x240] sm:$0xff]
      %v5703 = vld [vmem:[%s5643 + $0x248] sm:$0xff]
      %v5704 = vld [vmem:[%s5643 + $0x250] sm:$0xff]
      %v5705 = vld [vmem:[%s5643 + $0x258] sm:$0xff]
      %v5706 = vld [vmem:[%s5643 + $0x260] sm:$0xff]
      %v5707 = vld [vmem:[%s5643 + $0x268] sm:$0xff]
      %5772 = vrot.lane.b32.xlu0 %v5644, 8
      %v5773 = vpop.permute.xlu0 %5772
      %5774 = vrot.lane.b32.xlu0 %v5645, 8
      %v5775 = vpop.permute.xlu0 %5774
      %5776 = vrot.lane.b32.xlu0 %v5646, 8
      %v5777 = vpop.permute.xlu0 %5776
      %5778 = vrot.lane.b32.xlu0 %v5647, 8
      %v5779 = vpop.permute.xlu0 %5778
      %5780 = vrot.lane.b32.xlu0 %v5648, 8
      %v5781 = vpop.permute.xlu0 %5780
      %5782 = vrot.lane.b32.xlu0 %v5649, 8
      %v5783 = vpop.permute.xlu0 %5782
      %5784 = vrot.lane.b32.xlu0 %v5650, 8
      %v5785 = vpop.permute.xlu0 %5784
      %5786 = vrot.lane.b32.xlu0 %v5651, 8
      %v5787 = vpop.permute.xlu0 %5786
      %5788 = vrot.lane.b32.xlu0 %v5652, 8
      %v5789 = vpop.permute.xlu0 %5788
      %5790 = vrot.lane.b32.xlu0 %v5653, 8
      %v5791 = vpop.permute.xlu0 %5790
      %5792 = vrot.lane.b32.xlu0 %v5654, 8
      %v5793 = vpop.permute.xlu0 %5792
      %5794 = vrot.lane.b32.xlu0 %v5655, 8
      %v5795 = vpop.permute.xlu0 %5794
      %5796 = vrot.lane.b32.xlu0 %v5656, 8
      %v5797 = vpop.permute.xlu0 %5796
      %5798 = vrot.lane.b32.xlu0 %v5657, 8
      %v5799 = vpop.permute.xlu0 %5798
      %5800 = vrot.lane.b32.xlu0 %v5658, 8
      %v5801 = vpop.permute.xlu0 %5800
      %5802 = vrot.lane.b32.xlu0 %v5659, 8
      %v5803 = vpop.permute.xlu0 %5802
      %5804 = vrot.lane.b32.xlu0 %v5660, 8
      %v5805 = vpop.permute.xlu0 %5804
      %5806 = vrot.lane.b32.xlu0 %v5661, 8
      %v5807 = vpop.permute.xlu0 %5806
      %5808 = vrot.lane.b32.xlu0 %v5662, 8
      %v5809 = vpop.permute.xlu0 %5808
      %5810 = vrot.lane.b32.xlu0 %v5663, 8
      %v5811 = vpop.permute.xlu0 %5810
      %5812 = vrot.lane.b32.xlu0 %v5664, 8
      %v5813 = vpop.permute.xlu0 %5812
      %5814 = vrot.lane.b32.xlu0 %v5665, 8
      %v5815 = vpop.permute.xlu0 %5814
      %5816 = vrot.lane.b32.xlu0 %v5666, 8
      %v5817 = vpop.permute.xlu0 %5816
      %5818 = vrot.lane.b32.xlu0 %v5667, 8
      %v5819 = vpop.permute.xlu0 %5818
      %5820 = vrot.lane.b32.xlu0 %v5668, 8
      %v5821 = vpop.permute.xlu0 %5820
      %5822 = vrot.lane.b32.xlu0 %v5669, 8
      %v5823 = vpop.permute.xlu0 %5822
      %5824 = vrot.lane.b32.xlu0 %v5670, 8
      %v5825 = vpop.permute.xlu0 %5824
      %5826 = vrot.lane.b32.xlu0 %v5671, 8
      %v5827 = vpop.permute.xlu0 %5826
      %5828 = vrot.lane.b32.xlu0 %v5672, 8
      %v5829 = vpop.permute.xlu0 %5828
      %5830 = vrot.lane.b32.xlu0 %v5673, 8
      %v5831 = vpop.permute.xlu0 %5830
      %5832 = vrot.lane.b32.xlu0 %v5674, 8
      %v5833 = vpop.permute.xlu0 %5832
      %5834 = vrot.lane.b32.xlu0 %v5675, 8
      %v5835 = vpop.permute.xlu0 %5834
      %5836 = vrot.lane.b32.xlu0 %v5676, 8
      %v5837 = vpop.permute.xlu0 %5836
      %5838 = vrot.lane.b32.xlu0 %v5677, 8
      %v5839 = vpop.permute.xlu0 %5838
      %5840 = vrot.lane.b32.xlu0 %v5678, 8
      %v5841 = vpop.permute.xlu0 %5840
      %5842 = vrot.lane.b32.xlu0 %v5679, 8
      %v5843 = vpop.permute.xlu0 %5842
      %5844 = vrot.lane.b32.xlu0 %v5680, 8
      %v5845 = vpop.permute.xlu0 %5844
      %5846 = vrot.lane.b32.xlu0 %v5681, 8
      %v5847 = vpop.permute.xlu0 %5846
      %5848 = vrot.lane.b32.xlu0 %v5682, 8
      %v5849 = vpop.permute.xlu0 %5848
      %5850 = vrot.lane.b32.xlu0 %v5683, 8
      %v5851 = vpop.permute.xlu0 %5850
      %5852 = vrot.lane.b32.xlu0 %v5684, 8
      %v5853 = vpop.permute.xlu0 %5852
      %5854 = vrot.lane.b32.xlu0 %v5685, 8
      %v5855 = vpop.permute.xlu0 %5854
      %5856 = vrot.lane.b32.xlu0 %v5686, 8
      %v5857 = vpop.permute.xlu0 %5856
      %5858 = vrot.lane.b32.xlu0 %v5687, 8
      %v5859 = vpop.permute.xlu0 %5858
      %5860 = vrot.lane.b32.xlu0 %v5688, 8
      %v5861 = vpop.permute.xlu0 %5860
      %5862 = vrot.lane.b32.xlu0 %v5689, 8
      %v5863 = vpop.permute.xlu0 %5862
      %5864 = vrot.lane.b32.xlu0 %v5690, 8
      %v5865 = vpop.permute.xlu0 %5864
      %5866 = vrot.lane.b32.xlu0 %v5691, 8
      %v5867 = vpop.permute.xlu0 %5866
      %5868 = vrot.lane.b32.xlu0 %v5692, 8
      %v5869 = vpop.permute.xlu0 %5868
      %5870 = vrot.lane.b32.xlu0 %v5693, 8
      %v5871 = vpop.permute.xlu0 %5870
      %5872 = vrot.lane.b32.xlu0 %v5694, 8
      %v5873 = vpop.permute.xlu0 %5872
      %5874 = vrot.lane.b32.xlu0 %v5695, 8
      %v5875 = vpop.permute.xlu0 %5874
      %5876 = vrot.lane.b32.xlu0 %v5696, 8
      %v5877 = vpop.permute.xlu0 %5876
      %5878 = vrot.lane.b32.xlu0 %v5697, 8
      %v5879 = vpop.permute.xlu0 %5878
      %5880 = vrot.lane.b32.xlu0 %v5698, 8
      %v5881 = vpop.permute.xlu0 %5880
      %5882 = vrot.lane.b32.xlu0 %v5699, 8
      %v5883 = vpop.permute.xlu0 %5882
      %5884 = vrot.lane.b32.xlu0 %v5700, 8
      %v5885 = vpop.permute.xlu0 %5884
      %5886 = vrot.lane.b32.xlu0 %v5701, 8
      %v5887 = vpop.permute.xlu0 %5886
      %5888 = vrot.lane.b32.xlu0 %v5702, 8
      %v5889 = vpop.permute.xlu0 %5888
      %5890 = vrot.lane.b32.xlu0 %v5703, 8
      %v5891 = vpop.permute.xlu0 %5890
      %5892 = vrot.lane.b32.xlu0 %v5704, 8
      %v5893 = vpop.permute.xlu0 %5892
      %5894 = vrot.lane.b32.xlu0 %v5705, 8
      %v5895 = vpop.permute.xlu0 %5894
      %5896 = vrot.lane.b32.xlu0 %v5706, 8
      %v5897 = vpop.permute.xlu0 %5896
      %5898 = vrot.lane.b32.xlu0 %v5707, 8
      %v5899 = vpop.permute.xlu0 %5898
      %vm5964 = vcmask 130112
      %5965 = vst.msk [vmem:[#allocation5] sm:$0xff] %vm5964, %v5773
      %5966 = vst.msk [vmem:[#allocation5 + $0x8] sm:$0xff] %vm5964, %v5775
      %5967 = vst.msk [vmem:[#allocation5 + $0x10] sm:$0xff] %vm5964, %v5777
      %5968 = vst.msk [vmem:[#allocation5 + $0x18] sm:$0xff] %vm5964, %v5779
      %5969 = vst.msk [vmem:[#allocation5 + $0x20] sm:$0xff] %vm5964, %v5781
      %5970 = vst.msk [vmem:[#allocation5 + $0x28] sm:$0xff] %vm5964, %v5783
      %5971 = vst.msk [vmem:[#allocation5 + $0x30] sm:$0xff] %vm5964, %v5785
      %5972 = vst.msk [vmem:[#allocation5 + $0x38] sm:$0xff] %vm5964, %v5787
      %5973 = vst.msk [vmem:[#allocation5 + $0x40] sm:$0xff] %vm5964, %v5789
      %5974 = vst.msk [vmem:[#allocation5 + $0x48] sm:$0xff] %vm5964, %v5791
      %5975 = vst.msk [vmem:[#allocation5 + $0x50] sm:$0xff] %vm5964, %v5793
      %5976 = vst.msk [vmem:[#allocation5 + $0x58] sm:$0xff] %vm5964, %v5795
      %5977 = vst.msk [vmem:[#allocation5 + $0x60] sm:$0xff] %vm5964, %v5797
      %5978 = vst.msk [vmem:[#allocation5 + $0x68] sm:$0xff] %vm5964, %v5799
      %5979 = vst.msk [vmem:[#allocation5 + $0x70] sm:$0xff] %vm5964, %v5801
      %5980 = vst.msk [vmem:[#allocation5 + $0x78] sm:$0xff] %vm5964, %v5803
      %5981 = vst.msk [vmem:[#allocation5 + $0x80] sm:$0xff] %vm5964, %v5805
      %5982 = vst.msk [vmem:[#allocation5 + $0x88] sm:$0xff] %vm5964, %v5807
      %5983 = vst.msk [vmem:[#allocation5 + $0x90] sm:$0xff] %vm5964, %v5809
      %5984 = vst.msk [vmem:[#allocation5 + $0x98] sm:$0xff] %vm5964, %v5811
      %5985 = vst.msk [vmem:[#allocation5 + $0xa0] sm:$0xff] %vm5964, %v5813
      %5986 = vst.msk [vmem:[#allocation5 + $0xa8] sm:$0xff] %vm5964, %v5815
      %5987 = vst.msk [vmem:[#allocation5 + $0xb0] sm:$0xff] %vm5964, %v5817
      %5988 = vst.msk [vmem:[#allocation5 + $0xb8] sm:$0xff] %vm5964, %v5819
      %5989 = vst.msk [vmem:[#allocation5 + $0xc0] sm:$0xff] %vm5964, %v5821
      %5990 = vst.msk [vmem:[#allocation5 + $0xc8] sm:$0xff] %vm5964, %v5823
      %5991 = vst.msk [vmem:[#allocation5 + $0xd0] sm:$0xff] %vm5964, %v5825
      %5992 = vst.msk [vmem:[#allocation5 + $0xd8] sm:$0xff] %vm5964, %v5827
      %5993 = vst.msk [vmem:[#allocation5 + $0xe0] sm:$0xff] %vm5964, %v5829
      %5994 = vst.msk [vmem:[#allocation5 + $0xe8] sm:$0xff] %vm5964, %v5831
      %5995 = vst.msk [vmem:[#allocation5 + $0xf0] sm:$0xff] %vm5964, %v5833
      %5996 = vst.msk [vmem:[#allocation5 + $0xf8] sm:$0xff] %vm5964, %v5835
      %5997 = vst.msk [vmem:[#allocation5 + $0x100] sm:$0xff] %vm5964, %v5837
      %5998 = vst.msk [vmem:[#allocation5 + $0x108] sm:$0xff] %vm5964, %v5839
      %5999 = vst.msk [vmem:[#allocation5 + $0x110] sm:$0xff] %vm5964, %v5841
      %6000 = vst.msk [vmem:[#allocation5 + $0x118] sm:$0xff] %vm5964, %v5843
      %6001 = vst.msk [vmem:[#allocation5 + $0x120] sm:$0xff] %vm5964, %v5845
      %6002 = vst.msk [vmem:[#allocation5 + $0x128] sm:$0xff] %vm5964, %v5847
      %6003 = vst.msk [vmem:[#allocation5 + $0x130] sm:$0xff] %vm5964, %v5849
      %6004 = vst.msk [vmem:[#allocation5 + $0x138] sm:$0xff] %vm5964, %v5851
      %6005 = vst.msk [vmem:[#allocation5 + $0x140] sm:$0xff] %vm5964, %v5853
      %6006 = vst.msk [vmem:[#allocation5 + $0x148] sm:$0xff] %vm5964, %v5855
      %6007 = vst.msk [vmem:[#allocation5 + $0x150] sm:$0xff] %vm5964, %v5857
      %6008 = vst.msk [vmem:[#allocation5 + $0x158] sm:$0xff] %vm5964, %v5859
      %6009 = vst.msk [vmem:[#allocation5 + $0x160] sm:$0xff] %vm5964, %v5861
      %6010 = vst.msk [vmem:[#allocation5 + $0x168] sm:$0xff] %vm5964, %v5863
      %6011 = vst.msk [vmem:[#allocation5 + $0x170] sm:$0xff] %vm5964, %v5865
      %6012 = vst.msk [vmem:[#allocation5 + $0x178] sm:$0xff] %vm5964, %v5867
      %6013 = vst.msk [vmem:[#allocation5 + $0x180] sm:$0xff] %vm5964, %v5869
      %6014 = vst.msk [vmem:[#allocation5 + $0x188] sm:$0xff] %vm5964, %v5871
      %6015 = vst.msk [vmem:[#allocation5 + $0x190] sm:$0xff] %vm5964, %v5873
      %6016 = vst.msk [vmem:[#allocation5 + $0x198] sm:$0xff] %vm5964, %v5875
      %6017 = vst.msk [vmem:[#allocation5 + $0x1a0] sm:$0xff] %vm5964, %v5877
      %6018 = vst.msk [vmem:[#allocation5 + $0x1a8] sm:$0xff] %vm5964, %v5879
      %6019 = vst.msk [vmem:[#allocation5 + $0x1b0] sm:$0xff] %vm5964, %v5881
      %6020 = vst.msk [vmem:[#allocation5 + $0x1b8] sm:$0xff] %vm5964, %v5883
      %6021 = vst.msk [vmem:[#allocation5 + $0x1c0] sm:$0xff] %vm5964, %v5885
      %6022 = vst.msk [vmem:[#allocation5 + $0x1c8] sm:$0xff] %vm5964, %v5887
      %6023 = vst.msk [vmem:[#allocation5 + $0x1d0] sm:$0xff] %vm5964, %v5889
      %6024 = vst.msk [vmem:[#allocation5 + $0x1d8] sm:$0xff] %vm5964, %v5891
      %6025 = vst.msk [vmem:[#allocation5 + $0x1e0] sm:$0xff] %vm5964, %v5893
      %6026 = vst.msk [vmem:[#allocation5 + $0x1e8] sm:$0xff] %vm5964, %v5895
      %6027 = vst.msk [vmem:[#allocation5 + $0x1f0] sm:$0xff] %vm5964, %v5897
      %6028 = vst.msk [vmem:[#allocation5 + $0x1f8] sm:$0xff] %vm5964, %v5899
      %s6029 = scalar_lea.vmem [#allocation4], 16
      %v6030 = vld [vmem:[%s6029] sm:$0xff]
      %v6031 = vld [vmem:[%s6029 + $0x8] sm:$0xff]
      %v6032 = vld [vmem:[%s6029 + $0x10] sm:$0xff]
      %v6033 = vld [vmem:[%s6029 + $0x18] sm:$0xff]
      %v6034 = vld [vmem:[%s6029 + $0x20] sm:$0xff]
      %v6035 = vld [vmem:[%s6029 + $0x28] sm:$0xff]
      %v6036 = vld [vmem:[%s6029 + $0x30] sm:$0xff]
      %v6037 = vld [vmem:[%s6029 + $0x38] sm:$0xff]
      %v6038 = vld [vmem:[%s6029 + $0x50] sm:$0xff]
      %v6039 = vld [vmem:[%s6029 + $0x58] sm:$0xff]
      %v6040 = vld [vmem:[%s6029 + $0x60] sm:$0xff]
      %v6041 = vld [vmem:[%s6029 + $0x68] sm:$0xff]
      %v6042 = vld [vmem:[%s6029 + $0x70] sm:$0xff]
      %v6043 = vld [vmem:[%s6029 + $0x78] sm:$0xff]
      %v6044 = vld [vmem:[%s6029 + $0x80] sm:$0xff]
      %v6045 = vld [vmem:[%s6029 + $0x88] sm:$0xff]
      %v6046 = vld [vmem:[%s6029 + $0xa0] sm:$0xff]
      %v6047 = vld [vmem:[%s6029 + $0xa8] sm:$0xff]
      %v6048 = vld [vmem:[%s6029 + $0xb0] sm:$0xff]
      %v6049 = vld [vmem:[%s6029 + $0xb8] sm:$0xff]
      %v6050 = vld [vmem:[%s6029 + $0xc0] sm:$0xff]
      %v6051 = vld [vmem:[%s6029 + $0xc8] sm:$0xff]
      %v6052 = vld [vmem:[%s6029 + $0xd0] sm:$0xff]
      %v6053 = vld [vmem:[%s6029 + $0xd8] sm:$0xff]
      %v6054 = vld [vmem:[%s6029 + $0xf0] sm:$0xff]
      %v6055 = vld [vmem:[%s6029 + $0xf8] sm:$0xff]
      %v6056 = vld [vmem:[%s6029 + $0x100] sm:$0xff]
      %v6057 = vld [vmem:[%s6029 + $0x108] sm:$0xff]
      %v6058 = vld [vmem:[%s6029 + $0x110] sm:$0xff]
      %v6059 = vld [vmem:[%s6029 + $0x118] sm:$0xff]
      %v6060 = vld [vmem:[%s6029 + $0x120] sm:$0xff]
      %v6061 = vld [vmem:[%s6029 + $0x128] sm:$0xff]
      %v6062 = vld [vmem:[%s6029 + $0x140] sm:$0xff]
      %v6063 = vld [vmem:[%s6029 + $0x148] sm:$0xff]
      %v6064 = vld [vmem:[%s6029 + $0x150] sm:$0xff]
      %v6065 = vld [vmem:[%s6029 + $0x158] sm:$0xff]
      %v6066 = vld [vmem:[%s6029 + $0x160] sm:$0xff]
      %v6067 = vld [vmem:[%s6029 + $0x168] sm:$0xff]
      %v6068 = vld [vmem:[%s6029 + $0x170] sm:$0xff]
      %v6069 = vld [vmem:[%s6029 + $0x178] sm:$0xff]
      %v6070 = vld [vmem:[%s6029 + $0x190] sm:$0xff]
      %v6071 = vld [vmem:[%s6029 + $0x198] sm:$0xff]
      %v6072 = vld [vmem:[%s6029 + $0x1a0] sm:$0xff]
      %v6073 = vld [vmem:[%s6029 + $0x1a8] sm:$0xff]
      %v6074 = vld [vmem:[%s6029 + $0x1b0] sm:$0xff]
      %v6075 = vld [vmem:[%s6029 + $0x1b8] sm:$0xff]
      %v6076 = vld [vmem:[%s6029 + $0x1c0] sm:$0xff]
      %v6077 = vld [vmem:[%s6029 + $0x1c8] sm:$0xff]
      %v6078 = vld [vmem:[%s6029 + $0x1e0] sm:$0xff]
      %v6079 = vld [vmem:[%s6029 + $0x1e8] sm:$0xff]
      %v6080 = vld [vmem:[%s6029 + $0x1f0] sm:$0xff]
      %v6081 = vld [vmem:[%s6029 + $0x1f8] sm:$0xff]
      %v6082 = vld [vmem:[%s6029 + $0x200] sm:$0xff]
      %v6083 = vld [vmem:[%s6029 + $0x208] sm:$0xff]
      %v6084 = vld [vmem:[%s6029 + $0x210] sm:$0xff]
      %v6085 = vld [vmem:[%s6029 + $0x218] sm:$0xff]
      %v6086 = vld [vmem:[%s6029 + $0x230] sm:$0xff]
      %v6087 = vld [vmem:[%s6029 + $0x238] sm:$0xff]
      %v6088 = vld [vmem:[%s6029 + $0x240] sm:$0xff]
      %v6089 = vld [vmem:[%s6029 + $0x248] sm:$0xff]
      %v6090 = vld [vmem:[%s6029 + $0x250] sm:$0xff]
      %v6091 = vld [vmem:[%s6029 + $0x258] sm:$0xff]
      %v6092 = vld [vmem:[%s6029 + $0x260] sm:$0xff]
      %v6093 = vld [vmem:[%s6029 + $0x268] sm:$0xff]
      %6158 = vrot.lane.b32.xlu0 %v6030, 16
      %v6159 = vpop.permute.xlu0 %6158
      %6160 = vrot.lane.b32.xlu0 %v6031, 16
      %v6161 = vpop.permute.xlu0 %6160
      %6162 = vrot.lane.b32.xlu0 %v6032, 16
      %v6163 = vpop.permute.xlu0 %6162
      %6164 = vrot.lane.b32.xlu0 %v6033, 16
      %v6165 = vpop.permute.xlu0 %6164
      %6166 = vrot.lane.b32.xlu0 %v6034, 16
      %v6167 = vpop.permute.xlu0 %6166
      %6168 = vrot.lane.b32.xlu0 %v6035, 16
      %v6169 = vpop.permute.xlu0 %6168
      %6170 = vrot.lane.b32.xlu0 %v6036, 16
      %v6171 = vpop.permute.xlu0 %6170
      %6172 = vrot.lane.b32.xlu0 %v6037, 16
      %v6173 = vpop.permute.xlu0 %6172
      %6174 = vrot.lane.b32.xlu0 %v6038, 16
      %v6175 = vpop.permute.xlu0 %6174
      %6176 = vrot.lane.b32.xlu0 %v6039, 16
      %v6177 = vpop.permute.xlu0 %6176
      %6178 = vrot.lane.b32.xlu0 %v6040, 16
      %v6179 = vpop.permute.xlu0 %6178
      %6180 = vrot.lane.b32.xlu0 %v6041, 16
      %v6181 = vpop.permute.xlu0 %6180
      %6182 = vrot.lane.b32.xlu0 %v6042, 16
      %v6183 = vpop.permute.xlu0 %6182
      %6184 = vrot.lane.b32.xlu0 %v6043, 16
      %v6185 = vpop.permute.xlu0 %6184
      %6186 = vrot.lane.b32.xlu0 %v6044, 16
      %v6187 = vpop.permute.xlu0 %6186
      %6188 = vrot.lane.b32.xlu0 %v6045, 16
      %v6189 = vpop.permute.xlu0 %6188
      %6190 = vrot.lane.b32.xlu0 %v6046, 16
      %v6191 = vpop.permute.xlu0 %6190
      %6192 = vrot.lane.b32.xlu0 %v6047, 16
      %v6193 = vpop.permute.xlu0 %6192
      %6194 = vrot.lane.b32.xlu0 %v6048, 16
      %v6195 = vpop.permute.xlu0 %6194
      %6196 = vrot.lane.b32.xlu0 %v6049, 16
      %v6197 = vpop.permute.xlu0 %6196
      %6198 = vrot.lane.b32.xlu0 %v6050, 16
      %v6199 = vpop.permute.xlu0 %6198
      %6200 = vrot.lane.b32.xlu0 %v6051, 16
      %v6201 = vpop.permute.xlu0 %6200
      %6202 = vrot.lane.b32.xlu0 %v6052, 16
      %v6203 = vpop.permute.xlu0 %6202
      %6204 = vrot.lane.b32.xlu0 %v6053, 16
      %v6205 = vpop.permute.xlu0 %6204
      %6206 = vrot.lane.b32.xlu0 %v6054, 16
      %v6207 = vpop.permute.xlu0 %6206
      %6208 = vrot.lane.b32.xlu0 %v6055, 16
      %v6209 = vpop.permute.xlu0 %6208
      %6210 = vrot.lane.b32.xlu0 %v6056, 16
      %v6211 = vpop.permute.xlu0 %6210
      %6212 = vrot.lane.b32.xlu0 %v6057, 16
      %v6213 = vpop.permute.xlu0 %6212
      %6214 = vrot.lane.b32.xlu0 %v6058, 16
      %v6215 = vpop.permute.xlu0 %6214
      %6216 = vrot.lane.b32.xlu0 %v6059, 16
      %v6217 = vpop.permute.xlu0 %6216
      %6218 = vrot.lane.b32.xlu0 %v6060, 16
      %v6219 = vpop.permute.xlu0 %6218
      %6220 = vrot.lane.b32.xlu0 %v6061, 16
      %v6221 = vpop.permute.xlu0 %6220
      %6222 = vrot.lane.b32.xlu0 %v6062, 16
      %v6223 = vpop.permute.xlu0 %6222
      %6224 = vrot.lane.b32.xlu0 %v6063, 16
      %v6225 = vpop.permute.xlu0 %6224
      %6226 = vrot.lane.b32.xlu0 %v6064, 16
      %v6227 = vpop.permute.xlu0 %6226
      %6228 = vrot.lane.b32.xlu0 %v6065, 16
      %v6229 = vpop.permute.xlu0 %6228
      %6230 = vrot.lane.b32.xlu0 %v6066, 16
      %v6231 = vpop.permute.xlu0 %6230
      %6232 = vrot.lane.b32.xlu0 %v6067, 16
      %v6233 = vpop.permute.xlu0 %6232
      %6234 = vrot.lane.b32.xlu0 %v6068, 16
      %v6235 = vpop.permute.xlu0 %6234
      %6236 = vrot.lane.b32.xlu0 %v6069, 16
      %v6237 = vpop.permute.xlu0 %6236
      %6238 = vrot.lane.b32.xlu0 %v6070, 16
      %v6239 = vpop.permute.xlu0 %6238
      %6240 = vrot.lane.b32.xlu0 %v6071, 16
      %v6241 = vpop.permute.xlu0 %6240
      %6242 = vrot.lane.b32.xlu0 %v6072, 16
      %v6243 = vpop.permute.xlu0 %6242
      %6244 = vrot.lane.b32.xlu0 %v6073, 16
      %v6245 = vpop.permute.xlu0 %6244
      %6246 = vrot.lane.b32.xlu0 %v6074, 16
      %v6247 = vpop.permute.xlu0 %6246
      %6248 = vrot.lane.b32.xlu0 %v6075, 16
      %v6249 = vpop.permute.xlu0 %6248
      %6250 = vrot.lane.b32.xlu0 %v6076, 16
      %v6251 = vpop.permute.xlu0 %6250
      %6252 = vrot.lane.b32.xlu0 %v6077, 16
      %v6253 = vpop.permute.xlu0 %6252
      %6254 = vrot.lane.b32.xlu0 %v6078, 16
      %v6255 = vpop.permute.xlu0 %6254
      %6256 = vrot.lane.b32.xlu0 %v6079, 16
      %v6257 = vpop.permute.xlu0 %6256
      %6258 = vrot.lane.b32.xlu0 %v6080, 16
      %v6259 = vpop.permute.xlu0 %6258
      %6260 = vrot.lane.b32.xlu0 %v6081, 16
      %v6261 = vpop.permute.xlu0 %6260
      %6262 = vrot.lane.b32.xlu0 %v6082, 16
      %v6263 = vpop.permute.xlu0 %6262
      %6264 = vrot.lane.b32.xlu0 %v6083, 16
      %v6265 = vpop.permute.xlu0 %6264
      %6266 = vrot.lane.b32.xlu0 %v6084, 16
      %v6267 = vpop.permute.xlu0 %6266
      %6268 = vrot.lane.b32.xlu0 %v6085, 16
      %v6269 = vpop.permute.xlu0 %6268
      %6270 = vrot.lane.b32.xlu0 %v6086, 16
      %v6271 = vpop.permute.xlu0 %6270
      %6272 = vrot.lane.b32.xlu0 %v6087, 16
      %v6273 = vpop.permute.xlu0 %6272
      %6274 = vrot.lane.b32.xlu0 %v6088, 16
      %v6275 = vpop.permute.xlu0 %6274
      %6276 = vrot.lane.b32.xlu0 %v6089, 16
      %v6277 = vpop.permute.xlu0 %6276
      %6278 = vrot.lane.b32.xlu0 %v6090, 16
      %v6279 = vpop.permute.xlu0 %6278
      %6280 = vrot.lane.b32.xlu0 %v6091, 16
      %v6281 = vpop.permute.xlu0 %6280
      %6282 = vrot.lane.b32.xlu0 %v6092, 16
      %v6283 = vpop.permute.xlu0 %6282
      %6284 = vrot.lane.b32.xlu0 %v6093, 16
      %v6285 = vpop.permute.xlu0 %6284
      %vm6350 = vcmask 195712
      %6351 = vst.msk [vmem:[#allocation5] sm:$0xff] %vm6350, %v6159
      %6352 = vst.msk [vmem:[#allocation5 + $0x8] sm:$0xff] %vm6350, %v6161
      %6353 = vst.msk [vmem:[#allocation5 + $0x10] sm:$0xff] %vm6350, %v6163
      %6354 = vst.msk [vmem:[#allocation5 + $0x18] sm:$0xff] %vm6350, %v6165
      %6355 = vst.msk [vmem:[#allocation5 + $0x20] sm:$0xff] %vm6350, %v6167
      %6356 = vst.msk [vmem:[#allocation5 + $0x28] sm:$0xff] %vm6350, %v6169
      %6357 = vst.msk [vmem:[#allocation5 + $0x30] sm:$0xff] %vm6350, %v6171
      %6358 = vst.msk [vmem:[#allocation5 + $0x38] sm:$0xff] %vm6350, %v6173
      %6359 = vst.msk [vmem:[#allocation5 + $0x40] sm:$0xff] %vm6350, %v6175
      %6360 = vst.msk [vmem:[#allocation5 + $0x48] sm:$0xff] %vm6350, %v6177
      %6361 = vst.msk [vmem:[#allocation5 + $0x50] sm:$0xff] %vm6350, %v6179
      %6362 = vst.msk [vmem:[#allocation5 + $0x58] sm:$0xff] %vm6350, %v6181
      %6363 = vst.msk [vmem:[#allocation5 + $0x60] sm:$0xff] %vm6350, %v6183
      %6364 = vst.msk [vmem:[#allocation5 + $0x68] sm:$0xff] %vm6350, %v6185
      %6365 = vst.msk [vmem:[#allocation5 + $0x70] sm:$0xff] %vm6350, %v6187
      %6366 = vst.msk [vmem:[#allocation5 + $0x78] sm:$0xff] %vm6350, %v6189
      %6367 = vst.msk [vmem:[#allocation5 + $0x80] sm:$0xff] %vm6350, %v6191
      %6368 = vst.msk [vmem:[#allocation5 + $0x88] sm:$0xff] %vm6350, %v6193
      %6369 = vst.msk [vmem:[#allocation5 + $0x90] sm:$0xff] %vm6350, %v6195
      %6370 = vst.msk [vmem:[#allocation5 + $0x98] sm:$0xff] %vm6350, %v6197
      %6371 = vst.msk [vmem:[#allocation5 + $0xa0] sm:$0xff] %vm6350, %v6199
      %6372 = vst.msk [vmem:[#allocation5 + $0xa8] sm:$0xff] %vm6350, %v6201
      %6373 = vst.msk [vmem:[#allocation5 + $0xb0] sm:$0xff] %vm6350, %v6203
      %6374 = vst.msk [vmem:[#allocation5 + $0xb8] sm:$0xff] %vm6350, %v6205
      %6375 = vst.msk [vmem:[#allocation5 + $0xc0] sm:$0xff] %vm6350, %v6207
      %6376 = vst.msk [vmem:[#allocation5 + $0xc8] sm:$0xff] %vm6350, %v6209
      %6377 = vst.msk [vmem:[#allocation5 + $0xd0] sm:$0xff] %vm6350, %v6211
      %6378 = vst.msk [vmem:[#allocation5 + $0xd8] sm:$0xff] %vm6350, %v6213
      %6379 = vst.msk [vmem:[#allocation5 + $0xe0] sm:$0xff] %vm6350, %v6215
      %6380 = vst.msk [vmem:[#allocation5 + $0xe8] sm:$0xff] %vm6350, %v6217
      %6381 = vst.msk [vmem:[#allocation5 + $0xf0] sm:$0xff] %vm6350, %v6219
      %6382 = vst.msk [vmem:[#allocation5 + $0xf8] sm:$0xff] %vm6350, %v6221
      %6383 = vst.msk [vmem:[#allocation5 + $0x100] sm:$0xff] %vm6350, %v6223
      %6384 = vst.msk [vmem:[#allocation5 + $0x108] sm:$0xff] %vm6350, %v6225
      %6385 = vst.msk [vmem:[#allocation5 + $0x110] sm:$0xff] %vm6350, %v6227
      %6386 = vst.msk [vmem:[#allocation5 + $0x118] sm:$0xff] %vm6350, %v6229
      %6387 = vst.msk [vmem:[#allocation5 + $0x120] sm:$0xff] %vm6350, %v6231
      %6388 = vst.msk [vmem:[#allocation5 + $0x128] sm:$0xff] %vm6350, %v6233
      %6389 = vst.msk [vmem:[#allocation5 + $0x130] sm:$0xff] %vm6350, %v6235
      %6390 = vst.msk [vmem:[#allocation5 + $0x138] sm:$0xff] %vm6350, %v6237
      %6391 = vst.msk [vmem:[#allocation5 + $0x140] sm:$0xff] %vm6350, %v6239
      %6392 = vst.msk [vmem:[#allocation5 + $0x148] sm:$0xff] %vm6350, %v6241
      %6393 = vst.msk [vmem:[#allocation5 + $0x150] sm:$0xff] %vm6350, %v6243
      %6394 = vst.msk [vmem:[#allocation5 + $0x158] sm:$0xff] %vm6350, %v6245
      %6395 = vst.msk [vmem:[#allocation5 + $0x160] sm:$0xff] %vm6350, %v6247
      %6396 = vst.msk [vmem:[#allocation5 + $0x168] sm:$0xff] %vm6350, %v6249
      %6397 = vst.msk [vmem:[#allocation5 + $0x170] sm:$0xff] %vm6350, %v6251
      %6398 = vst.msk [vmem:[#allocation5 + $0x178] sm:$0xff] %vm6350, %v6253
      %6399 = vst.msk [vmem:[#allocation5 + $0x180] sm:$0xff] %vm6350, %v6255
      %6400 = vst.msk [vmem:[#allocation5 + $0x188] sm:$0xff] %vm6350, %v6257
      %6401 = vst.msk [vmem:[#allocation5 + $0x190] sm:$0xff] %vm6350, %v6259
      %6402 = vst.msk [vmem:[#allocation5 + $0x198] sm:$0xff] %vm6350, %v6261
      %6403 = vst.msk [vmem:[#allocation5 + $0x1a0] sm:$0xff] %vm6350, %v6263
      %6404 = vst.msk [vmem:[#allocation5 + $0x1a8] sm:$0xff] %vm6350, %v6265
      %6405 = vst.msk [vmem:[#allocation5 + $0x1b0] sm:$0xff] %vm6350, %v6267
      %6406 = vst.msk [vmem:[#allocation5 + $0x1b8] sm:$0xff] %vm6350, %v6269
      %6407 = vst.msk [vmem:[#allocation5 + $0x1c0] sm:$0xff] %vm6350, %v6271
      %6408 = vst.msk [vmem:[#allocation5 + $0x1c8] sm:$0xff] %vm6350, %v6273
      %6409 = vst.msk [vmem:[#allocation5 + $0x1d0] sm:$0xff] %vm6350, %v6275
      %6410 = vst.msk [vmem:[#allocation5 + $0x1d8] sm:$0xff] %vm6350, %v6277
      %6411 = vst.msk [vmem:[#allocation5 + $0x1e0] sm:$0xff] %vm6350, %v6279
      %6412 = vst.msk [vmem:[#allocation5 + $0x1e8] sm:$0xff] %vm6350, %v6281
      %6413 = vst.msk [vmem:[#allocation5 + $0x1f0] sm:$0xff] %vm6350, %v6283
      %6414 = vst.msk [vmem:[#allocation5 + $0x1f8] sm:$0xff] %vm6350, %v6285
      %s6415 = scalar_lea.vmem [#allocation4], 80
      %v6416 = vld [vmem:[%s6415] sm:$0xff]
      %v6417 = vld [vmem:[%s6415 + $0x8] sm:$0xff]
      %v6418 = vld [vmem:[%s6415 + $0x10] sm:$0xff]
      %v6419 = vld [vmem:[%s6415 + $0x18] sm:$0xff]
      %v6420 = vld [vmem:[%s6415 + $0x20] sm:$0xff]
      %v6421 = vld [vmem:[%s6415 + $0x28] sm:$0xff]
      %v6422 = vld [vmem:[%s6415 + $0x30] sm:$0xff]
      %v6423 = vld [vmem:[%s6415 + $0x38] sm:$0xff]
      %v6424 = vld [vmem:[%s6415 + $0x50] sm:$0xff]
      %v6425 = vld [vmem:[%s6415 + $0x58] sm:$0xff]
      %v6426 = vld [vmem:[%s6415 + $0x60] sm:$0xff]
      %v6427 = vld [vmem:[%s6415 + $0x68] sm:$0xff]
      %v6428 = vld [vmem:[%s6415 + $0x70] sm:$0xff]
      %v6429 = vld [vmem:[%s6415 + $0x78] sm:$0xff]
      %v6430 = vld [vmem:[%s6415 + $0x80] sm:$0xff]
      %v6431 = vld [vmem:[%s6415 + $0x88] sm:$0xff]
      %v6432 = vld [vmem:[%s6415 + $0xa0] sm:$0xff]
      %v6433 = vld [vmem:[%s6415 + $0xa8] sm:$0xff]
      %v6434 = vld [vmem:[%s6415 + $0xb0] sm:$0xff]
      %v6435 = vld [vmem:[%s6415 + $0xb8] sm:$0xff]
      %v6436 = vld [vmem:[%s6415 + $0xc0] sm:$0xff]
      %v6437 = vld [vmem:[%s6415 + $0xc8] sm:$0xff]
      %v6438 = vld [vmem:[%s6415 + $0xd0] sm:$0xff]
      %v6439 = vld [vmem:[%s6415 + $0xd8] sm:$0xff]
      %v6440 = vld [vmem:[%s6415 + $0xf0] sm:$0xff]
      %v6441 = vld [vmem:[%s6415 + $0xf8] sm:$0xff]
      %v6442 = vld [vmem:[%s6415 + $0x100] sm:$0xff]
      %v6443 = vld [vmem:[%s6415 + $0x108] sm:$0xff]
      %v6444 = vld [vmem:[%s6415 + $0x110] sm:$0xff]
      %v6445 = vld [vmem:[%s6415 + $0x118] sm:$0xff]
      %v6446 = vld [vmem:[%s6415 + $0x120] sm:$0xff]
      %v6447 = vld [vmem:[%s6415 + $0x128] sm:$0xff]
      %v6448 = vld [vmem:[%s6415 + $0x140] sm:$0xff]
      %v6449 = vld [vmem:[%s6415 + $0x148] sm:$0xff]
      %v6450 = vld [vmem:[%s6415 + $0x150] sm:$0xff]
      %v6451 = vld [vmem:[%s6415 + $0x158] sm:$0xff]
      %v6452 = vld [vmem:[%s6415 + $0x160] sm:$0xff]
      %v6453 = vld [vmem:[%s6415 + $0x168] sm:$0xff]
      %v6454 = vld [vmem:[%s6415 + $0x170] sm:$0xff]
      %v6455 = vld [vmem:[%s6415 + $0x178] sm:$0xff]
      %v6456 = vld [vmem:[%s6415 + $0x190] sm:$0xff]
      %v6457 = vld [vmem:[%s6415 + $0x198] sm:$0xff]
      %v6458 = vld [vmem:[%s6415 + $0x1a0] sm:$0xff]
      %v6459 = vld [vmem:[%s6415 + $0x1a8] sm:$0xff]
      %v6460 = vld [vmem:[%s6415 + $0x1b0] sm:$0xff]
      %v6461 = vld [vmem:[%s6415 + $0x1b8] sm:$0xff]
      %v6462 = vld [vmem:[%s6415 + $0x1c0] sm:$0xff]
      %v6463 = vld [vmem:[%s6415 + $0x1c8] sm:$0xff]
      %v6464 = vld [vmem:[%s6415 + $0x1e0] sm:$0xff]
      %v6465 = vld [vmem:[%s6415 + $0x1e8] sm:$0xff]
      %v6466 = vld [vmem:[%s6415 + $0x1f0] sm:$0xff]
      %v6467 = vld [vmem:[%s6415 + $0x1f8] sm:$0xff]
      %v6468 = vld [vmem:[%s6415 + $0x200] sm:$0xff]
      %v6469 = vld [vmem:[%s6415 + $0x208] sm:$0xff]
      %v6470 = vld [vmem:[%s6415 + $0x210] sm:$0xff]
      %v6471 = vld [vmem:[%s6415 + $0x218] sm:$0xff]
      %v6472 = vld [vmem:[%s6415 + $0x230] sm:$0xff]
      %v6473 = vld [vmem:[%s6415 + $0x238] sm:$0xff]
      %v6474 = vld [vmem:[%s6415 + $0x240] sm:$0xff]
      %v6475 = vld [vmem:[%s6415 + $0x248] sm:$0xff]
      %v6476 = vld [vmem:[%s6415 + $0x250] sm:$0xff]
      %v6477 = vld [vmem:[%s6415 + $0x258] sm:$0xff]
      %v6478 = vld [vmem:[%s6415 + $0x260] sm:$0xff]
      %v6479 = vld [vmem:[%s6415 + $0x268] sm:$0xff]
      %6544 = vrot.lane.b32.xlu0 %v6416, 24
      %v6545 = vpop.permute.xlu0 %6544
      %6546 = vrot.lane.b32.xlu0 %v6417, 24
      %v6547 = vpop.permute.xlu0 %6546
      %6548 = vrot.lane.b32.xlu0 %v6418, 24
      %v6549 = vpop.permute.xlu0 %6548
      %6550 = vrot.lane.b32.xlu0 %v6419, 24
      %v6551 = vpop.permute.xlu0 %6550
      %6552 = vrot.lane.b32.xlu0 %v6420, 24
      %v6553 = vpop.permute.xlu0 %6552
      %6554 = vrot.lane.b32.xlu0 %v6421, 24
      %v6555 = vpop.permute.xlu0 %6554
      %6556 = vrot.lane.b32.xlu0 %v6422, 24
      %v6557 = vpop.permute.xlu0 %6556
      %6558 = vrot.lane.b32.xlu0 %v6423, 24
      %v6559 = vpop.permute.xlu0 %6558
      %6560 = vrot.lane.b32.xlu0 %v6424, 24
      %v6561 = vpop.permute.xlu0 %6560
      %6562 = vrot.lane.b32.xlu0 %v6425, 24
      %v6563 = vpop.permute.xlu0 %6562
      %6564 = vrot.lane.b32.xlu0 %v6426, 24
      %v6565 = vpop.permute.xlu0 %6564
      %6566 = vrot.lane.b32.xlu0 %v6427, 24
      %v6567 = vpop.permute.xlu0 %6566
      %6568 = vrot.lane.b32.xlu0 %v6428, 24
      %v6569 = vpop.permute.xlu0 %6568
      %6570 = vrot.lane.b32.xlu0 %v6429, 24
      %v6571 = vpop.permute.xlu0 %6570
      %6572 = vrot.lane.b32.xlu0 %v6430, 24
      %v6573 = vpop.permute.xlu0 %6572
      %6574 = vrot.lane.b32.xlu0 %v6431, 24
      %v6575 = vpop.permute.xlu0 %6574
      %6576 = vrot.lane.b32.xlu0 %v6432, 24
      %v6577 = vpop.permute.xlu0 %6576
      %6578 = vrot.lane.b32.xlu0 %v6433, 24
      %v6579 = vpop.permute.xlu0 %6578
      %6580 = vrot.lane.b32.xlu0 %v6434, 24
      %v6581 = vpop.permute.xlu0 %6580
      %6582 = vrot.lane.b32.xlu0 %v6435, 24
      %v6583 = vpop.permute.xlu0 %6582
      %6584 = vrot.lane.b32.xlu0 %v6436, 24
      %v6585 = vpop.permute.xlu0 %6584
      %6586 = vrot.lane.b32.xlu0 %v6437, 24
      %v6587 = vpop.permute.xlu0 %6586
      %6588 = vrot.lane.b32.xlu0 %v6438, 24
      %v6589 = vpop.permute.xlu0 %6588
      %6590 = vrot.lane.b32.xlu0 %v6439, 24
      %v6591 = vpop.permute.xlu0 %6590
      %6592 = vrot.lane.b32.xlu0 %v6440, 24
      %v6593 = vpop.permute.xlu0 %6592
      %6594 = vrot.lane.b32.xlu0 %v6441, 24
      %v6595 = vpop.permute.xlu0 %6594
      %6596 = vrot.lane.b32.xlu0 %v6442, 24
      %v6597 = vpop.permute.xlu0 %6596
      %6598 = vrot.lane.b32.xlu0 %v6443, 24
      %v6599 = vpop.permute.xlu0 %6598
      %6600 = vrot.lane.b32.xlu0 %v6444, 24
      %v6601 = vpop.permute.xlu0 %6600
      %6602 = vrot.lane.b32.xlu0 %v6445, 24
      %v6603 = vpop.permute.xlu0 %6602
      %6604 = vrot.lane.b32.xlu0 %v6446, 24
      %v6605 = vpop.permute.xlu0 %6604
      %6606 = vrot.lane.b32.xlu0 %v6447, 24
      %v6607 = vpop.permute.xlu0 %6606
      %6608 = vrot.lane.b32.xlu0 %v6448, 24
      %v6609 = vpop.permute.xlu0 %6608
      %6610 = vrot.lane.b32.xlu0 %v6449, 24
      %v6611 = vpop.permute.xlu0 %6610
      %6612 = vrot.lane.b32.xlu0 %v6450, 24
      %v6613 = vpop.permute.xlu0 %6612
      %6614 = vrot.lane.b32.xlu0 %v6451, 24
      %v6615 = vpop.permute.xlu0 %6614
      %6616 = vrot.lane.b32.xlu0 %v6452, 24
      %v6617 = vpop.permute.xlu0 %6616
      %6618 = vrot.lane.b32.xlu0 %v6453, 24
      %v6619 = vpop.permute.xlu0 %6618
      %6620 = vrot.lane.b32.xlu0 %v6454, 24
      %v6621 = vpop.permute.xlu0 %6620
      %6622 = vrot.lane.b32.xlu0 %v6455, 24
      %v6623 = vpop.permute.xlu0 %6622
      %6624 = vrot.lane.b32.xlu0 %v6456, 24
      %v6625 = vpop.permute.xlu0 %6624
      %6626 = vrot.lane.b32.xlu0 %v6457, 24
      %v6627 = vpop.permute.xlu0 %6626
      %6628 = vrot.lane.b32.xlu0 %v6458, 24
      %v6629 = vpop.permute.xlu0 %6628
      %6630 = vrot.lane.b32.xlu0 %v6459, 24
      %v6631 = vpop.permute.xlu0 %6630
      %6632 = vrot.lane.b32.xlu0 %v6460, 24
      %v6633 = vpop.permute.xlu0 %6632
      %6634 = vrot.lane.b32.xlu0 %v6461, 24
      %v6635 = vpop.permute.xlu0 %6634
      %6636 = vrot.lane.b32.xlu0 %v6462, 24
      %v6637 = vpop.permute.xlu0 %6636
      %6638 = vrot.lane.b32.xlu0 %v6463, 24
      %v6639 = vpop.permute.xlu0 %6638
      %6640 = vrot.lane.b32.xlu0 %v6464, 24
      %v6641 = vpop.permute.xlu0 %6640
      %6642 = vrot.lane.b32.xlu0 %v6465, 24
      %v6643 = vpop.permute.xlu0 %6642
      %6644 = vrot.lane.b32.xlu0 %v6466, 24
      %v6645 = vpop.permute.xlu0 %6644
      %6646 = vrot.lane.b32.xlu0 %v6467, 24
      %v6647 = vpop.permute.xlu0 %6646
      %6648 = vrot.lane.b32.xlu0 %v6468, 24
      %v6649 = vpop.permute.xlu0 %6648
      %6650 = vrot.lane.b32.xlu0 %v6469, 24
      %v6651 = vpop.permute.xlu0 %6650
      %6652 = vrot.lane.b32.xlu0 %v6470, 24
      %v6653 = vpop.permute.xlu0 %6652
      %6654 = vrot.lane.b32.xlu0 %v6471, 24
      %v6655 = vpop.permute.xlu0 %6654
      %6656 = vrot.lane.b32.xlu0 %v6472, 24
      %v6657 = vpop.permute.xlu0 %6656
      %6658 = vrot.lane.b32.xlu0 %v6473, 24
      %v6659 = vpop.permute.xlu0 %6658
      %6660 = vrot.lane.b32.xlu0 %v6474, 24
      %v6661 = vpop.permute.xlu0 %6660
      %6662 = vrot.lane.b32.xlu0 %v6475, 24
      %v6663 = vpop.permute.xlu0 %6662
      %6664 = vrot.lane.b32.xlu0 %v6476, 24
      %v6665 = vpop.permute.xlu0 %6664
      %6666 = vrot.lane.b32.xlu0 %v6477, 24
      %v6667 = vpop.permute.xlu0 %6666
      %6668 = vrot.lane.b32.xlu0 %v6478, 24
      %v6669 = vpop.permute.xlu0 %6668
      %6670 = vrot.lane.b32.xlu0 %v6479, 24
      %v6671 = vpop.permute.xlu0 %6670
      %vm6736 = vcmask 261312
      %6737 = vst.msk [vmem:[#allocation5] sm:$0xff] %vm6736, %v6545
      %6738 = vst.msk [vmem:[#allocation5 + $0x8] sm:$0xff] %vm6736, %v6547
      %6739 = vst.msk [vmem:[#allocation5 + $0x10] sm:$0xff] %vm6736, %v6549
      %6740 = vst.msk [vmem:[#allocation5 + $0x18] sm:$0xff] %vm6736, %v6551
      %6741 = vst.msk [vmem:[#allocation5 + $0x20] sm:$0xff] %vm6736, %v6553
      %6742 = vst.msk [vmem:[#allocation5 + $0x28] sm:$0xff] %vm6736, %v6555
      %6743 = vst.msk [vmem:[#allocation5 + $0x30] sm:$0xff] %vm6736, %v6557
      %6744 = vst.msk [vmem:[#allocation5 + $0x38] sm:$0xff] %vm6736, %v6559
      %6745 = vst.msk [vmem:[#allocation5 + $0x40] sm:$0xff] %vm6736, %v6561
      %6746 = vst.msk [vmem:[#allocation5 + $0x48] sm:$0xff] %vm6736, %v6563
      %6747 = vst.msk [vmem:[#allocation5 + $0x50] sm:$0xff] %vm6736, %v6565
      %6748 = vst.msk [vmem:[#allocation5 + $0x58] sm:$0xff] %vm6736, %v6567
      %6749 = vst.msk [vmem:[#allocation5 + $0x60] sm:$0xff] %vm6736, %v6569
      %6750 = vst.msk [vmem:[#allocation5 + $0x68] sm:$0xff] %vm6736, %v6571
      %6751 = vst.msk [vmem:[#allocation5 + $0x70] sm:$0xff] %vm6736, %v6573
      %6752 = vst.msk [vmem:[#allocation5 + $0x78] sm:$0xff] %vm6736, %v6575
      %6753 = vst.msk [vmem:[#allocation5 + $0x80] sm:$0xff] %vm6736, %v6577
      %6754 = vst.msk [vmem:[#allocation5 + $0x88] sm:$0xff] %vm6736, %v6579
      %6755 = vst.msk [vmem:[#allocation5 + $0x90] sm:$0xff] %vm6736, %v6581
      %6756 = vst.msk [vmem:[#allocation5 + $0x98] sm:$0xff] %vm6736, %v6583
      %6757 = vst.msk [vmem:[#allocation5 + $0xa0] sm:$0xff] %vm6736, %v6585
      %6758 = vst.msk [vmem:[#allocation5 + $0xa8] sm:$0xff] %vm6736, %v6587
      %6759 = vst.msk [vmem:[#allocation5 + $0xb0] sm:$0xff] %vm6736, %v6589
      %6760 = vst.msk [vmem:[#allocation5 + $0xb8] sm:$0xff] %vm6736, %v6591
      %6761 = vst.msk [vmem:[#allocation5 + $0xc0] sm:$0xff] %vm6736, %v6593
      %6762 = vst.msk [vmem:[#allocation5 + $0xc8] sm:$0xff] %vm6736, %v6595
      %6763 = vst.msk [vmem:[#allocation5 + $0xd0] sm:$0xff] %vm6736, %v6597
      %6764 = vst.msk [vmem:[#allocation5 + $0xd8] sm:$0xff] %vm6736, %v6599
      %6765 = vst.msk [vmem:[#allocation5 + $0xe0] sm:$0xff] %vm6736, %v6601
      %6766 = vst.msk [vmem:[#allocation5 + $0xe8] sm:$0xff] %vm6736, %v6603
      %6767 = vst.msk [vmem:[#allocation5 + $0xf0] sm:$0xff] %vm6736, %v6605
      %6768 = vst.msk [vmem:[#allocation5 + $0xf8] sm:$0xff] %vm6736, %v6607
      %6769 = vst.msk [vmem:[#allocation5 + $0x100] sm:$0xff] %vm6736, %v6609
      %6770 = vst.msk [vmem:[#allocation5 + $0x108] sm:$0xff] %vm6736, %v6611
      %6771 = vst.msk [vmem:[#allocation5 + $0x110] sm:$0xff] %vm6736, %v6613
      %6772 = vst.msk [vmem:[#allocation5 + $0x118] sm:$0xff] %vm6736, %v6615
      %6773 = vst.msk [vmem:[#allocation5 + $0x120] sm:$0xff] %vm6736, %v6617
      %6774 = vst.msk [vmem:[#allocation5 + $0x128] sm:$0xff] %vm6736, %v6619
      %6775 = vst.msk [vmem:[#allocation5 + $0x130] sm:$0xff] %vm6736, %v6621
      %6776 = vst.msk [vmem:[#allocation5 + $0x138] sm:$0xff] %vm6736, %v6623
      %6777 = vst.msk [vmem:[#allocation5 + $0x140] sm:$0xff] %vm6736, %v6625
      %6778 = vst.msk [vmem:[#allocation5 + $0x148] sm:$0xff] %vm6736, %v6627
      %6779 = vst.msk [vmem:[#allocation5 + $0x150] sm:$0xff] %vm6736, %v6629
      %6780 = vst.msk [vmem:[#allocation5 + $0x158] sm:$0xff] %vm6736, %v6631
      %6781 = vst.msk [vmem:[#allocation5 + $0x160] sm:$0xff] %vm6736, %v6633
      %6782 = vst.msk [vmem:[#allocation5 + $0x168] sm:$0xff] %vm6736, %v6635
      %6783 = vst.msk [vmem:[#allocation5 + $0x170] sm:$0xff] %vm6736, %v6637
      %6784 = vst.msk [vmem:[#allocation5 + $0x178] sm:$0xff] %vm6736, %v6639
      %6785 = vst.msk [vmem:[#allocation5 + $0x180] sm:$0xff] %vm6736, %v6641
      %6786 = vst.msk [vmem:[#allocation5 + $0x188] sm:$0xff] %vm6736, %v6643
      %6787 = vst.msk [vmem:[#allocation5 + $0x190] sm:$0xff] %vm6736, %v6645
      %6788 = vst.msk [vmem:[#allocation5 + $0x198] sm:$0xff] %vm6736, %v6647
      %6789 = vst.msk [vmem:[#allocation5 + $0x1a0] sm:$0xff] %vm6736, %v6649
      %6790 = vst.msk [vmem:[#allocation5 + $0x1a8] sm:$0xff] %vm6736, %v6651
      %6791 = vst.msk [vmem:[#allocation5 + $0x1b0] sm:$0xff] %vm6736, %v6653
      %6792 = vst.msk [vmem:[#allocation5 + $0x1b8] sm:$0xff] %vm6736, %v6655
      %6793 = vst.msk [vmem:[#allocation5 + $0x1c0] sm:$0xff] %vm6736, %v6657
      %6794 = vst.msk [vmem:[#allocation5 + $0x1c8] sm:$0xff] %vm6736, %v6659
      %6795 = vst.msk [vmem:[#allocation5 + $0x1d0] sm:$0xff] %vm6736, %v6661
      %6796 = vst.msk [vmem:[#allocation5 + $0x1d8] sm:$0xff] %vm6736, %v6663
      %6797 = vst.msk [vmem:[#allocation5 + $0x1e0] sm:$0xff] %vm6736, %v6665
      %6798 = vst.msk [vmem:[#allocation5 + $0x1e8] sm:$0xff] %vm6736, %v6667
      %6799 = vst.msk [vmem:[#allocation5 + $0x1f0] sm:$0xff] %vm6736, %v6669
      %6800 = vst.msk [vmem:[#allocation5 + $0x1f8] sm:$0xff] %vm6736, %v6671
      %v6801 = vld [vmem:[%s5450] sm:$0xff]
      %v6802 = vld [vmem:[%s5450 + $0x8] sm:$0xff]
      %v6803 = vld [vmem:[%s5450 + $0x10] sm:$0xff]
      %v6804 = vld [vmem:[%s5450 + $0x18] sm:$0xff]
      %v6805 = vld [vmem:[%s5450 + $0x20] sm:$0xff]
      %v6806 = vld [vmem:[%s5450 + $0x28] sm:$0xff]
      %v6807 = vld [vmem:[%s5450 + $0x30] sm:$0xff]
      %v6808 = vld [vmem:[%s5450 + $0x38] sm:$0xff]
      %v6809 = vld [vmem:[%s5450 + $0x50] sm:$0xff]
      %v6810 = vld [vmem:[%s5450 + $0x58] sm:$0xff]
      %v6811 = vld [vmem:[%s5450 + $0x60] sm:$0xff]
      %v6812 = vld [vmem:[%s5450 + $0x68] sm:$0xff]
      %v6813 = vld [vmem:[%s5450 + $0x70] sm:$0xff]
      %v6814 = vld [vmem:[%s5450 + $0x78] sm:$0xff]
      %v6815 = vld [vmem:[%s5450 + $0x80] sm:$0xff]
      %v6816 = vld [vmem:[%s5450 + $0x88] sm:$0xff]
      %v6817 = vld [vmem:[%s5450 + $0xa0] sm:$0xff]
      %v6818 = vld [vmem:[%s5450 + $0xa8] sm:$0xff]
      %v6819 = vld [vmem:[%s5450 + $0xb0] sm:$0xff]
      %v6820 = vld [vmem:[%s5450 + $0xb8] sm:$0xff]
      %v6821 = vld [vmem:[%s5450 + $0xc0] sm:$0xff]
      %v6822 = vld [vmem:[%s5450 + $0xc8] sm:$0xff]
      %v6823 = vld [vmem:[%s5450 + $0xd0] sm:$0xff]
      %v6824 = vld [vmem:[%s5450 + $0xd8] sm:$0xff]
      %v6825 = vld [vmem:[%s5450 + $0xf0] sm:$0xff]
      %v6826 = vld [vmem:[%s5450 + $0xf8] sm:$0xff]
      %v6827 = vld [vmem:[%s5450 + $0x100] sm:$0xff]
      %v6828 = vld [vmem:[%s5450 + $0x108] sm:$0xff]
      %v6829 = vld [vmem:[%s5450 + $0x110] sm:$0xff]
      %v6830 = vld [vmem:[%s5450 + $0x118] sm:$0xff]
      %v6831 = vld [vmem:[%s5450 + $0x120] sm:$0xff]
      %v6832 = vld [vmem:[%s5450 + $0x128] sm:$0xff]
      %v6833 = vld [vmem:[%s5450 + $0x140] sm:$0xff]
      %v6834 = vld [vmem:[%s5450 + $0x148] sm:$0xff]
      %v6835 = vld [vmem:[%s5450 + $0x150] sm:$0xff]
      %v6836 = vld [vmem:[%s5450 + $0x158] sm:$0xff]
      %v6837 = vld [vmem:[%s5450 + $0x160] sm:$0xff]
      %v6838 = vld [vmem:[%s5450 + $0x168] sm:$0xff]
      %v6839 = vld [vmem:[%s5450 + $0x170] sm:$0xff]
      %v6840 = vld [vmem:[%s5450 + $0x178] sm:$0xff]
      %v6841 = vld [vmem:[%s5450 + $0x190] sm:$0xff]
      %v6842 = vld [vmem:[%s5450 + $0x198] sm:$0xff]
      %v6843 = vld [vmem:[%s5450 + $0x1a0] sm:$0xff]
      %v6844 = vld [vmem:[%s5450 + $0x1a8] sm:$0xff]
      %v6845 = vld [vmem:[%s5450 + $0x1b0] sm:$0xff]
      %v6846 = vld [vmem:[%s5450 + $0x1b8] sm:$0xff]
      %v6847 = vld [vmem:[%s5450 + $0x1c0] sm:$0xff]
      %v6848 = vld [vmem:[%s5450 + $0x1c8] sm:$0xff]
      %v6849 = vld [vmem:[%s5450 + $0x1e0] sm:$0xff]
      %v6850 = vld [vmem:[%s5450 + $0x1e8] sm:$0xff]
      %v6851 = vld [vmem:[%s5450 + $0x1f0] sm:$0xff]
      %v6852 = vld [vmem:[%s5450 + $0x1f8] sm:$0xff]
      %v6853 = vld [vmem:[%s5450 + $0x200] sm:$0xff]
      %v6854 = vld [vmem:[%s5450 + $0x208] sm:$0xff]
      %v6855 = vld [vmem:[%s5450 + $0x210] sm:$0xff]
      %v6856 = vld [vmem:[%s5450 + $0x218] sm:$0xff]
      %v6857 = vld [vmem:[%s5450 + $0x230] sm:$0xff]
      %v6858 = vld [vmem:[%s5450 + $0x238] sm:$0xff]
      %v6859 = vld [vmem:[%s5450 + $0x240] sm:$0xff]
      %v6860 = vld [vmem:[%s5450 + $0x248] sm:$0xff]
      %v6861 = vld [vmem:[%s5450 + $0x250] sm:$0xff]
      %v6862 = vld [vmem:[%s5450 + $0x258] sm:$0xff]
      %v6863 = vld [vmem:[%s5450 + $0x260] sm:$0xff]
      %v6864 = vld [vmem:[%s5450 + $0x268] sm:$0xff]
      %6929 = vrot.lane.b32.xlu0 %v6801, 32
      %v6930 = vpop.permute.xlu0 %6929
      %6931 = vrot.lane.b32.xlu0 %v6802, 32
      %v6932 = vpop.permute.xlu0 %6931
      %6933 = vrot.lane.b32.xlu0 %v6803, 32
      %v6934 = vpop.permute.xlu0 %6933
      %6935 = vrot.lane.b32.xlu0 %v6804, 32
      %v6936 = vpop.permute.xlu0 %6935
      %6937 = vrot.lane.b32.xlu0 %v6805, 32
      %v6938 = vpop.permute.xlu0 %6937
      %6939 = vrot.lane.b32.xlu0 %v6806, 32
      %v6940 = vpop.permute.xlu0 %6939
      %6941 = vrot.lane.b32.xlu0 %v6807, 32
      %v6942 = vpop.permute.xlu0 %6941
      %6943 = vrot.lane.b32.xlu0 %v6808, 32
      %v6944 = vpop.permute.xlu0 %6943
      %6945 = vrot.lane.b32.xlu0 %v6809, 32
      %v6946 = vpop.permute.xlu0 %6945
      %6947 = vrot.lane.b32.xlu0 %v6810, 32
      %v6948 = vpop.permute.xlu0 %6947
      %6949 = vrot.lane.b32.xlu0 %v6811, 32
      %v6950 = vpop.permute.xlu0 %6949
      %6951 = vrot.lane.b32.xlu0 %v6812, 32
      %v6952 = vpop.permute.xlu0 %6951
      %6953 = vrot.lane.b32.xlu0 %v6813, 32
      %v6954 = vpop.permute.xlu0 %6953
      %6955 = vrot.lane.b32.xlu0 %v6814, 32
      %v6956 = vpop.permute.xlu0 %6955
      %6957 = vrot.lane.b32.xlu0 %v6815, 32
      %v6958 = vpop.permute.xlu0 %6957
      %6959 = vrot.lane.b32.xlu0 %v6816, 32
      %v6960 = vpop.permute.xlu0 %6959
      %6961 = vrot.lane.b32.xlu0 %v6817, 32
      %v6962 = vpop.permute.xlu0 %6961
      %6963 = vrot.lane.b32.xlu0 %v6818, 32
      %v6964 = vpop.permute.xlu0 %6963
      %6965 = vrot.lane.b32.xlu0 %v6819, 32
      %v6966 = vpop.permute.xlu0 %6965
      %6967 = vrot.lane.b32.xlu0 %v6820, 32
      %v6968 = vpop.permute.xlu0 %6967
      %6969 = vrot.lane.b32.xlu0 %v6821, 32
      %v6970 = vpop.permute.xlu0 %6969
      %6971 = vrot.lane.b32.xlu0 %v6822, 32
      %v6972 = vpop.permute.xlu0 %6971
      %6973 = vrot.lane.b32.xlu0 %v6823, 32
      %v6974 = vpop.permute.xlu0 %6973
      %6975 = vrot.lane.b32.xlu0 %v6824, 32
      %v6976 = vpop.permute.xlu0 %6975
      %6977 = vrot.lane.b32.xlu0 %v6825, 32
      %v6978 = vpop.permute.xlu0 %6977
      %6979 = vrot.lane.b32.xlu0 %v6826, 32
      %v6980 = vpop.permute.xlu0 %6979
      %6981 = vrot.lane.b32.xlu0 %v6827, 32
      %v6982 = vpop.permute.xlu0 %6981
      %6983 = vrot.lane.b32.xlu0 %v6828, 32
      %v6984 = vpop.permute.xlu0 %6983
      %6985 = vrot.lane.b32.xlu0 %v6829, 32
      %v6986 = vpop.permute.xlu0 %6985
      %6987 = vrot.lane.b32.xlu0 %v6830, 32
      %v6988 = vpop.permute.xlu0 %6987
      %6989 = vrot.lane.b32.xlu0 %v6831, 32
      %v6990 = vpop.permute.xlu0 %6989
      %6991 = vrot.lane.b32.xlu0 %v6832, 32
      %v6992 = vpop.permute.xlu0 %6991
      %6993 = vrot.lane.b32.xlu0 %v6833, 32
      %v6994 = vpop.permute.xlu0 %6993
      %6995 = vrot.lane.b32.xlu0 %v6834, 32
      %v6996 = vpop.permute.xlu0 %6995
      %6997 = vrot.lane.b32.xlu0 %v6835, 32
      %v6998 = vpop.permute.xlu0 %6997
      %6999 = vrot.lane.b32.xlu0 %v6836, 32
      %v7000 = vpop.permute.xlu0 %6999
      %7001 = vrot.lane.b32.xlu0 %v6837, 32
      %v7002 = vpop.permute.xlu0 %7001
      %7003 = vrot.lane.b32.xlu0 %v6838, 32
      %v7004 = vpop.permute.xlu0 %7003
      %7005 = vrot.lane.b32.xlu0 %v6839, 32
      %v7006 = vpop.permute.xlu0 %7005
      %7007 = vrot.lane.b32.xlu0 %v6840, 32
      %v7008 = vpop.permute.xlu0 %7007
      %7009 = vrot.lane.b32.xlu0 %v6841, 32
      %v7010 = vpop.permute.xlu0 %7009
      %7011 = vrot.lane.b32.xlu0 %v6842, 32
      %v7012 = vpop.permute.xlu0 %7011
      %7013 = vrot.lane.b32.xlu0 %v6843, 32
      %v7014 = vpop.permute.xlu0 %7013
      %7015 = vrot.lane.b32.xlu0 %v6844, 32
      %v7016 = vpop.permute.xlu0 %7015
      %7017 = vrot.lane.b32.xlu0 %v6845, 32
      %v7018 = vpop.permute.xlu0 %7017
      %7019 = vrot.lane.b32.xlu0 %v6846, 32
      %v7020 = vpop.permute.xlu0 %7019
      %7021 = vrot.lane.b32.xlu0 %v6847, 32
      %v7022 = vpop.permute.xlu0 %7021
      %7023 = vrot.lane.b32.xlu0 %v6848, 32
      %v7024 = vpop.permute.xlu0 %7023
      %7025 = vrot.lane.b32.xlu0 %v6849, 32
      %v7026 = vpop.permute.xlu0 %7025
      %7027 = vrot.lane.b32.xlu0 %v6850, 32
      %v7028 = vpop.permute.xlu0 %7027
      %7029 = vrot.lane.b32.xlu0 %v6851, 32
      %v7030 = vpop.permute.xlu0 %7029
      %7031 = vrot.lane.b32.xlu0 %v6852, 32
      %v7032 = vpop.permute.xlu0 %7031
      %7033 = vrot.lane.b32.xlu0 %v6853, 32
      %v7034 = vpop.permute.xlu0 %7033
      %7035 = vrot.lane.b32.xlu0 %v6854, 32
      %v7036 = vpop.permute.xlu0 %7035
      %7037 = vrot.lane.b32.xlu0 %v6855, 32
      %v7038 = vpop.permute.xlu0 %7037
      %7039 = vrot.lane.b32.xlu0 %v6856, 32
      %v7040 = vpop.permute.xlu0 %7039
      %7041 = vrot.lane.b32.xlu0 %v6857, 32
      %v7042 = vpop.permute.xlu0 %7041
      %7043 = vrot.lane.b32.xlu0 %v6858, 32
      %v7044 = vpop.permute.xlu0 %7043
      %7045 = vrot.lane.b32.xlu0 %v6859, 32
      %v7046 = vpop.permute.xlu0 %7045
      %7047 = vrot.lane.b32.xlu0 %v6860, 32
      %v7048 = vpop.permute.xlu0 %7047
      %7049 = vrot.lane.b32.xlu0 %v6861, 32
      %v7050 = vpop.permute.xlu0 %7049
      %7051 = vrot.lane.b32.xlu0 %v6862, 32
      %v7052 = vpop.permute.xlu0 %7051
      %7053 = vrot.lane.b32.xlu0 %v6863, 32
      %v7054 = vpop.permute.xlu0 %7053
      %7055 = vrot.lane.b32.xlu0 %v6864, 32
      %v7056 = vpop.permute.xlu0 %7055
      %vm7121 = vcmask 326912
      %7122 = vst.msk [vmem:[#allocation5] sm:$0xff] %vm7121, %v6930
      %7123 = vst.msk [vmem:[#allocation5 + $0x8] sm:$0xff] %vm7121, %v6932
      %7124 = vst.msk [vmem:[#allocation5 + $0x10] sm:$0xff] %vm7121, %v6934
      %7125 = vst.msk [vmem:[#allocation5 + $0x18] sm:$0xff] %vm7121, %v6936
      %7126 = vst.msk [vmem:[#allocation5 + $0x20] sm:$0xff] %vm7121, %v6938
      %7127 = vst.msk [vmem:[#allocation5 + $0x28] sm:$0xff] %vm7121, %v6940
      %7128 = vst.msk [vmem:[#allocation5 + $0x30] sm:$0xff] %vm7121, %v6942
      %7129 = vst.msk [vmem:[#allocation5 + $0x38] sm:$0xff] %vm7121, %v6944
      %7130 = vst.msk [vmem:[#allocation5 + $0x40] sm:$0xff] %vm7121, %v6946
      %7131 = vst.msk [vmem:[#allocation5 + $0x48] sm:$0xff] %vm7121, %v6948
      %7132 = vst.msk [vmem:[#allocation5 + $0x50] sm:$0xff] %vm7121, %v6950
      %7133 = vst.msk [vmem:[#allocation5 + $0x58] sm:$0xff] %vm7121, %v6952
      %7134 = vst.msk [vmem:[#allocation5 + $0x60] sm:$0xff] %vm7121, %v6954
      %7135 = vst.msk [vmem:[#allocation5 + $0x68] sm:$0xff] %vm7121, %v6956
      %7136 = vst.msk [vmem:[#allocation5 + $0x70] sm:$0xff] %vm7121, %v6958
      %7137 = vst.msk [vmem:[#allocation5 + $0x78] sm:$0xff] %vm7121, %v6960
      %7138 = vst.msk [vmem:[#allocation5 + $0x80] sm:$0xff] %vm7121, %v6962
      %7139 = vst.msk [vmem:[#allocation5 + $0x88] sm:$0xff] %vm7121, %v6964
      %7140 = vst.msk [vmem:[#allocation5 + $0x90] sm:$0xff] %vm7121, %v6966
      %7141 = vst.msk [vmem:[#allocation5 + $0x98] sm:$0xff] %vm7121, %v6968
      %7142 = vst.msk [vmem:[#allocation5 + $0xa0] sm:$0xff] %vm7121, %v6970
      %7143 = vst.msk [vmem:[#allocation5 + $0xa8] sm:$0xff] %vm7121, %v6972
      %7144 = vst.msk [vmem:[#allocation5 + $0xb0] sm:$0xff] %vm7121, %v6974
      %7145 = vst.msk [vmem:[#allocation5 + $0xb8] sm:$0xff] %vm7121, %v6976
      %7146 = vst.msk [vmem:[#allocation5 + $0xc0] sm:$0xff] %vm7121, %v6978
      %7147 = vst.msk [vmem:[#allocation5 + $0xc8] sm:$0xff] %vm7121, %v6980
      %7148 = vst.msk [vmem:[#allocation5 + $0xd0] sm:$0xff] %vm7121, %v6982
      %7149 = vst.msk [vmem:[#allocation5 + $0xd8] sm:$0xff] %vm7121, %v6984
      %7150 = vst.msk [vmem:[#allocation5 + $0xe0] sm:$0xff] %vm7121, %v6986
      %7151 = vst.msk [vmem:[#allocation5 + $0xe8] sm:$0xff] %vm7121, %v6988
      %7152 = vst.msk [vmem:[#allocation5 + $0xf0] sm:$0xff] %vm7121, %v6990
      %7153 = vst.msk [vmem:[#allocation5 + $0xf8] sm:$0xff] %vm7121, %v6992
      %7154 = vst.msk [vmem:[#allocation5 + $0x100] sm:$0xff] %vm7121, %v6994
      %7155 = vst.msk [vmem:[#allocation5 + $0x108] sm:$0xff] %vm7121, %v6996
      %7156 = vst.msk [vmem:[#allocation5 + $0x110] sm:$0xff] %vm7121, %v6998
      %7157 = vst.msk [vmem:[#allocation5 + $0x118] sm:$0xff] %vm7121, %v7000
      %7158 = vst.msk [vmem:[#allocation5 + $0x120] sm:$0xff] %vm7121, %v7002
      %7159 = vst.msk [vmem:[#allocation5 + $0x128] sm:$0xff] %vm7121, %v7004
      %7160 = vst.msk [vmem:[#allocation5 + $0x130] sm:$0xff] %vm7121, %v7006
      %7161 = vst.msk [vmem:[#allocation5 + $0x138] sm:$0xff] %vm7121, %v7008
      %7162 = vst.msk [vmem:[#allocation5 + $0x140] sm:$0xff] %vm7121, %v7010
      %7163 = vst.msk [vmem:[#allocation5 + $0x148] sm:$0xff] %vm7121, %v7012
      %7164 = vst.msk [vmem:[#allocation5 + $0x150] sm:$0xff] %vm7121, %v7014
      %7165 = vst.msk [vmem:[#allocation5 + $0x158] sm:$0xff] %vm7121, %v7016
      %7166 = vst.msk [vmem:[#allocation5 + $0x160] sm:$0xff] %vm7121, %v7018
      %7167 = vst.msk [vmem:[#allocation5 + $0x168] sm:$0xff] %vm7121, %v7020
      %7168 = vst.msk [vmem:[#allocation5 + $0x170] sm:$0xff] %vm7121, %v7022
      %7169 = vst.msk [vmem:[#allocation5 + $0x178] sm:$0xff] %vm7121, %v7024
      %7170 = vst.msk [vmem:[#allocation5 + $0x180] sm:$0xff] %vm7121, %v7026
      %7171 = vst.msk [vmem:[#allocation5 + $0x188] sm:$0xff] %vm7121, %v7028
      %7172 = vst.msk [vmem:[#allocation5 + $0x190] sm:$0xff] %vm7121, %v7030
      %7173 = vst.msk [vmem:[#allocation5 + $0x198] sm:$0xff] %vm7121, %v7032
      %7174 = vst.msk [vmem:[#allocation5 + $0x1a0] sm:$0xff] %vm7121, %v7034
      %7175 = vst.msk [vmem:[#allocation5 + $0x1a8] sm:$0xff] %vm7121, %v7036
      %7176 = vst.msk [vmem:[#allocation5 + $0x1b0] sm:$0xff] %vm7121, %v7038
      %7177 = vst.msk [vmem:[#allocation5 + $0x1b8] sm:$0xff] %vm7121, %v7040
      %7178 = vst.msk [vmem:[#allocation5 + $0x1c0] sm:$0xff] %vm7121, %v7042
      %7179 = vst.msk [vmem:[#allocation5 + $0x1c8] sm:$0xff] %vm7121, %v7044
      %7180 = vst.msk [vmem:[#allocation5 + $0x1d0] sm:$0xff] %vm7121, %v7046
      %7181 = vst.msk [vmem:[#allocation5 + $0x1d8] sm:$0xff] %vm7121, %v7048
      %7182 = vst.msk [vmem:[#allocation5 + $0x1e0] sm:$0xff] %vm7121, %v7050
      %7183 = vst.msk [vmem:[#allocation5 + $0x1e8] sm:$0xff] %vm7121, %v7052
      %7184 = vst.msk [vmem:[#allocation5 + $0x1f0] sm:$0xff] %vm7121, %v7054
      %7185 = vst.msk [vmem:[#allocation5 + $0x1f8] sm:$0xff] %vm7121, %v7056
      %s7186 = scalar_lea.vmem [#allocation4], 96
      %v7187 = vld [vmem:[%s7186] sm:$0xff]
      %v7188 = vld [vmem:[%s7186 + $0x8] sm:$0xff]
      %v7189 = vld [vmem:[%s7186 + $0x10] sm:$0xff]
      %v7190 = vld [vmem:[%s7186 + $0x18] sm:$0xff]
      %v7191 = vld [vmem:[%s7186 + $0x20] sm:$0xff]
      %v7192 = vld [vmem:[%s7186 + $0x28] sm:$0xff]
      %v7193 = vld [vmem:[%s7186 + $0x30] sm:$0xff]
      %v7194 = vld [vmem:[%s7186 + $0x38] sm:$0xff]
      %v7195 = vld [vmem:[%s7186 + $0x50] sm:$0xff]
      %v7196 = vld [vmem:[%s7186 + $0x58] sm:$0xff]
      %v7197 = vld [vmem:[%s7186 + $0x60] sm:$0xff]
      %v7198 = vld [vmem:[%s7186 + $0x68] sm:$0xff]
      %v7199 = vld [vmem:[%s7186 + $0x70] sm:$0xff]
      %v7200 = vld [vmem:[%s7186 + $0x78] sm:$0xff]
      %v7201 = vld [vmem:[%s7186 + $0x80] sm:$0xff]
      %v7202 = vld [vmem:[%s7186 + $0x88] sm:$0xff]
      %v7203 = vld [vmem:[%s7186 + $0xa0] sm:$0xff]
      %v7204 = vld [vmem:[%s7186 + $0xa8] sm:$0xff]
      %v7205 = vld [vmem:[%s7186 + $0xb0] sm:$0xff]
      %v7206 = vld [vmem:[%s7186 + $0xb8] sm:$0xff]
      %v7207 = vld [vmem:[%s7186 + $0xc0] sm:$0xff]
      %v7208 = vld [vmem:[%s7186 + $0xc8] sm:$0xff]
      %v7209 = vld [vmem:[%s7186 + $0xd0] sm:$0xff]
      %v7210 = vld [vmem:[%s7186 + $0xd8] sm:$0xff]
      %v7211 = vld [vmem:[%s7186 + $0xf0] sm:$0xff]
      %v7212 = vld [vmem:[%s7186 + $0xf8] sm:$0xff]
      %v7213 = vld [vmem:[%s7186 + $0x100] sm:$0xff]
      %v7214 = vld [vmem:[%s7186 + $0x108] sm:$0xff]
      %v7215 = vld [vmem:[%s7186 + $0x110] sm:$0xff]
      %v7216 = vld [vmem:[%s7186 + $0x118] sm:$0xff]
      %v7217 = vld [vmem:[%s7186 + $0x120] sm:$0xff]
      %v7218 = vld [vmem:[%s7186 + $0x128] sm:$0xff]
      %v7219 = vld [vmem:[%s7186 + $0x140] sm:$0xff]
      %v7220 = vld [vmem:[%s7186 + $0x148] sm:$0xff]
      %v7221 = vld [vmem:[%s7186 + $0x150] sm:$0xff]
      %v7222 = vld [vmem:[%s7186 + $0x158] sm:$0xff]
      %v7223 = vld [vmem:[%s7186 + $0x160] sm:$0xff]
      %v7224 = vld [vmem:[%s7186 + $0x168] sm:$0xff]
      %v7225 = vld [vmem:[%s7186 + $0x170] sm:$0xff]
      %v7226 = vld [vmem:[%s7186 + $0x178] sm:$0xff]
      %v7227 = vld [vmem:[%s7186 + $0x190] sm:$0xff]
      %v7228 = vld [vmem:[%s7186 + $0x198] sm:$0xff]
      %v7229 = vld [vmem:[%s7186 + $0x1a0] sm:$0xff]
      %v7230 = vld [vmem:[%s7186 + $0x1a8] sm:$0xff]
      %v7231 = vld [vmem:[%s7186 + $0x1b0] sm:$0xff]
      %v7232 = vld [vmem:[%s7186 + $0x1b8] sm:$0xff]
      %v7233 = vld [vmem:[%s7186 + $0x1c0] sm:$0xff]
      %v7234 = vld [vmem:[%s7186 + $0x1c8] sm:$0xff]
      %v7235 = vld [vmem:[%s7186 + $0x1e0] sm:$0xff]
      %v7236 = vld [vmem:[%s7186 + $0x1e8] sm:$0xff]
      %v7237 = vld [vmem:[%s7186 + $0x1f0] sm:$0xff]
      %v7238 = vld [vmem:[%s7186 + $0x1f8] sm:$0xff]
      %v7239 = vld [vmem:[%s7186 + $0x200] sm:$0xff]
      %v7240 = vld [vmem:[%s7186 + $0x208] sm:$0xff]
      %v7241 = vld [vmem:[%s7186 + $0x210] sm:$0xff]
      %v7242 = vld [vmem:[%s7186 + $0x218] sm:$0xff]
      %v7243 = vld [vmem:[%s7186 + $0x230] sm:$0xff]
      %v7244 = vld [vmem:[%s7186 + $0x238] sm:$0xff]
      %v7245 = vld [vmem:[%s7186 + $0x240] sm:$0xff]
      %v7246 = vld [vmem:[%s7186 + $0x248] sm:$0xff]
      %v7247 = vld [vmem:[%s7186 + $0x250] sm:$0xff]
      %v7248 = vld [vmem:[%s7186 + $0x258] sm:$0xff]
      %v7249 = vld [vmem:[%s7186 + $0x260] sm:$0xff]
      %v7250 = vld [vmem:[%s7186 + $0x268] sm:$0xff]
      %7315 = vrot.lane.b32.xlu0 %v7187, 40
      %v7316 = vpop.permute.xlu0 %7315
      %7317 = vrot.lane.b32.xlu0 %v7188, 40
      %v7318 = vpop.permute.xlu0 %7317
      %7319 = vrot.lane.b32.xlu0 %v7189, 40
      %v7320 = vpop.permute.xlu0 %7319
      %7321 = vrot.lane.b32.xlu0 %v7190, 40
      %v7322 = vpop.permute.xlu0 %7321
      %7323 = vrot.lane.b32.xlu0 %v7191, 40
      %v7324 = vpop.permute.xlu0 %7323
      %7325 = vrot.lane.b32.xlu0 %v7192, 40
      %v7326 = vpop.permute.xlu0 %7325
      %7327 = vrot.lane.b32.xlu0 %v7193, 40
      %v7328 = vpop.permute.xlu0 %7327
      %7329 = vrot.lane.b32.xlu0 %v7194, 40
      %v7330 = vpop.permute.xlu0 %7329
      %7331 = vrot.lane.b32.xlu0 %v7195, 40
      %v7332 = vpop.permute.xlu0 %7331
      %7333 = vrot.lane.b32.xlu0 %v7196, 40
      %v7334 = vpop.permute.xlu0 %7333
      %7335 = vrot.lane.b32.xlu0 %v7197, 40
      %v7336 = vpop.permute.xlu0 %7335
      %7337 = vrot.lane.b32.xlu0 %v7198, 40
      %v7338 = vpop.permute.xlu0 %7337
      %7339 = vrot.lane.b32.xlu0 %v7199, 40
      %v7340 = vpop.permute.xlu0 %7339
      %7341 = vrot.lane.b32.xlu0 %v7200, 40
      %v7342 = vpop.permute.xlu0 %7341
      %7343 = vrot.lane.b32.xlu0 %v7201, 40
      %v7344 = vpop.permute.xlu0 %7343
      %7345 = vrot.lane.b32.xlu0 %v7202, 40
      %v7346 = vpop.permute.xlu0 %7345
      %7347 = vrot.lane.b32.xlu0 %v7203, 40
      %v7348 = vpop.permute.xlu0 %7347
      %7349 = vrot.lane.b32.xlu0 %v7204, 40
      %v7350 = vpop.permute.xlu0 %7349
      %7351 = vrot.lane.b32.xlu0 %v7205, 40
      %v7352 = vpop.permute.xlu0 %7351
      %7353 = vrot.lane.b32.xlu0 %v7206, 40
      %v7354 = vpop.permute.xlu0 %7353
      %7355 = vrot.lane.b32.xlu0 %v7207, 40
      %v7356 = vpop.permute.xlu0 %7355
      %7357 = vrot.lane.b32.xlu0 %v7208, 40
      %v7358 = vpop.permute.xlu0 %7357
      %7359 = vrot.lane.b32.xlu0 %v7209, 40
      %v7360 = vpop.permute.xlu0 %7359
      %7361 = vrot.lane.b32.xlu0 %v7210, 40
      %v7362 = vpop.permute.xlu0 %7361
      %7363 = vrot.lane.b32.xlu0 %v7211, 40
      %v7364 = vpop.permute.xlu0 %7363
      %7365 = vrot.lane.b32.xlu0 %v7212, 40
      %v7366 = vpop.permute.xlu0 %7365
      %7367 = vrot.lane.b32.xlu0 %v7213, 40
      %v7368 = vpop.permute.xlu0 %7367
      %7369 = vrot.lane.b32.xlu0 %v7214, 40
      %v7370 = vpop.permute.xlu0 %7369
      %7371 = vrot.lane.b32.xlu0 %v7215, 40
      %v7372 = vpop.permute.xlu0 %7371
      %7373 = vrot.lane.b32.xlu0 %v7216, 40
      %v7374 = vpop.permute.xlu0 %7373
      %7375 = vrot.lane.b32.xlu0 %v7217, 40
      %v7376 = vpop.permute.xlu0 %7375
      %7377 = vrot.lane.b32.xlu0 %v7218, 40
      %v7378 = vpop.permute.xlu0 %7377
      %7379 = vrot.lane.b32.xlu0 %v7219, 40
      %v7380 = vpop.permute.xlu0 %7379
      %7381 = vrot.lane.b32.xlu0 %v7220, 40
      %v7382 = vpop.permute.xlu0 %7381
      %7383 = vrot.lane.b32.xlu0 %v7221, 40
      %v7384 = vpop.permute.xlu0 %7383
      %7385 = vrot.lane.b32.xlu0 %v7222, 40
      %v7386 = vpop.permute.xlu0 %7385
      %7387 = vrot.lane.b32.xlu0 %v7223, 40
      %v7388 = vpop.permute.xlu0 %7387
      %7389 = vrot.lane.b32.xlu0 %v7224, 40
      %v7390 = vpop.permute.xlu0 %7389
      %7391 = vrot.lane.b32.xlu0 %v7225, 40
      %v7392 = vpop.permute.xlu0 %7391
      %7393 = vrot.lane.b32.xlu0 %v7226, 40
      %v7394 = vpop.permute.xlu0 %7393
      %7395 = vrot.lane.b32.xlu0 %v7227, 40
      %v7396 = vpop.permute.xlu0 %7395
      %7397 = vrot.lane.b32.xlu0 %v7228, 40
      %v7398 = vpop.permute.xlu0 %7397
      %7399 = vrot.lane.b32.xlu0 %v7229, 40
      %v7400 = vpop.permute.xlu0 %7399
      %7401 = vrot.lane.b32.xlu0 %v7230, 40
      %v7402 = vpop.permute.xlu0 %7401
      %7403 = vrot.lane.b32.xlu0 %v7231, 40
      %v7404 = vpop.permute.xlu0 %7403
      %7405 = vrot.lane.b32.xlu0 %v7232, 40
      %v7406 = vpop.permute.xlu0 %7405
      %7407 = vrot.lane.b32.xlu0 %v7233, 40
      %v7408 = vpop.permute.xlu0 %7407
      %7409 = vrot.lane.b32.xlu0 %v7234, 40
      %v7410 = vpop.permute.xlu0 %7409
      %7411 = vrot.lane.b32.xlu0 %v7235, 40
      %v7412 = vpop.permute.xlu0 %7411
      %7413 = vrot.lane.b32.xlu0 %v7236, 40
      %v7414 = vpop.permute.xlu0 %7413
      %7415 = vrot.lane.b32.xlu0 %v7237, 40
      %v7416 = vpop.permute.xlu0 %7415
      %7417 = vrot.lane.b32.xlu0 %v7238, 40
      %v7418 = vpop.permute.xlu0 %7417
      %7419 = vrot.lane.b32.xlu0 %v7239, 40
      %v7420 = vpop.permute.xlu0 %7419
      %7421 = vrot.lane.b32.xlu0 %v7240, 40
      %v7422 = vpop.permute.xlu0 %7421
      %7423 = vrot.lane.b32.xlu0 %v7241, 40
      %v7424 = vpop.permute.xlu0 %7423
      %7425 = vrot.lane.b32.xlu0 %v7242, 40
      %v7426 = vpop.permute.xlu0 %7425
      %7427 = vrot.lane.b32.xlu0 %v7243, 40
      %v7428 = vpop.permute.xlu0 %7427
      %7429 = vrot.lane.b32.xlu0 %v7244, 40
      %v7430 = vpop.permute.xlu0 %7429
      %7431 = vrot.lane.b32.xlu0 %v7245, 40
      %v7432 = vpop.permute.xlu0 %7431
      %7433 = vrot.lane.b32.xlu0 %v7246, 40
      %v7434 = vpop.permute.xlu0 %7433
      %7435 = vrot.lane.b32.xlu0 %v7247, 40
      %v7436 = vpop.permute.xlu0 %7435
      %7437 = vrot.lane.b32.xlu0 %v7248, 40
      %v7438 = vpop.permute.xlu0 %7437
      %7439 = vrot.lane.b32.xlu0 %v7249, 40
      %v7440 = vpop.permute.xlu0 %7439
      %7441 = vrot.lane.b32.xlu0 %v7250, 40
      %v7442 = vpop.permute.xlu0 %7441
      %vm7507 = vcmask 392512
      %7508 = vst.msk [vmem:[#allocation5] sm:$0xff] %vm7507, %v7316
      %7509 = vst.msk [vmem:[#allocation5 + $0x8] sm:$0xff] %vm7507, %v7318
      %7510 = vst.msk [vmem:[#allocation5 + $0x10] sm:$0xff] %vm7507, %v7320
      %7511 = vst.msk [vmem:[#allocation5 + $0x18] sm:$0xff] %vm7507, %v7322
      %7512 = vst.msk [vmem:[#allocation5 + $0x20] sm:$0xff] %vm7507, %v7324
      %7513 = vst.msk [vmem:[#allocation5 + $0x28] sm:$0xff] %vm7507, %v7326
      %7514 = vst.msk [vmem:[#allocation5 + $0x30] sm:$0xff] %vm7507, %v7328
      %7515 = vst.msk [vmem:[#allocation5 + $0x38] sm:$0xff] %vm7507, %v7330
      %7516 = vst.msk [vmem:[#allocation5 + $0x40] sm:$0xff] %vm7507, %v7332
      %7517 = vst.msk [vmem:[#allocation5 + $0x48] sm:$0xff] %vm7507, %v7334
      %7518 = vst.msk [vmem:[#allocation5 + $0x50] sm:$0xff] %vm7507, %v7336
      %7519 = vst.msk [vmem:[#allocation5 + $0x58] sm:$0xff] %vm7507, %v7338
      %7520 = vst.msk [vmem:[#allocation5 + $0x60] sm:$0xff] %vm7507, %v7340
      %7521 = vst.msk [vmem:[#allocation5 + $0x68] sm:$0xff] %vm7507, %v7342
      %7522 = vst.msk [vmem:[#allocation5 + $0x70] sm:$0xff] %vm7507, %v7344
      %7523 = vst.msk [vmem:[#allocation5 + $0x78] sm:$0xff] %vm7507, %v7346
      %7524 = vst.msk [vmem:[#allocation5 + $0x80] sm:$0xff] %vm7507, %v7348
      %7525 = vst.msk [vmem:[#allocation5 + $0x88] sm:$0xff] %vm7507, %v7350
      %7526 = vst.msk [vmem:[#allocation5 + $0x90] sm:$0xff] %vm7507, %v7352
      %7527 = vst.msk [vmem:[#allocation5 + $0x98] sm:$0xff] %vm7507, %v7354
      %7528 = vst.msk [vmem:[#allocation5 + $0xa0] sm:$0xff] %vm7507, %v7356
      %7529 = vst.msk [vmem:[#allocation5 + $0xa8] sm:$0xff] %vm7507, %v7358
      %7530 = vst.msk [vmem:[#allocation5 + $0xb0] sm:$0xff] %vm7507, %v7360
      %7531 = vst.msk [vmem:[#allocation5 + $0xb8] sm:$0xff] %vm7507, %v7362
      %7532 = vst.msk [vmem:[#allocation5 + $0xc0] sm:$0xff] %vm7507, %v7364
      %7533 = vst.msk [vmem:[#allocation5 + $0xc8] sm:$0xff] %vm7507, %v7366
      %7534 = vst.msk [vmem:[#allocation5 + $0xd0] sm:$0xff] %vm7507, %v7368
      %7535 = vst.msk [vmem:[#allocation5 + $0xd8] sm:$0xff] %vm7507, %v7370
      %7536 = vst.msk [vmem:[#allocation5 + $0xe0] sm:$0xff] %vm7507, %v7372
      %7537 = vst.msk [vmem:[#allocation5 + $0xe8] sm:$0xff] %vm7507, %v7374
      %7538 = vst.msk [vmem:[#allocation5 + $0xf0] sm:$0xff] %vm7507, %v7376
      %7539 = vst.msk [vmem:[#allocation5 + $0xf8] sm:$0xff] %vm7507, %v7378
      %7540 = vst.msk [vmem:[#allocation5 + $0x100] sm:$0xff] %vm7507, %v7380
      %7541 = vst.msk [vmem:[#allocation5 + $0x108] sm:$0xff] %vm7507, %v7382
      %7542 = vst.msk [vmem:[#allocation5 + $0x110] sm:$0xff] %vm7507, %v7384
      %7543 = vst.msk [vmem:[#allocation5 + $0x118] sm:$0xff] %vm7507, %v7386
      %7544 = vst.msk [vmem:[#allocation5 + $0x120] sm:$0xff] %vm7507, %v7388
      %7545 = vst.msk [vmem:[#allocation5 + $0x128] sm:$0xff] %vm7507, %v7390
      %7546 = vst.msk [vmem:[#allocation5 + $0x130] sm:$0xff] %vm7507, %v7392
      %7547 = vst.msk [vmem:[#allocation5 + $0x138] sm:$0xff] %vm7507, %v7394
      %7548 = vst.msk [vmem:[#allocation5 + $0x140] sm:$0xff] %vm7507, %v7396
      %7549 = vst.msk [vmem:[#allocation5 + $0x148] sm:$0xff] %vm7507, %v7398
      %7550 = vst.msk [vmem:[#allocation5 + $0x150] sm:$0xff] %vm7507, %v7400
      %7551 = vst.msk [vmem:[#allocation5 + $0x158] sm:$0xff] %vm7507, %v7402
      %7552 = vst.msk [vmem:[#allocation5 + $0x160] sm:$0xff] %vm7507, %v7404
      %7553 = vst.msk [vmem:[#allocation5 + $0x168] sm:$0xff] %vm7507, %v7406
      %7554 = vst.msk [vmem:[#allocation5 + $0x170] sm:$0xff] %vm7507, %v7408
      %7555 = vst.msk [vmem:[#allocation5 + $0x178] sm:$0xff] %vm7507, %v7410
      %7556 = vst.msk [vmem:[#allocation5 + $0x180] sm:$0xff] %vm7507, %v7412
      %7557 = vst.msk [vmem:[#allocation5 + $0x188] sm:$0xff] %vm7507, %v7414
      %7558 = vst.msk [vmem:[#allocation5 + $0x190] sm:$0xff] %vm7507, %v7416
      %7559 = vst.msk [vmem:[#allocation5 + $0x198] sm:$0xff] %vm7507, %v7418
      %7560 = vst.msk [vmem:[#allocation5 + $0x1a0] sm:$0xff] %vm7507, %v7420
      %7561 = vst.msk [vmem:[#allocation5 + $0x1a8] sm:$0xff] %vm7507, %v7422
      %7562 = vst.msk [vmem:[#allocation5 + $0x1b0] sm:$0xff] %vm7507, %v7424
      %7563 = vst.msk [vmem:[#allocation5 + $0x1b8] sm:$0xff] %vm7507, %v7426
      %7564 = vst.msk [vmem:[#allocation5 + $0x1c0] sm:$0xff] %vm7507, %v7428
      %7565 = vst.msk [vmem:[#allocation5 + $0x1c8] sm:$0xff] %vm7507, %v7430
      %7566 = vst.msk [vmem:[#allocation5 + $0x1d0] sm:$0xff] %vm7507, %v7432
      %7567 = vst.msk [vmem:[#allocation5 + $0x1d8] sm:$0xff] %vm7507, %v7434
      %7568 = vst.msk [vmem:[#allocation5 + $0x1e0] sm:$0xff] %vm7507, %v7436
      %7569 = vst.msk [vmem:[#allocation5 + $0x1e8] sm:$0xff] %vm7507, %v7438
      %7570 = vst.msk [vmem:[#allocation5 + $0x1f0] sm:$0xff] %vm7507, %v7440
      %7571 = vst.msk [vmem:[#allocation5 + $0x1f8] sm:$0xff] %vm7507, %v7442
      %s7572 = scalar_lea.vmem [#allocation4], 160
      %v7573 = vld [vmem:[%s7572] sm:$0xff]
      %v7574 = vld [vmem:[%s7572 + $0x8] sm:$0xff]
      %v7575 = vld [vmem:[%s7572 + $0x10] sm:$0xff]
      %v7576 = vld [vmem:[%s7572 + $0x18] sm:$0xff]
      %v7577 = vld [vmem:[%s7572 + $0x20] sm:$0xff]
      %v7578 = vld [vmem:[%s7572 + $0x28] sm:$0xff]
      %v7579 = vld [vmem:[%s7572 + $0x30] sm:$0xff]
      %v7580 = vld [vmem:[%s7572 + $0x38] sm:$0xff]
      %v7581 = vld [vmem:[%s7572 + $0x50] sm:$0xff]
      %v7582 = vld [vmem:[%s7572 + $0x58] sm:$0xff]
      %v7583 = vld [vmem:[%s7572 + $0x60] sm:$0xff]
      %v7584 = vld [vmem:[%s7572 + $0x68] sm:$0xff]
      %v7585 = vld [vmem:[%s7572 + $0x70] sm:$0xff]
      %v7586 = vld [vmem:[%s7572 + $0x78] sm:$0xff]
      %v7587 = vld [vmem:[%s7572 + $0x80] sm:$0xff]
      %v7588 = vld [vmem:[%s7572 + $0x88] sm:$0xff]
      %v7589 = vld [vmem:[%s7572 + $0xa0] sm:$0xff]
      %v7590 = vld [vmem:[%s7572 + $0xa8] sm:$0xff]
      %v7591 = vld [vmem:[%s7572 + $0xb0] sm:$0xff]
      %v7592 = vld [vmem:[%s7572 + $0xb8] sm:$0xff]
      %v7593 = vld [vmem:[%s7572 + $0xc0] sm:$0xff]
      %v7594 = vld [vmem:[%s7572 + $0xc8] sm:$0xff]
      %v7595 = vld [vmem:[%s7572 + $0xd0] sm:$0xff]
      %v7596 = vld [vmem:[%s7572 + $0xd8] sm:$0xff]
      %v7597 = vld [vmem:[%s7572 + $0xf0] sm:$0xff]
      %v7598 = vld [vmem:[%s7572 + $0xf8] sm:$0xff]
      %v7599 = vld [vmem:[%s7572 + $0x100] sm:$0xff]
      %v7600 = vld [vmem:[%s7572 + $0x108] sm:$0xff]
      %v7601 = vld [vmem:[%s7572 + $0x110] sm:$0xff]
      %v7602 = vld [vmem:[%s7572 + $0x118] sm:$0xff]
      %v7603 = vld [vmem:[%s7572 + $0x120] sm:$0xff]
      %v7604 = vld [vmem:[%s7572 + $0x128] sm:$0xff]
      %v7605 = vld [vmem:[%s7572 + $0x140] sm:$0xff]
      %v7606 = vld [vmem:[%s7572 + $0x148] sm:$0xff]
      %v7607 = vld [vmem:[%s7572 + $0x150] sm:$0xff]
      %v7608 = vld [vmem:[%s7572 + $0x158] sm:$0xff]
      %v7609 = vld [vmem:[%s7572 + $0x160] sm:$0xff]
      %v7610 = vld [vmem:[%s7572 + $0x168] sm:$0xff]
      %v7611 = vld [vmem:[%s7572 + $0x170] sm:$0xff]
      %v7612 = vld [vmem:[%s7572 + $0x178] sm:$0xff]
      %v7613 = vld [vmem:[%s7572 + $0x190] sm:$0xff]
      %v7614 = vld [vmem:[%s7572 + $0x198] sm:$0xff]
      %v7615 = vld [vmem:[%s7572 + $0x1a0] sm:$0xff]
      %v7616 = vld [vmem:[%s7572 + $0x1a8] sm:$0xff]
      %v7617 = vld [vmem:[%s7572 + $0x1b0] sm:$0xff]
      %v7618 = vld [vmem:[%s7572 + $0x1b8] sm:$0xff]
      %v7619 = vld [vmem:[%s7572 + $0x1c0] sm:$0xff]
      %v7620 = vld [vmem:[%s7572 + $0x1c8] sm:$0xff]
      %v7621 = vld [vmem:[%s7572 + $0x1e0] sm:$0xff]
      %v7622 = vld [vmem:[%s7572 + $0x1e8] sm:$0xff]
      %v7623 = vld [vmem:[%s7572 + $0x1f0] sm:$0xff]
      %v7624 = vld [vmem:[%s7572 + $0x1f8] sm:$0xff]
      %v7625 = vld [vmem:[%s7572 + $0x200] sm:$0xff]
      %v7626 = vld [vmem:[%s7572 + $0x208] sm:$0xff]
      %v7627 = vld [vmem:[%s7572 + $0x210] sm:$0xff]
      %v7628 = vld [vmem:[%s7572 + $0x218] sm:$0xff]
      %v7629 = vld [vmem:[%s7572 + $0x230] sm:$0xff]
      %v7630 = vld [vmem:[%s7572 + $0x238] sm:$0xff]
      %v7631 = vld [vmem:[%s7572 + $0x240] sm:$0xff]
      %v7632 = vld [vmem:[%s7572 + $0x248] sm:$0xff]
      %v7633 = vld [vmem:[%s7572 + $0x250] sm:$0xff]
      %v7634 = vld [vmem:[%s7572 + $0x258] sm:$0xff]
      %v7635 = vld [vmem:[%s7572 + $0x260] sm:$0xff]
      %v7636 = vld [vmem:[%s7572 + $0x268] sm:$0xff]
      %7701 = vrot.lane.b32.xlu0 %v7573, 48
      %v7702 = vpop.permute.xlu0 %7701
      %7703 = vrot.lane.b32.xlu0 %v7574, 48
      %v7704 = vpop.permute.xlu0 %7703
      %7705 = vrot.lane.b32.xlu0 %v7575, 48
      %v7706 = vpop.permute.xlu0 %7705
      %7707 = vrot.lane.b32.xlu0 %v7576, 48
      %v7708 = vpop.permute.xlu0 %7707
      %7709 = vrot.lane.b32.xlu0 %v7577, 48
      %v7710 = vpop.permute.xlu0 %7709
      %7711 = vrot.lane.b32.xlu0 %v7578, 48
      %v7712 = vpop.permute.xlu0 %7711
      %7713 = vrot.lane.b32.xlu0 %v7579, 48
      %v7714 = vpop.permute.xlu0 %7713
      %7715 = vrot.lane.b32.xlu0 %v7580, 48
      %v7716 = vpop.permute.xlu0 %7715
      %7717 = vrot.lane.b32.xlu0 %v7581, 48
      %v7718 = vpop.permute.xlu0 %7717
      %7719 = vrot.lane.b32.xlu0 %v7582, 48
      %v7720 = vpop.permute.xlu0 %7719
      %7721 = vrot.lane.b32.xlu0 %v7583, 48
      %v7722 = vpop.permute.xlu0 %7721
      %7723 = vrot.lane.b32.xlu0 %v7584, 48
      %v7724 = vpop.permute.xlu0 %7723
      %7725 = vrot.lane.b32.xlu0 %v7585, 48
      %v7726 = vpop.permute.xlu0 %7725
      %7727 = vrot.lane.b32.xlu0 %v7586, 48
      %v7728 = vpop.permute.xlu0 %7727
      %7729 = vrot.lane.b32.xlu0 %v7587, 48
      %v7730 = vpop.permute.xlu0 %7729
      %7731 = vrot.lane.b32.xlu0 %v7588, 48
      %v7732 = vpop.permute.xlu0 %7731
      %7733 = vrot.lane.b32.xlu0 %v7589, 48
      %v7734 = vpop.permute.xlu0 %7733
      %7735 = vrot.lane.b32.xlu0 %v7590, 48
      %v7736 = vpop.permute.xlu0 %7735
      %7737 = vrot.lane.b32.xlu0 %v7591, 48
      %v7738 = vpop.permute.xlu0 %7737
      %7739 = vrot.lane.b32.xlu0 %v7592, 48
      %v7740 = vpop.permute.xlu0 %7739
      %7741 = vrot.lane.b32.xlu0 %v7593, 48
      %v7742 = vpop.permute.xlu0 %7741
      %7743 = vrot.lane.b32.xlu0 %v7594, 48
      %v7744 = vpop.permute.xlu0 %7743
      %7745 = vrot.lane.b32.xlu0 %v7595, 48
      %v7746 = vpop.permute.xlu0 %7745
      %7747 = vrot.lane.b32.xlu0 %v7596, 48
      %v7748 = vpop.permute.xlu0 %7747
      %7749 = vrot.lane.b32.xlu0 %v7597, 48
      %v7750 = vpop.permute.xlu0 %7749
      %7751 = vrot.lane.b32.xlu0 %v7598, 48
      %v7752 = vpop.permute.xlu0 %7751
      %7753 = vrot.lane.b32.xlu0 %v7599, 48
      %v7754 = vpop.permute.xlu0 %7753
      %7755 = vrot.lane.b32.xlu0 %v7600, 48
      %v7756 = vpop.permute.xlu0 %7755
      %7757 = vrot.lane.b32.xlu0 %v7601, 48
      %v7758 = vpop.permute.xlu0 %7757
      %7759 = vrot.lane.b32.xlu0 %v7602, 48
      %v7760 = vpop.permute.xlu0 %7759
      %7761 = vrot.lane.b32.xlu0 %v7603, 48
      %v7762 = vpop.permute.xlu0 %7761
      %7763 = vrot.lane.b32.xlu0 %v7604, 48
      %v7764 = vpop.permute.xlu0 %7763
      %7765 = vrot.lane.b32.xlu0 %v7605, 48
      %v7766 = vpop.permute.xlu0 %7765
      %7767 = vrot.lane.b32.xlu0 %v7606, 48
      %v7768 = vpop.permute.xlu0 %7767
      %7769 = vrot.lane.b32.xlu0 %v7607, 48
      %v7770 = vpop.permute.xlu0 %7769
      %7771 = vrot.lane.b32.xlu0 %v7608, 48
      %v7772 = vpop.permute.xlu0 %7771
      %7773 = vrot.lane.b32.xlu0 %v7609, 48
      %v7774 = vpop.permute.xlu0 %7773
      %7775 = vrot.lane.b32.xlu0 %v7610, 48
      %v7776 = vpop.permute.xlu0 %7775
      %7777 = vrot.lane.b32.xlu0 %v7611, 48
      %v7778 = vpop.permute.xlu0 %7777
      %7779 = vrot.lane.b32.xlu0 %v7612, 48
      %v7780 = vpop.permute.xlu0 %7779
      %7781 = vrot.lane.b32.xlu0 %v7613, 48
      %v7782 = vpop.permute.xlu0 %7781
      %7783 = vrot.lane.b32.xlu0 %v7614, 48
      %v7784 = vpop.permute.xlu0 %7783
      %7785 = vrot.lane.b32.xlu0 %v7615, 48
      %v7786 = vpop.permute.xlu0 %7785
      %7787 = vrot.lane.b32.xlu0 %v7616, 48
      %v7788 = vpop.permute.xlu0 %7787
      %7789 = vrot.lane.b32.xlu0 %v7617, 48
      %v7790 = vpop.permute.xlu0 %7789
      %7791 = vrot.lane.b32.xlu0 %v7618, 48
      %v7792 = vpop.permute.xlu0 %7791
      %7793 = vrot.lane.b32.xlu0 %v7619, 48
      %v7794 = vpop.permute.xlu0 %7793
      %7795 = vrot.lane.b32.xlu0 %v7620, 48
      %v7796 = vpop.permute.xlu0 %7795
      %7797 = vrot.lane.b32.xlu0 %v7621, 48
      %v7798 = vpop.permute.xlu0 %7797
      %7799 = vrot.lane.b32.xlu0 %v7622, 48
      %v7800 = vpop.permute.xlu0 %7799
      %7801 = vrot.lane.b32.xlu0 %v7623, 48
      %v7802 = vpop.permute.xlu0 %7801
      %7803 = vrot.lane.b32.xlu0 %v7624, 48
      %v7804 = vpop.permute.xlu0 %7803
      %7805 = vrot.lane.b32.xlu0 %v7625, 48
      %v7806 = vpop.permute.xlu0 %7805
      %7807 = vrot.lane.b32.xlu0 %v7626, 48
      %v7808 = vpop.permute.xlu0 %7807
      %7809 = vrot.lane.b32.xlu0 %v7627, 48
      %v7810 = vpop.permute.xlu0 %7809
      %7811 = vrot.lane.b32.xlu0 %v7628, 48
      %v7812 = vpop.permute.xlu0 %7811
      %7813 = vrot.lane.b32.xlu0 %v7629, 48
      %v7814 = vpop.permute.xlu0 %7813
      %7815 = vrot.lane.b32.xlu0 %v7630, 48
      %v7816 = vpop.permute.xlu0 %7815
      %7817 = vrot.lane.b32.xlu0 %v7631, 48
      %v7818 = vpop.permute.xlu0 %7817
      %7819 = vrot.lane.b32.xlu0 %v7632, 48
      %v7820 = vpop.permute.xlu0 %7819
      %7821 = vrot.lane.b32.xlu0 %v7633, 48
      %v7822 = vpop.permute.xlu0 %7821
      %7823 = vrot.lane.b32.xlu0 %v7634, 48
      %v7824 = vpop.permute.xlu0 %7823
      %7825 = vrot.lane.b32.xlu0 %v7635, 48
      %v7826 = vpop.permute.xlu0 %7825
      %7827 = vrot.lane.b32.xlu0 %v7636, 48
      %v7828 = vpop.permute.xlu0 %7827
      %vm7893 = vcmask 458112
      %7894 = vst.msk [vmem:[#allocation5] sm:$0xff] %vm7893, %v7702
      %7895 = vst.msk [vmem:[#allocation5 + $0x8] sm:$0xff] %vm7893, %v7704
      %7896 = vst.msk [vmem:[#allocation5 + $0x10] sm:$0xff] %vm7893, %v7706
      %7897 = vst.msk [vmem:[#allocation5 + $0x18] sm:$0xff] %vm7893, %v7708
      %7898 = vst.msk [vmem:[#allocation5 + $0x20] sm:$0xff] %vm7893, %v7710
      %7899 = vst.msk [vmem:[#allocation5 + $0x28] sm:$0xff] %vm7893, %v7712
      %7900 = vst.msk [vmem:[#allocation5 + $0x30] sm:$0xff] %vm7893, %v7714
      %7901 = vst.msk [vmem:[#allocation5 + $0x38] sm:$0xff] %vm7893, %v7716
      %7902 = vst.msk [vmem:[#allocation5 + $0x40] sm:$0xff] %vm7893, %v7718
      %7903 = vst.msk [vmem:[#allocation5 + $0x48] sm:$0xff] %vm7893, %v7720
      %7904 = vst.msk [vmem:[#allocation5 + $0x50] sm:$0xff] %vm7893, %v7722
      %7905 = vst.msk [vmem:[#allocation5 + $0x58] sm:$0xff] %vm7893, %v7724
      %7906 = vst.msk [vmem:[#allocation5 + $0x60] sm:$0xff] %vm7893, %v7726
      %7907 = vst.msk [vmem:[#allocation5 + $0x68] sm:$0xff] %vm7893, %v7728
      %7908 = vst.msk [vmem:[#allocation5 + $0x70] sm:$0xff] %vm7893, %v7730
      %7909 = vst.msk [vmem:[#allocation5 + $0x78] sm:$0xff] %vm7893, %v7732
      %7910 = vst.msk [vmem:[#allocation5 + $0x80] sm:$0xff] %vm7893, %v7734
      %7911 = vst.msk [vmem:[#allocation5 + $0x88] sm:$0xff] %vm7893, %v7736
      %7912 = vst.msk [vmem:[#allocation5 + $0x90] sm:$0xff] %vm7893, %v7738
      %7913 = vst.msk [vmem:[#allocation5 + $0x98] sm:$0xff] %vm7893, %v7740
      %7914 = vst.msk [vmem:[#allocation5 + $0xa0] sm:$0xff] %vm7893, %v7742
      %7915 = vst.msk [vmem:[#allocation5 + $0xa8] sm:$0xff] %vm7893, %v7744
      %7916 = vst.msk [vmem:[#allocation5 + $0xb0] sm:$0xff] %vm7893, %v7746
      %7917 = vst.msk [vmem:[#allocation5 + $0xb8] sm:$0xff] %vm7893, %v7748
      %7918 = vst.msk [vmem:[#allocation5 + $0xc0] sm:$0xff] %vm7893, %v7750
      %7919 = vst.msk [vmem:[#allocation5 + $0xc8] sm:$0xff] %vm7893, %v7752
      %7920 = vst.msk [vmem:[#allocation5 + $0xd0] sm:$0xff] %vm7893, %v7754
      %7921 = vst.msk [vmem:[#allocation5 + $0xd8] sm:$0xff] %vm7893, %v7756
      %7922 = vst.msk [vmem:[#allocation5 + $0xe0] sm:$0xff] %vm7893, %v7758
      %7923 = vst.msk [vmem:[#allocation5 + $0xe8] sm:$0xff] %vm7893, %v7760
      %7924 = vst.msk [vmem:[#allocation5 + $0xf0] sm:$0xff] %vm7893, %v7762
      %7925 = vst.msk [vmem:[#allocation5 + $0xf8] sm:$0xff] %vm7893, %v7764
      %7926 = vst.msk [vmem:[#allocation5 + $0x100] sm:$0xff] %vm7893, %v7766
      %7927 = vst.msk [vmem:[#allocation5 + $0x108] sm:$0xff] %vm7893, %v7768
      %7928 = vst.msk [vmem:[#allocation5 + $0x110] sm:$0xff] %vm7893, %v7770
      %7929 = vst.msk [vmem:[#allocation5 + $0x118] sm:$0xff] %vm7893, %v7772
      %7930 = vst.msk [vmem:[#allocation5 + $0x120] sm:$0xff] %vm7893, %v7774
      %7931 = vst.msk [vmem:[#allocation5 + $0x128] sm:$0xff] %vm7893, %v7776
      %7932 = vst.msk [vmem:[#allocation5 + $0x130] sm:$0xff] %vm7893, %v7778
      %7933 = vst.msk [vmem:[#allocation5 + $0x138] sm:$0xff] %vm7893, %v7780
      %7934 = vst.msk [vmem:[#allocation5 + $0x140] sm:$0xff] %vm7893, %v7782
      %7935 = vst.msk [vmem:[#allocation5 + $0x148] sm:$0xff] %vm7893, %v7784
      %7936 = vst.msk [vmem:[#allocation5 + $0x150] sm:$0xff] %vm7893, %v7786
      %7937 = vst.msk [vmem:[#allocation5 + $0x158] sm:$0xff] %vm7893, %v7788
      %7938 = vst.msk [vmem:[#allocation5 + $0x160] sm:$0xff] %vm7893, %v7790
      %7939 = vst.msk [vmem:[#allocation5 + $0x168] sm:$0xff] %vm7893, %v7792
      %7940 = vst.msk [vmem:[#allocation5 + $0x170] sm:$0xff] %vm7893, %v7794
      %7941 = vst.msk [vmem:[#allocation5 + $0x178] sm:$0xff] %vm7893, %v7796
      %7942 = vst.msk [vmem:[#allocation5 + $0x180] sm:$0xff] %vm7893, %v7798
      %7943 = vst.msk [vmem:[#allocation5 + $0x188] sm:$0xff] %vm7893, %v7800
      %7944 = vst.msk [vmem:[#allocation5 + $0x190] sm:$0xff] %vm7893, %v7802
      %7945 = vst.msk [vmem:[#allocation5 + $0x198] sm:$0xff] %vm7893, %v7804
      %7946 = vst.msk [vmem:[#allocation5 + $0x1a0] sm:$0xff] %vm7893, %v7806
      %7947 = vst.msk [vmem:[#allocation5 + $0x1a8] sm:$0xff] %vm7893, %v7808
      %7948 = vst.msk [vmem:[#allocation5 + $0x1b0] sm:$0xff] %vm7893, %v7810
      %7949 = vst.msk [vmem:[#allocation5 + $0x1b8] sm:$0xff] %vm7893, %v7812
      %7950 = vst.msk [vmem:[#allocation5 + $0x1c0] sm:$0xff] %vm7893, %v7814
      %7951 = vst.msk [vmem:[#allocation5 + $0x1c8] sm:$0xff] %vm7893, %v7816
      %7952 = vst.msk [vmem:[#allocation5 + $0x1d0] sm:$0xff] %vm7893, %v7818
      %7953 = vst.msk [vmem:[#allocation5 + $0x1d8] sm:$0xff] %vm7893, %v7820
      %7954 = vst.msk [vmem:[#allocation5 + $0x1e0] sm:$0xff] %vm7893, %v7822
      %7955 = vst.msk [vmem:[#allocation5 + $0x1e8] sm:$0xff] %vm7893, %v7824
      %7956 = vst.msk [vmem:[#allocation5 + $0x1f0] sm:$0xff] %vm7893, %v7826
      %7957 = vst.msk [vmem:[#allocation5 + $0x1f8] sm:$0xff] %vm7893, %v7828
      %s7958 = scalar_lea.vmem [#allocation4], 168
      %v7959 = vld [vmem:[%s7958] sm:$0xff]
      %v7960 = vld [vmem:[%s7958 + $0x8] sm:$0xff]
      %v7961 = vld [vmem:[%s7958 + $0x10] sm:$0xff]
      %v7962 = vld [vmem:[%s7958 + $0x18] sm:$0xff]
      %v7963 = vld [vmem:[%s7958 + $0x20] sm:$0xff]
      %v7964 = vld [vmem:[%s7958 + $0x28] sm:$0xff]
      %v7965 = vld [vmem:[%s7958 + $0x30] sm:$0xff]
      %v7966 = vld [vmem:[%s7958 + $0x38] sm:$0xff]
      %v7967 = vld [vmem:[%s7958 + $0x50] sm:$0xff]
      %v7968 = vld [vmem:[%s7958 + $0x58] sm:$0xff]
      %v7969 = vld [vmem:[%s7958 + $0x60] sm:$0xff]
      %v7970 = vld [vmem:[%s7958 + $0x68] sm:$0xff]
      %v7971 = vld [vmem:[%s7958 + $0x70] sm:$0xff]
      %v7972 = vld [vmem:[%s7958 + $0x78] sm:$0xff]
      %v7973 = vld [vmem:[%s7958 + $0x80] sm:$0xff]
      %v7974 = vld [vmem:[%s7958 + $0x88] sm:$0xff]
      %v7975 = vld [vmem:[%s7958 + $0xa0] sm:$0xff]
      %v7976 = vld [vmem:[%s7958 + $0xa8] sm:$0xff]
      %v7977 = vld [vmem:[%s7958 + $0xb0] sm:$0xff]
      %v7978 = vld [vmem:[%s7958 + $0xb8] sm:$0xff]
      %v7979 = vld [vmem:[%s7958 + $0xc0] sm:$0xff]
      %v7980 = vld [vmem:[%s7958 + $0xc8] sm:$0xff]
      %v7981 = vld [vmem:[%s7958 + $0xd0] sm:$0xff]
      %v7982 = vld [vmem:[%s7958 + $0xd8] sm:$0xff]
      %v7983 = vld [vmem:[%s7958 + $0xf0] sm:$0xff]
      %v7984 = vld [vmem:[%s7958 + $0xf8] sm:$0xff]
      %v7985 = vld [vmem:[%s7958 + $0x100] sm:$0xff]
      %v7986 = vld [vmem:[%s7958 + $0x108] sm:$0xff]
      %v7987 = vld [vmem:[%s7958 + $0x110] sm:$0xff]
      %v7988 = vld [vmem:[%s7958 + $0x118] sm:$0xff]
      %v7989 = vld [vmem:[%s7958 + $0x120] sm:$0xff]
      %v7990 = vld [vmem:[%s7958 + $0x128] sm:$0xff]
      %v7991 = vld [vmem:[%s7958 + $0x140] sm:$0xff]
      %v7992 = vld [vmem:[%s7958 + $0x148] sm:$0xff]
      %v7993 = vld [vmem:[%s7958 + $0x150] sm:$0xff]
      %v7994 = vld [vmem:[%s7958 + $0x158] sm:$0xff]
      %v7995 = vld [vmem:[%s7958 + $0x160] sm:$0xff]
      %v7996 = vld [vmem:[%s7958 + $0x168] sm:$0xff]
      %v7997 = vld [vmem:[%s7958 + $0x170] sm:$0xff]
      %v7998 = vld [vmem:[%s7958 + $0x178] sm:$0xff]
      %v7999 = vld [vmem:[%s7958 + $0x190] sm:$0xff]
      %v8000 = vld [vmem:[%s7958 + $0x198] sm:$0xff]
      %v8001 = vld [vmem:[%s7958 + $0x1a0] sm:$0xff]
      %v8002 = vld [vmem:[%s7958 + $0x1a8] sm:$0xff]
      %v8003 = vld [vmem:[%s7958 + $0x1b0] sm:$0xff]
      %v8004 = vld [vmem:[%s7958 + $0x1b8] sm:$0xff]
      %v8005 = vld [vmem:[%s7958 + $0x1c0] sm:$0xff]
      %v8006 = vld [vmem:[%s7958 + $0x1c8] sm:$0xff]
      %v8007 = vld [vmem:[%s7958 + $0x1e0] sm:$0xff]
      %v8008 = vld [vmem:[%s7958 + $0x1e8] sm:$0xff]
      %v8009 = vld [vmem:[%s7958 + $0x1f0] sm:$0xff]
      %v8010 = vld [vmem:[%s7958 + $0x1f8] sm:$0xff]
      %v8011 = vld [vmem:[%s7958 + $0x200] sm:$0xff]
      %v8012 = vld [vmem:[%s7958 + $0x208] sm:$0xff]
      %v8013 = vld [vmem:[%s7958 + $0x210] sm:$0xff]
      %v8014 = vld [vmem:[%s7958 + $0x218] sm:$0xff]
      %v8015 = vld [vmem:[%s7958 + $0x230] sm:$0xff]
      %v8016 = vld [vmem:[%s7958 + $0x238] sm:$0xff]
      %v8017 = vld [vmem:[%s7958 + $0x240] sm:$0xff]
      %v8018 = vld [vmem:[%s7958 + $0x248] sm:$0xff]
      %v8019 = vld [vmem:[%s7958 + $0x250] sm:$0xff]
      %v8020 = vld [vmem:[%s7958 + $0x258] sm:$0xff]
      %v8021 = vld [vmem:[%s7958 + $0x260] sm:$0xff]
      %v8022 = vld [vmem:[%s7958 + $0x268] sm:$0xff]
      %8087 = vrot.lane.b32.xlu0 %v7959, 56
      %v8088 = vpop.permute.xlu0 %8087
      %8089 = vrot.lane.b32.xlu0 %v7960, 56
      %v8090 = vpop.permute.xlu0 %8089
      %8091 = vrot.lane.b32.xlu0 %v7961, 56
      %v8092 = vpop.permute.xlu0 %8091
      %8093 = vrot.lane.b32.xlu0 %v7962, 56
      %v8094 = vpop.permute.xlu0 %8093
      %8095 = vrot.lane.b32.xlu0 %v7963, 56
      %v8096 = vpop.permute.xlu0 %8095
      %8097 = vrot.lane.b32.xlu0 %v7964, 56
      %v8098 = vpop.permute.xlu0 %8097
      %8099 = vrot.lane.b32.xlu0 %v7965, 56
      %v8100 = vpop.permute.xlu0 %8099
      %8101 = vrot.lane.b32.xlu0 %v7966, 56
      %v8102 = vpop.permute.xlu0 %8101
      %8103 = vrot.lane.b32.xlu0 %v7967, 56
      %v8104 = vpop.permute.xlu0 %8103
      %8105 = vrot.lane.b32.xlu0 %v7968, 56
      %v8106 = vpop.permute.xlu0 %8105
      %8107 = vrot.lane.b32.xlu0 %v7969, 56
      %v8108 = vpop.permute.xlu0 %8107
      %8109 = vrot.lane.b32.xlu0 %v7970, 56
      %v8110 = vpop.permute.xlu0 %8109
      %8111 = vrot.lane.b32.xlu0 %v7971, 56
      %v8112 = vpop.permute.xlu0 %8111
      %8113 = vrot.lane.b32.xlu0 %v7972, 56
      %v8114 = vpop.permute.xlu0 %8113
      %8115 = vrot.lane.b32.xlu0 %v7973, 56
      %v8116 = vpop.permute.xlu0 %8115
      %8117 = vrot.lane.b32.xlu0 %v7974, 56
      %v8118 = vpop.permute.xlu0 %8117
      %8119 = vrot.lane.b32.xlu0 %v7975, 56
      %v8120 = vpop.permute.xlu0 %8119
      %8121 = vrot.lane.b32.xlu0 %v7976, 56
      %v8122 = vpop.permute.xlu0 %8121
      %8123 = vrot.lane.b32.xlu0 %v7977, 56
      %v8124 = vpop.permute.xlu0 %8123
      %8125 = vrot.lane.b32.xlu0 %v7978, 56
      %v8126 = vpop.permute.xlu0 %8125
      %8127 = vrot.lane.b32.xlu0 %v7979, 56
      %v8128 = vpop.permute.xlu0 %8127
      %8129 = vrot.lane.b32.xlu0 %v7980, 56
      %v8130 = vpop.permute.xlu0 %8129
      %8131 = vrot.lane.b32.xlu0 %v7981, 56
      %v8132 = vpop.permute.xlu0 %8131
      %8133 = vrot.lane.b32.xlu0 %v7982, 56
      %v8134 = vpop.permute.xlu0 %8133
      %8135 = vrot.lane.b32.xlu0 %v7983, 56
      %v8136 = vpop.permute.xlu0 %8135
      %8137 = vrot.lane.b32.xlu0 %v7984, 56
      %v8138 = vpop.permute.xlu0 %8137
      %8139 = vrot.lane.b32.xlu0 %v7985, 56
      %v8140 = vpop.permute.xlu0 %8139
      %8141 = vrot.lane.b32.xlu0 %v7986, 56
      %v8142 = vpop.permute.xlu0 %8141
      %8143 = vrot.lane.b32.xlu0 %v7987, 56
      %v8144 = vpop.permute.xlu0 %8143
      %8145 = vrot.lane.b32.xlu0 %v7988, 56
      %v8146 = vpop.permute.xlu0 %8145
      %8147 = vrot.lane.b32.xlu0 %v7989, 56
      %v8148 = vpop.permute.xlu0 %8147
      %8149 = vrot.lane.b32.xlu0 %v7990, 56
      %v8150 = vpop.permute.xlu0 %8149
      %8151 = vrot.lane.b32.xlu0 %v7991, 56
      %v8152 = vpop.permute.xlu0 %8151
      %8153 = vrot.lane.b32.xlu0 %v7992, 56
      %v8154 = vpop.permute.xlu0 %8153
      %8155 = vrot.lane.b32.xlu0 %v7993, 56
      %v8156 = vpop.permute.xlu0 %8155
      %8157 = vrot.lane.b32.xlu0 %v7994, 56
      %v8158 = vpop.permute.xlu0 %8157
      %8159 = vrot.lane.b32.xlu0 %v7995, 56
      %v8160 = vpop.permute.xlu0 %8159
      %8161 = vrot.lane.b32.xlu0 %v7996, 56
      %v8162 = vpop.permute.xlu0 %8161
      %8163 = vrot.lane.b32.xlu0 %v7997, 56
      %v8164 = vpop.permute.xlu0 %8163
      %8165 = vrot.lane.b32.xlu0 %v7998, 56
      %v8166 = vpop.permute.xlu0 %8165
      %8167 = vrot.lane.b32.xlu0 %v7999, 56
      %v8168 = vpop.permute.xlu0 %8167
      %8169 = vrot.lane.b32.xlu0 %v8000, 56
      %v8170 = vpop.permute.xlu0 %8169
      %8171 = vrot.lane.b32.xlu0 %v8001, 56
      %v8172 = vpop.permute.xlu0 %8171
      %8173 = vrot.lane.b32.xlu0 %v8002, 56
      %v8174 = vpop.permute.xlu0 %8173
      %8175 = vrot.lane.b32.xlu0 %v8003, 56
      %v8176 = vpop.permute.xlu0 %8175
      %8177 = vrot.lane.b32.xlu0 %v8004, 56
      %v8178 = vpop.permute.xlu0 %8177
      %8179 = vrot.lane.b32.xlu0 %v8005, 56
      %v8180 = vpop.permute.xlu0 %8179
      %8181 = vrot.lane.b32.xlu0 %v8006, 56
      %v8182 = vpop.permute.xlu0 %8181
      %8183 = vrot.lane.b32.xlu0 %v8007, 56
      %v8184 = vpop.permute.xlu0 %8183
      %8185 = vrot.lane.b32.xlu0 %v8008, 56
      %v8186 = vpop.permute.xlu0 %8185
      %8187 = vrot.lane.b32.xlu0 %v8009, 56
      %v8188 = vpop.permute.xlu0 %8187
      %8189 = vrot.lane.b32.xlu0 %v8010, 56
      %v8190 = vpop.permute.xlu0 %8189
      %8191 = vrot.lane.b32.xlu0 %v8011, 56
      %v8192 = vpop.permute.xlu0 %8191
      %8193 = vrot.lane.b32.xlu0 %v8012, 56
      %v8194 = vpop.permute.xlu0 %8193
      %8195 = vrot.lane.b32.xlu0 %v8013, 56
      %v8196 = vpop.permute.xlu0 %8195
      %8197 = vrot.lane.b32.xlu0 %v8014, 56
      %v8198 = vpop.permute.xlu0 %8197
      %8199 = vrot.lane.b32.xlu0 %v8015, 56
      %v8200 = vpop.permute.xlu0 %8199
      %8201 = vrot.lane.b32.xlu0 %v8016, 56
      %v8202 = vpop.permute.xlu0 %8201
      %8203 = vrot.lane.b32.xlu0 %v8017, 56
      %v8204 = vpop.permute.xlu0 %8203
      %8205 = vrot.lane.b32.xlu0 %v8018, 56
      %v8206 = vpop.permute.xlu0 %8205
      %8207 = vrot.lane.b32.xlu0 %v8019, 56
      %v8208 = vpop.permute.xlu0 %8207
      %8209 = vrot.lane.b32.xlu0 %v8020, 56
      %v8210 = vpop.permute.xlu0 %8209
      %8211 = vrot.lane.b32.xlu0 %v8021, 56
      %v8212 = vpop.permute.xlu0 %8211
      %8213 = vrot.lane.b32.xlu0 %v8022, 56
      %v8214 = vpop.permute.xlu0 %8213
      %vm8279 = vcmask 523712
      %8280 = vst.msk [vmem:[#allocation5] sm:$0xff] %vm8279, %v8088
      %8281 = vst.msk [vmem:[#allocation5 + $0x8] sm:$0xff] %vm8279, %v8090
      %8282 = vst.msk [vmem:[#allocation5 + $0x10] sm:$0xff] %vm8279, %v8092
      %8283 = vst.msk [vmem:[#allocation5 + $0x18] sm:$0xff] %vm8279, %v8094
      %8284 = vst.msk [vmem:[#allocation5 + $0x20] sm:$0xff] %vm8279, %v8096
      %8285 = vst.msk [vmem:[#allocation5 + $0x28] sm:$0xff] %vm8279, %v8098
      %8286 = vst.msk [vmem:[#allocation5 + $0x30] sm:$0xff] %vm8279, %v8100
      %8287 = vst.msk [vmem:[#allocation5 + $0x38] sm:$0xff] %vm8279, %v8102
      %8288 = vst.msk [vmem:[#allocation5 + $0x40] sm:$0xff] %vm8279, %v8104
      %8289 = vst.msk [vmem:[#allocation5 + $0x48] sm:$0xff] %vm8279, %v8106
      %8290 = vst.msk [vmem:[#allocation5 + $0x50] sm:$0xff] %vm8279, %v8108
      %8291 = vst.msk [vmem:[#allocation5 + $0x58] sm:$0xff] %vm8279, %v8110
      %8292 = vst.msk [vmem:[#allocation5 + $0x60] sm:$0xff] %vm8279, %v8112
      %8293 = vst.msk [vmem:[#allocation5 + $0x68] sm:$0xff] %vm8279, %v8114
      %8294 = vst.msk [vmem:[#allocation5 + $0x70] sm:$0xff] %vm8279, %v8116
      %8295 = vst.msk [vmem:[#allocation5 + $0x78] sm:$0xff] %vm8279, %v8118
      %8296 = vst.msk [vmem:[#allocation5 + $0x80] sm:$0xff] %vm8279, %v8120
      %8297 = vst.msk [vmem:[#allocation5 + $0x88] sm:$0xff] %vm8279, %v8122
      %8298 = vst.msk [vmem:[#allocation5 + $0x90] sm:$0xff] %vm8279, %v8124
      %8299 = vst.msk [vmem:[#allocation5 + $0x98] sm:$0xff] %vm8279, %v8126
      %8300 = vst.msk [vmem:[#allocation5 + $0xa0] sm:$0xff] %vm8279, %v8128
      %8301 = vst.msk [vmem:[#allocation5 + $0xa8] sm:$0xff] %vm8279, %v8130
      %8302 = vst.msk [vmem:[#allocation5 + $0xb0] sm:$0xff] %vm8279, %v8132
      %8303 = vst.msk [vmem:[#allocation5 + $0xb8] sm:$0xff] %vm8279, %v8134
      %8304 = vst.msk [vmem:[#allocation5 + $0xc0] sm:$0xff] %vm8279, %v8136
      %8305 = vst.msk [vmem:[#allocation5 + $0xc8] sm:$0xff] %vm8279, %v8138
      %8306 = vst.msk [vmem:[#allocation5 + $0xd0] sm:$0xff] %vm8279, %v8140
      %8307 = vst.msk [vmem:[#allocation5 + $0xd8] sm:$0xff] %vm8279, %v8142
      %8308 = vst.msk [vmem:[#allocation5 + $0xe0] sm:$0xff] %vm8279, %v8144
      %8309 = vst.msk [vmem:[#allocation5 + $0xe8] sm:$0xff] %vm8279, %v8146
      %8310 = vst.msk [vmem:[#allocation5 + $0xf0] sm:$0xff] %vm8279, %v8148
      %8311 = vst.msk [vmem:[#allocation5 + $0xf8] sm:$0xff] %vm8279, %v8150
      %8312 = vst.msk [vmem:[#allocation5 + $0x100] sm:$0xff] %vm8279, %v8152
      %8313 = vst.msk [vmem:[#allocation5 + $0x108] sm:$0xff] %vm8279, %v8154
      %8314 = vst.msk [vmem:[#allocation5 + $0x110] sm:$0xff] %vm8279, %v8156
      %8315 = vst.msk [vmem:[#allocation5 + $0x118] sm:$0xff] %vm8279, %v8158
      %8316 = vst.msk [vmem:[#allocation5 + $0x120] sm:$0xff] %vm8279, %v8160
      %8317 = vst.msk [vmem:[#allocation5 + $0x128] sm:$0xff] %vm8279, %v8162
      %8318 = vst.msk [vmem:[#allocation5 + $0x130] sm:$0xff] %vm8279, %v8164
      %8319 = vst.msk [vmem:[#allocation5 + $0x138] sm:$0xff] %vm8279, %v8166
      %8320 = vst.msk [vmem:[#allocation5 + $0x140] sm:$0xff] %vm8279, %v8168
      %8321 = vst.msk [vmem:[#allocation5 + $0x148] sm:$0xff] %vm8279, %v8170
      %8322 = vst.msk [vmem:[#allocation5 + $0x150] sm:$0xff] %vm8279, %v8172
      %8323 = vst.msk [vmem:[#allocation5 + $0x158] sm:$0xff] %vm8279, %v8174
      %8324 = vst.msk [vmem:[#allocation5 + $0x160] sm:$0xff] %vm8279, %v8176
      %8325 = vst.msk [vmem:[#allocation5 + $0x168] sm:$0xff] %vm8279, %v8178
      %8326 = vst.msk [vmem:[#allocation5 + $0x170] sm:$0xff] %vm8279, %v8180
      %8327 = vst.msk [vmem:[#allocation5 + $0x178] sm:$0xff] %vm8279, %v8182
      %8328 = vst.msk [vmem:[#allocation5 + $0x180] sm:$0xff] %vm8279, %v8184
      %8329 = vst.msk [vmem:[#allocation5 + $0x188] sm:$0xff] %vm8279, %v8186
      %8330 = vst.msk [vmem:[#allocation5 + $0x190] sm:$0xff] %vm8279, %v8188
      %8331 = vst.msk [vmem:[#allocation5 + $0x198] sm:$0xff] %vm8279, %v8190
      %8332 = vst.msk [vmem:[#allocation5 + $0x1a0] sm:$0xff] %vm8279, %v8192
      %8333 = vst.msk [vmem:[#allocation5 + $0x1a8] sm:$0xff] %vm8279, %v8194
      %8334 = vst.msk [vmem:[#allocation5 + $0x1b0] sm:$0xff] %vm8279, %v8196
      %8335 = vst.msk [vmem:[#allocation5 + $0x1b8] sm:$0xff] %vm8279, %v8198
      %8336 = vst.msk [vmem:[#allocation5 + $0x1c0] sm:$0xff] %vm8279, %v8200
      %8337 = vst.msk [vmem:[#allocation5 + $0x1c8] sm:$0xff] %vm8279, %v8202
      %8338 = vst.msk [vmem:[#allocation5 + $0x1d0] sm:$0xff] %vm8279, %v8204
      %8339 = vst.msk [vmem:[#allocation5 + $0x1d8] sm:$0xff] %vm8279, %v8206
      %8340 = vst.msk [vmem:[#allocation5 + $0x1e0] sm:$0xff] %vm8279, %v8208
      %8341 = vst.msk [vmem:[#allocation5 + $0x1e8] sm:$0xff] %vm8279, %v8210
      %8342 = vst.msk [vmem:[#allocation5 + $0x1f0] sm:$0xff] %vm8279, %v8212
      %8343 = vst.msk [vmem:[#allocation5 + $0x1f8] sm:$0xff] %vm8279, %v8214
      %s8344 = scalar_lea.vmem [#allocation4], 176
      %v8345 = vld [vmem:[%s8344] sm:$0xff]
      %v8346 = vld [vmem:[%s8344 + $0x8] sm:$0xff]
      %v8347 = vld [vmem:[%s8344 + $0x10] sm:$0xff]
      %v8348 = vld [vmem:[%s8344 + $0x18] sm:$0xff]
      %v8349 = vld [vmem:[%s8344 + $0x20] sm:$0xff]
      %v8350 = vld [vmem:[%s8344 + $0x28] sm:$0xff]
      %v8351 = vld [vmem:[%s8344 + $0x30] sm:$0xff]
      %v8352 = vld [vmem:[%s8344 + $0x38] sm:$0xff]
      %v8353 = vld [vmem:[%s8344 + $0x50] sm:$0xff]
      %v8354 = vld [vmem:[%s8344 + $0x58] sm:$0xff]
      %v8355 = vld [vmem:[%s8344 + $0x60] sm:$0xff]
      %v8356 = vld [vmem:[%s8344 + $0x68] sm:$0xff]
      %v8357 = vld [vmem:[%s8344 + $0x70] sm:$0xff]
      %v8358 = vld [vmem:[%s8344 + $0x78] sm:$0xff]
      %v8359 = vld [vmem:[%s8344 + $0x80] sm:$0xff]
      %v8360 = vld [vmem:[%s8344 + $0x88] sm:$0xff]
      %v8361 = vld [vmem:[%s8344 + $0xa0] sm:$0xff]
      %v8362 = vld [vmem:[%s8344 + $0xa8] sm:$0xff]
      %v8363 = vld [vmem:[%s8344 + $0xb0] sm:$0xff]
      %v8364 = vld [vmem:[%s8344 + $0xb8] sm:$0xff]
      %v8365 = vld [vmem:[%s8344 + $0xc0] sm:$0xff]
      %v8366 = vld [vmem:[%s8344 + $0xc8] sm:$0xff]
      %v8367 = vld [vmem:[%s8344 + $0xd0] sm:$0xff]
      %v8368 = vld [vmem:[%s8344 + $0xd8] sm:$0xff]
      %v8369 = vld [vmem:[%s8344 + $0xf0] sm:$0xff]
      %v8370 = vld [vmem:[%s8344 + $0xf8] sm:$0xff]
      %v8371 = vld [vmem:[%s8344 + $0x100] sm:$0xff]
      %v8372 = vld [vmem:[%s8344 + $0x108] sm:$0xff]
      %v8373 = vld [vmem:[%s8344 + $0x110] sm:$0xff]
      %v8374 = vld [vmem:[%s8344 + $0x118] sm:$0xff]
      %v8375 = vld [vmem:[%s8344 + $0x120] sm:$0xff]
      %v8376 = vld [vmem:[%s8344 + $0x128] sm:$0xff]
      %v8377 = vld [vmem:[%s8344 + $0x140] sm:$0xff]
      %v8378 = vld [vmem:[%s8344 + $0x148] sm:$0xff]
      %v8379 = vld [vmem:[%s8344 + $0x150] sm:$0xff]
      %v8380 = vld [vmem:[%s8344 + $0x158] sm:$0xff]
      %v8381 = vld [vmem:[%s8344 + $0x160] sm:$0xff]
      %v8382 = vld [vmem:[%s8344 + $0x168] sm:$0xff]
      %v8383 = vld [vmem:[%s8344 + $0x170] sm:$0xff]
      %v8384 = vld [vmem:[%s8344 + $0x178] sm:$0xff]
      %v8385 = vld [vmem:[%s8344 + $0x190] sm:$0xff]
      %v8386 = vld [vmem:[%s8344 + $0x198] sm:$0xff]
      %v8387 = vld [vmem:[%s8344 + $0x1a0] sm:$0xff]
      %v8388 = vld [vmem:[%s8344 + $0x1a8] sm:$0xff]
      %v8389 = vld [vmem:[%s8344 + $0x1b0] sm:$0xff]
      %v8390 = vld [vmem:[%s8344 + $0x1b8] sm:$0xff]
      %v8391 = vld [vmem:[%s8344 + $0x1c0] sm:$0xff]
      %v8392 = vld [vmem:[%s8344 + $0x1c8] sm:$0xff]
      %v8393 = vld [vmem:[%s8344 + $0x1e0] sm:$0xff]
      %v8394 = vld [vmem:[%s8344 + $0x1e8] sm:$0xff]
      %v8395 = vld [vmem:[%s8344 + $0x1f0] sm:$0xff]
      %v8396 = vld [vmem:[%s8344 + $0x1f8] sm:$0xff]
      %v8397 = vld [vmem:[%s8344 + $0x200] sm:$0xff]
      %v8398 = vld [vmem:[%s8344 + $0x208] sm:$0xff]
      %v8399 = vld [vmem:[%s8344 + $0x210] sm:$0xff]
      %v8400 = vld [vmem:[%s8344 + $0x218] sm:$0xff]
      %v8401 = vld [vmem:[%s8344 + $0x230] sm:$0xff]
      %v8402 = vld [vmem:[%s8344 + $0x238] sm:$0xff]
      %v8403 = vld [vmem:[%s8344 + $0x240] sm:$0xff]
      %v8404 = vld [vmem:[%s8344 + $0x248] sm:$0xff]
      %v8405 = vld [vmem:[%s8344 + $0x250] sm:$0xff]
      %v8406 = vld [vmem:[%s8344 + $0x258] sm:$0xff]
      %v8407 = vld [vmem:[%s8344 + $0x260] sm:$0xff]
      %v8408 = vld [vmem:[%s8344 + $0x268] sm:$0xff]
      %8473 = vrot.lane.b32.xlu0 %v8345, 64
      %v8474 = vpop.permute.xlu0 %8473
      %8475 = vrot.lane.b32.xlu0 %v8346, 64
      %v8476 = vpop.permute.xlu0 %8475
      %8477 = vrot.lane.b32.xlu0 %v8347, 64
      %v8478 = vpop.permute.xlu0 %8477
      %8479 = vrot.lane.b32.xlu0 %v8348, 64
      %v8480 = vpop.permute.xlu0 %8479
      %8481 = vrot.lane.b32.xlu0 %v8349, 64
      %v8482 = vpop.permute.xlu0 %8481
      %8483 = vrot.lane.b32.xlu0 %v8350, 64
      %v8484 = vpop.permute.xlu0 %8483
      %8485 = vrot.lane.b32.xlu0 %v8351, 64
      %v8486 = vpop.permute.xlu0 %8485
      %8487 = vrot.lane.b32.xlu0 %v8352, 64
      %v8488 = vpop.permute.xlu0 %8487
      %8489 = vrot.lane.b32.xlu0 %v8353, 64
      %v8490 = vpop.permute.xlu0 %8489
      %8491 = vrot.lane.b32.xlu0 %v8354, 64
      %v8492 = vpop.permute.xlu0 %8491
      %8493 = vrot.lane.b32.xlu0 %v8355, 64
      %v8494 = vpop.permute.xlu0 %8493
      %8495 = vrot.lane.b32.xlu0 %v8356, 64
      %v8496 = vpop.permute.xlu0 %8495
      %8497 = vrot.lane.b32.xlu0 %v8357, 64
      %v8498 = vpop.permute.xlu0 %8497
      %8499 = vrot.lane.b32.xlu0 %v8358, 64
      %v8500 = vpop.permute.xlu0 %8499
      %8501 = vrot.lane.b32.xlu0 %v8359, 64
      %v8502 = vpop.permute.xlu0 %8501
      %8503 = vrot.lane.b32.xlu0 %v8360, 64
      %v8504 = vpop.permute.xlu0 %8503
      %8505 = vrot.lane.b32.xlu0 %v8361, 64
      %v8506 = vpop.permute.xlu0 %8505
      %8507 = vrot.lane.b32.xlu0 %v8362, 64
      %v8508 = vpop.permute.xlu0 %8507
      %8509 = vrot.lane.b32.xlu0 %v8363, 64
      %v8510 = vpop.permute.xlu0 %8509
      %8511 = vrot.lane.b32.xlu0 %v8364, 64
      %v8512 = vpop.permute.xlu0 %8511
      %8513 = vrot.lane.b32.xlu0 %v8365, 64
      %v8514 = vpop.permute.xlu0 %8513
      %8515 = vrot.lane.b32.xlu0 %v8366, 64
      %v8516 = vpop.permute.xlu0 %8515
      %8517 = vrot.lane.b32.xlu0 %v8367, 64
      %v8518 = vpop.permute.xlu0 %8517
      %8519 = vrot.lane.b32.xlu0 %v8368, 64
      %v8520 = vpop.permute.xlu0 %8519
      %8521 = vrot.lane.b32.xlu0 %v8369, 64
      %v8522 = vpop.permute.xlu0 %8521
      %8523 = vrot.lane.b32.xlu0 %v8370, 64
      %v8524 = vpop.permute.xlu0 %8523
      %8525 = vrot.lane.b32.xlu0 %v8371, 64
      %v8526 = vpop.permute.xlu0 %8525
      %8527 = vrot.lane.b32.xlu0 %v8372, 64
      %v8528 = vpop.permute.xlu0 %8527
      %8529 = vrot.lane.b32.xlu0 %v8373, 64
      %v8530 = vpop.permute.xlu0 %8529
      %8531 = vrot.lane.b32.xlu0 %v8374, 64
      %v8532 = vpop.permute.xlu0 %8531
      %8533 = vrot.lane.b32.xlu0 %v8375, 64
      %v8534 = vpop.permute.xlu0 %8533
      %8535 = vrot.lane.b32.xlu0 %v8376, 64
      %v8536 = vpop.permute.xlu0 %8535
      %8537 = vrot.lane.b32.xlu0 %v8377, 64
      %v8538 = vpop.permute.xlu0 %8537
      %8539 = vrot.lane.b32.xlu0 %v8378, 64
      %v8540 = vpop.permute.xlu0 %8539
      %8541 = vrot.lane.b32.xlu0 %v8379, 64
      %v8542 = vpop.permute.xlu0 %8541
      %8543 = vrot.lane.b32.xlu0 %v8380, 64
      %v8544 = vpop.permute.xlu0 %8543
      %8545 = vrot.lane.b32.xlu0 %v8381, 64
      %v8546 = vpop.permute.xlu0 %8545
      %8547 = vrot.lane.b32.xlu0 %v8382, 64
      %v8548 = vpop.permute.xlu0 %8547
      %8549 = vrot.lane.b32.xlu0 %v8383, 64
      %v8550 = vpop.permute.xlu0 %8549
      %8551 = vrot.lane.b32.xlu0 %v8384, 64
      %v8552 = vpop.permute.xlu0 %8551
      %8553 = vrot.lane.b32.xlu0 %v8385, 64
      %v8554 = vpop.permute.xlu0 %8553
      %8555 = vrot.lane.b32.xlu0 %v8386, 64
      %v8556 = vpop.permute.xlu0 %8555
      %8557 = vrot.lane.b32.xlu0 %v8387, 64
      %v8558 = vpop.permute.xlu0 %8557
      %8559 = vrot.lane.b32.xlu0 %v8388, 64
      %v8560 = vpop.permute.xlu0 %8559
      %8561 = vrot.lane.b32.xlu0 %v8389, 64
      %v8562 = vpop.permute.xlu0 %8561
      %8563 = vrot.lane.b32.xlu0 %v8390, 64
      %v8564 = vpop.permute.xlu0 %8563
      %8565 = vrot.lane.b32.xlu0 %v8391, 64
      %v8566 = vpop.permute.xlu0 %8565
      %8567 = vrot.lane.b32.xlu0 %v8392, 64
      %v8568 = vpop.permute.xlu0 %8567
      %8569 = vrot.lane.b32.xlu0 %v8393, 64
      %v8570 = vpop.permute.xlu0 %8569
      %8571 = vrot.lane.b32.xlu0 %v8394, 64
      %v8572 = vpop.permute.xlu0 %8571
      %8573 = vrot.lane.b32.xlu0 %v8395, 64
      %v8574 = vpop.permute.xlu0 %8573
      %8575 = vrot.lane.b32.xlu0 %v8396, 64
      %v8576 = vpop.permute.xlu0 %8575
      %8577 = vrot.lane.b32.xlu0 %v8397, 64
      %v8578 = vpop.permute.xlu0 %8577
      %8579 = vrot.lane.b32.xlu0 %v8398, 64
      %v8580 = vpop.permute.xlu0 %8579
      %8581 = vrot.lane.b32.xlu0 %v8399, 64
      %v8582 = vpop.permute.xlu0 %8581
      %8583 = vrot.lane.b32.xlu0 %v8400, 64
      %v8584 = vpop.permute.xlu0 %8583
      %8585 = vrot.lane.b32.xlu0 %v8401, 64
      %v8586 = vpop.permute.xlu0 %8585
      %8587 = vrot.lane.b32.xlu0 %v8402, 64
      %v8588 = vpop.permute.xlu0 %8587
      %8589 = vrot.lane.b32.xlu0 %v8403, 64
      %v8590 = vpop.permute.xlu0 %8589
      %8591 = vrot.lane.b32.xlu0 %v8404, 64
      %v8592 = vpop.permute.xlu0 %8591
      %8593 = vrot.lane.b32.xlu0 %v8405, 64
      %v8594 = vpop.permute.xlu0 %8593
      %8595 = vrot.lane.b32.xlu0 %v8406, 64
      %v8596 = vpop.permute.xlu0 %8595
      %8597 = vrot.lane.b32.xlu0 %v8407, 64
      %v8598 = vpop.permute.xlu0 %8597
      %8599 = vrot.lane.b32.xlu0 %v8408, 64
      %v8600 = vpop.permute.xlu0 %8599
      %vm8665 = vcmask 589312
      %8666 = vst.msk [vmem:[#allocation5] sm:$0xff] %vm8665, %v8474
      %8667 = vst.msk [vmem:[#allocation5 + $0x8] sm:$0xff] %vm8665, %v8476
      %8668 = vst.msk [vmem:[#allocation5 + $0x10] sm:$0xff] %vm8665, %v8478
      %8669 = vst.msk [vmem:[#allocation5 + $0x18] sm:$0xff] %vm8665, %v8480
      %8670 = vst.msk [vmem:[#allocation5 + $0x20] sm:$0xff] %vm8665, %v8482
      %8671 = vst.msk [vmem:[#allocation5 + $0x28] sm:$0xff] %vm8665, %v8484
      %8672 = vst.msk [vmem:[#allocation5 + $0x30] sm:$0xff] %vm8665, %v8486
      %8673 = vst.msk [vmem:[#allocation5 + $0x38] sm:$0xff] %vm8665, %v8488
      %8674 = vst.msk [vmem:[#allocation5 + $0x40] sm:$0xff] %vm8665, %v8490
      %8675 = vst.msk [vmem:[#allocation5 + $0x48] sm:$0xff] %vm8665, %v8492
      %8676 = vst.msk [vmem:[#allocation5 + $0x50] sm:$0xff] %vm8665, %v8494
      %8677 = vst.msk [vmem:[#allocation5 + $0x58] sm:$0xff] %vm8665, %v8496
      %8678 = vst.msk [vmem:[#allocation5 + $0x60] sm:$0xff] %vm8665, %v8498
      %8679 = vst.msk [vmem:[#allocation5 + $0x68] sm:$0xff] %vm8665, %v8500
      %8680 = vst.msk [vmem:[#allocation5 + $0x70] sm:$0xff] %vm8665, %v8502
      %8681 = vst.msk [vmem:[#allocation5 + $0x78] sm:$0xff] %vm8665, %v8504
      %8682 = vst.msk [vmem:[#allocation5 + $0x80] sm:$0xff] %vm8665, %v8506
      %8683 = vst.msk [vmem:[#allocation5 + $0x88] sm:$0xff] %vm8665, %v8508
      %8684 = vst.msk [vmem:[#allocation5 + $0x90] sm:$0xff] %vm8665, %v8510
      %8685 = vst.msk [vmem:[#allocation5 + $0x98] sm:$0xff] %vm8665, %v8512
      %8686 = vst.msk [vmem:[#allocation5 + $0xa0] sm:$0xff] %vm8665, %v8514
      %8687 = vst.msk [vmem:[#allocation5 + $0xa8] sm:$0xff] %vm8665, %v8516
      %8688 = vst.msk [vmem:[#allocation5 + $0xb0] sm:$0xff] %vm8665, %v8518
      %8689 = vst.msk [vmem:[#allocation5 + $0xb8] sm:$0xff] %vm8665, %v8520
      %8690 = vst.msk [vmem:[#allocation5 + $0xc0] sm:$0xff] %vm8665, %v8522
      %8691 = vst.msk [vmem:[#allocation5 + $0xc8] sm:$0xff] %vm8665, %v8524
      %8692 = vst.msk [vmem:[#allocation5 + $0xd0] sm:$0xff] %vm8665, %v8526
      %8693 = vst.msk [vmem:[#allocation5 + $0xd8] sm:$0xff] %vm8665, %v8528
      %8694 = vst.msk [vmem:[#allocation5 + $0xe0] sm:$0xff] %vm8665, %v8530
      %8695 = vst.msk [vmem:[#allocation5 + $0xe8] sm:$0xff] %vm8665, %v8532
      %8696 = vst.msk [vmem:[#allocation5 + $0xf0] sm:$0xff] %vm8665, %v8534
      %8697 = vst.msk [vmem:[#allocation5 + $0xf8] sm:$0xff] %vm8665, %v8536
      %8698 = vst.msk [vmem:[#allocation5 + $0x100] sm:$0xff] %vm8665, %v8538
      %8699 = vst.msk [vmem:[#allocation5 + $0x108] sm:$0xff] %vm8665, %v8540
      %8700 = vst.msk [vmem:[#allocation5 + $0x110] sm:$0xff] %vm8665, %v8542
      %8701 = vst.msk [vmem:[#allocation5 + $0x118] sm:$0xff] %vm8665, %v8544
      %8702 = vst.msk [vmem:[#allocation5 + $0x120] sm:$0xff] %vm8665, %v8546
      %8703 = vst.msk [vmem:[#allocation5 + $0x128] sm:$0xff] %vm8665, %v8548
      %8704 = vst.msk [vmem:[#allocation5 + $0x130] sm:$0xff] %vm8665, %v8550
      %8705 = vst.msk [vmem:[#allocation5 + $0x138] sm:$0xff] %vm8665, %v8552
      %8706 = vst.msk [vmem:[#allocation5 + $0x140] sm:$0xff] %vm8665, %v8554
      %8707 = vst.msk [vmem:[#allocation5 + $0x148] sm:$0xff] %vm8665, %v8556
      %8708 = vst.msk [vmem:[#allocation5 + $0x150] sm:$0xff] %vm8665, %v8558
      %8709 = vst.msk [vmem:[#allocation5 + $0x158] sm:$0xff] %vm8665, %v8560
      %8710 = vst.msk [vmem:[#allocation5 + $0x160] sm:$0xff] %vm8665, %v8562
      %8711 = vst.msk [vmem:[#allocation5 + $0x168] sm:$0xff] %vm8665, %v8564
      %8712 = vst.msk [vmem:[#allocation5 + $0x170] sm:$0xff] %vm8665, %v8566
      %8713 = vst.msk [vmem:[#allocation5 + $0x178] sm:$0xff] %vm8665, %v8568
      %8714 = vst.msk [vmem:[#allocation5 + $0x180] sm:$0xff] %vm8665, %v8570
      %8715 = vst.msk [vmem:[#allocation5 + $0x188] sm:$0xff] %vm8665, %v8572
      %8716 = vst.msk [vmem:[#allocation5 + $0x190] sm:$0xff] %vm8665, %v8574
      %8717 = vst.msk [vmem:[#allocation5 + $0x198] sm:$0xff] %vm8665, %v8576
      %8718 = vst.msk [vmem:[#allocation5 + $0x1a0] sm:$0xff] %vm8665, %v8578
      %8719 = vst.msk [vmem:[#allocation5 + $0x1a8] sm:$0xff] %vm8665, %v8580
      %8720 = vst.msk [vmem:[#allocation5 + $0x1b0] sm:$0xff] %vm8665, %v8582
      %8721 = vst.msk [vmem:[#allocation5 + $0x1b8] sm:$0xff] %vm8665, %v8584
      %8722 = vst.msk [vmem:[#allocation5 + $0x1c0] sm:$0xff] %vm8665, %v8586
      %8723 = vst.msk [vmem:[#allocation5 + $0x1c8] sm:$0xff] %vm8665, %v8588
      %8724 = vst.msk [vmem:[#allocation5 + $0x1d0] sm:$0xff] %vm8665, %v8590
      %8725 = vst.msk [vmem:[#allocation5 + $0x1d8] sm:$0xff] %vm8665, %v8592
      %8726 = vst.msk [vmem:[#allocation5 + $0x1e0] sm:$0xff] %vm8665, %v8594
      %8727 = vst.msk [vmem:[#allocation5 + $0x1e8] sm:$0xff] %vm8665, %v8596
      %8728 = vst.msk [vmem:[#allocation5 + $0x1f0] sm:$0xff] %vm8665, %v8598
      %8729 = vst.msk [vmem:[#allocation5 + $0x1f8] sm:$0xff] %vm8665, %v8600
      %v8730 = vld [vmem:[#allocation5] sm:$0xff]
      %v8731 = vld [vmem:[#allocation5 + $0x8] sm:$0xff]
      %v8732 = vld [vmem:[#allocation5 + $0x10] sm:$0xff]
      %v8733 = vld [vmem:[#allocation5 + $0x18] sm:$0xff]
      %v8734 = vld [vmem:[#allocation5 + $0x20] sm:$0xff]
      %v8735 = vld [vmem:[#allocation5 + $0x28] sm:$0xff]
      %v8736 = vld [vmem:[#allocation5 + $0x30] sm:$0xff]
      %v8737 = vld [vmem:[#allocation5 + $0x38] sm:$0xff]
      %v8738 = vld [vmem:[#allocation5 + $0x40] sm:$0xff]
      %v8739 = vld [vmem:[#allocation5 + $0x48] sm:$0xff]
      %v8740 = vld [vmem:[#allocation5 + $0x50] sm:$0xff]
      %v8741 = vld [vmem:[#allocation5 + $0x58] sm:$0xff]
      %v8742 = vld [vmem:[#allocation5 + $0x60] sm:$0xff]
      %v8743 = vld [vmem:[#allocation5 + $0x68] sm:$0xff]
      %v8744 = vld [vmem:[#allocation5 + $0x70] sm:$0xff]
      %v8745 = vld [vmem:[#allocation5 + $0x78] sm:$0xff]
      %v8746 = vld [vmem:[#allocation5 + $0x80] sm:$0xff]
      %v8747 = vld [vmem:[#allocation5 + $0x88] sm:$0xff]
      %v8748 = vld [vmem:[#allocation5 + $0x90] sm:$0xff]
      %v8749 = vld [vmem:[#allocation5 + $0x98] sm:$0xff]
      %v8750 = vld [vmem:[#allocation5 + $0xa0] sm:$0xff]
      %v8751 = vld [vmem:[#allocation5 + $0xa8] sm:$0xff]
      %v8752 = vld [vmem:[#allocation5 + $0xb0] sm:$0xff]
      %v8753 = vld [vmem:[#allocation5 + $0xb8] sm:$0xff]
      %v8754 = vld [vmem:[#allocation5 + $0xc0] sm:$0xff]
      %v8755 = vld [vmem:[#allocation5 + $0xc8] sm:$0xff]
      %v8756 = vld [vmem:[#allocation5 + $0xd0] sm:$0xff]
      %v8757 = vld [vmem:[#allocation5 + $0xd8] sm:$0xff]
      %v8758 = vld [vmem:[#allocation5 + $0xe0] sm:$0xff]
      %v8759 = vld [vmem:[#allocation5 + $0xe8] sm:$0xff]
      %v8760 = vld [vmem:[#allocation5 + $0xf0] sm:$0xff]
      %v8761 = vld [vmem:[#allocation5 + $0xf8] sm:$0xff]
      %v8762 = vld [vmem:[#allocation5 + $0x100] sm:$0xff]
      %v8763 = vld [vmem:[#allocation5 + $0x108] sm:$0xff]
      %v8764 = vld [vmem:[#allocation5 + $0x110] sm:$0xff]
      %v8765 = vld [vmem:[#allocation5 + $0x118] sm:$0xff]
      %v8766 = vld [vmem:[#allocation5 + $0x120] sm:$0xff]
      %v8767 = vld [vmem:[#allocation5 + $0x128] sm:$0xff]
      %v8768 = vld [vmem:[#allocation5 + $0x130] sm:$0xff]
      %v8769 = vld [vmem:[#allocation5 + $0x138] sm:$0xff]
      %v8770 = vld [vmem:[#allocation5 + $0x140] sm:$0xff]
      %v8771 = vld [vmem:[#allocation5 + $0x148] sm:$0xff]
      %v8772 = vld [vmem:[#allocation5 + $0x150] sm:$0xff]
      %v8773 = vld [vmem:[#allocation5 + $0x158] sm:$0xff]
      %v8774 = vld [vmem:[#allocation5 + $0x160] sm:$0xff]
      %v8775 = vld [vmem:[#allocation5 + $0x168] sm:$0xff]
      %v8776 = vld [vmem:[#allocation5 + $0x170] sm:$0xff]
      %v8777 = vld [vmem:[#allocation5 + $0x178] sm:$0xff]
      %v8778 = vld [vmem:[#allocation5 + $0x180] sm:$0xff]
      %v8779 = vld [vmem:[#allocation5 + $0x188] sm:$0xff]
      %v8780 = vld [vmem:[#allocation5 + $0x190] sm:$0xff]
      %v8781 = vld [vmem:[#allocation5 + $0x198] sm:$0xff]
      %v8782 = vld [vmem:[#allocation5 + $0x1a0] sm:$0xff]
      %v8783 = vld [vmem:[#allocation5 + $0x1a8] sm:$0xff]
      %v8784 = vld [vmem:[#allocation5 + $0x1b0] sm:$0xff]
      %v8785 = vld [vmem:[#allocation5 + $0x1b8] sm:$0xff]
      %v8786 = vld [vmem:[#allocation5 + $0x1c0] sm:$0xff]
      %v8787 = vld [vmem:[#allocation5 + $0x1c8] sm:$0xff]
      %v8788 = vld [vmem:[#allocation5 + $0x1d0] sm:$0xff]
      %v8789 = vld [vmem:[#allocation5 + $0x1d8] sm:$0xff]
      %v8790 = vld [vmem:[#allocation5 + $0x1e0] sm:$0xff]
      %v8791 = vld [vmem:[#allocation5 + $0x1e8] sm:$0xff]
      %v8792 = vld [vmem:[#allocation5 + $0x1f0] sm:$0xff]
      %v8793 = vld [vmem:[#allocation5 + $0x1f8] sm:$0xff]
      %v8794 = vld [vmem:[%s4] sm:$0xff]
      %v8795 = vld [vmem:[%s4 + $0x8] sm:$0xff]
      %v8796 = vld [vmem:[%s4 + $0x10] sm:$0xff]
      %v8797 = vld [vmem:[%s4 + $0x18] sm:$0xff]
      %v8798 = vld [vmem:[%s4 + $0x20] sm:$0xff]
      %v8799 = vld [vmem:[%s4 + $0x28] sm:$0xff]
      %v8800 = vld [vmem:[%s4 + $0x30] sm:$0xff]
      %v8801 = vld [vmem:[%s4 + $0x38] sm:$0xff]
      %v8802 = vld [vmem:[%s4 + $0x40] sm:$0xff]
      %vm8803 = vcmask 588800
      %v8805 = vsel %vm8803, %v8730, 0
      %v8808 = vsel %vm8803, %v8731, 0
      %v8811 = vsel %vm8803, %v8732, 0
      %v8814 = vsel %vm8803, %v8733, 0
      %v8817 = vsel %vm8803, %v8734, 0
      %v8820 = vsel %vm8803, %v8735, 0
      %v8823 = vsel %vm8803, %v8736, 0
      %v8826 = vsel %vm8803, %v8737, 0
      %v8829 = vsel %vm8803, %v8738, 0
      %v8832 = vsel %vm8803, %v8739, 0
      %v8835 = vsel %vm8803, %v8740, 0
      %v8838 = vsel %vm8803, %v8741, 0
      %v8841 = vsel %vm8803, %v8742, 0
      %v8844 = vsel %vm8803, %v8743, 0
      %v8847 = vsel %vm8803, %v8744, 0
      %v8850 = vsel %vm8803, %v8745, 0
      %v8853 = vsel %vm8803, %v8746, 0
      %v8856 = vsel %vm8803, %v8747, 0
      %v8859 = vsel %vm8803, %v8748, 0
      %v8862 = vsel %vm8803, %v8749, 0
      %v8865 = vsel %vm8803, %v8750, 0
      %v8868 = vsel %vm8803, %v8751, 0
      %v8871 = vsel %vm8803, %v8752, 0
      %v8874 = vsel %vm8803, %v8753, 0
      %v8877 = vsel %vm8803, %v8754, 0
      %v8880 = vsel %vm8803, %v8755, 0
      %v8883 = vsel %vm8803, %v8756, 0
      %v8886 = vsel %vm8803, %v8757, 0
      %v8889 = vsel %vm8803, %v8758, 0
      %v8892 = vsel %vm8803, %v8759, 0
      %v8895 = vsel %vm8803, %v8760, 0
      %v8898 = vsel %vm8803, %v8761, 0
      %v8901 = vsel %vm8803, %v8762, 0
      %v8904 = vsel %vm8803, %v8763, 0
      %v8907 = vsel %vm8803, %v8764, 0
      %v8910 = vsel %vm8803, %v8765, 0
      %v8913 = vsel %vm8803, %v8766, 0
      %v8916 = vsel %vm8803, %v8767, 0
      %v8919 = vsel %vm8803, %v8768, 0
      %v8922 = vsel %vm8803, %v8769, 0
      %v8925 = vsel %vm8803, %v8770, 0
      %v8928 = vsel %vm8803, %v8771, 0
      %v8931 = vsel %vm8803, %v8772, 0
      %v8934 = vsel %vm8803, %v8773, 0
      %v8937 = vsel %vm8803, %v8774, 0
      %v8940 = vsel %vm8803, %v8775, 0
      %v8943 = vsel %vm8803, %v8776, 0
      %v8946 = vsel %vm8803, %v8777, 0
      %v8949 = vsel %vm8803, %v8778, 0
      %v8952 = vsel %vm8803, %v8779, 0
      %v8955 = vsel %vm8803, %v8780, 0
      %v8958 = vsel %vm8803, %v8781, 0
      %v8961 = vsel %vm8803, %v8782, 0
      %v8964 = vsel %vm8803, %v8783, 0
      %v8967 = vsel %vm8803, %v8784, 0
      %v8970 = vsel %vm8803, %v8785, 0
      %v8973 = vsel %vm8803, %v8786, 0
      %v8976 = vsel %vm8803, %v8787, 0
      %v8979 = vsel %vm8803, %v8788, 0
      %v8982 = vsel %vm8803, %v8789, 0
      %v8985 = vsel %vm8803, %v8790, 0
      %v8988 = vsel %vm8803, %v8791, 0
      %v8991 = vsel %vm8803, %v8792, 0
      %v8994 = vsel %vm8803, %v8793, 0
      %8996 = vmatprep.subr.mxu0 0.0
      %8997 = vmatpush1.msra.mxu0 %v8794
      %8998 = vmatprep.subr.mxu0 0.0
      %8999 = vmatpush1.msra.mxu0 %v8795
      %9000 = vmatprep.subr.mxu0 0.0
      %9001 = vmatpush1.msra.mxu0 %v8796
      %9002 = vmatprep.subr.mxu0 0.0
      %9003 = vmatpush1.msra.mxu0 %v8797
      %9004 = vmatprep.subr.mxu0 0.0
      %9005 = vmatpush1.msra.mxu0 %v8798
      %9006 = vmatprep.subr.mxu0 0.0
      %9007 = vmatpush1.msra.mxu0 %v8799
      %9008 = vmatprep.subr.mxu0 0.0
      %9009 = vmatpush1.msra.mxu0 %v8800
      %9010 = vmatprep.subr.mxu0 0.0
      %9011 = vmatpush1.msra.mxu0 %v8801
      %9012 = vmatprep.subr.mxu0 0.0
      %9013 = vmatpush1.msra.mxu0 %v8802
      %9014 = vmatprep.subr.mxu0 0.0
      %9015 = vmatpush1.msra.mxu0 0.0
      %9016 = vmatprep.subr.mxu0 0.0
      %9017 = vmatpush1.msra.mxu0 0.0
      %9018 = vmatprep.subr.mxu0 0.0
      %9019 = vmatpush1.msra.mxu0 0.0
      %9020 = vmatprep.subr.mxu0 0.0
      %9021 = vmatpush1.msra.mxu0 0.0
      %9022 = vmatprep.subr.mxu0 0.0
      %9023 = vmatpush1.msra.mxu0 0.0
      %9024 = vmatprep.subr.mxu0 0.0
      %9025 = vmatpush1.msra.mxu0 0.0
      %9026 = vmatprep.subr.mxu0 0.0
      %9027 = vmatpush1.msra.mxu0 0.0
      %9028 = vmatprep.subr.mxu0 0.0
      %9029 = vmatpush1.msra.mxu0 0.0
      %9030 = vmatprep.subr.mxu0 0.0
      %9031 = vmatpush1.msra.mxu0 0.0
      %9032 = vmatprep.subr.mxu0 0.0
      %9033 = vmatpush1.msra.mxu0 0.0
      %9034 = vmatprep.subr.mxu0 0.0
      %9035 = vmatpush1.msra.mxu0 0.0
      %9036 = vmatprep.subr.mxu0 0.0
      %9037 = vmatpush1.msra.mxu0 0.0
      %9038 = vmatprep.subr.mxu0 0.0
      %9039 = vmatpush1.msra.mxu0 0.0
      %9040 = vmatprep.subr.mxu0 0.0
      %9041 = vmatpush1.msra.mxu0 0.0
      %9042 = vmatprep.subr.mxu0 0.0
      %9043 = vmatpush1.msra.mxu0 0.0
      %9044 = vmatprep.subr.mxu0 0.0
      %9045 = vmatpush1.msra.mxu0 0.0
      %9046 = vmatprep.subr.mxu0 0.0
      %9047 = vmatpush1.msra.mxu0 0.0
      %9048 = vmatprep.subr.mxu0 0.0
      %9049 = vmatpush1.msra.mxu0 0.0
      %9050 = vmatprep.subr.mxu0 0.0
      %9051 = vmatpush1.msra.mxu0 0.0
      %9052 = vmatprep.subr.mxu0 0.0
      %9053 = vmatpush1.msra.mxu0 0.0
      %9054 = vmatprep.subr.mxu0 0.0
      %9055 = vmatpush1.msra.mxu0 0.0
      %9056 = vmatprep.subr.mxu0 0.0
      %9057 = vmatpush1.msra.mxu0 0.0
      %9058 = vmatprep.subr.mxu0 0.0
      %9059 = vmatpush1.msra.mxu0 0.0
      %9060 = vmatprep.mubr.f32.mxu0 0.0
      %9061 = vmatmul.mubr.f32.gmra.mrb[0].mxu0 %v8805
      %v9062 = vpop.f32.mrb[0].mxu0
      %v9063 = vadd.f32 0.0, %v9062
      %v9064 = vpop.f32.mrb[0].mxu0
      %9065 = vmatprep.mubr.f32.mxu0 0.0
      %9066 = vmatmul.mubr.f32.gmra.mrb[0].mxu0 %v8808
      %v9067 = vpop.f32.mrb[0].mxu0
      %v9068 = vadd.f32 0.0, %v9067
      %v9069 = vpop.f32.mrb[0].mxu0
      %9070 = vmatprep.mubr.f32.mxu0 0.0
      %9071 = vmatmul.mubr.f32.gmra.mrb[0].mxu0 %v8811
      %v9072 = vpop.f32.mrb[0].mxu0
      %v9073 = vadd.f32 0.0, %v9072
      %v9074 = vpop.f32.mrb[0].mxu0
      %9075 = vmatprep.mubr.f32.mxu0 0.0
      %9076 = vmatmul.mubr.f32.gmra.mrb[0].mxu0 %v8814
      %v9077 = vpop.f32.mrb[0].mxu0
      %v9078 = vadd.f32 0.0, %v9077
      %v9079 = vpop.f32.mrb[0].mxu0
      %9080 = vmatprep.mubr.f32.mxu0 0.0
      %9081 = vmatmul.mubr.f32.gmra.mrb[0].mxu0 %v8817
      %v9082 = vpop.f32.mrb[0].mxu0
      %v9083 = vadd.f32 0.0, %v9082
      %v9084 = vpop.f32.mrb[0].mxu0
      %9085 = vmatprep.mubr.f32.mxu0 0.0
      %9086 = vmatmul.mubr.f32.gmra.mrb[0].mxu0 %v8820
      %v9087 = vpop.f32.mrb[0].mxu0
      %v9088 = vadd.f32 0.0, %v9087
      %v9089 = vpop.f32.mrb[0].mxu0
      %9090 = vmatprep.mubr.f32.mxu0 0.0
      %9091 = vmatmul.mubr.f32.gmra.mrb[0].mxu0 %v8823
      %v9092 = vpop.f32.mrb[0].mxu0
      %v9093 = vadd.f32 0.0, %v9092
      %v9094 = vpop.f32.mrb[0].mxu0
      %9095 = vmatprep.mubr.f32.mxu0 0.0
      %9096 = vmatmul.mubr.f32.gmra.mrb[0].mxu0 %v8826
      %v9097 = vpop.f32.mrb[0].mxu0
      %v9098 = vadd.f32 0.0, %v9097
      %v9099 = vpop.f32.mrb[0].mxu0
      %9100 = vmatprep.mubr.f32.mxu0 0.0
      %9101 = vmatmul.mubr.f32.gmra.mrb[0].mxu0 %v8829
      %v9102 = vpop.f32.mrb[0].mxu0
      %v9103 = vadd.f32 0.0, %v9102
      %v9104 = vpop.f32.mrb[0].mxu0
      %9105 = vmatprep.mubr.f32.mxu0 0.0
      %9106 = vmatmul.mubr.f32.gmra.mrb[0].mxu0 %v8832
      %v9107 = vpop.f32.mrb[0].mxu0
      %v9108 = vadd.f32 0.0, %v9107
      %v9109 = vpop.f32.mrb[0].mxu0
      %9110 = vmatprep.mubr.f32.mxu0 0.0
      %9111 = vmatmul.mubr.f32.gmra.mrb[0].mxu0 %v8835
      %v9112 = vpop.f32.mrb[0].mxu0
      %v9113 = vadd.f32 0.0, %v9112
      %v9114 = vpop.f32.mrb[0].mxu0
      %9115 = vmatprep.mubr.f32.mxu0 0.0
      %9116 = vmatmul.mubr.f32.gmra.mrb[0].mxu0 %v8838
      %v9117 = vpop.f32.mrb[0].mxu0
      %v9118 = vadd.f32 0.0, %v9117
      %v9119 = vpop.f32.mrb[0].mxu0
      %9120 = vmatprep.mubr.f32.mxu0 0.0
      %9121 = vmatmul.mubr.f32.gmra.mrb[0].mxu0 %v8841
      %v9122 = vpop.f32.mrb[0].mxu0
      %v9123 = vadd.f32 0.0, %v9122
      %v9124 = vpop.f32.mrb[0].mxu0
      %9125 = vmatprep.mubr.f32.mxu0 0.0
      %9126 = vmatmul.mubr.f32.gmra.mrb[0].mxu0 %v8844
      %v9127 = vpop.f32.mrb[0].mxu0
      %v9128 = vadd.f32 0.0, %v9127
      %v9129 = vpop.f32.mrb[0].mxu0
      %9130 = vmatprep.mubr.f32.mxu0 0.0
      %9131 = vmatmul.mubr.f32.gmra.mrb[0].mxu0 %v8847
      %v9132 = vpop.f32.mrb[0].mxu0
      %v9133 = vadd.f32 0.0, %v9132
      %v9134 = vpop.f32.mrb[0].mxu0
      %9135 = vmatprep.mubr.f32.mxu0 0.0
      %9136 = vmatmul.mubr.f32.gmra.mrb[0].mxu0 %v8850
      %v9137 = vpop.f32.mrb[0].mxu0
      %v9138 = vadd.f32 0.0, %v9137
      %v9139 = vpop.f32.mrb[0].mxu0
      %9140 = vmatprep.mubr.f32.mxu0 0.0
      %9141 = vmatmul.mubr.f32.gmra.mrb[0].mxu0 %v8853
      %v9142 = vpop.f32.mrb[0].mxu0
      %v9143 = vadd.f32 0.0, %v9142
      %v9144 = vpop.f32.mrb[0].mxu0
      %9145 = vmatprep.mubr.f32.mxu0 0.0
      %9146 = vmatmul.mubr.f32.gmra.mrb[0].mxu0 %v8856
      %v9147 = vpop.f32.mrb[0].mxu0
      %v9148 = vadd.f32 0.0, %v9147
      %v9149 = vpop.f32.mrb[0].mxu0
      %9150 = vmatprep.mubr.f32.mxu0 0.0
      %9151 = vmatmul.mubr.f32.gmra.mrb[0].mxu0 %v8859
      %v9152 = vpop.f32.mrb[0].mxu0
      %v9153 = vadd.f32 0.0, %v9152
      %v9154 = vpop.f32.mrb[0].mxu0
      %9155 = vmatprep.mubr.f32.mxu0 0.0
      %9156 = vmatmul.mubr.f32.gmra.mrb[0].mxu0 %v8862
      %v9157 = vpop.f32.mrb[0].mxu0
      %v9158 = vadd.f32 0.0, %v9157
      %v9159 = vpop.f32.mrb[0].mxu0
      %9160 = vmatprep.mubr.f32.mxu0 0.0
      %9161 = vmatmul.mubr.f32.gmra.mrb[0].mxu0 %v8865
      %v9162 = vpop.f32.mrb[0].mxu0
      %v9163 = vadd.f32 0.0, %v9162
      %v9164 = vpop.f32.mrb[0].mxu0
      %9165 = vmatprep.mubr.f32.mxu0 0.0
      %9166 = vmatmul.mubr.f32.gmra.mrb[0].mxu0 %v8868
      %v9167 = vpop.f32.mrb[0].mxu0
      %v9168 = vadd.f32 0.0, %v9167
      %v9169 = vpop.f32.mrb[0].mxu0
      %9170 = vmatprep.mubr.f32.mxu0 0.0
      %9171 = vmatmul.mubr.f32.gmra.mrb[0].mxu0 %v8871
      %v9172 = vpop.f32.mrb[0].mxu0
      %v9173 = vadd.f32 0.0, %v9172
      %v9174 = vpop.f32.mrb[0].mxu0
      %9175 = vmatprep.mubr.f32.mxu0 0.0
      %9176 = vmatmul.mubr.f32.gmra.mrb[0].mxu0 %v8874
      %v9177 = vpop.f32.mrb[0].mxu0
      %v9178 = vadd.f32 0.0, %v9177
      %v9179 = vpop.f32.mrb[0].mxu0
      %9180 = vmatprep.mubr.f32.mxu0 0.0
      %9181 = vmatmul.mubr.f32.gmra.mrb[0].mxu0 %v8877
      %v9182 = vpop.f32.mrb[0].mxu0
      %v9183 = vadd.f32 0.0, %v9182
      %v9184 = vpop.f32.mrb[0].mxu0
      %9185 = vmatprep.mubr.f32.mxu0 0.0
      %9186 = vmatmul.mubr.f32.gmra.mrb[0].mxu0 %v8880
      %v9187 = vpop.f32.mrb[0].mxu0
      %v9188 = vadd.f32 0.0, %v9187
      %v9189 = vpop.f32.mrb[0].mxu0
      %9190 = vmatprep.mubr.f32.mxu0 0.0
      %9191 = vmatmul.mubr.f32.gmra.mrb[0].mxu0 %v8883
      %v9192 = vpop.f32.mrb[0].mxu0
      %v9193 = vadd.f32 0.0, %v9192
      %v9194 = vpop.f32.mrb[0].mxu0
      %9195 = vmatprep.mubr.f32.mxu0 0.0
      %9196 = vmatmul.mubr.f32.gmra.mrb[0].mxu0 %v8886
      %v9197 = vpop.f32.mrb[0].mxu0
      %v9198 = vadd.f32 0.0, %v9197
      %v9199 = vpop.f32.mrb[0].mxu0
      %9200 = vmatprep.mubr.f32.mxu0 0.0
      %9201 = vmatmul.mubr.f32.gmra.mrb[0].mxu0 %v8889
      %v9202 = vpop.f32.mrb[0].mxu0
      %v9203 = vadd.f32 0.0, %v9202
      %v9204 = vpop.f32.mrb[0].mxu0
      %9205 = vmatprep.mubr.f32.mxu0 0.0
      %9206 = vmatmul.mubr.f32.gmra.mrb[0].mxu0 %v8892
      %v9207 = vpop.f32.mrb[0].mxu0
      %v9208 = vadd.f32 0.0, %v9207
      %v9209 = vpop.f32.mrb[0].mxu0
      %9210 = vmatprep.mubr.f32.mxu0 0.0
      %9211 = vmatmul.mubr.f32.gmra.mrb[0].mxu0 %v8895
      %v9212 = vpop.f32.mrb[0].mxu0
      %v9213 = vadd.f32 0.0, %v9212
      %v9214 = vpop.f32.mrb[0].mxu0
      %9215 = vmatprep.mubr.f32.mxu0 0.0
      %9216 = vmatmul.mubr.f32.gmra.mrb[0].mxu0 %v8898
      %v9217 = vpop.f32.mrb[0].mxu0
      %v9218 = vadd.f32 0.0, %v9217
      %v9219 = vpop.f32.mrb[0].mxu0
      %9220 = vmatprep.mubr.f32.mxu0 0.0
      %9221 = vmatmul.mubr.f32.gmra.mrb[0].mxu0 %v8901
      %v9222 = vpop.f32.mrb[0].mxu0
      %v9223 = vadd.f32 0.0, %v9222
      %v9224 = vpop.f32.mrb[0].mxu0
      %9225 = vmatprep.mubr.f32.mxu0 0.0
      %9226 = vmatmul.mubr.f32.gmra.mrb[0].mxu0 %v8904
      %v9227 = vpop.f32.mrb[0].mxu0
      %v9228 = vadd.f32 0.0, %v9227
      %v9229 = vpop.f32.mrb[0].mxu0
      %9230 = vmatprep.mubr.f32.mxu0 0.0
      %9231 = vmatmul.mubr.f32.gmra.mrb[0].mxu0 %v8907
      %v9232 = vpop.f32.mrb[0].mxu0
      %v9233 = vadd.f32 0.0, %v9232
      %v9234 = vpop.f32.mrb[0].mxu0
      %9235 = vmatprep.mubr.f32.mxu0 0.0
      %9236 = vmatmul.mubr.f32.gmra.mrb[0].mxu0 %v8910
      %v9237 = vpop.f32.mrb[0].mxu0
      %v9238 = vadd.f32 0.0, %v9237
      %v9239 = vpop.f32.mrb[0].mxu0
      %9240 = vmatprep.mubr.f32.mxu0 0.0
      %9241 = vmatmul.mubr.f32.gmra.mrb[0].mxu0 %v8913
      %v9242 = vpop.f32.mrb[0].mxu0
      %v9243 = vadd.f32 0.0, %v9242
      %v9244 = vpop.f32.mrb[0].mxu0
      %9245 = vmatprep.mubr.f32.mxu0 0.0
      %9246 = vmatmul.mubr.f32.gmra.mrb[0].mxu0 %v8916
      %v9247 = vpop.f32.mrb[0].mxu0
      %v9248 = vadd.f32 0.0, %v9247
      %v9249 = vpop.f32.mrb[0].mxu0
      %9250 = vmatprep.mubr.f32.mxu0 0.0
      %9251 = vmatmul.mubr.f32.gmra.mrb[0].mxu0 %v8919
      %v9252 = vpop.f32.mrb[0].mxu0
      %v9253 = vadd.f32 0.0, %v9252
      %v9254 = vpop.f32.mrb[0].mxu0
      %9255 = vmatprep.mubr.f32.mxu0 0.0
      %9256 = vmatmul.mubr.f32.gmra.mrb[0].mxu0 %v8922
      %v9257 = vpop.f32.mrb[0].mxu0
      %v9258 = vadd.f32 0.0, %v9257
      %v9259 = vpop.f32.mrb[0].mxu0
      %9260 = vmatprep.mubr.f32.mxu0 0.0
      %9261 = vmatmul.mubr.f32.gmra.mrb[0].mxu0 %v8925
      %v9262 = vpop.f32.mrb[0].mxu0
      %v9263 = vadd.f32 0.0, %v9262
      %v9264 = vpop.f32.mrb[0].mxu0
      %9265 = vmatprep.mubr.f32.mxu0 0.0
      %9266 = vmatmul.mubr.f32.gmra.mrb[0].mxu0 %v8928
      %v9267 = vpop.f32.mrb[0].mxu0
      %v9268 = vadd.f32 0.0, %v9267
      %v9269 = vpop.f32.mrb[0].mxu0
      %9270 = vmatprep.mubr.f32.mxu0 0.0
      %9271 = vmatmul.mubr.f32.gmra.mrb[0].mxu0 %v8931
      %v9272 = vpop.f32.mrb[0].mxu0
      %v9273 = vadd.f32 0.0, %v9272
      %v9274 = vpop.f32.mrb[0].mxu0
      %9275 = vmatprep.mubr.f32.mxu0 0.0
      %9276 = vmatmul.mubr.f32.gmra.mrb[0].mxu0 %v8934
      %v9277 = vpop.f32.mrb[0].mxu0
      %v9278 = vadd.f32 0.0, %v9277
      %v9279 = vpop.f32.mrb[0].mxu0
      %9280 = vmatprep.mubr.f32.mxu0 0.0
      %9281 = vmatmul.mubr.f32.gmra.mrb[0].mxu0 %v8937
      %v9282 = vpop.f32.mrb[0].mxu0
      %v9283 = vadd.f32 0.0, %v9282
      %v9284 = vpop.f32.mrb[0].mxu0
      %9285 = vmatprep.mubr.f32.mxu0 0.0
      %9286 = vmatmul.mubr.f32.gmra.mrb[0].mxu0 %v8940
      %v9287 = vpop.f32.mrb[0].mxu0
      %v9288 = vadd.f32 0.0, %v9287
      %v9289 = vpop.f32.mrb[0].mxu0
      %9290 = vmatprep.mubr.f32.mxu0 0.0
      %9291 = vmatmul.mubr.f32.gmra.mrb[0].mxu0 %v8943
      %v9292 = vpop.f32.mrb[0].mxu0
      %v9293 = vadd.f32 0.0, %v9292
      %v9294 = vpop.f32.mrb[0].mxu0
      %9295 = vmatprep.mubr.f32.mxu0 0.0
      %9296 = vmatmul.mubr.f32.gmra.mrb[0].mxu0 %v8946
      %v9297 = vpop.f32.mrb[0].mxu0
      %v9298 = vadd.f32 0.0, %v9297
      %v9299 = vpop.f32.mrb[0].mxu0
      %9300 = vmatprep.mubr.f32.mxu0 0.0
      %9301 = vmatmul.mubr.f32.gmra.mrb[0].mxu0 %v8949
      %v9302 = vpop.f32.mrb[0].mxu0
      %v9303 = vadd.f32 0.0, %v9302
      %v9304 = vpop.f32.mrb[0].mxu0
      %9305 = vmatprep.mubr.f32.mxu0 0.0
      %9306 = vmatmul.mubr.f32.gmra.mrb[0].mxu0 %v8952
      %v9307 = vpop.f32.mrb[0].mxu0
      %v9308 = vadd.f32 0.0, %v9307
      %v9309 = vpop.f32.mrb[0].mxu0
      %9310 = vmatprep.mubr.f32.mxu0 0.0
      %9311 = vmatmul.mubr.f32.gmra.mrb[0].mxu0 %v8955
      %v9312 = vpop.f32.mrb[0].mxu0
      %v9313 = vadd.f32 0.0, %v9312
      %v9314 = vpop.f32.mrb[0].mxu0
      %9315 = vmatprep.mubr.f32.mxu0 0.0
      %9316 = vmatmul.mubr.f32.gmra.mrb[0].mxu0 %v8958
      %v9317 = vpop.f32.mrb[0].mxu0
      %v9318 = vadd.f32 0.0, %v9317
      %v9319 = vpop.f32.mrb[0].mxu0
      %9320 = vmatprep.mubr.f32.mxu0 0.0
      %9321 = vmatmul.mubr.f32.gmra.mrb[0].mxu0 %v8961
      %v9322 = vpop.f32.mrb[0].mxu0
      %v9323 = vadd.f32 0.0, %v9322
      %v9324 = vpop.f32.mrb[0].mxu0
      %9325 = vmatprep.mubr.f32.mxu0 0.0
      %9326 = vmatmul.mubr.f32.gmra.mrb[0].mxu0 %v8964
      %v9327 = vpop.f32.mrb[0].mxu0
      %v9328 = vadd.f32 0.0, %v9327
      %v9329 = vpop.f32.mrb[0].mxu0
      %9330 = vmatprep.mubr.f32.mxu0 0.0
      %9331 = vmatmul.mubr.f32.gmra.mrb[0].mxu0 %v8967
      %v9332 = vpop.f32.mrb[0].mxu0
      %v9333 = vadd.f32 0.0, %v9332
      %v9334 = vpop.f32.mrb[0].mxu0
      %9335 = vmatprep.mubr.f32.mxu0 0.0
      %9336 = vmatmul.mubr.f32.gmra.mrb[0].mxu0 %v8970
      %v9337 = vpop.f32.mrb[0].mxu0
      %v9338 = vadd.f32 0.0, %v9337
      %v9339 = vpop.f32.mrb[0].mxu0
      %9340 = vmatprep.mubr.f32.mxu0 0.0
      %9341 = vmatmul.mubr.f32.gmra.mrb[0].mxu0 %v8973
      %v9342 = vpop.f32.mrb[0].mxu0
      %v9343 = vadd.f32 0.0, %v9342
      %v9344 = vpop.f32.mrb[0].mxu0
      %9345 = vmatprep.mubr.f32.mxu0 0.0
      %9346 = vmatmul.mubr.f32.gmra.mrb[0].mxu0 %v8976
      %v9347 = vpop.f32.mrb[0].mxu0
      %v9348 = vadd.f32 0.0, %v9347
      %v9349 = vpop.f32.mrb[0].mxu0
      %9350 = vmatprep.mubr.f32.mxu0 0.0
      %9351 = vmatmul.mubr.f32.gmra.mrb[0].mxu0 %v8979
      %v9352 = vpop.f32.mrb[0].mxu0
      %v9353 = vadd.f32 0.0, %v9352
      %v9354 = vpop.f32.mrb[0].mxu0
      %9355 = vmatprep.mubr.f32.mxu0 0.0
      %9356 = vmatmul.mubr.f32.gmra.mrb[0].mxu0 %v8982
      %v9357 = vpop.f32.mrb[0].mxu0
      %v9358 = vadd.f32 0.0, %v9357
      %v9359 = vpop.f32.mrb[0].mxu0
      %9360 = vmatprep.mubr.f32.mxu0 0.0
      %9361 = vmatmul.mubr.f32.gmra.mrb[0].mxu0 %v8985
      %v9362 = vpop.f32.mrb[0].mxu0
      %v9363 = vadd.f32 0.0, %v9362
      %v9364 = vpop.f32.mrb[0].mxu0
      %9365 = vmatprep.mubr.f32.mxu0 0.0
      %9366 = vmatmul.mubr.f32.gmra.mrb[0].mxu0 %v8988
      %v9367 = vpop.f32.mrb[0].mxu0
      %v9368 = vadd.f32 0.0, %v9367
      %v9369 = vpop.f32.mrb[0].mxu0
      %9370 = vmatprep.mubr.f32.mxu0 0.0
      %9371 = vmatmul.mubr.f32.gmra.mrb[0].mxu0 %v8991
      %v9372 = vpop.f32.mrb[0].mxu0
      %v9373 = vadd.f32 0.0, %v9372
      %v9374 = vpop.f32.mrb[0].mxu0
      %9375 = vmatprep.mubr.f32.mxu0 0.0
      %9376 = vmatmul.mubr.f32.gmra.mrb[0].mxu0 %v8994
      %v9377 = vpop.f32.mrb[0].mxu0
      %v9378 = vadd.f32 0.0, %v9377
      %v9379 = vpop.f32.mrb[0].mxu0
      %9380 = vdwg.mxu0
      %v9381 = vld [vmem:[%s5] sm:$0x1]
      %v9383 = vlaneseq
      %v9384 = vshrl.u32 %v9383, 7
      %v9385 = vsub.s32 0, %v9384
      %v9386 = vrot.slane %v9381, %v9385
      %v9388 = vmul.f32 %v9063, %v9386
      %v9389 = vmul.f32 %v9068, %v9386
      %v9390 = vmul.f32 %v9073, %v9386
      %v9391 = vmul.f32 %v9078, %v9386
      %v9392 = vmul.f32 %v9083, %v9386
      %v9393 = vmul.f32 %v9088, %v9386
      %v9394 = vmul.f32 %v9093, %v9386
      %v9395 = vmul.f32 %v9098, %v9386
      %v9396 = vmul.f32 %v9103, %v9386
      %v9397 = vmul.f32 %v9108, %v9386
      %v9398 = vmul.f32 %v9113, %v9386
      %v9399 = vmul.f32 %v9118, %v9386
      %v9400 = vmul.f32 %v9123, %v9386
      %v9401 = vmul.f32 %v9128, %v9386
      %v9402 = vmul.f32 %v9133, %v9386
      %v9403 = vmul.f32 %v9138, %v9386
      %v9404 = vmul.f32 %v9143, %v9386
      %v9405 = vmul.f32 %v9148, %v9386
      %v9406 = vmul.f32 %v9153, %v9386
      %v9407 = vmul.f32 %v9158, %v9386
      %v9408 = vmul.f32 %v9163, %v9386
      %v9409 = vmul.f32 %v9168, %v9386
      %v9410 = vmul.f32 %v9173, %v9386
      %v9411 = vmul.f32 %v9178, %v9386
      %v9412 = vmul.f32 %v9183, %v9386
      %v9413 = vmul.f32 %v9188, %v9386
      %v9414 = vmul.f32 %v9193, %v9386
      %v9415 = vmul.f32 %v9198, %v9386
      %v9416 = vmul.f32 %v9203, %v9386
      %v9417 = vmul.f32 %v9208, %v9386
      %v9418 = vmul.f32 %v9213, %v9386
      %v9419 = vmul.f32 %v9218, %v9386
      %v9420 = vmul.f32 %v9223, %v9386
      %v9421 = vmul.f32 %v9228, %v9386
      %v9422 = vmul.f32 %v9233, %v9386
      %v9423 = vmul.f32 %v9238, %v9386
      %v9424 = vmul.f32 %v9243, %v9386
      %v9425 = vmul.f32 %v9248, %v9386
      %v9426 = vmul.f32 %v9253, %v9386
      %v9427 = vmul.f32 %v9258, %v9386
      %v9428 = vmul.f32 %v9263, %v9386
      %v9429 = vmul.f32 %v9268, %v9386
      %v9430 = vmul.f32 %v9273, %v9386
      %v9431 = vmul.f32 %v9278, %v9386
      %v9432 = vmul.f32 %v9283, %v9386
      %v9433 = vmul.f32 %v9288, %v9386
      %v9434 = vmul.f32 %v9293, %v9386
      %v9435 = vmul.f32 %v9298, %v9386
      %v9436 = vmul.f32 %v9303, %v9386
      %v9437 = vmul.f32 %v9308, %v9386
      %v9438 = vmul.f32 %v9313, %v9386
      %v9439 = vmul.f32 %v9318, %v9386
      %v9440 = vmul.f32 %v9323, %v9386
      %v9441 = vmul.f32 %v9328, %v9386
      %v9442 = vmul.f32 %v9333, %v9386
      %v9443 = vmul.f32 %v9338, %v9386
      %v9444 = vmul.f32 %v9343, %v9386
      %v9445 = vmul.f32 %v9348, %v9386
      %v9446 = vmul.f32 %v9353, %v9386
      %v9447 = vmul.f32 %v9358, %v9386
      %v9448 = vmul.f32 %v9363, %v9386
      %v9449 = vmul.f32 %v9368, %v9386
      %v9450 = vmul.f32 %v9373, %v9386
      %v9451 = vmul.f32 %v9378, %v9386
      %v9452 = vld [vmem:[%s6] sm:$0x1]
      %v9454 = vlaneseq
      %v9455 = vshrl.u32 %v9454, 7
      %v9456 = vsub.s32 0, %v9455
      %v9457 = vrot.slane %v9452, %v9456
      %v9459 = vadd.f32 %v9388, %v9457
      %v9460 = vadd.f32 %v9389, %v9457
      %v9461 = vadd.f32 %v9390, %v9457
      %v9462 = vadd.f32 %v9391, %v9457
      %v9463 = vadd.f32 %v9392, %v9457
      %v9464 = vadd.f32 %v9393, %v9457
      %v9465 = vadd.f32 %v9394, %v9457
      %v9466 = vadd.f32 %v9395, %v9457
      %v9467 = vadd.f32 %v9396, %v9457
      %v9468 = vadd.f32 %v9397, %v9457
      %v9469 = vadd.f32 %v9398, %v9457
      %v9470 = vadd.f32 %v9399, %v9457
      %v9471 = vadd.f32 %v9400, %v9457
      %v9472 = vadd.f32 %v9401, %v9457
      %v9473 = vadd.f32 %v9402, %v9457
      %v9474 = vadd.f32 %v9403, %v9457
      %v9475 = vadd.f32 %v9404, %v9457
      %v9476 = vadd.f32 %v9405, %v9457
      %v9477 = vadd.f32 %v9406, %v9457
      %v9478 = vadd.f32 %v9407, %v9457
      %v9479 = vadd.f32 %v9408, %v9457
      %v9480 = vadd.f32 %v9409, %v9457
      %v9481 = vadd.f32 %v9410, %v9457
      %v9482 = vadd.f32 %v9411, %v9457
      %v9483 = vadd.f32 %v9412, %v9457
      %v9484 = vadd.f32 %v9413, %v9457
      %v9485 = vadd.f32 %v9414, %v9457
      %v9486 = vadd.f32 %v9415, %v9457
      %v9487 = vadd.f32 %v9416, %v9457
      %v9488 = vadd.f32 %v9417, %v9457
      %v9489 = vadd.f32 %v9418, %v9457
      %v9490 = vadd.f32 %v9419, %v9457
      %v9491 = vadd.f32 %v9420, %v9457
      %v9492 = vadd.f32 %v9421, %v9457
      %v9493 = vadd.f32 %v9422, %v9457
      %v9494 = vadd.f32 %v9423, %v9457
      %v9495 = vadd.f32 %v9424, %v9457
      %v9496 = vadd.f32 %v9425, %v9457
      %v9497 = vadd.f32 %v9426, %v9457
      %v9498 = vadd.f32 %v9427, %v9457
      %v9499 = vadd.f32 %v9428, %v9457
      %v9500 = vadd.f32 %v9429, %v9457
      %v9501 = vadd.f32 %v9430, %v9457
      %v9502 = vadd.f32 %v9431, %v9457
      %v9503 = vadd.f32 %v9432, %v9457
      %v9504 = vadd.f32 %v9433, %v9457
      %v9505 = vadd.f32 %v9434, %v9457
      %v9506 = vadd.f32 %v9435, %v9457
      %v9507 = vadd.f32 %v9436, %v9457
      %v9508 = vadd.f32 %v9437, %v9457
      %v9509 = vadd.f32 %v9438, %v9457
      %v9510 = vadd.f32 %v9439, %v9457
      %v9511 = vadd.f32 %v9440, %v9457
      %v9512 = vadd.f32 %v9441, %v9457
      %v9513 = vadd.f32 %v9442, %v9457
      %v9514 = vadd.f32 %v9443, %v9457
      %v9515 = vadd.f32 %v9444, %v9457
      %v9516 = vadd.f32 %v9445, %v9457
      %v9517 = vadd.f32 %v9446, %v9457
      %v9518 = vadd.f32 %v9447, %v9457
      %v9519 = vadd.f32 %v9448, %v9457
      %v9520 = vadd.f32 %v9449, %v9457
      %v9521 = vadd.f32 %v9450, %v9457
      %v9522 = vadd.f32 %v9451, %v9457
      %v9523 = vmax.f32 %v9459, 0.0
      %v9524 = vmax.f32 %v9460, 0.0
      %v9525 = vmax.f32 %v9461, 0.0
      %v9526 = vmax.f32 %v9462, 0.0
      %v9527 = vmax.f32 %v9463, 0.0
      %v9528 = vmax.f32 %v9464, 0.0
      %v9529 = vmax.f32 %v9465, 0.0
      %v9530 = vmax.f32 %v9466, 0.0
      %v9531 = vmax.f32 %v9467, 0.0
      %v9532 = vmax.f32 %v9468, 0.0
      %v9533 = vmax.f32 %v9469, 0.0
      %v9534 = vmax.f32 %v9470, 0.0
      %v9535 = vmax.f32 %v9471, 0.0
      %v9536 = vmax.f32 %v9472, 0.0
      %v9537 = vmax.f32 %v9473, 0.0
      %v9538 = vmax.f32 %v9474, 0.0
      %v9539 = vmax.f32 %v9475, 0.0
      %v9540 = vmax.f32 %v9476, 0.0
      %v9541 = vmax.f32 %v9477, 0.0
      %v9542 = vmax.f32 %v9478, 0.0
      %v9543 = vmax.f32 %v9479, 0.0
      %v9544 = vmax.f32 %v9480, 0.0
      %v9545 = vmax.f32 %v9481, 0.0
      %v9546 = vmax.f32 %v9482, 0.0
      %v9547 = vmax.f32 %v9483, 0.0
      %v9548 = vmax.f32 %v9484, 0.0
      %v9549 = vmax.f32 %v9485, 0.0
      %v9550 = vmax.f32 %v9486, 0.0
      %v9551 = vmax.f32 %v9487, 0.0
      %v9552 = vmax.f32 %v9488, 0.0
      %v9553 = vmax.f32 %v9489, 0.0
      %v9554 = vmax.f32 %v9490, 0.0
      %v9555 = vmax.f32 %v9491, 0.0
      %v9556 = vmax.f32 %v9492, 0.0
      %v9557 = vmax.f32 %v9493, 0.0
      %v9558 = vmax.f32 %v9494, 0.0
      %v9559 = vmax.f32 %v9495, 0.0
      %v9560 = vmax.f32 %v9496, 0.0
      %v9561 = vmax.f32 %v9497, 0.0
      %v9562 = vmax.f32 %v9498, 0.0
      %v9563 = vmax.f32 %v9499, 0.0
      %v9564 = vmax.f32 %v9500, 0.0
      %v9565 = vmax.f32 %v9501, 0.0
      %v9566 = vmax.f32 %v9502, 0.0
      %v9567 = vmax.f32 %v9503, 0.0
      %v9568 = vmax.f32 %v9504, 0.0
      %v9569 = vmax.f32 %v9505, 0.0
      %v9570 = vmax.f32 %v9506, 0.0
      %v9571 = vmax.f32 %v9507, 0.0
      %v9572 = vmax.f32 %v9508, 0.0
      %v9573 = vmax.f32 %v9509, 0.0
      %v9574 = vmax.f32 %v9510, 0.0
      %v9575 = vmax.f32 %v9511, 0.0
      %v9576 = vmax.f32 %v9512, 0.0
      %v9577 = vmax.f32 %v9513, 0.0
      %v9578 = vmax.f32 %v9514, 0.0
      %v9579 = vmax.f32 %v9515, 0.0
      %v9580 = vmax.f32 %v9516, 0.0
      %v9581 = vmax.f32 %v9517, 0.0
      %v9582 = vmax.f32 %v9518, 0.0
      %v9583 = vmax.f32 %v9519, 0.0
      %v9584 = vmax.f32 %v9520, 0.0
      %v9585 = vmax.f32 %v9521, 0.0
      %v9586 = vmax.f32 %v9522, 0.0
      %9587 = vst.msk [vmem:[%s278] sm:$0xff] %vm5349, %v9523
      %9588 = vst.msk [vmem:[%s278 + $0x8] sm:$0xff] %vm5349, %v9524
      %9589 = vst.msk [vmem:[%s278 + $0x10] sm:$0xff] %vm5349, %v9525
      %9590 = vst.msk [vmem:[%s278 + $0x18] sm:$0xff] %vm5349, %v9526
      %9591 = vst.msk [vmem:[%s278 + $0x20] sm:$0xff] %vm5349, %v9527
      %9592 = vst.msk [vmem:[%s278 + $0x28] sm:$0xff] %vm5349, %v9528
      %9593 = vst.msk [vmem:[%s278 + $0x30] sm:$0xff] %vm5349, %v9529
      %9594 = vst.msk [vmem:[%s278 + $0x38] sm:$0xff] %vm5349, %v9530
      %9595 = vst.msk [vmem:[%s278 + $0x40] sm:$0xff] %vm5349, %v9531
      %9596 = vst.msk [vmem:[%s278 + $0x48] sm:$0xff] %vm5349, %v9532
      %9597 = vst.msk [vmem:[%s278 + $0x50] sm:$0xff] %vm5349, %v9533
      %9598 = vst.msk [vmem:[%s278 + $0x58] sm:$0xff] %vm5349, %v9534
      %9599 = vst.msk [vmem:[%s278 + $0x60] sm:$0xff] %vm5349, %v9535
      %9600 = vst.msk [vmem:[%s278 + $0x68] sm:$0xff] %vm5349, %v9536
      %9601 = vst.msk [vmem:[%s278 + $0x70] sm:$0xff] %vm5349, %v9537
      %9602 = vst.msk [vmem:[%s278 + $0x78] sm:$0xff] %vm5349, %v9538
      %9603 = vst.msk [vmem:[%s278 + $0x80] sm:$0xff] %vm5349, %v9539
      %9604 = vst.msk [vmem:[%s278 + $0x88] sm:$0xff] %vm5349, %v9540
      %9605 = vst.msk [vmem:[%s278 + $0x90] sm:$0xff] %vm5349, %v9541
      %9606 = vst.msk [vmem:[%s278 + $0x98] sm:$0xff] %vm5349, %v9542
      %9607 = vst.msk [vmem:[%s278 + $0xa0] sm:$0xff] %vm5349, %v9543
      %9608 = vst.msk [vmem:[%s278 + $0xa8] sm:$0xff] %vm5349, %v9544
      %9609 = vst.msk [vmem:[%s278 + $0xb0] sm:$0xff] %vm5349, %v9545
      %9610 = vst.msk [vmem:[%s278 + $0xb8] sm:$0xff] %vm5349, %v9546
      %9611 = vst.msk [vmem:[%s278 + $0xc0] sm:$0xff] %vm5349, %v9547
      %9612 = vst.msk [vmem:[%s278 + $0xc8] sm:$0xff] %vm5349, %v9548
      %9613 = vst.msk [vmem:[%s278 + $0xd0] sm:$0xff] %vm5349, %v9549
      %9614 = vst.msk [vmem:[%s278 + $0xd8] sm:$0xff] %vm5349, %v9550
      %9615 = vst.msk [vmem:[%s278 + $0xe0] sm:$0xff] %vm5349, %v9551
      %9616 = vst.msk [vmem:[%s278 + $0xe8] sm:$0xff] %vm5349, %v9552
      %9617 = vst.msk [vmem:[%s278 + $0xf0] sm:$0xff] %vm5349, %v9553
      %9618 = vst.msk [vmem:[%s278 + $0xf8] sm:$0xff] %vm5349, %v9554
      %9619 = vst.msk [vmem:[%s278 + $0x100] sm:$0xff] %vm5349, %v9555
      %9620 = vst.msk [vmem:[%s278 + $0x108] sm:$0xff] %vm5349, %v9556
      %9621 = vst.msk [vmem:[%s278 + $0x110] sm:$0xff] %vm5349, %v9557
      %9622 = vst.msk [vmem:[%s278 + $0x118] sm:$0xff] %vm5349, %v9558
      %9623 = vst.msk [vmem:[%s278 + $0x120] sm:$0xff] %vm5349, %v9559
      %9624 = vst.msk [vmem:[%s278 + $0x128] sm:$0xff] %vm5349, %v9560
      %9625 = vst.msk [vmem:[%s278 + $0x130] sm:$0xff] %vm5349, %v9561
      %9626 = vst.msk [vmem:[%s278 + $0x138] sm:$0xff] %vm5349, %v9562
      %9627 = vst.msk [vmem:[%s278 + $0x140] sm:$0xff] %vm5349, %v9563
      %9628 = vst.msk [vmem:[%s278 + $0x148] sm:$0xff] %vm5349, %v9564
      %9629 = vst.msk [vmem:[%s278 + $0x150] sm:$0xff] %vm5349, %v9565
      %9630 = vst.msk [vmem:[%s278 + $0x158] sm:$0xff] %vm5349, %v9566
      %9631 = vst.msk [vmem:[%s278 + $0x160] sm:$0xff] %vm5349, %v9567
      %9632 = vst.msk [vmem:[%s278 + $0x168] sm:$0xff] %vm5349, %v9568
      %9633 = vst.msk [vmem:[%s278 + $0x170] sm:$0xff] %vm5349, %v9569
      %9634 = vst.msk [vmem:[%s278 + $0x178] sm:$0xff] %vm5349, %v9570
      %9635 = vst.msk [vmem:[%s278 + $0x180] sm:$0xff] %vm5349, %v9571
      %9636 = vst.msk [vmem:[%s278 + $0x188] sm:$0xff] %vm5349, %v9572
      %9637 = vst.msk [vmem:[%s278 + $0x190] sm:$0xff] %vm5349, %v9573
      %9638 = vst.msk [vmem:[%s278 + $0x198] sm:$0xff] %vm5349, %v9574
      %9639 = vst.msk [vmem:[%s278 + $0x1a0] sm:$0xff] %vm5349, %v9575
      %9640 = vst.msk [vmem:[%s278 + $0x1a8] sm:$0xff] %vm5349, %v9576
      %9641 = vst.msk [vmem:[%s278 + $0x1b0] sm:$0xff] %vm5349, %v9577
      %9642 = vst.msk [vmem:[%s278 + $0x1b8] sm:$0xff] %vm5349, %v9578
      %9643 = vst.msk [vmem:[%s278 + $0x1c0] sm:$0xff] %vm5349, %v9579
      %9644 = vst.msk [vmem:[%s278 + $0x1c8] sm:$0xff] %vm5349, %v9580
      %9645 = vst.msk [vmem:[%s278 + $0x1d0] sm:$0xff] %vm5349, %v9581
      %9646 = vst.msk [vmem:[%s278 + $0x1d8] sm:$0xff] %vm5349, %v9582
      %9647 = vst.msk [vmem:[%s278 + $0x1e0] sm:$0xff] %vm5349, %v9583
      %9648 = vst.msk [vmem:[%s278 + $0x1e8] sm:$0xff] %vm5349, %v9584
      %9649 = vst.msk [vmem:[%s278 + $0x1f0] sm:$0xff] %vm5349, %v9585
      %9650 = vst.msk [vmem:[%s278 + $0x1f8] sm:$0xff] %vm5349, %v9586
      %p9651 = scmp.lt.s32.totalorder %s18, 1
      %s9652 = scalar_select %p9651, %s18, 1
      %s9653 = smul.addr %s9652, 64
      %s9654 = smul.addr %s9653, 8
      %s9655 = scalar_lea.vmem %s7, %s9654
      // Predicated region
      $region49: #{down_forward.1} parent=47 // pred_check
        %p9656 = pneg %p188
      $region50: #{down_forward.1} parent=47 // pred_check_branch
        %9658 = sbr.rel (%p9656) target = $region52
      $region51: #{down_forward.1} parent=47 // pred_region
        _
      $region52: #{down_forward.1} parent=47 // pred_fallthru
        _
    $region48: #{down_forward.1} parent=5 // pred_fallthru
      _
    %p9659 = scmp.le.s32.totalorder 2, %s13
    // Predicated region
    $region53: #{down_forward.1} parent=5 // pred_check
      %p9660 = pneg %p9659
    $region54: #{down_forward.1} parent=5 // pred_check_branch
      %9662 = sbr.rel (%p9660) target = $region56
    $region55: #{down_forward.1} parent=5 // pred_region
      %s9663 = ssub.s32 %s13, 2
      // Predicated region
      $region57: #{down_forward.1} parent=55 // pred_check
        %p9664 = pneg %p194
      $region58: #{down_forward.1} parent=55 // pred_check_branch
        %9666 = sbr.rel (%p9664) target = $region60
      $region59: #{down_forward.1} parent=55 // pred_region
        %p9667 = scmp.lt.s32.totalorder %s19, 1
        %s9668 = scalar_select %p9667, %s19, 1
        %s9669 = smul.addr %s9668, 64
        %s9670 = smul.addr %s9669, 8
        %s9671 = scalar_lea.vmem %s7, %s9670
      $region60: #{down_forward.1} parent=55 // pred_fallthru
        _
    $region56: #{down_forward.1} parent=5 // pred_fallthru
      _
  $region6: #{down_forward.1} parent=0 // loop_footer
    %s17 = sadd.s32 1, %s13
  $region7: #{down_forward.1} parent=0 // loop_footer_branch
    %12 = sbr.rel target = $region3
  $region8: #{down_forward.1} parent=0 // loop_exit
    _

</llo_original>
